<compile_context>
chip_gen: v6e
topology: v6e:2x2x1
jax: 0.10.0
libtpu: 0.0.40
codegen_flags: <defaults>
</compile_context>

<pallas_src>
import functools

import jax
import jax.numpy as jnp
from jax import lax
from jax.experimental import pallas as pl
from jax.experimental.pallas import tpu as pltpu


# Taps per output-row parity for ConvTranspose2d(k=4, stride=2, padding=1):
#   parity 0 (even output rows): kernel rows {1, 3}, input-row shifts {0, -1}
#   parity 1 (odd  output rows): kernel rows {0, 2}, input-row shifts {+1, 0}
_TAPS = (((1, 0), (3, -1)), ((0, 1), (2, 0)))

_M_TILE_TARGET = 4096     # lanes per GEMM grid step (multiple of 128)
_BN_EPS = 1e-5


def _choose_m_tile(m, target=_M_TILE_TARGET):
    """Largest lane tile (<= target, multiple of 128) that divides M, else full M."""
    if m <= target:
        return m
    for t in range(target - target % 128, 127, -128):
        if m % t == 0:
            return t
    return m


# ----------------------------------------------------------------------------
# Fused kernel: GEMM (+ channel stats) -> BN/bias + activation, all in one call
# ----------------------------------------------------------------------------
def _fused_convT_kernel(a_ref, w_ref, b_ref, o_ref, sum_ref, ssq_ref,
                        *, act, bn, m_tile, n_m, n_par, inv_n):
    p = pl.program_id(0)          # parity class
    i = pl.program_id(1)          # M tile

    # [Cout, K] @ [K, m_tile] on the MXU, f32 accumulation.
    y = jnp.dot(w_ref[0], a_ref[0], preferred_element_type=jnp.float32)

    if bn:
        @pl.when((p == 0) & (i == 0))
        def _init():
            sum_ref[...] = jnp.zeros_like(sum_ref)
            ssq_ref[...] = jnp.zeros_like(ssq_ref)

        sum_ref[...] += jnp.sum(y, axis=1, keepdims=True)
        ssq_ref[...] += jnp.sum(y * y, axis=1, keepdims=True)

    # Stash the raw GEMM result into the VMEM-resident output block.
    if n_m == 1:
        o_ref[p] = y.astype(o_ref.dtype)
    else:
        off = pl.multiple_of(i * m_tile, m_tile)       # m_tile is a multiple of 128 here
        o_ref[p, :, pl.ds(off, m_tile)] = y.astype(o_ref.dtype)

    # Last grid step: finalize BN (or bias) + activation over the whole layer,
    # then the resident block is written back to HBM once.
    @pl.when((p == n_par - 1) & (i == n_m - 1))
    def _finalize():
        y_all = o_ref[...].astype(jnp.float32)
        if bn:
            mean = sum_ref[...] * inv_n
            var = jnp.maximum(ssq_ref[...] * inv_n - mean * mean, 0.0)
            scale = lax.rsqrt(var + _BN_EPS)
            z = (y_all - mean[None]) * scale[None]
        else:
            z = y_all + b_ref[...][None]
        if act == "relu":
            z = jnp.maximum(z, 0.0)
        else:
            z = jnp.tanh(z)
        o_ref[...] = z.astype(o_ref.dtype)


def _fused_convT(A, W, bias, *, act, bn, out_dtype):
    """A: [P, K, M] bf16 patches; W: [P, Cout, K] bf16; bias: [Cout, 1] f32.

    Returns [P, Cout, M] activated output (one pallas_call, grid=(P, M//tile),
    whole-layer output resident in VMEM so BN/bias + act are fused)."""
    P, K, M = A.shape
    Cout = W.shape[1]
    m_tile = _choose_m_tile(M)
    n_m = M // m_tile

    # Explicit VMEM budget: resident output + double-buffered A/W tiles + slack.
    # TODO(synk): layers whose full output exceeds this budget would need a
    # 2-call split (GEMM+stats, then affine); not needed at these sizes.
    out_bytes = P * Cout * M * jnp.dtype(out_dtype).itemsize
    vmem_est = out_bytes + 2 * K * m_tile * 2 + 2 * Cout * K * 2 + (2 << 20)
    vmem_limit = int(min(max(32 << 20, 2 * vmem_est), 56 << 20))

    kernel = functools.partial(
        _fused_convT_kernel, act=act, bn=bn, m_tile=m_tile, n_m=n_m,
        n_par=P, inv_n=1.0 / float(P * M))

    return pl.pallas_call(
        kernel,
        out_shape=jax.ShapeDtypeStruct((P, Cout, M), out_dtype),
        grid_spec=pltpu.PrefetchScalarGridSpec(
            num_scalar_prefetch=0,
            grid=(P, n_m),
            in_specs=[
                pl.BlockSpec((1, K, m_tile), lambda p, i: (p, 0, i)),   # patches
                pl.BlockSpec((1, Cout, K), lambda p, i: (p, 0, 0)),     # weights
                pl.BlockSpec((Cout, 1), lambda p, i: (0, 0)),           # bias
            ],
            out_specs=pl.BlockSpec((P, Cout, M), lambda p, i: (0, 0, 0)),  # resident
            scratch_shapes=[pltpu.VMEM((Cout, 1), jnp.float32),
                            pltpu.VMEM((Cout, 1), jnp.float32)],
        ),
        compiler_params=pltpu.CompilerParams(
            # Resident output + stats accumulation create cross-step deps.
            dimension_semantics=("arbitrary", "arbitrary"),
            vmem_limit_bytes=vmem_limit,
        ),
    )(A, W, bias)


# ----------------------------------------------------------------------------
# Layer wrappers (cheap XLA glue for tap extraction / parity interleave)
# ----------------------------------------------------------------------------
def _first_layer(x2d, w, bias, *, act, bn, out_dtype):
    """ConvTranspose2d(k=4, s=1, p=0) on a 1x1 input: each of the 16 output
    pixels is its own [Cout, Cin] @ [Cin, B] GEMM (16 'parities', 1 tap)."""
    Cin, B = x2d.shape
    Cout, k = w.shape[1], w.shape[2]
    P = k * k
    A = jnp.broadcast_to(x2d.astype(jnp.bfloat16)[None], (P, Cin, B))
    Wm = w.transpose(2, 3, 1, 0).reshape(P, Cout, Cin).astype(jnp.bfloat16)
    y = _fused_convT(A, Wm, bias, act=act, bn=bn, out_dtype=out_dtype)   # [P, Cout, B]
    return y.transpose(1, 2, 0).reshape(Cout, B, k, k)                   # [Cout, B, 4, 4]


def _stride2_layer(h, w, bias, *, act, bn, out_dtype):
    """ConvTranspose2d(k=4, s=2, p=1) via stride-phase decomposition.

    h: [Cin, B, H, W] -> [Cout, B, 2H, 2W]."""
    Cin, B, H, W = h.shape
    Cout = w.shape[1]
    hb = h.astype(jnp.bfloat16)
    hp = jnp.pad(hb, ((0, 0), (0, 0), (1, 1), (1, 1)))

    A_par, W_par = [], []
    for py in (0, 1):
        for px in (0, 1):
            a_taps, w_taps = [], []
            for kh, sy in _TAPS[py]:
                for kw, sx in _TAPS[px]:
                    a_taps.append(hp[:, :, 1 + sy:1 + sy + H, 1 + sx:1 + sx + W])
                    w_taps.append(w[:, :, kh, kw].T)                     # [Cout, Cin]
            A_par.append(jnp.concatenate(a_taps, axis=0).reshape(4 * Cin, B * H * W))
            W_par.append(jnp.concatenate(w_taps, axis=1))                # [Cout, 4*Cin]

    A = jnp.stack(A_par, 0)                                              # [4, 4Cin, M] bf16
    Wm = jnp.stack(W_par, 0).astype(jnp.bfloat16)                        # [4, Cout, 4Cin]
    y4 = _fused_convT(A, Wm, bias, act=act, bn=bn, out_dtype=out_dtype)  # [4, Cout, M]

    # Interleave the 4 parity classes back to [Cout, B, 2H, 2W].
    y4 = y4.reshape(2, 2, Cout, B, H, W).transpose(2, 3, 4, 0, 5, 1)
    return y4.reshape(Cout, B, 2 * H, 2 * W)


# ----------------------------------------------------------------------------
# Generator: parameters + forward
# ----------------------------------------------------------------------------
def init_generator_params(key, channel_noise, channel_image, feature_g):
    cfg = [
        (channel_noise,  feature_g * 16),
        (feature_g * 16, feature_g * 8),
        (feature_g * 8,  feature_g * 4),
        (feature_g * 4,  feature_g * 2),
        (feature_g * 2,  feature_g),
        (feature_g,      channel_image),     # last layer: bias=True, Tanh
    ]
    keys = jax.random.split(key, len(cfg) + 1)
    weights = [0.02 * jax.random.normal(k, (cin, cout, 4, 4), jnp.float32)
               for k, (cin, cout) in zip(keys[:-1], cfg)]
    bias_last = 0.02 * jax.random.normal(keys[-1], (channel_image,), jnp.float32)
    return {"weights": weights, "bias_last": bias_last}


@jax.jit
def generator_forward(x, params):
    """x: [B, channel_noise, 1, 1] (NCHW) -> [B, channel_image, 128, 128]."""
    B = x.shape[0]
    weights = params["weights"]
    n_layers = len(weights)

    h = x.reshape(B, -1).T                                   # [Cin, B], channels-first

    # layer 0: 1x1 -> 4x4, BN + ReLU
    c0 = weights[0].shape[1]
    h = _first_layer(h, weights[0], jnp.zeros((c0, 1), jnp.float32),
                     act="relu", bn=True, out_dtype=jnp.bfloat16)

    # layers 1..n-2: stride-2 ConvT + BN + ReLU
    for li in range(1, n_layers - 1):
        c = weights[li].shape[1]
        h = _stride2_layer(h, weights[li], jnp.zeros((c, 1), jnp.float32),
                           act="relu", bn=True, out_dtype=jnp.bfloat16)

    # last layer: stride-2 ConvT + bias + Tanh (no BN), f32 output
    bias = params["bias_last"].reshape(-1, 1).astype(jnp.float32)
    h = _stride2_layer(h, weights[-1], bias, act="tanh", bn=False,
                       out_dtype=jnp.float32)

    return h.transpose(1, 0, 2, 3)                           # -> NCHW


# ----------------------------------------------------------------------------
# Pure-JAX f32 reference (validation only)
# ----------------------------------------------------------------------------
def _convT_ref(x, w, stride, padding):
    B, Cin, H, W = x.shape
    Cout, k = w.shape[1], w.shape[2]
    Hf, Wf = (H - 1) * stride + k, (W - 1) * stride + k
    prod = jnp.einsum('bihw,iokl->bohwkl', x, w)
    out = jnp.zeros((B, Cout, Hf, Wf), jnp.float32)
    for kh in range(k):
        for kw in range(k):
            out = out.at[:, :, kh:kh + (H - 1) * stride + 1:stride,
                               kw:kw + (W - 1) * stride + 1:stride].add(
                                   prod[:, :, :, :, kh, kw])
    if padding:
        out = out[:, :, padding:Hf - padding, padding:Wf - padding]
    return out


@jax.jit
def generator_reference(x, params):
    strides = [1, 2, 2, 2, 2, 2]
    paddings = [0, 1, 1, 1, 1, 1]
    h = x.astype(jnp.float32)
    n = len(params["weights"])
    for li in range(n):
        y = _convT_ref(h, params["weights"][li], strides[li], paddings[li])
        if li < n - 1:
            mean = y.mean(axis=(0, 2, 3), keepdims=True)
            var = ((y - mean) ** 2).mean(axis=(0, 2, 3), keepdims=True)
            h = jnp.maximum((y - mean) * lax.rsqrt(var + _BN_EPS), 0.0)
        else:
            h = jnp.tanh(y + params["bias_last"][None, :, None, None])
    return h


# ----------------------------------------------------------------------------
if __name__ == "__main__":
    # Small but architecture-consistent sizes:
    #   noise [B, channel_noise, 1, 1] -> image [B, channel_image, 128, 128]
    B, channel_noise, channel_image, feature_g = 2, 8, 3, 4

    key = jax.random.PRNGKey(0)
    k_param, k_x = jax.random.split(key)
    params = init_generator_params(k_param, channel_noise, channel_image, feature_g)
    x = jax.random.normal(k_x, (B, channel_noise, 1, 1), jnp.float32)

    out = jax.block_until_ready(generator_forward(x, params))

    assert out.shape == (B, channel_image, 128, 128), out.shape
    assert bool(jnp.all(jnp.isfinite(out)))
    assert bool(jnp.max(jnp.abs(out)) <= 1.0 + 1e-6)          # tanh range

    # Loose validation against a pure-JAX f32 reference (GEMMs run in bf16).
    ref = jax.block_until_ready(generator_reference(x, params))
    diff = jnp.abs(out - ref)
    assert float(jnp.max(diff)) < 0.2, float(jnp.max(diff))
    assert float(jnp.mean(diff)) < 0.05, float(jnp.mean(diff))

    print("KERNEL_OK")
</pallas_src>

<mosaic_0001>
module attributes {stable_mosaic.version = 11 : i64} {
  func.func @_fused_convT_kernel(%arg0: i32, %arg1: i32, %arg2: memref<1x8x2xbf16, #tpu.memory_space<vmem>>, %arg3: memref<1x64x8xbf16, #tpu.memory_space<vmem>>, %arg4: memref<64x1xf32, #tpu.memory_space<vmem>>, %arg5: memref<16x64x2xbf16, #tpu.memory_space<vmem>>, %arg6: memref<64x1xf32, #tpu.memory_space<vmem>>, %arg7: memref<64x1xf32, #tpu.memory_space<vmem>>) attributes {dimension_semantics = [#tpu.dimension_semantics<arbitrary>, #tpu.dimension_semantics<arbitrary>], iteration_bounds = array<i64: 16, 1>, scalar_prefetch = 0 : i64, scratch_operands = 2 : i64, tpu.core_type = #tpu.core_type<tc>, window_params = [{transform_indices = @transform_0, window_bounds = array<i64: 1, 8, 2>}, {transform_indices = @transform_1, window_bounds = array<i64: 1, 64, 8>}, {pipeline_mode = #tpu.pipeline_mode<synchronous>, transform_indices = @transform_2, window_bounds = array<i64: 64, 1>}, {pipeline_mode = #tpu.pipeline_mode<synchronous>, transform_indices = @transform_3, window_bounds = array<i64: 16, 64, 2>}]} {
    %c0 = arith.constant 0 : index
    %c0_0 = arith.constant 0 : index
    %c0_1 = arith.constant 0 : index
    %0 = vector.load %arg3[%c0, %c0_0, %c0_1] : memref<1x64x8xbf16, #tpu.memory_space<vmem>>, vector<1x64x8xbf16>
    %1 = vector.shape_cast %0 : vector<1x64x8xbf16> to vector<64x8xbf16>
    %c0_2 = arith.constant 0 : index
    %c0_3 = arith.constant 0 : index
    %c0_4 = arith.constant 0 : index
    %2 = vector.load %arg2[%c0_2, %c0_3, %c0_4] : memref<1x8x2xbf16, #tpu.memory_space<vmem>>, vector<1x8x2xbf16>
    %3 = vector.shape_cast %2 : vector<1x8x2xbf16> to vector<8x2xbf16>
    %cst = arith.constant dense<0.000000e+00> : vector<64x2xf32>
    %4 = tpu.matmul %1, %3, %cst {dimension_numbers = #tpu.dot_dimension_numbers<[1], [0], [0], [1], [0, 0, 1, 1], [], []>} : vector<64x8xbf16>, vector<8x2xbf16>, vector<64x2xf32> -> vector<64x2xf32>
    %c0_i32 = arith.constant 0 : i32
    %5 = arith.cmpi eq, %arg0, %c0_i32 : i32
    %c0_i32_5 = arith.constant 0 : i32
    %6 = arith.cmpi eq, %arg1, %c0_i32_5 : i32
    %7 = arith.andi %5, %6 : i1
    %8 = arith.extui %7 : i1 to i32
    %c0_i32_6 = arith.constant 0 : i32
    %9 = arith.cmpi ne, %8, %c0_i32_6 : i32
    scf.if %9 {
      %cst_21 = arith.constant 0.000000e+00 : f32
      %31 = vector.broadcast %cst_21 : f32 to vector<64x1xf32>
      %c0_22 = arith.constant 0 : index
      %c0_23 = arith.constant 0 : index
      %32 = vector.load %arg6[%c0_22, %c0_23] : memref<64x1xf32, #tpu.memory_space<vmem>>, vector<64x1xf32>
      tpu.vector_store %arg6[%c0_22, %c0_23], %31 {strides = array<i32>} : memref<64x1xf32, #tpu.memory_space<vmem>>, vector<64x1xf32>,
      %cst_24 = arith.constant 0.000000e+00 : f32
      %33 = vector.broadcast %cst_24 : f32 to vector<64x1xf32>
      %c0_25 = arith.constant 0 : index
      %c0_26 = arith.constant 0 : index
      %34 = vector.load %arg7[%c0_25, %c0_26] : memref<64x1xf32, #tpu.memory_space<vmem>>, vector<64x1xf32>
      tpu.vector_store %arg7[%c0_25, %c0_26], %33 {strides = array<i32>} : memref<64x1xf32, #tpu.memory_space<vmem>>, vector<64x1xf32>,
    } else {
    }
    %c0_7 = arith.constant 0 : index
    %c0_8 = arith.constant 0 : index
    %10 = vector.load %arg6[%c0_7, %c0_8] : memref<64x1xf32, #tpu.memory_space<vmem>>, vector<64x1xf32>
    %cst_9 = arith.constant dense<0.000000e+00> : vector<64xf32>
    %11 = vector.multi_reduction <add>, %4, %cst_9 [1] : vector<64x2xf32> to vector<64xf32>
    %12 = vector.shape_cast %11 : vector<64xf32> to vector<64x1xf32>
    %13 = arith.addf %10, %12 : vector<64x1xf32>
    %c0_10 = arith.constant 0 : index
    %c0_11 = arith.constant 0 : index
    %14 = vector.load %arg6[%c0_10, %c0_11] : memref<64x1xf32, #tpu.memory_space<vmem>>, vector<64x1xf32>
    tpu.vector_store %arg6[%c0_10, %c0_11], %13 {strides = array<i32>} : memref<64x1xf32, #tpu.memory_space<vmem>>, vector<64x1xf32>,
    %c0_12 = arith.constant 0 : index
    %c0_13 = arith.constant 0 : index
    %15 = vector.load %arg7[%c0_12, %c0_13] : memref<64x1xf32, #tpu.memory_space<vmem>>, vector<64x1xf32>
    %16 = arith.mulf %4, %4 : vector<64x2xf32>
    %cst_14 = arith.constant dense<0.000000e+00> : vector<64xf32>
    %17 = vector.multi_reduction <add>, %16, %cst_14 [1] : vector<64x2xf32> to vector<64xf32>
    %18 = vector.shape_cast %17 : vector<64xf32> to vector<64x1xf32>
    %19 = arith.addf %15, %18 : vector<64x1xf32>
    %c0_15 = arith.constant 0 : index
    %c0_16 = arith.constant 0 : index
    %20 = vector.load %arg7[%c0_15, %c0_16] : memref<64x1xf32, #tpu.memory_space<vmem>>, vector<64x1xf32>
    tpu.vector_store %arg7[%c0_15, %c0_16], %19 {strides = array<i32>} : memref<64x1xf32, #tpu.memory_space<vmem>>, vector<64x1xf32>,
    %21 = arith.truncf %4 : vector<64x2xf32> to vector<64x2xbf16>
    %22 = arith.index_cast %arg0 : i32 to index
    %c0_17 = arith.constant 0 : index
    %c0_18 = arith.constant 0 : index
    %23 = vector.load %arg5[%22, %c0_17, %c0_18] : memref<16x64x2xbf16, #tpu.memory_space<vmem>>, vector<1x64x2xbf16>
    %24 = vector.shape_cast %23 : vector<1x64x2xbf16> to vector<64x2xbf16>
    %25 = vector.shape_cast %21 : vector<64x2xbf16> to vector<1x64x2xbf16>
    tpu.vector_store %arg5[%22, %c0_17, %c0_18], %25 {strides = array<i32>} : memref<16x64x2xbf16, #tpu.memory_space<vmem>>, vector<1x64x2xbf16>,
    %c15_i32 = arith.constant 15 : i32
    %26 = arith.cmpi eq, %arg0, %c15_i32 : i32
    %c0_i32_19 = arith.constant 0 : i32
    %27 = arith.cmpi eq, %arg1, %c0_i32_19 : i32
    %28 = arith.andi %26, %27 : i1
    %29 = arith.extui %28 : i1 to i32
    %c0_i32_20 = arith.constant 0 : i32
    %30 = arith.cmpi ne, %29, %c0_i32_20 : i32
    scf.if %30 {
      %c0_21 = arith.constant 0 : index
      %c0_22 = arith.constant 0 : index
      %c0_23 = arith.constant 0 : index
      %31 = vector.load %arg5[%c0_21, %c0_22, %c0_23] : memref<16x64x2xbf16, #tpu.memory_space<vmem>>, vector<16x64x2xbf16>
      %32 = arith.extf %31 : vector<16x64x2xbf16> to vector<16x64x2xf32>
      %c0_24 = arith.constant 0 : index
      %c0_25 = arith.constant 0 : index
      %33 = vector.load %arg6[%c0_24, %c0_25] : memref<64x1xf32, #tpu.memory_space<vmem>>, vector<64x1xf32>
      %cst_26 = arith.constant 3.125000e-02 : f32
      %34 = vector.broadcast %cst_26 : f32 to vector<64x1xf32>
      %35 = arith.mulf %33, %34 : vector<64x1xf32>
      %c0_27 = arith.constant 0 : index
      %c0_28 = arith.constant 0 : index
      %36 = vector.load %arg7[%c0_27, %c0_28] : memref<64x1xf32, #tpu.memory_space<vmem>>, vector<64x1xf32>
      %cst_29 = arith.constant 3.125000e-02 : f32
      %37 = vector.broadcast %cst_29 : f32 to vector<64x1xf32>
      %38 = arith.mulf %36, %37 : vector<64x1xf32>
      %39 = arith.mulf %35, %35 : vector<64x1xf32>
      %40 = arith.subf %38, %39 : vector<64x1xf32>
      %cst_30 = arith.constant 0.000000e+00 : f32
      %41 = vector.broadcast %cst_30 : f32 to vector<64x1xf32>
      %42 = arith.maximumf %40, %41 : vector<64x1xf32>
      %cst_31 = arith.constant 9.99999974E-6 : f32
      %43 = vector.broadcast %cst_31 : f32 to vector<64x1xf32>
      %44 = arith.addf %42, %43 : vector<64x1xf32>
      %45 = math.rsqrt %44 : vector<64x1xf32>
      %46 = vector.shape_cast %35 : vector<64x1xf32> to vector<1x64x1xf32>
      %47 = vector.broadcast %46 : vector<1x64x1xf32> to vector<16x64x2xf32>
      %48 = arith.subf %32, %47 : vector<16x64x2xf32>
      %49 = vector.shape_cast %45 : vector<64x1xf32> to vector<1x64x1xf32>
      %50 = vector.broadcast %49 : vector<1x64x1xf32> to vector<16x64x2xf32>
      %51 = arith.mulf %48, %50 : vector<16x64x2xf32>
      %cst_32 = arith.constant 0.000000e+00 : f32
      %52 = vector.broadcast %cst_32 : f32 to vector<16x64x2xf32>
      %53 = arith.maximumf %51, %52 : vector<16x64x2xf32>
      %54 = arith.truncf %53 : vector<16x64x2xf32> to vector<16x64x2xbf16>
      %c0_33 = arith.constant 0 : index
      %c0_34 = arith.constant 0 : index
      %c0_35 = arith.constant 0 : index
      %55 = vector.load %arg5[%c0_33, %c0_34, %c0_35] : memref<16x64x2xbf16, #tpu.memory_space<vmem>>, vector<16x64x2xbf16>
      tpu.vector_store %arg5[%c0_33, %c0_34, %c0_35], %54 {strides = array<i32>} : memref<16x64x2xbf16, #tpu.memory_space<vmem>>, vector<16x64x2xbf16>,
    } else {
    }
    return
  }
  func.func @transform_0(%arg0: i32, %arg1: i32) -> (i32, i32, i32) {
    %c0_i32 = arith.constant 0 : i32
    %c0_i32_0 = arith.constant 0 : i32
    return %arg0, %c0_i32, %arg1 : i32, i32, i32
  }
  func.func @transform_1(%arg0: i32, %arg1: i32) -> (i32, i32, i32) {
    %c0_i32 = arith.constant 0 : i32
    %c0_i32_0 = arith.constant 0 : i32
    %c0_i32_1 = arith.constant 0 : i32
    return %arg0, %c0_i32, %c0_i32_0 : i32, i32, i32
  }
  func.func @transform_2(%arg0: i32, %arg1: i32) -> (i32, i32) {
    %c0_i32 = arith.constant 0 : i32
    %c0_i32_0 = arith.constant 0 : i32
    %c0_i32_1 = arith.constant 0 : i32
    return %c0_i32, %c0_i32_0 : i32, i32
  }
  func.func @transform_3(%arg0: i32, %arg1: i32) -> (i32, i32, i32) {
    %c0_i32 = arith.constant 0 : i32
    %c0_i32_0 = arith.constant 0 : i32
    %c0_i32_1 = arith.constant 0 : i32
    %c0_i32_2 = arith.constant 0 : i32
    return %c0_i32, %c0_i32_0, %c0_i32_1 : i32, i32, i32
  }
}

module attributes {stable_mosaic.version = 11 : i64} {
  func.func @_fused_convT_kernel(%arg0: i32, %arg1: i32, %arg2: memref<1x256x32xbf16, #tpu.memory_space<vmem>>, %arg3: memref<1x32x256xbf16, #tpu.memory_space<vmem>>, %arg4: memref<32x1xf32, #tpu.memory_space<vmem>>, %arg5: memref<4x32x32xbf16, #tpu.memory_space<vmem>>, %arg6: memref<32x1xf32, #tpu.memory_space<vmem>>, %arg7: memref<32x1xf32, #tpu.memory_space<vmem>>) attributes {dimension_semantics = [#tpu.dimension_semantics<arbitrary>, #tpu.dimension_semantics<arbitrary>], iteration_bounds = array<i64: 4, 1>, scalar_prefetch = 0 : i64, scratch_operands = 2 : i64, tpu.core_type = #tpu.core_type<tc>, window_params = [{transform_indices = @transform_0, window_bounds = array<i64: 1, 256, 32>}, {transform_indices = @transform_1, window_bounds = array<i64: 1, 32, 256>}, {pipeline_mode = #tpu.pipeline_mode<synchronous>, transform_indices = @transform_2, window_bounds = array<i64: 32, 1>}, {pipeline_mode = #tpu.pipeline_mode<synchronous>, transform_indices = @transform_3, window_bounds = array<i64: 4, 32, 32>}]} {
    %c0 = arith.constant 0 : index
    %c0_0 = arith.constant 0 : index
    %c0_1 = arith.constant 0 : index
    %0 = vector.load %arg3[%c0, %c0_0, %c0_1] : memref<1x32x256xbf16, #tpu.memory_space<vmem>>, vector<1x32x256xbf16>
    %1 = vector.shape_cast %0 : vector<1x32x256xbf16> to vector<32x256xbf16>
    %c0_2 = arith.constant 0 : index
    %c0_3 = arith.constant 0 : index
    %c0_4 = arith.constant 0 : index
    %2 = vector.load %arg2[%c0_2, %c0_3, %c0_4] : memref<1x256x32xbf16, #tpu.memory_space<vmem>>, vector<1x256x32xbf16>
    %3 = vector.shape_cast %2 : vector<1x256x32xbf16> to vector<256x32xbf16>
    %cst = arith.constant dense<0.000000e+00> : vector<32x32xf32>
    %4 = tpu.matmul %1, %3, %cst {dimension_numbers = #tpu.dot_dimension_numbers<[1], [0], [0], [1], [0, 0, 1, 1], [], []>} : vector<32x256xbf16>, vector<256x32xbf16>, vector<32x32xf32> -> vector<32x32xf32>
    %c0_i32 = arith.constant 0 : i32
    %5 = arith.cmpi eq, %arg0, %c0_i32 : i32
    %c0_i32_5 = arith.constant 0 : i32
    %6 = arith.cmpi eq, %arg1, %c0_i32_5 : i32
    %7 = arith.andi %5, %6 : i1
    %8 = arith.extui %7 : i1 to i32
    %c0_i32_6 = arith.constant 0 : i32
    %9 = arith.cmpi ne, %8, %c0_i32_6 : i32
    scf.if %9 {
      %cst_21 = arith.constant 0.000000e+00 : f32
      %31 = vector.broadcast %cst_21 : f32 to vector<32x1xf32>
      %c0_22 = arith.constant 0 : index
      %c0_23 = arith.constant 0 : index
      %32 = vector.load %arg6[%c0_22, %c0_23] : memref<32x1xf32, #tpu.memory_space<vmem>>, vector<32x1xf32>
      tpu.vector_store %arg6[%c0_22, %c0_23], %31 {strides = array<i32>} : memref<32x1xf32, #tpu.memory_space<vmem>>, vector<32x1xf32>,
      %cst_24 = arith.constant 0.000000e+00 : f32
      %33 = vector.broadcast %cst_24 : f32 to vector<32x1xf32>
      %c0_25 = arith.constant 0 : index
      %c0_26 = arith.constant 0 : index
      %34 = vector.load %arg7[%c0_25, %c0_26] : memref<32x1xf32, #tpu.memory_space<vmem>>, vector<32x1xf32>
      tpu.vector_store %arg7[%c0_25, %c0_26], %33 {strides = array<i32>} : memref<32x1xf32, #tpu.memory_space<vmem>>, vector<32x1xf32>,
    } else {
    }
    %c0_7 = arith.constant 0 : index
    %c0_8 = arith.constant 0 : index
    %10 = vector.load %arg6[%c0_7, %c0_8] : memref<32x1xf32, #tpu.memory_space<vmem>>, vector<32x1xf32>
    %cst_9 = arith.constant dense<0.000000e+00> : vector<32xf32>
    %11 = vector.multi_reduction <add>, %4, %cst_9 [1] : vector<32x32xf32> to vector<32xf32>
    %12 = vector.shape_cast %11 : vector<32xf32> to vector<32x1xf32>
    %13 = arith.addf %10, %12 : vector<32x1xf32>
    %c0_10 = arith.constant 0 : index
    %c0_11 = arith.constant 0 : index
    %14 = vector.load %arg6[%c0_10, %c0_11] : memref<32x1xf32, #tpu.memory_space<vmem>>, vector<32x1xf32>
    tpu.vector_store %arg6[%c0_10, %c0_11], %13 {strides = array<i32>} : memref<32x1xf32, #tpu.memory_space<vmem>>, vector<32x1xf32>,
    %c0_12 = arith.constant 0 : index
    %c0_13 = arith.constant 0 : index
    %15 = vector.load %arg7[%c0_12, %c0_13] : memref<32x1xf32, #tpu.memory_space<vmem>>, vector<32x1xf32>
    %16 = arith.mulf %4, %4 : vector<32x32xf32>
    %cst_14 = arith.constant dense<0.000000e+00> : vector<32xf32>
    %17 = vector.multi_reduction <add>, %16, %cst_14 [1] : vector<32x32xf32> to vector<32xf32>
    %18 = vector.shape_cast %17 : vector<32xf32> to vector<32x1xf32>
    %19 = arith.addf %15, %18 : vector<32x1xf32>
    %c0_15 = arith.constant 0 : index
    %c0_16 = arith.constant 0 : index
    %20 = vector.load %arg7[%c0_15, %c0_16] : memref<32x1xf32, #tpu.memory_space<vmem>>, vector<32x1xf32>
    tpu.vector_store %arg7[%c0_15, %c0_16], %19 {strides = array<i32>} : memref<32x1xf32, #tpu.memory_space<vmem>>, vector<32x1xf32>,
    %21 = arith.truncf %4 : vector<32x32xf32> to vector<32x32xbf16>
    %22 = arith.index_cast %arg0 : i32 to index
    %c0_17 = arith.constant 0 : index
    %c0_18 = arith.constant 0 : index
    %23 = vector.load %arg5[%22, %c0_17, %c0_18] : memref<4x32x32xbf16, #tpu.memory_space<vmem>>, vector<1x32x32xbf16>
    %24 = vector.shape_cast %23 : vector<1x32x32xbf16> to vector<32x32xbf16>
    %25 = vector.shape_cast %21 : vector<32x32xbf16> to vector<1x32x32xbf16>
    tpu.vector_store %arg5[%22, %c0_17, %c0_18], %25 {strides = array<i32>} : memref<4x32x32xbf16, #tpu.memory_space<vmem>>, vector<1x32x32xbf16>,
    %c3_i32 = arith.constant 3 : i32
    %26 = arith.cmpi eq, %arg0, %c3_i32 : i32
    %c0_i32_19 = arith.constant 0 : i32
    %27 = arith.cmpi eq, %arg1, %c0_i32_19 : i32
    %28 = arith.andi %26, %27 : i1
    %29 = arith.extui %28 : i1 to i32
    %c0_i32_20 = arith.constant 0 : i32
    %30 = arith.cmpi ne, %29, %c0_i32_20 : i32
    scf.if %30 {
      %c0_21 = arith.constant 0 : index
      %c0_22 = arith.constant 0 : index
      %c0_23 = arith.constant 0 : index
      %31 = vector.load %arg5[%c0_21, %c0_22, %c0_23] : memref<4x32x32xbf16, #tpu.memory_space<vmem>>, vector<4x32x32xbf16>
      %32 = arith.extf %31 : vector<4x32x32xbf16> to vector<4x32x32xf32>
      %c0_24 = arith.constant 0 : index
      %c0_25 = arith.constant 0 : index
      %33 = vector.load %arg6[%c0_24, %c0_25] : memref<32x1xf32, #tpu.memory_space<vmem>>, vector<32x1xf32>
      %cst_26 = arith.constant 7.812500e-03 : f32
      %34 = vector.broadcast %cst_26 : f32 to vector<32x1xf32>
      %35 = arith.mulf %33, %34 : vector<32x1xf32>
      %c0_27 = arith.constant 0 : index
      %c0_28 = arith.constant 0 : index
      %36 = vector.load %arg7[%c0_27, %c0_28] : memref<32x1xf32, #tpu.memory_space<vmem>>, vector<32x1xf32>
      %cst_29 = arith.constant 7.812500e-03 : f32
      %37 = vector.broadcast %cst_29 : f32 to vector<32x1xf32>
      %38 = arith.mulf %36, %37 : vector<32x1xf32>
      %39 = arith.mulf %35, %35 : vector<32x1xf32>
      %40 = arith.subf %38, %39 : vector<32x1xf32>
      %cst_30 = arith.constant 0.000000e+00 : f32
      %41 = vector.broadcast %cst_30 : f32 to vector<32x1xf32>
      %42 = arith.maximumf %40, %41 : vector<32x1xf32>
      %cst_31 = arith.constant 9.99999974E-6 : f32
      %43 = vector.broadcast %cst_31 : f32 to vector<32x1xf32>
      %44 = arith.addf %42, %43 : vector<32x1xf32>
      %45 = math.rsqrt %44 : vector<32x1xf32>
      %46 = vector.shape_cast %35 : vector<32x1xf32> to vector<1x32x1xf32>
      %47 = vector.broadcast %46 : vector<1x32x1xf32> to vector<4x32x32xf32>
      %48 = arith.subf %32, %47 : vector<4x32x32xf32>
      %49 = vector.shape_cast %45 : vector<32x1xf32> to vector<1x32x1xf32>
      %50 = vector.broadcast %49 : vector<1x32x1xf32> to vector<4x32x32xf32>
      %51 = arith.mulf %48, %50 : vector<4x32x32xf32>
      %cst_32 = arith.constant 0.000000e+00 : f32
      %52 = vector.broadcast %cst_32 : f32 to vector<4x32x32xf32>
      %53 = arith.maximumf %51, %52 : vector<4x32x32xf32>
      %54 = arith.truncf %53 : vector<4x32x32xf32> to vector<4x32x32xbf16>
      %c0_33 = arith.constant 0 : index
      %c0_34 = arith.constant 0 : index
      %c0_35 = arith.constant 0 : index
      %55 = vector.load %arg5[%c0_33, %c0_34, %c0_35] : memref<4x32x32xbf16, #tpu.memory_space<vmem>>, vector<4x32x32xbf16>
      tpu.vector_store %arg5[%c0_33, %c0_34, %c0_35], %54 {strides = array<i32>} : memref<4x32x32xbf16, #tpu.memory_space<vmem>>, vector<4x32x32xbf16>,
    } else {
    }
    return
  }
  func.func @transform_0(%arg0: i32, %arg1: i32) -> (i32, i32, i32) {
    %c0_i32 = arith.constant 0 : i32
    %c0_i32_0 = arith.constant 0 : i32
    return %arg0, %c0_i32, %arg1 : i32, i32, i32
  }
  func.func @transform_1(%arg0: i32, %arg1: i32) -> (i32, i32, i32) {
    %c0_i32 = arith.constant 0 : i32
    %c0_i32_0 = arith.constant 0 : i32
    %c0_i32_1 = arith.constant 0 : i32
    return %arg0, %c0_i32, %c0_i32_0 : i32, i32, i32
  }
  func.func @transform_2(%arg0: i32, %arg1: i32) -> (i32, i32) {
    %c0_i32 = arith.constant 0 : i32
    %c0_i32_0 = arith.constant 0 : i32
    %c0_i32_1 = arith.constant 0 : i32
    return %c0_i32, %c0_i32_0 : i32, i32
  }
  func.func @transform_3(%arg0: i32, %arg1: i32) -> (i32, i32, i32) {
    %c0_i32 = arith.constant 0 : i32
    %c0_i32_0 = arith.constant 0 : i32
    %c0_i32_1 = arith.constant 0 : i32
    %c0_i32_2 = arith.constant 0 : i32
    return %c0_i32, %c0_i32_0, %c0_i32_1 : i32, i32, i32
  }
}

module attributes {stable_mosaic.version = 11 : i64} {
  func.func @_fused_convT_kernel(%arg0: i32, %arg1: i32, %arg2: memref<1x128x128xbf16, #tpu.memory_space<vmem>>, %arg3: memref<1x16x128xbf16, #tpu.memory_space<vmem>>, %arg4: memref<16x1xf32, #tpu.memory_space<vmem>>, %arg5: memref<4x16x128xbf16, #tpu.memory_space<vmem>>, %arg6: memref<16x1xf32, #tpu.memory_space<vmem>>, %arg7: memref<16x1xf32, #tpu.memory_space<vmem>>) attributes {dimension_semantics = [#tpu.dimension_semantics<arbitrary>, #tpu.dimension_semantics<arbitrary>], iteration_bounds = array<i64: 4, 1>, scalar_prefetch = 0 : i64, scratch_operands = 2 : i64, tpu.core_type = #tpu.core_type<tc>, window_params = [{transform_indices = @transform_0, window_bounds = array<i64: 1, 128, 128>}, {transform_indices = @transform_1, window_bounds = array<i64: 1, 16, 128>}, {pipeline_mode = #tpu.pipeline_mode<synchronous>, transform_indices = @transform_2, window_bounds = array<i64: 16, 1>}, {pipeline_mode = #tpu.pipeline_mode<synchronous>, transform_indices = @transform_3, window_bounds = array<i64: 4, 16, 128>}]} {
    %c0 = arith.constant 0 : index
    %c0_0 = arith.constant 0 : index
    %c0_1 = arith.constant 0 : index
    %0 = vector.load %arg3[%c0, %c0_0, %c0_1] : memref<1x16x128xbf16, #tpu.memory_space<vmem>>, vector<1x16x128xbf16>
    %1 = vector.shape_cast %0 : vector<1x16x128xbf16> to vector<16x128xbf16>
    %c0_2 = arith.constant 0 : index
    %c0_3 = arith.constant 0 : index
    %c0_4 = arith.constant 0 : index
    %2 = vector.load %arg2[%c0_2, %c0_3, %c0_4] : memref<1x128x128xbf16, #tpu.memory_space<vmem>>, vector<1x128x128xbf16>
    %3 = vector.shape_cast %2 : vector<1x128x128xbf16> to vector<128x128xbf16>
    %cst = arith.constant dense<0.000000e+00> : vector<16x128xf32>
    %4 = tpu.matmul %1, %3, %cst {dimension_numbers = #tpu.dot_dimension_numbers<[1], [0], [0], [1], [0, 0, 1, 1], [], []>} : vector<16x128xbf16>, vector<128x128xbf16>, vector<16x128xf32> -> vector<16x128xf32>
    %c0_i32 = arith.constant 0 : i32
    %5 = arith.cmpi eq, %arg0, %c0_i32 : i32
    %c0_i32_5 = arith.constant 0 : i32
    %6 = arith.cmpi eq, %arg1, %c0_i32_5 : i32
    %7 = arith.andi %5, %6 : i1
    %8 = arith.extui %7 : i1 to i32
    %c0_i32_6 = arith.constant 0 : i32
    %9 = arith.cmpi ne, %8, %c0_i32_6 : i32
    scf.if %9 {
      %cst_21 = arith.constant 0.000000e+00 : f32
      %31 = vector.broadcast %cst_21 : f32 to vector<16x1xf32>
      %c0_22 = arith.constant 0 : index
      %c0_23 = arith.constant 0 : index
      %32 = vector.load %arg6[%c0_22, %c0_23] : memref<16x1xf32, #tpu.memory_space<vmem>>, vector<16x1xf32>
      tpu.vector_store %arg6[%c0_22, %c0_23], %31 {strides = array<i32>} : memref<16x1xf32, #tpu.memory_space<vmem>>, vector<16x1xf32>,
      %cst_24 = arith.constant 0.000000e+00 : f32
      %33 = vector.broadcast %cst_24 : f32 to vector<16x1xf32>
      %c0_25 = arith.constant 0 : index
      %c0_26 = arith.constant 0 : index
      %34 = vector.load %arg7[%c0_25, %c0_26] : memref<16x1xf32, #tpu.memory_space<vmem>>, vector<16x1xf32>
      tpu.vector_store %arg7[%c0_25, %c0_26], %33 {strides = array<i32>} : memref<16x1xf32, #tpu.memory_space<vmem>>, vector<16x1xf32>,
    } else {
    }
    %c0_7 = arith.constant 0 : index
    %c0_8 = arith.constant 0 : index
    %10 = vector.load %arg6[%c0_7, %c0_8] : memref<16x1xf32, #tpu.memory_space<vmem>>, vector<16x1xf32>
    %cst_9 = arith.constant dense<0.000000e+00> : vector<16xf32>
    %11 = vector.multi_reduction <add>, %4, %cst_9 [1] : vector<16x128xf32> to vector<16xf32>
    %12 = vector.shape_cast %11 : vector<16xf32> to vector<16x1xf32>
    %13 = arith.addf %10, %12 : vector<16x1xf32>
    %c0_10 = arith.constant 0 : index
    %c0_11 = arith.constant 0 : index
    %14 = vector.load %arg6[%c0_10, %c0_11] : memref<16x1xf32, #tpu.memory_space<vmem>>, vector<16x1xf32>
    tpu.vector_store %arg6[%c0_10, %c0_11], %13 {strides = array<i32>} : memref<16x1xf32, #tpu.memory_space<vmem>>, vector<16x1xf32>,
    %c0_12 = arith.constant 0 : index
    %c0_13 = arith.constant 0 : index
    %15 = vector.load %arg7[%c0_12, %c0_13] : memref<16x1xf32, #tpu.memory_space<vmem>>, vector<16x1xf32>
    %16 = arith.mulf %4, %4 : vector<16x128xf32>
    %cst_14 = arith.constant dense<0.000000e+00> : vector<16xf32>
    %17 = vector.multi_reduction <add>, %16, %cst_14 [1] : vector<16x128xf32> to vector<16xf32>
    %18 = vector.shape_cast %17 : vector<16xf32> to vector<16x1xf32>
    %19 = arith.addf %15, %18 : vector<16x1xf32>
    %c0_15 = arith.constant 0 : index
    %c0_16 = arith.constant 0 : index
    %20 = vector.load %arg7[%c0_15, %c0_16] : memref<16x1xf32, #tpu.memory_space<vmem>>, vector<16x1xf32>
    tpu.vector_store %arg7[%c0_15, %c0_16], %19 {strides = array<i32>} : memref<16x1xf32, #tpu.memory_space<vmem>>, vector<16x1xf32>,
    %21 = arith.truncf %4 : vector<16x128xf32> to vector<16x128xbf16>
    %22 = arith.index_cast %arg0 : i32 to index
    %c0_17 = arith.constant 0 : index
    %c0_18 = arith.constant 0 : index
    %23 = vector.load %arg5[%22, %c0_17, %c0_18] : memref<4x16x128xbf16, #tpu.memory_space<vmem>>, vector<1x16x128xbf16>
    %24 = vector.shape_cast %23 : vector<1x16x128xbf16> to vector<16x128xbf16>
    %25 = vector.shape_cast %21 : vector<16x128xbf16> to vector<1x16x128xbf16>
    tpu.vector_store %arg5[%22, %c0_17, %c0_18], %25 {strides = array<i32>} : memref<4x16x128xbf16, #tpu.memory_space<vmem>>, vector<1x16x128xbf16>,
    %c3_i32 = arith.constant 3 : i32
    %26 = arith.cmpi eq, %arg0, %c3_i32 : i32
    %c0_i32_19 = arith.constant 0 : i32
    %27 = arith.cmpi eq, %arg1, %c0_i32_19 : i32
    %28 = arith.andi %26, %27 : i1
    %29 = arith.extui %28 : i1 to i32
    %c0_i32_20 = arith.constant 0 : i32
    %30 = arith.cmpi ne, %29, %c0_i32_20 : i32
    scf.if %30 {
      %c0_21 = arith.constant 0 : index
      %c0_22 = arith.constant 0 : index
      %c0_23 = arith.constant 0 : index
      %31 = vector.load %arg5[%c0_21, %c0_22, %c0_23] : memref<4x16x128xbf16, #tpu.memory_space<vmem>>, vector<4x16x128xbf16>
      %32 = arith.extf %31 : vector<4x16x128xbf16> to vector<4x16x128xf32>
      %c0_24 = arith.constant 0 : index
      %c0_25 = arith.constant 0 : index
      %33 = vector.load %arg6[%c0_24, %c0_25] : memref<16x1xf32, #tpu.memory_space<vmem>>, vector<16x1xf32>
      %cst_26 = arith.constant 0.001953125 : f32
      %34 = vector.broadcast %cst_26 : f32 to vector<16x1xf32>
      %35 = arith.mulf %33, %34 : vector<16x1xf32>
      %c0_27 = arith.constant 0 : index
      %c0_28 = arith.constant 0 : index
      %36 = vector.load %arg7[%c0_27, %c0_28] : memref<16x1xf32, #tpu.memory_space<vmem>>, vector<16x1xf32>
      %cst_29 = arith.constant 0.001953125 : f32
      %37 = vector.broadcast %cst_29 : f32 to vector<16x1xf32>
      %38 = arith.mulf %36, %37 : vector<16x1xf32>
      %39 = arith.mulf %35, %35 : vector<16x1xf32>
      %40 = arith.subf %38, %39 : vector<16x1xf32>
      %cst_30 = arith.constant 0.000000e+00 : f32
      %41 = vector.broadcast %cst_30 : f32 to vector<16x1xf32>
      %42 = arith.maximumf %40, %41 : vector<16x1xf32>
      %cst_31 = arith.constant 9.99999974E-6 : f32
      %43 = vector.broadcast %cst_31 : f32 to vector<16x1xf32>
      %44 = arith.addf %42, %43 : vector<16x1xf32>
      %45 = math.rsqrt %44 : vector<16x1xf32>
      %46 = vector.shape_cast %35 : vector<16x1xf32> to vector<1x16x1xf32>
      %47 = vector.broadcast %46 : vector<1x16x1xf32> to vector<4x16x128xf32>
      %48 = arith.subf %32, %47 : vector<4x16x128xf32>
      %49 = vector.shape_cast %45 : vector<16x1xf32> to vector<1x16x1xf32>
      %50 = vector.broadcast %49 : vector<1x16x1xf32> to vector<4x16x128xf32>
      %51 = arith.mulf %48, %50 : vector<4x16x128xf32>
      %cst_32 = arith.constant 0.000000e+00 : f32
      %52 = vector.broadcast %cst_32 : f32 to vector<4x16x128xf32>
      %53 = arith.maximumf %51, %52 : vector<4x16x128xf32>
      %54 = arith.truncf %53 : vector<4x16x128xf32> to vector<4x16x128xbf16>
      %c0_33 = arith.constant 0 : index
      %c0_34 = arith.constant 0 : index
      %c0_35 = arith.constant 0 : index
      %55 = vector.load %arg5[%c0_33, %c0_34, %c0_35] : memref<4x16x128xbf16, #tpu.memory_space<vmem>>, vector<4x16x128xbf16>
      tpu.vector_store %arg5[%c0_33, %c0_34, %c0_35], %54 {strides = array<i32>} : memref<4x16x128xbf16, #tpu.memory_space<vmem>>, vector<4x16x128xbf16>,
    } else {
    }
    return
  }
  func.func @transform_0(%arg0: i32, %arg1: i32) -> (i32, i32, i32) {
    %c0_i32 = arith.constant 0 : i32
    %c0_i32_0 = arith.constant 0 : i32
    return %arg0, %c0_i32, %arg1 : i32, i32, i32
  }
  func.func @transform_1(%arg0: i32, %arg1: i32) -> (i32, i32, i32) {
    %c0_i32 = arith.constant 0 : i32
    %c0_i32_0 = arith.constant 0 : i32
    %c0_i32_1 = arith.constant 0 : i32
    return %arg0, %c0_i32, %c0_i32_0 : i32, i32, i32
  }
  func.func @transform_2(%arg0: i32, %arg1: i32) -> (i32, i32) {
    %c0_i32 = arith.constant 0 : i32
    %c0_i32_0 = arith.constant 0 : i32
    %c0_i32_1 = arith.constant 0 : i32
    return %c0_i32, %c0_i32_0 : i32, i32
  }
  func.func @transform_3(%arg0: i32, %arg1: i32) -> (i32, i32, i32) {
    %c0_i32 = arith.constant 0 : i32
    %c0_i32_0 = arith.constant 0 : i32
    %c0_i32_1 = arith.constant 0 : i32
    %c0_i32_2 = arith.constant 0 : i32
    return %c0_i32, %c0_i32_0, %c0_i32_1 : i32, i32, i32
  }
}

module attributes {stable_mosaic.version = 11 : i64} {
  func.func @_fused_convT_kernel(%arg0: i32, %arg1: i32, %arg2: memref<1x64x512xbf16, #tpu.memory_space<vmem>>, %arg3: memref<1x8x64xbf16, #tpu.memory_space<vmem>>, %arg4: memref<8x1xf32, #tpu.memory_space<vmem>>, %arg5: memref<4x8x512xbf16, #tpu.memory_space<vmem>>, %arg6: memref<8x1xf32, #tpu.memory_space<vmem>>, %arg7: memref<8x1xf32, #tpu.memory_space<vmem>>) attributes {dimension_semantics = [#tpu.dimension_semantics<arbitrary>, #tpu.dimension_semantics<arbitrary>], iteration_bounds = array<i64: 4, 1>, scalar_prefetch = 0 : i64, scratch_operands = 2 : i64, tpu.core_type = #tpu.core_type<tc>, window_params = [{transform_indices = @transform_0, window_bounds = array<i64: 1, 64, 512>}, {transform_indices = @transform_1, window_bounds = array<i64: 1, 8, 64>}, {pipeline_mode = #tpu.pipeline_mode<synchronous>, transform_indices = @transform_2, window_bounds = array<i64: 8, 1>}, {pipeline_mode = #tpu.pipeline_mode<synchronous>, transform_indices = @transform_3, window_bounds = array<i64: 4, 8, 512>}]} {
    %c0 = arith.constant 0 : index
    %c0_0 = arith.constant 0 : index
    %c0_1 = arith.constant 0 : index
    %0 = vector.load %arg3[%c0, %c0_0, %c0_1] : memref<1x8x64xbf16, #tpu.memory_space<vmem>>, vector<1x8x64xbf16>
    %1 = vector.shape_cast %0 : vector<1x8x64xbf16> to vector<8x64xbf16>
    %c0_2 = arith.constant 0 : index
    %c0_3 = arith.constant 0 : index
    %c0_4 = arith.constant 0 : index
    %2 = vector.load %arg2[%c0_2, %c0_3, %c0_4] : memref<1x64x512xbf16, #tpu.memory_space<vmem>>, vector<1x64x512xbf16>
    %3 = vector.shape_cast %2 : vector<1x64x512xbf16> to vector<64x512xbf16>
    %cst = arith.constant dense<0.000000e+00> : vector<8x512xf32>
    %4 = tpu.matmul %1, %3, %cst {dimension_numbers = #tpu.dot_dimension_numbers<[1], [0], [0], [1], [0, 0, 1, 1], [], []>} : vector<8x64xbf16>, vector<64x512xbf16>, vector<8x512xf32> -> vector<8x512xf32>
    %c0_i32 = arith.constant 0 : i32
    %5 = arith.cmpi eq, %arg0, %c0_i32 : i32
    %c0_i32_5 = arith.constant 0 : i32
    %6 = arith.cmpi eq, %arg1, %c0_i32_5 : i32
    %7 = arith.andi %5, %6 : i1
    %8 = arith.extui %7 : i1 to i32
    %c0_i32_6 = arith.constant 0 : i32
    %9 = arith.cmpi ne, %8, %c0_i32_6 : i32
    scf.if %9 {
      %cst_21 = arith.constant 0.000000e+00 : f32
      %31 = vector.broadcast %cst_21 : f32 to vector<8x1xf32>
      %c0_22 = arith.constant 0 : index
      %c0_23 = arith.constant 0 : index
      %32 = vector.load %arg6[%c0_22, %c0_23] : memref<8x1xf32, #tpu.memory_space<vmem>>, vector<8x1xf32>
      tpu.vector_store %arg6[%c0_22, %c0_23], %31 {strides = array<i32>} : memref<8x1xf32, #tpu.memory_space<vmem>>, vector<8x1xf32>,
      %cst_24 = arith.constant 0.000000e+00 : f32
      %33 = vector.broadcast %cst_24 : f32 to vector<8x1xf32>
      %c0_25 = arith.constant 0 : index
      %c0_26 = arith.constant 0 : index
      %34 = vector.load %arg7[%c0_25, %c0_26] : memref<8x1xf32, #tpu.memory_space<vmem>>, vector<8x1xf32>
      tpu.vector_store %arg7[%c0_25, %c0_26], %33 {strides = array<i32>} : memref<8x1xf32, #tpu.memory_space<vmem>>, vector<8x1xf32>,
    } else {
    }
    %c0_7 = arith.constant 0 : index
    %c0_8 = arith.constant 0 : index
    %10 = vector.load %arg6[%c0_7, %c0_8] : memref<8x1xf32, #tpu.memory_space<vmem>>, vector<8x1xf32>
    %cst_9 = arith.constant dense<0.000000e+00> : vector<8xf32>
    %11 = vector.multi_reduction <add>, %4, %cst_9 [1] : vector<8x512xf32> to vector<8xf32>
    %12 = vector.shape_cast %11 : vector<8xf32> to vector<8x1xf32>
    %13 = arith.addf %10, %12 : vector<8x1xf32>
    %c0_10 = arith.constant 0 : index
    %c0_11 = arith.constant 0 : index
    %14 = vector.load %arg6[%c0_10, %c0_11] : memref<8x1xf32, #tpu.memory_space<vmem>>, vector<8x1xf32>
    tpu.vector_store %arg6[%c0_10, %c0_11], %13 {strides = array<i32>} : memref<8x1xf32, #tpu.memory_space<vmem>>, vector<8x1xf32>,
    %c0_12 = arith.constant 0 : index
    %c0_13 = arith.constant 0 : index
    %15 = vector.load %arg7[%c0_12, %c0_13] : memref<8x1xf32, #tpu.memory_space<vmem>>, vector<8x1xf32>
    %16 = arith.mulf %4, %4 : vector<8x512xf32>
    %cst_14 = arith.constant dense<0.000000e+00> : vector<8xf32>
    %17 = vector.multi_reduction <add>, %16, %cst_14 [1] : vector<8x512xf32> to vector<8xf32>
    %18 = vector.shape_cast %17 : vector<8xf32> to vector<8x1xf32>
    %19 = arith.addf %15, %18 : vector<8x1xf32>
    %c0_15 = arith.constant 0 : index
    %c0_16 = arith.constant 0 : index
    %20 = vector.load %arg7[%c0_15, %c0_16] : memref<8x1xf32, #tpu.memory_space<vmem>>, vector<8x1xf32>
    tpu.vector_store %arg7[%c0_15, %c0_16], %19 {strides = array<i32>} : memref<8x1xf32, #tpu.memory_space<vmem>>, vector<8x1xf32>,
    %21 = arith.truncf %4 : vector<8x512xf32> to vector<8x512xbf16>
    %22 = arith.index_cast %arg0 : i32 to index
    %c0_17 = arith.constant 0 : index
    %c0_18 = arith.constant 0 : index
    %23 = vector.load %arg5[%22, %c0_17, %c0_18] : memref<4x8x512xbf16, #tpu.memory_space<vmem>>, vector<1x8x512xbf16>
    %24 = vector.shape_cast %23 : vector<1x8x512xbf16> to vector<8x512xbf16>
    %25 = vector.shape_cast %21 : vector<8x512xbf16> to vector<1x8x512xbf16>
    tpu.vector_store %arg5[%22, %c0_17, %c0_18], %25 {strides = array<i32>} : memref<4x8x512xbf16, #tpu.memory_space<vmem>>, vector<1x8x512xbf16>,
    %c3_i32 = arith.constant 3 : i32
    %26 = arith.cmpi eq, %arg0, %c3_i32 : i32
    %c0_i32_19 = arith.constant 0 : i32
    %27 = arith.cmpi eq, %arg1, %c0_i32_19 : i32
    %28 = arith.andi %26, %27 : i1
    %29 = arith.extui %28 : i1 to i32
    %c0_i32_20 = arith.constant 0 : i32
    %30 = arith.cmpi ne, %29, %c0_i32_20 : i32
    scf.if %30 {
      %c0_21 = arith.constant 0 : index
      %c0_22 = arith.constant 0 : index
      %c0_23 = arith.constant 0 : index
      %31 = vector.load %arg5[%c0_21, %c0_22, %c0_23] : memref<4x8x512xbf16, #tpu.memory_space<vmem>>, vector<4x8x512xbf16>
      %32 = arith.extf %31 : vector<4x8x512xbf16> to vector<4x8x512xf32>
      %c0_24 = arith.constant 0 : index
      %c0_25 = arith.constant 0 : index
      %33 = vector.load %arg6[%c0_24, %c0_25] : memref<8x1xf32, #tpu.memory_space<vmem>>, vector<8x1xf32>
      %cst_26 = arith.constant 4.8828125E-4 : f32
      %34 = vector.broadcast %cst_26 : f32 to vector<8x1xf32>
      %35 = arith.mulf %33, %34 : vector<8x1xf32>
      %c0_27 = arith.constant 0 : index
      %c0_28 = arith.constant 0 : index
      %36 = vector.load %arg7[%c0_27, %c0_28] : memref<8x1xf32, #tpu.memory_space<vmem>>, vector<8x1xf32>
      %cst_29 = arith.constant 4.8828125E-4 : f32
      %37 = vector.broadcast %cst_29 : f32 to vector<8x1xf32>
      %38 = arith.mulf %36, %37 : vector<8x1xf32>
      %39 = arith.mulf %35, %35 : vector<8x1xf32>
      %40 = arith.subf %38, %39 : vector<8x1xf32>
      %cst_30 = arith.constant 0.000000e+00 : f32
      %41 = vector.broadcast %cst_30 : f32 to vector<8x1xf32>
      %42 = arith.maximumf %40, %41 : vector<8x1xf32>
      %cst_31 = arith.constant 9.99999974E-6 : f32
      %43 = vector.broadcast %cst_31 : f32 to vector<8x1xf32>
      %44 = arith.addf %42, %43 : vector<8x1xf32>
      %45 = math.rsqrt %44 : vector<8x1xf32>
      %46 = vector.shape_cast %35 : vector<8x1xf32> to vector<1x8x1xf32>
      %47 = vector.broadcast %46 : vector<1x8x1xf32> to vector<4x8x512xf32>
      %48 = arith.subf %32, %47 : vector<4x8x512xf32>
      %49 = vector.shape_cast %45 : vector<8x1xf32> to vector<1x8x1xf32>
      %50 = vector.broadcast %49 : vector<1x8x1xf32> to vector<4x8x512xf32>
      %51 = arith.mulf %48, %50 : vector<4x8x512xf32>
      %cst_32 = arith.constant 0.000000e+00 : f32
      %52 = vector.broadcast %cst_32 : f32 to vector<4x8x512xf32>
      %53 = arith.maximumf %51, %52 : vector<4x8x512xf32>
      %54 = arith.truncf %53 : vector<4x8x512xf32> to vector<4x8x512xbf16>
      %c0_33 = arith.constant 0 : index
      %c0_34 = arith.constant 0 : index
      %c0_35 = arith.constant 0 : index
      %55 = vector.load %arg5[%c0_33, %c0_34, %c0_35] : memref<4x8x512xbf16, #tpu.memory_space<vmem>>, vector<4x8x512xbf16>
      tpu.vector_store %arg5[%c0_33, %c0_34, %c0_35], %54 {strides = array<i32>} : memref<4x8x512xbf16, #tpu.memory_space<vmem>>, vector<4x8x512xbf16>,
    } else {
    }
    return
  }
  func.func @transform_0(%arg0: i32, %arg1: i32) -> (i32, i32, i32) {
    %c0_i32 = arith.constant 0 : i32
    %c0_i32_0 = arith.constant 0 : i32
    return %arg0, %c0_i32, %arg1 : i32, i32, i32
  }
  func.func @transform_1(%arg0: i32, %arg1: i32) -> (i32, i32, i32) {
    %c0_i32 = arith.constant 0 : i32
    %c0_i32_0 = arith.constant 0 : i32
    %c0_i32_1 = arith.constant 0 : i32
    return %arg0, %c0_i32, %c0_i32_0 : i32, i32, i32
  }
  func.func @transform_2(%arg0: i32, %arg1: i32) -> (i32, i32) {
    %c0_i32 = arith.constant 0 : i32
    %c0_i32_0 = arith.constant 0 : i32
    %c0_i32_1 = arith.constant 0 : i32
    return %c0_i32, %c0_i32_0 : i32, i32
  }
  func.func @transform_3(%arg0: i32, %arg1: i32) -> (i32, i32, i32) {
    %c0_i32 = arith.constant 0 : i32
    %c0_i32_0 = arith.constant 0 : i32
    %c0_i32_1 = arith.constant 0 : i32
    %c0_i32_2 = arith.constant 0 : i32
    return %c0_i32, %c0_i32_0, %c0_i32_1 : i32, i32, i32
  }
}

module attributes {stable_mosaic.version = 11 : i64} {
  func.func @_fused_convT_kernel(%arg0: i32, %arg1: i32, %arg2: memref<1x32x2048xbf16, #tpu.memory_space<vmem>>, %arg3: memref<1x4x32xbf16, #tpu.memory_space<vmem>>, %arg4: memref<4x1xf32, #tpu.memory_space<vmem>>, %arg5: memref<4x4x2048xbf16, #tpu.memory_space<vmem>>, %arg6: memref<4x1xf32, #tpu.memory_space<vmem>>, %arg7: memref<4x1xf32, #tpu.memory_space<vmem>>) attributes {dimension_semantics = [#tpu.dimension_semantics<arbitrary>, #tpu.dimension_semantics<arbitrary>], iteration_bounds = array<i64: 4, 1>, scalar_prefetch = 0 : i64, scratch_operands = 2 : i64, tpu.core_type = #tpu.core_type<tc>, window_params = [{transform_indices = @transform_0, window_bounds = array<i64: 1, 32, 2048>}, {transform_indices = @transform_1, window_bounds = array<i64: 1, 4, 32>}, {pipeline_mode = #tpu.pipeline_mode<synchronous>, transform_indices = @transform_2, window_bounds = array<i64: 4, 1>}, {pipeline_mode = #tpu.pipeline_mode<synchronous>, transform_indices = @transform_3, window_bounds = array<i64: 4, 4, 2048>}]} {
    %c0 = arith.constant 0 : index
    %c0_0 = arith.constant 0 : index
    %c0_1 = arith.constant 0 : index
    %0 = vector.load %arg3[%c0, %c0_0, %c0_1] : memref<1x4x32xbf16, #tpu.memory_space<vmem>>, vector<1x4x32xbf16>
    %1 = vector.shape_cast %0 : vector<1x4x32xbf16> to vector<4x32xbf16>
    %c0_2 = arith.constant 0 : index
    %c0_3 = arith.constant 0 : index
    %c0_4 = arith.constant 0 : index
    %2 = vector.load %arg2[%c0_2, %c0_3, %c0_4] : memref<1x32x2048xbf16, #tpu.memory_space<vmem>>, vector<1x32x2048xbf16>
    %3 = vector.shape_cast %2 : vector<1x32x2048xbf16> to vector<32x2048xbf16>
    %cst = arith.constant dense<0.000000e+00> : vector<4x2048xf32>
    %4 = tpu.matmul %1, %3, %cst {dimension_numbers = #tpu.dot_dimension_numbers<[1], [0], [0], [1], [0, 0, 1, 1], [], []>} : vector<4x32xbf16>, vector<32x2048xbf16>, vector<4x2048xf32> -> vector<4x2048xf32>
    %c0_i32 = arith.constant 0 : i32
    %5 = arith.cmpi eq, %arg0, %c0_i32 : i32
    %c0_i32_5 = arith.constant 0 : i32
    %6 = arith.cmpi eq, %arg1, %c0_i32_5 : i32
    %7 = arith.andi %5, %6 : i1
    %8 = arith.extui %7 : i1 to i32
    %c0_i32_6 = arith.constant 0 : i32
    %9 = arith.cmpi ne, %8, %c0_i32_6 : i32
    scf.if %9 {
      %cst_21 = arith.constant 0.000000e+00 : f32
      %31 = vector.broadcast %cst_21 : f32 to vector<4x1xf32>
      %c0_22 = arith.constant 0 : index
      %c0_23 = arith.constant 0 : index
      %32 = vector.load %arg6[%c0_22, %c0_23] : memref<4x1xf32, #tpu.memory_space<vmem>>, vector<4x1xf32>
      tpu.vector_store %arg6[%c0_22, %c0_23], %31 {strides = array<i32>} : memref<4x1xf32, #tpu.memory_space<vmem>>, vector<4x1xf32>,
      %cst_24 = arith.constant 0.000000e+00 : f32
      %33 = vector.broadcast %cst_24 : f32 to vector<4x1xf32>
      %c0_25 = arith.constant 0 : index
      %c0_26 = arith.constant 0 : index
      %34 = vector.load %arg7[%c0_25, %c0_26] : memref<4x1xf32, #tpu.memory_space<vmem>>, vector<4x1xf32>
      tpu.vector_store %arg7[%c0_25, %c0_26], %33 {strides = array<i32>} : memref<4x1xf32, #tpu.memory_space<vmem>>, vector<4x1xf32>,
    } else {
    }
    %c0_7 = arith.constant 0 : index
    %c0_8 = arith.constant 0 : index
    %10 = vector.load %arg6[%c0_7, %c0_8] : memref<4x1xf32, #tpu.memory_space<vmem>>, vector<4x1xf32>
    %cst_9 = arith.constant dense<0.000000e+00> : vector<4xf32>
    %11 = vector.multi_reduction <add>, %4, %cst_9 [1] : vector<4x2048xf32> to vector<4xf32>
    %12 = vector.shape_cast %11 : vector<4xf32> to vector<4x1xf32>
    %13 = arith.addf %10, %12 : vector<4x1xf32>
    %c0_10 = arith.constant 0 : index
    %c0_11 = arith.constant 0 : index
    %14 = vector.load %arg6[%c0_10, %c0_11] : memref<4x1xf32, #tpu.memory_space<vmem>>, vector<4x1xf32>
    tpu.vector_store %arg6[%c0_10, %c0_11], %13 {strides = array<i32>} : memref<4x1xf32, #tpu.memory_space<vmem>>, vector<4x1xf32>,
    %c0_12 = arith.constant 0 : index
    %c0_13 = arith.constant 0 : index
    %15 = vector.load %arg7[%c0_12, %c0_13] : memref<4x1xf32, #tpu.memory_space<vmem>>, vector<4x1xf32>
    %16 = arith.mulf %4, %4 : vector<4x2048xf32>
    %cst_14 = arith.constant dense<0.000000e+00> : vector<4xf32>
    %17 = vector.multi_reduction <add>, %16, %cst_14 [1] : vector<4x2048xf32> to vector<4xf32>
    %18 = vector.shape_cast %17 : vector<4xf32> to vector<4x1xf32>
    %19 = arith.addf %15, %18 : vector<4x1xf32>
    %c0_15 = arith.constant 0 : index
    %c0_16 = arith.constant 0 : index
    %20 = vector.load %arg7[%c0_15, %c0_16] : memref<4x1xf32, #tpu.memory_space<vmem>>, vector<4x1xf32>
    tpu.vector_store %arg7[%c0_15, %c0_16], %19 {strides = array<i32>} : memref<4x1xf32, #tpu.memory_space<vmem>>, vector<4x1xf32>,
    %21 = arith.truncf %4 : vector<4x2048xf32> to vector<4x2048xbf16>
    %22 = arith.index_cast %arg0 : i32 to index
    %c0_17 = arith.constant 0 : index
    %c0_18 = arith.constant 0 : index
    %23 = vector.load %arg5[%22, %c0_17, %c0_18] : memref<4x4x2048xbf16, #tpu.memory_space<vmem>>, vector<1x4x2048xbf16>
    %24 = vector.shape_cast %23 : vector<1x4x2048xbf16> to vector<4x2048xbf16>
    %25 = vector.shape_cast %21 : vector<4x2048xbf16> to vector<1x4x2048xbf16>
    tpu.vector_store %arg5[%22, %c0_17, %c0_18], %25 {strides = array<i32>} : memref<4x4x2048xbf16, #tpu.memory_space<vmem>>, vector<1x4x2048xbf16>,
    %c3_i32 = arith.constant 3 : i32
    %26 = arith.cmpi eq, %arg0, %c3_i32 : i32
    %c0_i32_19 = arith.constant 0 : i32
    %27 = arith.cmpi eq, %arg1, %c0_i32_19 : i32
    %28 = arith.andi %26, %27 : i1
    %29 = arith.extui %28 : i1 to i32
    %c0_i32_20 = arith.constant 0 : i32
    %30 = arith.cmpi ne, %29, %c0_i32_20 : i32
    scf.if %30 {
      %c0_21 = arith.constant 0 : index
      %c0_22 = arith.constant 0 : index
      %c0_23 = arith.constant 0 : index
      %31 = vector.load %arg5[%c0_21, %c0_22, %c0_23] : memref<4x4x2048xbf16, #tpu.memory_space<vmem>>, vector<4x4x2048xbf16>
      %32 = arith.extf %31 : vector<4x4x2048xbf16> to vector<4x4x2048xf32>
      %c0_24 = arith.constant 0 : index
      %c0_25 = arith.constant 0 : index
      %33 = vector.load %arg6[%c0_24, %c0_25] : memref<4x1xf32, #tpu.memory_space<vmem>>, vector<4x1xf32>
      %cst_26 = arith.constant 1.22070313E-4 : f32
      %34 = vector.broadcast %cst_26 : f32 to vector<4x1xf32>
      %35 = arith.mulf %33, %34 : vector<4x1xf32>
      %c0_27 = arith.constant 0 : index
      %c0_28 = arith.constant 0 : index
      %36 = vector.load %arg7[%c0_27, %c0_28] : memref<4x1xf32, #tpu.memory_space<vmem>>, vector<4x1xf32>
      %cst_29 = arith.constant 1.22070313E-4 : f32
      %37 = vector.broadcast %cst_29 : f32 to vector<4x1xf32>
      %38 = arith.mulf %36, %37 : vector<4x1xf32>
      %39 = arith.mulf %35, %35 : vector<4x1xf32>
      %40 = arith.subf %38, %39 : vector<4x1xf32>
      %cst_30 = arith.constant 0.000000e+00 : f32
      %41 = vector.broadcast %cst_30 : f32 to vector<4x1xf32>
      %42 = arith.maximumf %40, %41 : vector<4x1xf32>
      %cst_31 = arith.constant 9.99999974E-6 : f32
      %43 = vector.broadcast %cst_31 : f32 to vector<4x1xf32>
      %44 = arith.addf %42, %43 : vector<4x1xf32>
      %45 = math.rsqrt %44 : vector<4x1xf32>
      %46 = vector.shape_cast %35 : vector<4x1xf32> to vector<1x4x1xf32>
      %47 = vector.broadcast %46 : vector<1x4x1xf32> to vector<4x4x2048xf32>
      %48 = arith.subf %32, %47 : vector<4x4x2048xf32>
      %49 = vector.shape_cast %45 : vector<4x1xf32> to vector<1x4x1xf32>
      %50 = vector.broadcast %49 : vector<1x4x1xf32> to vector<4x4x2048xf32>
      %51 = arith.mulf %48, %50 : vector<4x4x2048xf32>
      %cst_32 = arith.constant 0.000000e+00 : f32
      %52 = vector.broadcast %cst_32 : f32 to vector<4x4x2048xf32>
      %53 = arith.maximumf %51, %52 : vector<4x4x2048xf32>
      %54 = arith.truncf %53 : vector<4x4x2048xf32> to vector<4x4x2048xbf16>
      %c0_33 = arith.constant 0 : index
      %c0_34 = arith.constant 0 : index
      %c0_35 = arith.constant 0 : index
      %55 = vector.load %arg5[%c0_33, %c0_34, %c0_35] : memref<4x4x2048xbf16, #tpu.memory_space<vmem>>, vector<4x4x2048xbf16>
      tpu.vector_store %arg5[%c0_33, %c0_34, %c0_35], %54 {strides = array<i32>} : memref<4x4x2048xbf16, #tpu.memory_space<vmem>>, vector<4x4x2048xbf16>,
    } else {
    }
    return
  }
  func.func @transform_0(%arg0: i32, %arg1: i32) -> (i32, i32, i32) {
    %c0_i32 = arith.constant 0 : i32
    %c0_i32_0 = arith.constant 0 : i32
    return %arg0, %c0_i32, %arg1 : i32, i32, i32
  }
  func.func @transform_1(%arg0: i32, %arg1: i32) -> (i32, i32, i32) {
    %c0_i32 = arith.constant 0 : i32
    %c0_i32_0 = arith.constant 0 : i32
    %c0_i32_1 = arith.constant 0 : i32
    return %arg0, %c0_i32, %c0_i32_0 : i32, i32, i32
  }
  func.func @transform_2(%arg0: i32, %arg1: i32) -> (i32, i32) {
    %c0_i32 = arith.constant 0 : i32
    %c0_i32_0 = arith.constant 0 : i32
    %c0_i32_1 = arith.constant 0 : i32
    return %c0_i32, %c0_i32_0 : i32, i32
  }
  func.func @transform_3(%arg0: i32, %arg1: i32) -> (i32, i32, i32) {
    %c0_i32 = arith.constant 0 : i32
    %c0_i32_0 = arith.constant 0 : i32
    %c0_i32_1 = arith.constant 0 : i32
    %c0_i32_2 = arith.constant 0 : i32
    return %c0_i32, %c0_i32_0, %c0_i32_1 : i32, i32, i32
  }
}

module attributes {stable_mosaic.version = 11 : i64} {
  func.func @_fused_convT_kernel(%arg0: i32, %arg1: i32, %arg2: memref<1x16x4096xbf16, #tpu.memory_space<vmem>>, %arg3: memref<1x3x16xbf16, #tpu.memory_space<vmem>>, %arg4: memref<3x1xf32, #tpu.memory_space<vmem>>, %arg5: memref<4x3x8192xf32, #tpu.memory_space<vmem>>, %arg6: memref<3x1xf32, #tpu.memory_space<vmem>>, %arg7: memref<3x1xf32, #tpu.memory_space<vmem>>) attributes {dimension_semantics = [#tpu.dimension_semantics<arbitrary>, #tpu.dimension_semantics<arbitrary>], iteration_bounds = array<i64: 4, 2>, scalar_prefetch = 0 : i64, scratch_operands = 2 : i64, tpu.core_type = #tpu.core_type<tc>, window_params = [{transform_indices = @transform_0, window_bounds = array<i64: 1, 16, 4096>}, {transform_indices = @transform_1, window_bounds = array<i64: 1, 3, 16>}, {pipeline_mode = #tpu.pipeline_mode<synchronous>, transform_indices = @transform_2, window_bounds = array<i64: 3, 1>}, {pipeline_mode = #tpu.pipeline_mode<synchronous>, transform_indices = @transform_3, window_bounds = array<i64: 4, 3, 8192>}]} {
    %c0 = arith.constant 0 : index
    %c0_0 = arith.constant 0 : index
    %c0_1 = arith.constant 0 : index
    %0 = vector.load %arg3[%c0, %c0_0, %c0_1] : memref<1x3x16xbf16, #tpu.memory_space<vmem>>, vector<1x3x16xbf16>
    %1 = vector.shape_cast %0 : vector<1x3x16xbf16> to vector<3x16xbf16>
    %c0_2 = arith.constant 0 : index
    %c0_3 = arith.constant 0 : index
    %c0_4 = arith.constant 0 : index
    %2 = vector.load %arg2[%c0_2, %c0_3, %c0_4] : memref<1x16x4096xbf16, #tpu.memory_space<vmem>>, vector<1x16x4096xbf16>
    %3 = vector.shape_cast %2 : vector<1x16x4096xbf16> to vector<16x4096xbf16>
    %cst = arith.constant dense<0.000000e+00> : vector<3x4096xf32>
    %4 = tpu.matmul %1, %3, %cst {dimension_numbers = #tpu.dot_dimension_numbers<[1], [0], [0], [1], [0, 0, 1, 1], [], []>} : vector<3x16xbf16>, vector<16x4096xbf16>, vector<3x4096xf32> -> vector<3x4096xf32>
    %c4096_i32 = arith.constant 4096 : i32
    %5 = arith.muli %arg1, %c4096_i32 : i32
    %6 = tpu.assume_multiple %5, 4096 : i32
    %7 = arith.index_cast %arg0 : i32 to index
    %c0_5 = arith.constant 0 : index
    %8 = arith.index_cast %6 : i32 to index
    %9 = vector.load %arg5[%7, %c0_5, %8] : memref<4x3x8192xf32, #tpu.memory_space<vmem>>, vector<1x3x4096xf32>
    %10 = vector.shape_cast %9 : vector<1x3x4096xf32> to vector<3x4096xf32>
    %11 = vector.shape_cast %4 : vector<3x4096xf32> to vector<1x3x4096xf32>
    tpu.vector_store %arg5[%7, %c0_5, %8], %11 {strides = array<i32>} : memref<4x3x8192xf32, #tpu.memory_space<vmem>>, vector<1x3x4096xf32>,
    %c3_i32 = arith.constant 3 : i32
    %12 = arith.cmpi eq, %arg0, %c3_i32 : i32
    %c1_i32 = arith.constant 1 : i32
    %13 = arith.cmpi eq, %arg1, %c1_i32 : i32
    %14 = arith.andi %12, %13 : i1
    %15 = arith.extui %14 : i1 to i32
    %c0_i32 = arith.constant 0 : i32
    %16 = arith.cmpi ne, %15, %c0_i32 : i32
    scf.if %16 {
      %c0_6 = arith.constant 0 : index
      %c0_7 = arith.constant 0 : index
      %c0_8 = arith.constant 0 : index
      %17 = vector.load %arg5[%c0_6, %c0_7, %c0_8] : memref<4x3x8192xf32, #tpu.memory_space<vmem>>, vector<4x3x8192xf32>
      %c0_9 = arith.constant 0 : index
      %c0_10 = arith.constant 0 : index
      %18 = vector.load %arg4[%c0_9, %c0_10] : memref<3x1xf32, #tpu.memory_space<vmem>>, vector<3x1xf32>
      %19 = vector.shape_cast %18 : vector<3x1xf32> to vector<1x3x1xf32>
      %20 = vector.broadcast %19 : vector<1x3x1xf32> to vector<4x3x8192xf32>
      %21 = arith.addf %17, %20 : vector<4x3x8192xf32>
      %22 = math.tanh %21 : vector<4x3x8192xf32>
      %c0_11 = arith.constant 0 : index
      %c0_12 = arith.constant 0 : index
      %c0_13 = arith.constant 0 : index
      %23 = vector.load %arg5[%c0_11, %c0_12, %c0_13] : memref<4x3x8192xf32, #tpu.memory_space<vmem>>, vector<4x3x8192xf32>
      tpu.vector_store %arg5[%c0_11, %c0_12, %c0_13], %22 {strides = array<i32>} : memref<4x3x8192xf32, #tpu.memory_space<vmem>>, vector<4x3x8192xf32>,
    } else {
    }
    return
  }
  func.func @transform_0(%arg0: i32, %arg1: i32) -> (i32, i32, i32) {
    %c0_i32 = arith.constant 0 : i32
    %c0_i32_0 = arith.constant 0 : i32
    return %arg0, %c0_i32, %arg1 : i32, i32, i32
  }
  func.func @transform_1(%arg0: i32, %arg1: i32) -> (i32, i32, i32) {
    %c0_i32 = arith.constant 0 : i32
    %c0_i32_0 = arith.constant 0 : i32
    %c0_i32_1 = arith.constant 0 : i32
    return %arg0, %c0_i32, %c0_i32_0 : i32, i32, i32
  }
  func.func @transform_2(%arg0: i32, %arg1: i32) -> (i32, i32) {
    %c0_i32 = arith.constant 0 : i32
    %c0_i32_0 = arith.constant 0 : i32
    %c0_i32_1 = arith.constant 0 : i32
    return %c0_i32, %c0_i32_0 : i32, i32
  }
  func.func @transform_3(%arg0: i32, %arg1: i32) -> (i32, i32, i32) {
    %c0_i32 = arith.constant 0 : i32
    %c0_i32_0 = arith.constant 0 : i32
    %c0_i32_1 = arith.constant 0 : i32
    %c0_i32_2 = arith.constant 0 : i32
    return %c0_i32, %c0_i32_0, %c0_i32_1 : i32, i32, i32
  }
}

</mosaic_0001>

<llo_original>
// kernel: generator_forward.6
$region0: #{generator_forward.6}
  #allocation0 [shape = 'u32[]', space=smem, size = 0x4, offset = 0x4, fixed_abs, tag = 'smem constant byte address 0x4 - core index']
  #allocation1 [shape = 'u32[144,128]{1,0:T(1,128)}', space=vmem, size = 0x12000, scoped, tag = 'internal scratch']
  #allocation2 [shape = 'f32[64,1]{1,0:T(8,128)}', space=vmem, size = 0x8000, scoped, tag = 'scratch operand']
  #allocation3 [shape = 'f32[64,1]{1,0:T(8,128)}', space=vmem, size = 0x8000, scoped, tag = 'scratch operand']
  %s0 = inlined_call_operand.vmem [shape: bf16[16,8,2], index: 0, kind: input, shape index: {}]
  %s1 = inlined_call_operand.vmem [shape: bf16[16,64,8], index: 1, kind: input, shape index: {}]
  %s2 = inlined_call_operand.vmem [shape: f32[64,1], index: 2, kind: input, shape index: {}]
  %s3 = inlined_call_operand.vmem [shape: bf16[16,64,2], index: 3, kind: output, shape index: {}]
  %s4 = sld [smem:[#allocation0]]
  $region53: #{generator_forward.6} parent=0
    _
  %s6 = ssub.s32 1, %s4
  %s7 = scalar_select 0, %s6, %s4
  loop: start=0, step=1, limit=18
  $region2: #{generator_forward.6} parent=0 // loop_pre_header
    _
  $region3: #{generator_forward.6} parent=0 // loop_header
    %s9 = sphi 0, %s13
    %p10 = scmp.ge.s32.totalorder %s9, 18
    %s16 = sphi 0, %s28
    %s17 = sphi 0, %s24
    %s18 = sphi 0, %s16
    %s19 = sphi 0, %s17
    %s20 = sphi 0, %s18
    %s21 = sphi 0, %s19
    %s33 = sphi 0, %s35
    %s36 = sphi 0, %s33
    %s37 = sphi 0, %s36
    %s53 = sphi 0, %s37
    %s59 = sphi 0, %s61
    %s62 = sphi 0, %s59
    %s63 = sphi 0, %s62
    %s79 = sphi 0, %s63
    %s83 = sphi 0, %s83
    %s85 = sphi 0, %s83
    %s86 = sphi 0, %s85
    %s100 = sphi 0, %s86
    %s104 = sphi 0, %s104
    %s106 = sphi 0, %s104
    %s107 = sphi 0, %s106
    %s121 = sphi 0, %s107
  $region4: #{generator_forward.6} parent=0 // loop_header_branch
    %12 = sbr.rel (%p10) target = $region8
  $region5: #{generator_forward.6} parent=0 // loop_body
    %s14 = ssub.s32 %s9, 1
    %s15 = ssub.s32 %s9, 2
    %s22 = sadd.s32 1, %s17
    %p23 = scmp.ge.s32.totalorder %s22, 1
    %s24 = scalar_select %p23, 0, %s22
    %s25 = sadd.s32 1, %s16
    %s26 = scalar_select %p23, %s25, %s16
    %p27 = scmp.ge.s32.totalorder %s26, 16
    %s28 = scalar_select %p27, 0, %s26
    %s29 = ssub.s32 %s16, %s28
    %s30 = ssub.s32 %s17, %s24
    %s31 = sor.u32 %s29, %s30
    %p32 = scmp.eq.s32.totalorder %s31, 0
    %s34 = sadd.s32 %s33, 1
    %s35 = scalar_select %p32, %s33, %s34
    %p38 = pneg %p32
    %p39 = scmp.eq.s32.totalorder %s9, 15
    %p40 = por %p38, %p39
    %p41 = scmp.ne.s32.totalorder %s33, %s36
    %p42 = scmp.eq.s32.totalorder %s9, 0
    %p43 = por %p41, %p42
    %p44 = scmp.ne.s32.totalorder %s33, %s36
    %p45 = scmp.eq.s32.totalorder %s14, 15
    %p46 = por %p44, %p45
    %p47 = scmp.ne.s32.totalorder %s36, %s37
    %p48 = scmp.eq.s32.totalorder %s14, 0
    %p49 = por %p47, %p48
    %p50 = scmp.ne.s32.totalorder %s36, %s37
    %p51 = scmp.eq.s32.totalorder %s15, 15
    %p52 = por %p50, %p51
    %p54 = scmp.ne.s32.totalorder %s37, %s53
    %p55 = scmp.eq.s32.totalorder %s15, 0
    %p56 = por %p54, %p55
    %s57 = ssub.s32 %s16, %s28
    %p58 = scmp.eq.s32.totalorder %s57, 0
    %s60 = sadd.s32 %s59, 1
    %s61 = scalar_select %p58, %s59, %s60
    %p64 = pneg %p58
    %p65 = scmp.eq.s32.totalorder %s9, 15
    %p66 = por %p64, %p65
    %p67 = scmp.ne.s32.totalorder %s59, %s62
    %p68 = scmp.eq.s32.totalorder %s9, 0
    %p69 = por %p67, %p68
    %p70 = scmp.ne.s32.totalorder %s59, %s62
    %p71 = scmp.eq.s32.totalorder %s14, 15
    %p72 = por %p70, %p71
    %p73 = scmp.ne.s32.totalorder %s62, %s63
    %p74 = scmp.eq.s32.totalorder %s14, 0
    %p75 = por %p73, %p74
    %p76 = scmp.ne.s32.totalorder %s62, %s63
    %p77 = scmp.eq.s32.totalorder %s15, 15
    %p78 = por %p76, %p77
    %p80 = scmp.ne.s32.totalorder %s63, %s79
    %p81 = scmp.eq.s32.totalorder %s15, 0
    %p82 = por %p80, %p81
    %s84 = sadd.s32 %s83, 1
    %p87 = scmp.eq.s32.totalorder %s9, 15
    %p88 = scmp.ne.s32.totalorder %s83, %s85
    %p89 = scmp.eq.s32.totalorder %s9, 0
    %p90 = por %p88, %p89
    %p91 = scmp.ne.s32.totalorder %s83, %s85
    %p92 = scmp.eq.s32.totalorder %s14, 15
    %p93 = por %p91, %p92
    %p94 = scmp.ne.s32.totalorder %s85, %s86
    %p95 = scmp.eq.s32.totalorder %s14, 0
    %p96 = por %p94, %p95
    %p97 = scmp.ne.s32.totalorder %s85, %s86
    %p98 = scmp.eq.s32.totalorder %s15, 15
    %p99 = por %p97, %p98
    %p101 = scmp.ne.s32.totalorder %s86, %s100
    %p102 = scmp.eq.s32.totalorder %s15, 0
    %p103 = por %p101, %p102
    %s105 = sadd.s32 %s104, 1
    %p108 = scmp.eq.s32.totalorder %s9, 15
    %p109 = scmp.ne.s32.totalorder %s104, %s106
    %p110 = scmp.eq.s32.totalorder %s9, 0
    %p111 = por %p109, %p110
    %p112 = scmp.ne.s32.totalorder %s104, %s106
    %p113 = scmp.eq.s32.totalorder %s14, 15
    %p114 = por %p112, %p113
    %p115 = scmp.ne.s32.totalorder %s106, %s107
    %p116 = scmp.eq.s32.totalorder %s14, 0
    %p117 = por %p115, %p116
    %p118 = scmp.ne.s32.totalorder %s106, %s107
    %p119 = scmp.eq.s32.totalorder %s15, 15
    %p120 = por %p118, %p119
    %p122 = scmp.ne.s32.totalorder %s107, %s121
    %p123 = scmp.eq.s32.totalorder %s15, 0
    %p124 = por %p122, %p123
    %p125 = scmp.le.s32.totalorder 1, %s9
    %p126 = scmp.lt.s32.totalorder %s9, 17
    %p127 = pnand %p125, %p126
    %p128 = pneg %p127
    // Predicated region
    $region9: #{generator_forward.6} parent=5 // pred_check
      _
    $region10: #{generator_forward.6} parent=5 // pred_check_branch
      %130 = sbr.rel (%p127) target = $region12
    $region11: #{generator_forward.6} parent=5 // pred_region
      %s131 = ssub.s32 %s9, 1
      // Predicated region
      $region13: #{generator_forward.6} parent=11 // pred_check
        %p132 = pneg %p96
      $region14: #{generator_forward.6} parent=11 // pred_check_branch
        %134 = sbr.rel (%p132) target = $region16
      $region15: #{generator_forward.6} parent=11 // pred_region
        _
      $region16: #{generator_forward.6} parent=11 // pred_fallthru
        _
    $region12: #{generator_forward.6} parent=5 // pred_fallthru
      _
    %p135 = scmp.lt.s32.totalorder %s9, 16
    // Predicated region
    $region17: #{generator_forward.6} parent=5 // pred_check
      %p136 = pneg %p135
    $region18: #{generator_forward.6} parent=5 // pred_check_branch
      %138 = sbr.rel (%p136) target = $region20
    $region19: #{generator_forward.6} parent=5 // pred_region
      // Predicated region
      $region21: #{generator_forward.6} parent=19 // pred_check
        %p139 = pneg %p43
      $region22: #{generator_forward.6} parent=19 // pred_check_branch
        %141 = sbr.rel (%p139) target = $region24
      $region23: #{generator_forward.6} parent=19 // pred_region
        %p142 = scmp.lt.s32.totalorder %s16, 15
        %s143 = scalar_select %p142, %s16, 15
        %p144 = scmp.lt.s32.totalorder %s17, 0
        %s145 = scalar_select %p144, %s17, 0
        %s146 = sadd.s32 %s145, %s143
        %s147 = smul.addr %s146, 4
        %s148 = scalar_lea.vmem %s0, %s147
      $region24: #{generator_forward.6} parent=19 // pred_fallthru
        _
      // Predicated region
      $region25: #{generator_forward.6} parent=19 // pred_check
        %p149 = pneg %p69
      $region26: #{generator_forward.6} parent=19 // pred_check_branch
        %151 = sbr.rel (%p149) target = $region28
      $region27: #{generator_forward.6} parent=19 // pred_region
        %p152 = scmp.lt.s32.totalorder %s16, 15
        %s153 = scalar_select %p152, %s16, 15
        %s154 = smul.addr %s153, 8
        %s155 = smul.addr %s154, 4
        %s156 = scalar_lea.vmem %s1, %s155
      $region28: #{generator_forward.6} parent=19 // pred_fallthru
        _
    $region20: #{generator_forward.6} parent=5 // pred_fallthru
      _
    %p157 = scmp.le.s32.totalorder 1, %s9
    %p158 = scmp.lt.s32.totalorder %s9, 17
    %p159 = pnand %p157, %p158
    %p160 = pneg %p159
    // Predicated region
    $region29: #{generator_forward.6} parent=5 // pred_check
      _
    $region30: #{generator_forward.6} parent=5 // pred_check_branch
      %162 = sbr.rel (%p159) target = $region32
    $region31: #{generator_forward.6} parent=5 // pred_region
      %s163 = ssub.s32 %s9, 1
      %p164 = scmp.lt.s32.totalorder %s18, 15
      %s165 = scalar_select %p164, %s18, 15
      %p166 = scmp.lt.s32.totalorder %s19, 0
      %s167 = scalar_select %p166, %s19, 0
      %s168 = sadd.s32 %s167, %s165
      %s169 = smul.addr %s168, 4
      %s170 = scalar_lea.vmem %s0, %s169
      %p171 = pneg %p49
      %p172 = pneg %p46
      %p173 = scmp.lt.s32.totalorder %s18, 15
      %s174 = scalar_select %p173, %s18, 15
      %s175 = smul.addr %s174, 8
      %s176 = smul.addr %s175, 4
      %s177 = scalar_lea.vmem %s1, %s176
      %p178 = pneg %p75
      %p179 = pneg %p72
      %p180 = pneg %p96
      %p181 = pneg %p93
      %p182 = pneg %p117
      %p183 = pneg %p114
      %p184 = scmp.lt.s32.totalorder %s18, 15
      %s185 = scalar_select %p184, %s18, 15
      %p186 = scmp.lt.s32.totalorder %s19, 0
      %s187 = scalar_select %p186, %s19, 0
      %s188 = sadd.s32 %s187, %s185
      %s189 = smul.addr %s188, 4
      %s190 = scalar_lea.vmem %s0, %s189
      %p191 = scmp.lt.s32.totalorder %s18, 15
      %s192 = scalar_select %p191, %s18, 15
      %s193 = smul.addr %s192, 8
      %s194 = smul.addr %s193, 4
      %s195 = scalar_lea.vmem %s1, %s194
      %v197 = vld [vmem:[%s195] sm:$0xf]
      %v198 = vld [vmem:[%s195 + $0x4] sm:$0xf]
      %v199 = vld [vmem:[%s195 + $0x8] sm:$0xf]
      %v200 = vld [vmem:[%s195 + $0xc] sm:$0xf]
      %v201 = vld [vmem:[%s195 + $0x10] sm:$0xf]
      %v202 = vld [vmem:[%s195 + $0x14] sm:$0xf]
      %v203 = vld [vmem:[%s195 + $0x18] sm:$0xf]
      %v204 = vld [vmem:[%s195 + $0x1c] sm:$0xf]
      %v205 = vld [vmem:[%s190] sm:$0xf]
      %v214 = vunpack.c.l.b16 %v197
      %v215 = vunpack.c.l.b16 %v198
      %v216 = vunpack.c.l.b16 %v199
      %v217 = vunpack.c.l.b16 %v200
      %v218 = vunpack.c.l.b16 %v201
      %v219 = vunpack.c.l.b16 %v202
      %v220 = vunpack.c.l.b16 %v203
      %v221 = vunpack.c.l.b16 %v204
      %v222 = vpack.c.b16 %v215, %v214
      %v223 = vpack.c.b16 %v217, %v216
      %v224 = vpack.c.b16 %v219, %v218
      %v225 = vpack.c.b16 %v221, %v220
      %vm226 = vcmask 64512
      %v228 = vsel %vm226, %v222, 0
      %v231 = vsel %vm226, %v223, 0
      %v234 = vsel %vm226, %v224, 0
      %v237 = vsel %vm226, %v225, 0
      %vm239 = vcmask 1043456
      %v241 = vsel %vm239, %v205, 0
      %243 = vmatprep.subr.bf16.mxu0 0
      %244 = vmatpush1.bf16.msra.mxu0 0
      %245 = vmatprep.subr.bf16.mxu0 0
      %246 = vmatpush1.bf16.msra.mxu0 0
      %247 = vmatprep.subr.bf16.mxu0 0
      %248 = vmatpush1.bf16.msra.mxu0 0
      %249 = vmatprep.subr.bf16.mxu0 0
      %250 = vmatpush1.bf16.msra.mxu0 0
      %251 = vmatprep.subr.bf16.mxu0 0
      %252 = vmatpush1.bf16.msra.mxu0 0
      %253 = vmatprep.subr.bf16.mxu0 0
      %254 = vmatpush1.bf16.msra.mxu0 0
      %255 = vmatprep.subr.bf16.mxu0 0
      %256 = vmatpush1.bf16.msra.mxu0 0
      %257 = vmatprep.subr.bf16.mxu0 0
      %258 = vmatpush1.bf16.msra.mxu0 %v241
      %259 = vmatprep.subr.bf16.mxu0 0
      %260 = vmatpush2.bf16.msra.mxu0 0
      %261 = vmatprep.subr.bf16.mxu0 0
      %262 = vmatpush2.bf16.msra.mxu0 0
      %263 = vmatprep.subr.bf16.mxu0 0
      %264 = vmatpush2.bf16.msra.mxu0 0
      %265 = vmatprep.subr.bf16.mxu0 0
      %266 = vmatpush2.bf16.msra.mxu0 0
      %267 = vmatprep.subr.bf16.mxu0 0
      %268 = vmatpush2.bf16.msra.mxu0 0
      %269 = vmatprep.subr.bf16.mxu0 0
      %270 = vmatpush2.bf16.msra.mxu0 0
      %271 = vmatprep.subr.bf16.mxu0 0
      %272 = vmatpush2.bf16.msra.mxu0 0
      %273 = vmatprep.subr.bf16.mxu0 0
      %274 = vmatpush2.bf16.msra.mxu0 0
      %275 = vmatprep.mubr.bf16.mxu0 0
      %276 = vmatmul.mubr.bf16.gmra.mxu0 %v228
      %v277 = vpop.f32.mrf.mxu0
      %v278 = vadd.f32 0.0, %v277
      %v279 = vpop.f32.mrf.mxu0
      %v280 = vpop.f32.mrf.mxu0
      %v281 = vadd.f32 0.0, %v280
      %v282 = vpop.f32.mrf.mxu0
      %283 = vmatprep.mubr.bf16.mxu0 0
      %284 = vmatmul.mubr.bf16.gmra.mxu0 %v231
      %v285 = vpop.f32.mrf.mxu0
      %v286 = vadd.f32 0.0, %v285
      %v287 = vpop.f32.mrf.mxu0
      %v288 = vpop.f32.mrf.mxu0
      %v289 = vadd.f32 0.0, %v288
      %v290 = vpop.f32.mrf.mxu0
      %291 = vmatprep.mubr.bf16.mxu0 0
      %292 = vmatmul.mubr.bf16.gmra.mxu0 %v234
      %v293 = vpop.f32.mrf.mxu0
      %v294 = vadd.f32 0.0, %v293
      %v295 = vpop.f32.mrf.mxu0
      %v296 = vpop.f32.mrf.mxu0
      %v297 = vadd.f32 0.0, %v296
      %v298 = vpop.f32.mrf.mxu0
      %299 = vmatprep.mubr.bf16.mxu0 0
      %300 = vmatmul.mubr.bf16.gmra.mxu0 %v237
      %v301 = vpop.f32.mrf.mxu0
      %v302 = vadd.f32 0.0, %v301
      %v303 = vpop.f32.mrf.mxu0
      %v304 = vpop.f32.mrf.mxu0
      %v305 = vadd.f32 0.0, %v304
      %v306 = vpop.f32.mrf.mxu0
      %307 = vdwg.mxu0
      %p308 = scmp.eq.s32.totalorder %s18, 0
      %p309 = scmp.eq.s32.totalorder %s19, 0
      %p310 = pnand %p308, %p309
      %p311 = pneg %p310
      // Predicated region
      $region33: #{generator_forward.6} parent=31 // pred_check
        _
      $region34: #{generator_forward.6} parent=31 // pred_check_branch
        %313 = sbr.rel (%p310) target = $region36
      $region35: #{generator_forward.6} parent=31 // pred_region
        %vm314 = vcmask 7168
        %315 = vst.msk [vmem:[#allocation2] sm:$0xff] %vm314, 0.0
        %316 = vst.msk [vmem:[#allocation2 + $0x8] sm:$0xff] %vm314, 0.0
        %317 = vst.msk [vmem:[#allocation2 + $0x10] sm:$0xff] %vm314, 0.0
        %318 = vst.msk [vmem:[#allocation2 + $0x18] sm:$0xff] %vm314, 0.0
        %319 = vst.msk [vmem:[#allocation2 + $0x20] sm:$0xff] %vm314, 0.0
        %320 = vst.msk [vmem:[#allocation2 + $0x28] sm:$0xff] %vm314, 0.0
        %321 = vst.msk [vmem:[#allocation2 + $0x30] sm:$0xff] %vm314, 0.0
        %322 = vst.msk [vmem:[#allocation2 + $0x38] sm:$0xff] %vm314, 0.0
        %323 = vst.msk [vmem:[#allocation3] sm:$0xff] %vm314, 0.0
        %324 = vst.msk [vmem:[#allocation3 + $0x8] sm:$0xff] %vm314, 0.0
        %325 = vst.msk [vmem:[#allocation3 + $0x10] sm:$0xff] %vm314, 0.0
        %326 = vst.msk [vmem:[#allocation3 + $0x18] sm:$0xff] %vm314, 0.0
        %327 = vst.msk [vmem:[#allocation3 + $0x20] sm:$0xff] %vm314, 0.0
        %328 = vst.msk [vmem:[#allocation3 + $0x28] sm:$0xff] %vm314, 0.0
        %329 = vst.msk [vmem:[#allocation3 + $0x30] sm:$0xff] %vm314, 0.0
        %330 = vst.msk [vmem:[#allocation3 + $0x38] sm:$0xff] %vm314, 0.0
      $region36: #{generator_forward.6} parent=31 // pred_fallthru
        _
      %v331 = vld [vmem:[#allocation2] sm:$0xff]
      %v332 = vld [vmem:[#allocation2 + $0x8] sm:$0xff]
      %v333 = vld [vmem:[#allocation2 + $0x10] sm:$0xff]
      %v334 = vld [vmem:[#allocation2 + $0x18] sm:$0xff]
      %v335 = vld [vmem:[#allocation2 + $0x20] sm:$0xff]
      %v336 = vld [vmem:[#allocation2 + $0x28] sm:$0xff]
      %v337 = vld [vmem:[#allocation2 + $0x30] sm:$0xff]
      %v338 = vld [vmem:[#allocation2 + $0x38] sm:$0xff]
      %vm339 = vcmask 15360
      %v340 = vsel %vm339, %v278, 0.0
      %341 = vadd.xlane.f32.xlu0 %v340
      %v342 = vpop.xlane.xlu0 %341
      %v343 = vsel %vm339, %v281, 0.0
      %344 = vadd.xlane.f32.xlu0 %v343
      %v345 = vpop.xlane.xlu0 %344
      %v346 = vsel %vm339, %v286, 0.0
      %347 = vadd.xlane.f32.xlu0 %v346
      %v348 = vpop.xlane.xlu0 %347
      %v349 = vsel %vm339, %v289, 0.0
      %350 = vadd.xlane.f32.xlu0 %v349
      %v351 = vpop.xlane.xlu0 %350
      %v352 = vsel %vm339, %v294, 0.0
      %353 = vadd.xlane.f32.xlu0 %v352
      %v354 = vpop.xlane.xlu0 %353
      %v355 = vsel %vm339, %v297, 0.0
      %356 = vadd.xlane.f32.xlu0 %v355
      %v357 = vpop.xlane.xlu0 %356
      %v358 = vsel %vm339, %v302, 0.0
      %359 = vadd.xlane.f32.xlu0 %v358
      %v360 = vpop.xlane.xlu0 %359
      %v361 = vsel %vm339, %v305, 0.0
      %362 = vadd.xlane.f32.xlu0 %v361
      %v363 = vpop.xlane.xlu0 %362
      %v364 = vadd.f32 %v331, %v342
      %v365 = vadd.f32 %v332, %v345
      %v366 = vadd.f32 %v333, %v348
      %v367 = vadd.f32 %v334, %v351
      %v368 = vadd.f32 %v335, %v354
      %v369 = vadd.f32 %v336, %v357
      %v370 = vadd.f32 %v337, %v360
      %v371 = vadd.f32 %v338, %v363
      %vm372 = vcmask 7168
      %373 = vst.msk [vmem:[#allocation2] sm:$0xff] %vm372, %v364
      %374 = vst.msk [vmem:[#allocation2 + $0x8] sm:$0xff] %vm372, %v365
      %375 = vst.msk [vmem:[#allocation2 + $0x10] sm:$0xff] %vm372, %v366
      %376 = vst.msk [vmem:[#allocation2 + $0x18] sm:$0xff] %vm372, %v367
      %377 = vst.msk [vmem:[#allocation2 + $0x20] sm:$0xff] %vm372, %v368
      %378 = vst.msk [vmem:[#allocation2 + $0x28] sm:$0xff] %vm372, %v369
      %379 = vst.msk [vmem:[#allocation2 + $0x30] sm:$0xff] %vm372, %v370
      %380 = vst.msk [vmem:[#allocation2 + $0x38] sm:$0xff] %vm372, %v371
      %v381 = vld [vmem:[#allocation3] sm:$0xff]
      %v382 = vld [vmem:[#allocation3 + $0x8] sm:$0xff]
      %v383 = vld [vmem:[#allocation3 + $0x10] sm:$0xff]
      %v384 = vld [vmem:[#allocation3 + $0x18] sm:$0xff]
      %v385 = vld [vmem:[#allocation3 + $0x20] sm:$0xff]
      %v386 = vld [vmem:[#allocation3 + $0x28] sm:$0xff]
      %v387 = vld [vmem:[#allocation3 + $0x30] sm:$0xff]
      %v388 = vld [vmem:[#allocation3 + $0x38] sm:$0xff]
      %v389 = vmul.f32 %v278, %v278
      %v390 = vmul.f32 %v281, %v281
      %v391 = vmul.f32 %v286, %v286
      %v392 = vmul.f32 %v289, %v289
      %v393 = vmul.f32 %v294, %v294
      %v394 = vmul.f32 %v297, %v297
      %v395 = vmul.f32 %v302, %v302
      %v396 = vmul.f32 %v305, %v305
      %v397 = vsel %vm339, %v389, 0.0
      %398 = vadd.xlane.f32.xlu0 %v397
      %v399 = vpop.xlane.xlu0 %398
      %v400 = vsel %vm339, %v390, 0.0
      %401 = vadd.xlane.f32.xlu0 %v400
      %v402 = vpop.xlane.xlu0 %401
      %v403 = vsel %vm339, %v391, 0.0
      %404 = vadd.xlane.f32.xlu0 %v403
      %v405 = vpop.xlane.xlu0 %404
      %v406 = vsel %vm339, %v392, 0.0
      %407 = vadd.xlane.f32.xlu0 %v406
      %v408 = vpop.xlane.xlu0 %407
      %v409 = vsel %vm339, %v393, 0.0
      %410 = vadd.xlane.f32.xlu0 %v409
      %v411 = vpop.xlane.xlu0 %410
      %v412 = vsel %vm339, %v394, 0.0
      %413 = vadd.xlane.f32.xlu0 %v412
      %v414 = vpop.xlane.xlu0 %413
      %v415 = vsel %vm339, %v395, 0.0
      %416 = vadd.xlane.f32.xlu0 %v415
      %v417 = vpop.xlane.xlu0 %416
      %v418 = vsel %vm339, %v396, 0.0
      %419 = vadd.xlane.f32.xlu0 %v418
      %v420 = vpop.xlane.xlu0 %419
      %v421 = vadd.f32 %v381, %v399
      %v422 = vadd.f32 %v382, %v402
      %v423 = vadd.f32 %v383, %v405
      %v424 = vadd.f32 %v384, %v408
      %v425 = vadd.f32 %v385, %v411
      %v426 = vadd.f32 %v386, %v414
      %v427 = vadd.f32 %v387, %v417
      %v428 = vadd.f32 %v388, %v420
      %429 = vst.msk [vmem:[#allocation3] sm:$0xff] %vm372, %v421
      %430 = vst.msk [vmem:[#allocation3 + $0x8] sm:$0xff] %vm372, %v422
      %431 = vst.msk [vmem:[#allocation3 + $0x10] sm:$0xff] %vm372, %v423
      %432 = vst.msk [vmem:[#allocation3 + $0x18] sm:$0xff] %vm372, %v424
      %433 = vst.msk [vmem:[#allocation3 + $0x20] sm:$0xff] %vm372, %v425
      %434 = vst.msk [vmem:[#allocation3 + $0x28] sm:$0xff] %vm372, %v426
      %435 = vst.msk [vmem:[#allocation3 + $0x30] sm:$0xff] %vm372, %v427
      %436 = vst.msk [vmem:[#allocation3 + $0x38] sm:$0xff] %vm372, %v428
      %v437 = vpack.c.bf16 %v281, %v278
      %v438 = vpack.c.bf16 %v289, %v286
      %v439 = vpack.c.bf16 %v297, %v294
      %v440 = vpack.c.bf16 %v305, %v302
      %v445 = vunpack.c.l.b16 %v437
      %v446 = vunpack.c.h.b16 %v437
      %v447 = vunpack.c.l.b16 %v438
      %v448 = vunpack.c.h.b16 %v438
      %v449 = vunpack.c.l.b16 %v439
      %v450 = vunpack.c.h.b16 %v439
      %v451 = vunpack.c.l.b16 %v440
      %v452 = vunpack.c.h.b16 %v440
      %v453 = vpack.c.b16 %v445, %v445
      %v454 = vpack.c.b16 %v446, %v446
      %v455 = vpack.c.b16 %v447, %v447
      %v456 = vpack.c.b16 %v448, %v448
      %v457 = vpack.c.b16 %v449, %v449
      %v458 = vpack.c.b16 %v450, %v450
      %v459 = vpack.c.b16 %v451, %v451
      %v460 = vpack.c.b16 %v452, %v452
      %s469 = smul.u32 %s18, 8
      %s470 = smul.addr %s469, 4
      %s471 = scalar_lea.vmem %s3, %s470
      %vm472 = vcmask 11264
      %473 = vst.msk [vmem:[%s471] sm:$0xf] %vm472, %v453
      %474 = vst.msk [vmem:[%s471 + $0x4] sm:$0xf] %vm472, %v454
      %475 = vst.msk [vmem:[%s471 + $0x8] sm:$0xf] %vm472, %v455
      %476 = vst.msk [vmem:[%s471 + $0xc] sm:$0xf] %vm472, %v456
      %477 = vst.msk [vmem:[%s471 + $0x10] sm:$0xf] %vm472, %v457
      %478 = vst.msk [vmem:[%s471 + $0x14] sm:$0xf] %vm472, %v458
      %479 = vst.msk [vmem:[%s471 + $0x18] sm:$0xf] %vm472, %v459
      %480 = vst.msk [vmem:[%s471 + $0x1c] sm:$0xf] %vm472, %v460
      %p481 = scmp.eq.s32.totalorder %s18, 15
      %p482 = pnand %p481, %p309
      %p483 = pneg %p482
      // Predicated region
      $region37: #{generator_forward.6} parent=31 // pred_check
        _
      $region38: #{generator_forward.6} parent=31 // pred_check_branch
        %485 = sbr.rel (%p482) target = $region40
      $region39: #{generator_forward.6} parent=31 // pred_region
        %v486 = vld [vmem:[%s3] sm:$0xf]
        %v487 = vld [vmem:[%s3 + $0x4] sm:$0xf]
        %v488 = vld [vmem:[%s3 + $0x8] sm:$0xf]
        %v489 = vld [vmem:[%s3 + $0xc] sm:$0xf]
        %v490 = vld [vmem:[%s3 + $0x10] sm:$0xf]
        %v491 = vld [vmem:[%s3 + $0x14] sm:$0xf]
        %v492 = vld [vmem:[%s3 + $0x18] sm:$0xf]
        %v493 = vld [vmem:[%s3 + $0x1c] sm:$0xf]
        %v494 = vld [vmem:[%s3 + $0x20] sm:$0xf]
        %v495 = vld [vmem:[%s3 + $0x24] sm:$0xf]
        %v496 = vld [vmem:[%s3 + $0x28] sm:$0xf]
        %v497 = vld [vmem:[%s3 + $0x2c] sm:$0xf]
        %v498 = vld [vmem:[%s3 + $0x30] sm:$0xf]
        %v499 = vld [vmem:[%s3 + $0x34] sm:$0xf]
        %v500 = vld [vmem:[%s3 + $0x38] sm:$0xf]
        %v501 = vld [vmem:[%s3 + $0x3c] sm:$0xf]
        %v502 = vld [vmem:[%s3 + $0x40] sm:$0xf]
        %v503 = vld [vmem:[%s3 + $0x44] sm:$0xf]
        %v504 = vld [vmem:[%s3 + $0x48] sm:$0xf]
        %v505 = vld [vmem:[%s3 + $0x4c] sm:$0xf]
        %v506 = vld [vmem:[%s3 + $0x50] sm:$0xf]
        %v507 = vld [vmem:[%s3 + $0x54] sm:$0xf]
        %v508 = vld [vmem:[%s3 + $0x58] sm:$0xf]
        %v509 = vld [vmem:[%s3 + $0x5c] sm:$0xf]
        %v510 = vld [vmem:[%s3 + $0x60] sm:$0xf]
        %v511 = vld [vmem:[%s3 + $0x64] sm:$0xf]
        %v512 = vld [vmem:[%s3 + $0x68] sm:$0xf]
        %v513 = vld [vmem:[%s3 + $0x6c] sm:$0xf]
        %v514 = vld [vmem:[%s3 + $0x70] sm:$0xf]
        %v515 = vld [vmem:[%s3 + $0x74] sm:$0xf]
        %v516 = vld [vmem:[%s3 + $0x78] sm:$0xf]
        %v517 = vld [vmem:[%s3 + $0x7c] sm:$0xf]
        %v518 = vld [vmem:[%s3 + $0x80] sm:$0xf]
        %v519 = vld [vmem:[%s3 + $0x84] sm:$0xf]
        %v520 = vld [vmem:[%s3 + $0x88] sm:$0xf]
        %v521 = vld [vmem:[%s3 + $0x8c] sm:$0xf]
        %v522 = vld [vmem:[%s3 + $0x90] sm:$0xf]
        %v523 = vld [vmem:[%s3 + $0x94] sm:$0xf]
        %v524 = vld [vmem:[%s3 + $0x98] sm:$0xf]
        %v525 = vld [vmem:[%s3 + $0x9c] sm:$0xf]
        %v526 = vld [vmem:[%s3 + $0xa0] sm:$0xf]
        %v527 = vld [vmem:[%s3 + $0xa4] sm:$0xf]
        %v528 = vld [vmem:[%s3 + $0xa8] sm:$0xf]
        %v529 = vld [vmem:[%s3 + $0xac] sm:$0xf]
        %v530 = vld [vmem:[%s3 + $0xb0] sm:$0xf]
        %v531 = vld [vmem:[%s3 + $0xb4] sm:$0xf]
        %v532 = vld [vmem:[%s3 + $0xb8] sm:$0xf]
        %v533 = vld [vmem:[%s3 + $0xbc] sm:$0xf]
        %v534 = vld [vmem:[%s3 + $0xc0] sm:$0xf]
        %v535 = vld [vmem:[%s3 + $0xc4] sm:$0xf]
        %v536 = vld [vmem:[%s3 + $0xc8] sm:$0xf]
        %v537 = vld [vmem:[%s3 + $0xcc] sm:$0xf]
        %v538 = vld [vmem:[%s3 + $0xd0] sm:$0xf]
        %v539 = vld [vmem:[%s3 + $0xd4] sm:$0xf]
        %v540 = vld [vmem:[%s3 + $0xd8] sm:$0xf]
        %v541 = vld [vmem:[%s3 + $0xdc] sm:$0xf]
        %v542 = vld [vmem:[%s3 + $0xe0] sm:$0xf]
        %v543 = vld [vmem:[%s3 + $0xe4] sm:$0xf]
        %v544 = vld [vmem:[%s3 + $0xe8] sm:$0xf]
        %v545 = vld [vmem:[%s3 + $0xec] sm:$0xf]
        %v546 = vld [vmem:[%s3 + $0xf0] sm:$0xf]
        %v547 = vld [vmem:[%s3 + $0xf4] sm:$0xf]
        %v548 = vld [vmem:[%s3 + $0xf8] sm:$0xf]
        %v549 = vld [vmem:[%s3 + $0xfc] sm:$0xf]
        %v550 = vld [vmem:[%s3 + $0x100] sm:$0xf]
        %v551 = vld [vmem:[%s3 + $0x104] sm:$0xf]
        %v552 = vld [vmem:[%s3 + $0x108] sm:$0xf]
        %v553 = vld [vmem:[%s3 + $0x10c] sm:$0xf]
        %v554 = vld [vmem:[%s3 + $0x110] sm:$0xf]
        %v555 = vld [vmem:[%s3 + $0x114] sm:$0xf]
        %v556 = vld [vmem:[%s3 + $0x118] sm:$0xf]
        %v557 = vld [vmem:[%s3 + $0x11c] sm:$0xf]
        %v558 = vld [vmem:[%s3 + $0x120] sm:$0xf]
        %v559 = vld [vmem:[%s3 + $0x124] sm:$0xf]
        %v560 = vld [vmem:[%s3 + $0x128] sm:$0xf]
        %v561 = vld [vmem:[%s3 + $0x12c] sm:$0xf]
        %v562 = vld [vmem:[%s3 + $0x130] sm:$0xf]
        %v563 = vld [vmem:[%s3 + $0x134] sm:$0xf]
        %v564 = vld [vmem:[%s3 + $0x138] sm:$0xf]
        %v565 = vld [vmem:[%s3 + $0x13c] sm:$0xf]
        %v566 = vld [vmem:[%s3 + $0x140] sm:$0xf]
        %v567 = vld [vmem:[%s3 + $0x144] sm:$0xf]
        %v568 = vld [vmem:[%s3 + $0x148] sm:$0xf]
        %v569 = vld [vmem:[%s3 + $0x14c] sm:$0xf]
        %v570 = vld [vmem:[%s3 + $0x150] sm:$0xf]
        %v571 = vld [vmem:[%s3 + $0x154] sm:$0xf]
        %v572 = vld [vmem:[%s3 + $0x158] sm:$0xf]
        %v573 = vld [vmem:[%s3 + $0x15c] sm:$0xf]
        %v574 = vld [vmem:[%s3 + $0x160] sm:$0xf]
        %v575 = vld [vmem:[%s3 + $0x164] sm:$0xf]
        %v576 = vld [vmem:[%s3 + $0x168] sm:$0xf]
        %v577 = vld [vmem:[%s3 + $0x16c] sm:$0xf]
        %v578 = vld [vmem:[%s3 + $0x170] sm:$0xf]
        %v579 = vld [vmem:[%s3 + $0x174] sm:$0xf]
        %v580 = vld [vmem:[%s3 + $0x178] sm:$0xf]
        %v581 = vld [vmem:[%s3 + $0x17c] sm:$0xf]
        %v582 = vld [vmem:[%s3 + $0x180] sm:$0xf]
        %v583 = vld [vmem:[%s3 + $0x184] sm:$0xf]
        %v584 = vld [vmem:[%s3 + $0x188] sm:$0xf]
        %v585 = vld [vmem:[%s3 + $0x18c] sm:$0xf]
        %v586 = vld [vmem:[%s3 + $0x190] sm:$0xf]
        %v587 = vld [vmem:[%s3 + $0x194] sm:$0xf]
        %v588 = vld [vmem:[%s3 + $0x198] sm:$0xf]
        %v589 = vld [vmem:[%s3 + $0x19c] sm:$0xf]
        %v590 = vld [vmem:[%s3 + $0x1a0] sm:$0xf]
        %v591 = vld [vmem:[%s3 + $0x1a4] sm:$0xf]
        %v592 = vld [vmem:[%s3 + $0x1a8] sm:$0xf]
        %v593 = vld [vmem:[%s3 + $0x1ac] sm:$0xf]
        %v594 = vld [vmem:[%s3 + $0x1b0] sm:$0xf]
        %v595 = vld [vmem:[%s3 + $0x1b4] sm:$0xf]
        %v596 = vld [vmem:[%s3 + $0x1b8] sm:$0xf]
        %v597 = vld [vmem:[%s3 + $0x1bc] sm:$0xf]
        %v598 = vld [vmem:[%s3 + $0x1c0] sm:$0xf]
        %v599 = vld [vmem:[%s3 + $0x1c4] sm:$0xf]
        %v600 = vld [vmem:[%s3 + $0x1c8] sm:$0xf]
        %v601 = vld [vmem:[%s3 + $0x1cc] sm:$0xf]
        %v602 = vld [vmem:[%s3 + $0x1d0] sm:$0xf]
        %v603 = vld [vmem:[%s3 + $0x1d4] sm:$0xf]
        %v604 = vld [vmem:[%s3 + $0x1d8] sm:$0xf]
        %v605 = vld [vmem:[%s3 + $0x1dc] sm:$0xf]
        %v606 = vld [vmem:[%s3 + $0x1e0] sm:$0xf]
        %v607 = vld [vmem:[%s3 + $0x1e4] sm:$0xf]
        %v608 = vld [vmem:[%s3 + $0x1e8] sm:$0xf]
        %v609 = vld [vmem:[%s3 + $0x1ec] sm:$0xf]
        %v610 = vld [vmem:[%s3 + $0x1f0] sm:$0xf]
        %v611 = vld [vmem:[%s3 + $0x1f4] sm:$0xf]
        %v612 = vld [vmem:[%s3 + $0x1f8] sm:$0xf]
        %v613 = vld [vmem:[%s3 + $0x1fc] sm:$0xf]
        %v614 = vunpack.c.l.bf16 %v486
        %v615 = vunpack.c.l.bf16 %v487
        %v616 = vunpack.c.l.bf16 %v488
        %v617 = vunpack.c.l.bf16 %v489
        %v618 = vunpack.c.l.bf16 %v490
        %v619 = vunpack.c.l.bf16 %v491
        %v620 = vunpack.c.l.bf16 %v492
        %v621 = vunpack.c.l.bf16 %v493
        %v622 = vunpack.c.l.bf16 %v494
        %v623 = vunpack.c.l.bf16 %v495
        %v624 = vunpack.c.l.bf16 %v496
        %v625 = vunpack.c.l.bf16 %v497
        %v626 = vunpack.c.l.bf16 %v498
        %v627 = vunpack.c.l.bf16 %v499
        %v628 = vunpack.c.l.bf16 %v500
        %v629 = vunpack.c.l.bf16 %v501
        %v630 = vunpack.c.l.bf16 %v502
        %v631 = vunpack.c.l.bf16 %v503
        %v632 = vunpack.c.l.bf16 %v504
        %v633 = vunpack.c.l.bf16 %v505
        %v634 = vunpack.c.l.bf16 %v506
        %v635 = vunpack.c.l.bf16 %v507
        %v636 = vunpack.c.l.bf16 %v508
        %v637 = vunpack.c.l.bf16 %v509
        %v638 = vunpack.c.l.bf16 %v510
        %v639 = vunpack.c.l.bf16 %v511
        %v640 = vunpack.c.l.bf16 %v512
        %v641 = vunpack.c.l.bf16 %v513
        %v642 = vunpack.c.l.bf16 %v514
        %v643 = vunpack.c.l.bf16 %v515
        %v644 = vunpack.c.l.bf16 %v516
        %v645 = vunpack.c.l.bf16 %v517
        %v646 = vunpack.c.l.bf16 %v518
        %v647 = vunpack.c.l.bf16 %v519
        %v648 = vunpack.c.l.bf16 %v520
        %v649 = vunpack.c.l.bf16 %v521
        %v650 = vunpack.c.l.bf16 %v522
        %v651 = vunpack.c.l.bf16 %v523
        %v652 = vunpack.c.l.bf16 %v524
        %v653 = vunpack.c.l.bf16 %v525
        %v654 = vunpack.c.l.bf16 %v526
        %v655 = vunpack.c.l.bf16 %v527
        %v656 = vunpack.c.l.bf16 %v528
        %v657 = vunpack.c.l.bf16 %v529
        %v658 = vunpack.c.l.bf16 %v530
        %v659 = vunpack.c.l.bf16 %v531
        %v660 = vunpack.c.l.bf16 %v532
        %v661 = vunpack.c.l.bf16 %v533
        %v662 = vunpack.c.l.bf16 %v534
        %v663 = vunpack.c.l.bf16 %v535
        %v664 = vunpack.c.l.bf16 %v536
        %v665 = vunpack.c.l.bf16 %v537
        %v666 = vunpack.c.l.bf16 %v538
        %v667 = vunpack.c.l.bf16 %v539
        %v668 = vunpack.c.l.bf16 %v540
        %v669 = vunpack.c.l.bf16 %v541
        %v670 = vunpack.c.l.bf16 %v542
        %v671 = vunpack.c.l.bf16 %v543
        %v672 = vunpack.c.l.bf16 %v544
        %v673 = vunpack.c.l.bf16 %v545
        %v674 = vunpack.c.l.bf16 %v546
        %v675 = vunpack.c.l.bf16 %v547
        %v676 = vunpack.c.l.bf16 %v548
        %v677 = vunpack.c.l.bf16 %v549
        %v678 = vunpack.c.l.bf16 %v550
        %v679 = vunpack.c.l.bf16 %v551
        %v680 = vunpack.c.l.bf16 %v552
        %v681 = vunpack.c.l.bf16 %v553
        %v682 = vunpack.c.l.bf16 %v554
        %v683 = vunpack.c.l.bf16 %v555
        %v684 = vunpack.c.l.bf16 %v556
        %v685 = vunpack.c.l.bf16 %v557
        %v686 = vunpack.c.l.bf16 %v558
        %v687 = vunpack.c.l.bf16 %v559
        %v688 = vunpack.c.l.bf16 %v560
        %v689 = vunpack.c.l.bf16 %v561
        %v690 = vunpack.c.l.bf16 %v562
        %v691 = vunpack.c.l.bf16 %v563
        %v692 = vunpack.c.l.bf16 %v564
        %v693 = vunpack.c.l.bf16 %v565
        %v694 = vunpack.c.l.bf16 %v566
        %v695 = vunpack.c.l.bf16 %v567
        %v696 = vunpack.c.l.bf16 %v568
        %v697 = vunpack.c.l.bf16 %v569
        %v698 = vunpack.c.l.bf16 %v570
        %v699 = vunpack.c.l.bf16 %v571
        %v700 = vunpack.c.l.bf16 %v572
        %v701 = vunpack.c.l.bf16 %v573
        %v702 = vunpack.c.l.bf16 %v574
        %v703 = vunpack.c.l.bf16 %v575
        %v704 = vunpack.c.l.bf16 %v576
        %v705 = vunpack.c.l.bf16 %v577
        %v706 = vunpack.c.l.bf16 %v578
        %v707 = vunpack.c.l.bf16 %v579
        %v708 = vunpack.c.l.bf16 %v580
        %v709 = vunpack.c.l.bf16 %v581
        %v710 = vunpack.c.l.bf16 %v582
        %v711 = vunpack.c.l.bf16 %v583
        %v712 = vunpack.c.l.bf16 %v584
        %v713 = vunpack.c.l.bf16 %v585
        %v714 = vunpack.c.l.bf16 %v586
        %v715 = vunpack.c.l.bf16 %v587
        %v716 = vunpack.c.l.bf16 %v588
        %v717 = vunpack.c.l.bf16 %v589
        %v718 = vunpack.c.l.bf16 %v590
        %v719 = vunpack.c.l.bf16 %v591
        %v720 = vunpack.c.l.bf16 %v592
        %v721 = vunpack.c.l.bf16 %v593
        %v722 = vunpack.c.l.bf16 %v594
        %v723 = vunpack.c.l.bf16 %v595
        %v724 = vunpack.c.l.bf16 %v596
        %v725 = vunpack.c.l.bf16 %v597
        %v726 = vunpack.c.l.bf16 %v598
        %v727 = vunpack.c.l.bf16 %v599
        %v728 = vunpack.c.l.bf16 %v600
        %v729 = vunpack.c.l.bf16 %v601
        %v730 = vunpack.c.l.bf16 %v602
        %v731 = vunpack.c.l.bf16 %v603
        %v732 = vunpack.c.l.bf16 %v604
        %v733 = vunpack.c.l.bf16 %v605
        %v734 = vunpack.c.l.bf16 %v606
        %v735 = vunpack.c.l.bf16 %v607
        %v736 = vunpack.c.l.bf16 %v608
        %v737 = vunpack.c.l.bf16 %v609
        %v738 = vunpack.c.l.bf16 %v610
        %v739 = vunpack.c.l.bf16 %v611
        %v740 = vunpack.c.l.bf16 %v612
        %v741 = vunpack.c.l.bf16 %v613
        %v742 = vld [vmem:[#allocation2] sm:$0xff]
        %v743 = vld [vmem:[#allocation2 + $0x8] sm:$0xff]
        %v744 = vld [vmem:[#allocation2 + $0x10] sm:$0xff]
        %v745 = vld [vmem:[#allocation2 + $0x18] sm:$0xff]
        %v746 = vld [vmem:[#allocation2 + $0x20] sm:$0xff]
        %v747 = vld [vmem:[#allocation2 + $0x28] sm:$0xff]
        %v748 = vld [vmem:[#allocation2 + $0x30] sm:$0xff]
        %v749 = vld [vmem:[#allocation2 + $0x38] sm:$0xff]
        %v750 = vmul.f32 %v742, 0.03125
        %v751 = vmul.f32 %v743, 0.03125
        %v752 = vmul.f32 %v744, 0.03125
        %v753 = vmul.f32 %v745, 0.03125
        %v754 = vmul.f32 %v746, 0.03125
        %v755 = vmul.f32 %v747, 0.03125
        %v756 = vmul.f32 %v748, 0.03125
        %v757 = vmul.f32 %v749, 0.03125
        %v758 = vld [vmem:[#allocation3] sm:$0xff]
        %v759 = vld [vmem:[#allocation3 + $0x8] sm:$0xff]
        %v760 = vld [vmem:[#allocation3 + $0x10] sm:$0xff]
        %v761 = vld [vmem:[#allocation3 + $0x18] sm:$0xff]
        %v762 = vld [vmem:[#allocation3 + $0x20] sm:$0xff]
        %v763 = vld [vmem:[#allocation3 + $0x28] sm:$0xff]
        %v764 = vld [vmem:[#allocation3 + $0x30] sm:$0xff]
        %v765 = vld [vmem:[#allocation3 + $0x38] sm:$0xff]
        %v766 = vmul.f32 %v758, 0.03125
        %v767 = vmul.f32 %v759, 0.03125
        %v768 = vmul.f32 %v760, 0.03125
        %v769 = vmul.f32 %v761, 0.03125
        %v770 = vmul.f32 %v762, 0.03125
        %v771 = vmul.f32 %v763, 0.03125
        %v772 = vmul.f32 %v764, 0.03125
        %v773 = vmul.f32 %v765, 0.03125
        %v774 = vmul.f32 %v750, %v750
        %v775 = vmul.f32 %v751, %v751
        %v776 = vmul.f32 %v752, %v752
        %v777 = vmul.f32 %v753, %v753
        %v778 = vmul.f32 %v754, %v754
        %v779 = vmul.f32 %v755, %v755
        %v780 = vmul.f32 %v756, %v756
        %v781 = vmul.f32 %v757, %v757
        %v782 = vsub.f32 %v766, %v774
        %v783 = vsub.f32 %v767, %v775
        %v784 = vsub.f32 %v768, %v776
        %v785 = vsub.f32 %v769, %v777
        %v786 = vsub.f32 %v770, %v778
        %v787 = vsub.f32 %v771, %v779
        %v788 = vsub.f32 %v772, %v780
        %v789 = vsub.f32 %v773, %v781
        %v790 = vmax.f32 %v782, 0.0
        %v791 = vmax.f32 %v783, 0.0
        %v792 = vmax.f32 %v784, 0.0
        %v793 = vmax.f32 %v785, 0.0
        %v794 = vmax.f32 %v786, 0.0
        %v795 = vmax.f32 %v787, 0.0
        %v796 = vmax.f32 %v788, 0.0
        %v797 = vmax.f32 %v789, 0.0
        %v798 = vadd.f32 %v790, 1e-05
        %v799 = vadd.f32 %v791, 1e-05
        %v800 = vadd.f32 %v792, 1e-05
        %v801 = vadd.f32 %v793, 1e-05
        %v802 = vadd.f32 %v794, 1e-05
        %v803 = vadd.f32 %v795, 1e-05
        %v804 = vadd.f32 %v796, 1e-05
        %v805 = vadd.f32 %v797, 1e-05
        %v806 = vrsqrt.pop %v798
        %v807 = vrsqrt.pop %v799
        %v808 = vrsqrt.pop %v800
        %v809 = vrsqrt.pop %v801
        %v810 = vrsqrt.pop %v802
        %v811 = vrsqrt.pop %v803
        %v812 = vrsqrt.pop %v804
        %v813 = vrsqrt.pop %v805
        %815 = vset.pattern.permute.xlu0 0
        %816 = vperm.xlu0 %815, %v750
        %v817 = vpop.permute.xlu0 %816
        %820 = vset.pattern.permute.xlu0 0
        %821 = vperm.xlu0 %820, %v751
        %v822 = vpop.permute.xlu0 %821
        %825 = vset.pattern.permute.xlu0 0
        %826 = vperm.xlu0 %825, %v752
        %v827 = vpop.permute.xlu0 %826
        %830 = vset.pattern.permute.xlu0 0
        %831 = vperm.xlu0 %830, %v753
        %v832 = vpop.permute.xlu0 %831
        %835 = vset.pattern.permute.xlu0 0
        %836 = vperm.xlu0 %835, %v754
        %v837 = vpop.permute.xlu0 %836
        %840 = vset.pattern.permute.xlu0 0
        %841 = vperm.xlu0 %840, %v755
        %v842 = vpop.permute.xlu0 %841
        %845 = vset.pattern.permute.xlu0 0
        %846 = vperm.xlu0 %845, %v756
        %v847 = vpop.permute.xlu0 %846
        %850 = vset.pattern.permute.xlu0 0
        %851 = vperm.xlu0 %850, %v757
        %v852 = vpop.permute.xlu0 %851
        %v854 = vsub.f32 %v614, %v817
        %v855 = vsub.f32 %v615, %v822
        %v856 = vsub.f32 %v616, %v827
        %v857 = vsub.f32 %v617, %v832
        %v858 = vsub.f32 %v618, %v837
        %v859 = vsub.f32 %v619, %v842
        %v860 = vsub.f32 %v620, %v847
        %v861 = vsub.f32 %v621, %v852
        %v862 = vsub.f32 %v622, %v817
        %v863 = vsub.f32 %v623, %v822
        %v864 = vsub.f32 %v624, %v827
        %v865 = vsub.f32 %v625, %v832
        %v866 = vsub.f32 %v626, %v837
        %v867 = vsub.f32 %v627, %v842
        %v868 = vsub.f32 %v628, %v847
        %v869 = vsub.f32 %v629, %v852
        %v870 = vsub.f32 %v630, %v817
        %v871 = vsub.f32 %v631, %v822
        %v872 = vsub.f32 %v632, %v827
        %v873 = vsub.f32 %v633, %v832
        %v874 = vsub.f32 %v634, %v837
        %v875 = vsub.f32 %v635, %v842
        %v876 = vsub.f32 %v636, %v847
        %v877 = vsub.f32 %v637, %v852
        %v878 = vsub.f32 %v638, %v817
        %v879 = vsub.f32 %v639, %v822
        %v880 = vsub.f32 %v640, %v827
        %v881 = vsub.f32 %v641, %v832
        %v882 = vsub.f32 %v642, %v837
        %v883 = vsub.f32 %v643, %v842
        %v884 = vsub.f32 %v644, %v847
        %v885 = vsub.f32 %v645, %v852
        %v886 = vsub.f32 %v646, %v817
        %v887 = vsub.f32 %v647, %v822
        %v888 = vsub.f32 %v648, %v827
        %v889 = vsub.f32 %v649, %v832
        %v890 = vsub.f32 %v650, %v837
        %v891 = vsub.f32 %v651, %v842
        %v892 = vsub.f32 %v652, %v847
        %v893 = vsub.f32 %v653, %v852
        %v894 = vsub.f32 %v654, %v817
        %v895 = vsub.f32 %v655, %v822
        %v896 = vsub.f32 %v656, %v827
        %v897 = vsub.f32 %v657, %v832
        %v898 = vsub.f32 %v658, %v837
        %v899 = vsub.f32 %v659, %v842
        %v900 = vsub.f32 %v660, %v847
        %v901 = vsub.f32 %v661, %v852
        %v902 = vsub.f32 %v662, %v817
        %v903 = vsub.f32 %v663, %v822
        %v904 = vsub.f32 %v664, %v827
        %v905 = vsub.f32 %v665, %v832
        %v906 = vsub.f32 %v666, %v837
        %v907 = vsub.f32 %v667, %v842
        %v908 = vsub.f32 %v668, %v847
        %v909 = vsub.f32 %v669, %v852
        %v910 = vsub.f32 %v670, %v817
        %v911 = vsub.f32 %v671, %v822
        %v912 = vsub.f32 %v672, %v827
        %v913 = vsub.f32 %v673, %v832
        %v914 = vsub.f32 %v674, %v837
        %v915 = vsub.f32 %v675, %v842
        %v916 = vsub.f32 %v676, %v847
        %v917 = vsub.f32 %v677, %v852
        %v918 = vsub.f32 %v678, %v817
        %v919 = vsub.f32 %v679, %v822
        %v920 = vsub.f32 %v680, %v827
        %v921 = vsub.f32 %v681, %v832
        %v922 = vsub.f32 %v682, %v837
        %v923 = vsub.f32 %v683, %v842
        %v924 = vsub.f32 %v684, %v847
        %v925 = vsub.f32 %v685, %v852
        %v926 = vsub.f32 %v686, %v817
        %v927 = vsub.f32 %v687, %v822
        %v928 = vsub.f32 %v688, %v827
        %v929 = vsub.f32 %v689, %v832
        %v930 = vsub.f32 %v690, %v837
        %v931 = vsub.f32 %v691, %v842
        %v932 = vsub.f32 %v692, %v847
        %v933 = vsub.f32 %v693, %v852
        %v934 = vsub.f32 %v694, %v817
        %v935 = vsub.f32 %v695, %v822
        %v936 = vsub.f32 %v696, %v827
        %v937 = vsub.f32 %v697, %v832
        %v938 = vsub.f32 %v698, %v837
        %v939 = vsub.f32 %v699, %v842
        %v940 = vsub.f32 %v700, %v847
        %v941 = vsub.f32 %v701, %v852
        %v942 = vsub.f32 %v702, %v817
        %v943 = vsub.f32 %v703, %v822
        %v944 = vsub.f32 %v704, %v827
        %v945 = vsub.f32 %v705, %v832
        %v946 = vsub.f32 %v706, %v837
        %v947 = vsub.f32 %v707, %v842
        %v948 = vsub.f32 %v708, %v847
        %v949 = vsub.f32 %v709, %v852
        %v950 = vsub.f32 %v710, %v817
        %v951 = vsub.f32 %v711, %v822
        %v952 = vsub.f32 %v712, %v827
        %v953 = vsub.f32 %v713, %v832
        %v954 = vsub.f32 %v714, %v837
        %v955 = vsub.f32 %v715, %v842
        %v956 = vsub.f32 %v716, %v847
        %v957 = vsub.f32 %v717, %v852
        %v958 = vsub.f32 %v718, %v817
        %v959 = vsub.f32 %v719, %v822
        %v960 = vsub.f32 %v720, %v827
        %v961 = vsub.f32 %v721, %v832
        %v962 = vsub.f32 %v722, %v837
        %v963 = vsub.f32 %v723, %v842
        %v964 = vsub.f32 %v724, %v847
        %v965 = vsub.f32 %v725, %v852
        %v966 = vsub.f32 %v726, %v817
        %v967 = vsub.f32 %v727, %v822
        %v968 = vsub.f32 %v728, %v827
        %v969 = vsub.f32 %v729, %v832
        %v970 = vsub.f32 %v730, %v837
        %v971 = vsub.f32 %v731, %v842
        %v972 = vsub.f32 %v732, %v847
        %v973 = vsub.f32 %v733, %v852
        %v974 = vsub.f32 %v734, %v817
        %v975 = vsub.f32 %v735, %v822
        %v976 = vsub.f32 %v736, %v827
        %v977 = vsub.f32 %v737, %v832
        %v978 = vsub.f32 %v738, %v837
        %v979 = vsub.f32 %v739, %v842
        %v980 = vsub.f32 %v740, %v847
        %v981 = vsub.f32 %v741, %v852
        %983 = vset.pattern.permute.xlu0 0
        %984 = vperm.xlu0 %983, %v806
        %v985 = vpop.permute.xlu0 %984
        %988 = vset.pattern.permute.xlu0 0
        %989 = vperm.xlu0 %988, %v807
        %v990 = vpop.permute.xlu0 %989
        %993 = vset.pattern.permute.xlu0 0
        %994 = vperm.xlu0 %993, %v808
        %v995 = vpop.permute.xlu0 %994
        %998 = vset.pattern.permute.xlu0 0
        %999 = vperm.xlu0 %998, %v809
        %v1000 = vpop.permute.xlu0 %999
        %1003 = vset.pattern.permute.xlu0 0
        %1004 = vperm.xlu0 %1003, %v810
        %v1005 = vpop.permute.xlu0 %1004
        %1008 = vset.pattern.permute.xlu0 0
        %1009 = vperm.xlu0 %1008, %v811
        %v1010 = vpop.permute.xlu0 %1009
        %1013 = vset.pattern.permute.xlu0 0
        %1014 = vperm.xlu0 %1013, %v812
        %v1015 = vpop.permute.xlu0 %1014
        %1018 = vset.pattern.permute.xlu0 0
        %1019 = vperm.xlu0 %1018, %v813
        %v1020 = vpop.permute.xlu0 %1019
        %v1022 = vmul.f32 %v854, %v985
        %v1023 = vmul.f32 %v855, %v990
        %v1024 = vmul.f32 %v856, %v995
        %v1025 = vmul.f32 %v857, %v1000
        %v1026 = vmul.f32 %v858, %v1005
        %v1027 = vmul.f32 %v859, %v1010
        %v1028 = vmul.f32 %v860, %v1015
        %v1029 = vmul.f32 %v861, %v1020
        %v1030 = vmul.f32 %v862, %v985
        %v1031 = vmul.f32 %v863, %v990
        %v1032 = vmul.f32 %v864, %v995
        %v1033 = vmul.f32 %v865, %v1000
        %v1034 = vmul.f32 %v866, %v1005
        %v1035 = vmul.f32 %v867, %v1010
        %v1036 = vmul.f32 %v868, %v1015
        %v1037 = vmul.f32 %v869, %v1020
        %v1038 = vmul.f32 %v870, %v985
        %v1039 = vmul.f32 %v871, %v990
        %v1040 = vmul.f32 %v872, %v995
        %v1041 = vmul.f32 %v873, %v1000
        %v1042 = vmul.f32 %v874, %v1005
        %v1043 = vmul.f32 %v875, %v1010
        %v1044 = vmul.f32 %v876, %v1015
        %v1045 = vmul.f32 %v877, %v1020
        %v1046 = vmul.f32 %v878, %v985
        %v1047 = vmul.f32 %v879, %v990
        %v1048 = vmul.f32 %v880, %v995
        %v1049 = vmul.f32 %v881, %v1000
        %v1050 = vmul.f32 %v882, %v1005
        %v1051 = vmul.f32 %v883, %v1010
        %v1052 = vmul.f32 %v884, %v1015
        %v1053 = vmul.f32 %v885, %v1020
        %v1054 = vmul.f32 %v886, %v985
        %v1055 = vmul.f32 %v887, %v990
        %v1056 = vmul.f32 %v888, %v995
        %v1057 = vmul.f32 %v889, %v1000
        %v1058 = vmul.f32 %v890, %v1005
        %v1059 = vmul.f32 %v891, %v1010
        %v1060 = vmul.f32 %v892, %v1015
        %v1061 = vmul.f32 %v893, %v1020
        %v1062 = vmul.f32 %v894, %v985
        %v1063 = vmul.f32 %v895, %v990
        %v1064 = vmul.f32 %v896, %v995
        %v1065 = vmul.f32 %v897, %v1000
        %v1066 = vmul.f32 %v898, %v1005
        %v1067 = vmul.f32 %v899, %v1010
        %v1068 = vmul.f32 %v900, %v1015
        %v1069 = vmul.f32 %v901, %v1020
        %v1070 = vmul.f32 %v902, %v985
        %v1071 = vmul.f32 %v903, %v990
        %v1072 = vmul.f32 %v904, %v995
        %v1073 = vmul.f32 %v905, %v1000
        %v1074 = vmul.f32 %v906, %v1005
        %v1075 = vmul.f32 %v907, %v1010
        %v1076 = vmul.f32 %v908, %v1015
        %v1077 = vmul.f32 %v909, %v1020
        %v1078 = vmul.f32 %v910, %v985
        %v1079 = vmul.f32 %v911, %v990
        %v1080 = vmul.f32 %v912, %v995
        %v1081 = vmul.f32 %v913, %v1000
        %v1082 = vmul.f32 %v914, %v1005
        %v1083 = vmul.f32 %v915, %v1010
        %v1084 = vmul.f32 %v916, %v1015
        %v1085 = vmul.f32 %v917, %v1020
        %v1086 = vmul.f32 %v918, %v985
        %v1087 = vmul.f32 %v919, %v990
        %v1088 = vmul.f32 %v920, %v995
        %v1089 = vmul.f32 %v921, %v1000
        %v1090 = vmul.f32 %v922, %v1005
        %v1091 = vmul.f32 %v923, %v1010
        %v1092 = vmul.f32 %v924, %v1015
        %v1093 = vmul.f32 %v925, %v1020
        %v1094 = vmul.f32 %v926, %v985
        %v1095 = vmul.f32 %v927, %v990
        %v1096 = vmul.f32 %v928, %v995
        %v1097 = vmul.f32 %v929, %v1000
        %v1098 = vmul.f32 %v930, %v1005
        %v1099 = vmul.f32 %v931, %v1010
        %v1100 = vmul.f32 %v932, %v1015
        %v1101 = vmul.f32 %v933, %v1020
        %v1102 = vmul.f32 %v934, %v985
        %v1103 = vmul.f32 %v935, %v990
        %v1104 = vmul.f32 %v936, %v995
        %v1105 = vmul.f32 %v937, %v1000
        %v1106 = vmul.f32 %v938, %v1005
        %v1107 = vmul.f32 %v939, %v1010
        %v1108 = vmul.f32 %v940, %v1015
        %v1109 = vmul.f32 %v941, %v1020
        %v1110 = vmul.f32 %v942, %v985
        %v1111 = vmul.f32 %v943, %v990
        %v1112 = vmul.f32 %v944, %v995
        %v1113 = vmul.f32 %v945, %v1000
        %v1114 = vmul.f32 %v946, %v1005
        %v1115 = vmul.f32 %v947, %v1010
        %v1116 = vmul.f32 %v948, %v1015
        %v1117 = vmul.f32 %v949, %v1020
        %v1118 = vmul.f32 %v950, %v985
        %v1119 = vmul.f32 %v951, %v990
        %v1120 = vmul.f32 %v952, %v995
        %v1121 = vmul.f32 %v953, %v1000
        %v1122 = vmul.f32 %v954, %v1005
        %v1123 = vmul.f32 %v955, %v1010
        %v1124 = vmul.f32 %v956, %v1015
        %v1125 = vmul.f32 %v957, %v1020
        %v1126 = vmul.f32 %v958, %v985
        %v1127 = vmul.f32 %v959, %v990
        %v1128 = vmul.f32 %v960, %v995
        %v1129 = vmul.f32 %v961, %v1000
        %v1130 = vmul.f32 %v962, %v1005
        %v1131 = vmul.f32 %v963, %v1010
        %v1132 = vmul.f32 %v964, %v1015
        %v1133 = vmul.f32 %v965, %v1020
        %v1134 = vmul.f32 %v966, %v985
        %v1135 = vmul.f32 %v967, %v990
        %v1136 = vmul.f32 %v968, %v995
        %v1137 = vmul.f32 %v969, %v1000
        %v1138 = vmul.f32 %v970, %v1005
        %v1139 = vmul.f32 %v971, %v1010
        %v1140 = vmul.f32 %v972, %v1015
        %v1141 = vmul.f32 %v973, %v1020
        %v1142 = vmul.f32 %v974, %v985
        %v1143 = vmul.f32 %v975, %v990
        %v1144 = vmul.f32 %v976, %v995
        %v1145 = vmul.f32 %v977, %v1000
        %v1146 = vmul.f32 %v978, %v1005
        %v1147 = vmul.f32 %v979, %v1010
        %v1148 = vmul.f32 %v980, %v1015
        %v1149 = vmul.f32 %v981, %v1020
        %v1150 = vmax.f32 %v1022, 0.0
        %v1151 = vmax.f32 %v1023, 0.0
        %v1152 = vmax.f32 %v1024, 0.0
        %v1153 = vmax.f32 %v1025, 0.0
        %v1154 = vmax.f32 %v1026, 0.0
        %v1155 = vmax.f32 %v1027, 0.0
        %v1156 = vmax.f32 %v1028, 0.0
        %v1157 = vmax.f32 %v1029, 0.0
        %v1158 = vmax.f32 %v1030, 0.0
        %v1159 = vmax.f32 %v1031, 0.0
        %v1160 = vmax.f32 %v1032, 0.0
        %v1161 = vmax.f32 %v1033, 0.0
        %v1162 = vmax.f32 %v1034, 0.0
        %v1163 = vmax.f32 %v1035, 0.0
        %v1164 = vmax.f32 %v1036, 0.0
        %v1165 = vmax.f32 %v1037, 0.0
        %v1166 = vmax.f32 %v1038, 0.0
        %v1167 = vmax.f32 %v1039, 0.0
        %v1168 = vmax.f32 %v1040, 0.0
        %v1169 = vmax.f32 %v1041, 0.0
        %v1170 = vmax.f32 %v1042, 0.0
        %v1171 = vmax.f32 %v1043, 0.0
        %v1172 = vmax.f32 %v1044, 0.0
        %v1173 = vmax.f32 %v1045, 0.0
        %v1174 = vmax.f32 %v1046, 0.0
        %v1175 = vmax.f32 %v1047, 0.0
        %v1176 = vmax.f32 %v1048, 0.0
        %v1177 = vmax.f32 %v1049, 0.0
        %v1178 = vmax.f32 %v1050, 0.0
        %v1179 = vmax.f32 %v1051, 0.0
        %v1180 = vmax.f32 %v1052, 0.0
        %v1181 = vmax.f32 %v1053, 0.0
        %v1182 = vmax.f32 %v1054, 0.0
        %v1183 = vmax.f32 %v1055, 0.0
        %v1184 = vmax.f32 %v1056, 0.0
        %v1185 = vmax.f32 %v1057, 0.0
        %v1186 = vmax.f32 %v1058, 0.0
        %v1187 = vmax.f32 %v1059, 0.0
        %v1188 = vmax.f32 %v1060, 0.0
        %v1189 = vmax.f32 %v1061, 0.0
        %v1190 = vmax.f32 %v1062, 0.0
        %v1191 = vmax.f32 %v1063, 0.0
        %v1192 = vmax.f32 %v1064, 0.0
        %v1193 = vmax.f32 %v1065, 0.0
        %v1194 = vmax.f32 %v1066, 0.0
        %v1195 = vmax.f32 %v1067, 0.0
        %v1196 = vmax.f32 %v1068, 0.0
        %v1197 = vmax.f32 %v1069, 0.0
        %v1198 = vmax.f32 %v1070, 0.0
        %v1199 = vmax.f32 %v1071, 0.0
        %v1200 = vmax.f32 %v1072, 0.0
        %v1201 = vmax.f32 %v1073, 0.0
        %v1202 = vmax.f32 %v1074, 0.0
        %v1203 = vmax.f32 %v1075, 0.0
        %v1204 = vmax.f32 %v1076, 0.0
        %v1205 = vmax.f32 %v1077, 0.0
        %v1206 = vmax.f32 %v1078, 0.0
        %v1207 = vmax.f32 %v1079, 0.0
        %v1208 = vmax.f32 %v1080, 0.0
        %v1209 = vmax.f32 %v1081, 0.0
        %v1210 = vmax.f32 %v1082, 0.0
        %v1211 = vmax.f32 %v1083, 0.0
        %v1212 = vmax.f32 %v1084, 0.0
        %v1213 = vmax.f32 %v1085, 0.0
        %v1214 = vmax.f32 %v1086, 0.0
        %v1215 = vmax.f32 %v1087, 0.0
        %v1216 = vmax.f32 %v1088, 0.0
        %v1217 = vmax.f32 %v1089, 0.0
        %v1218 = vmax.f32 %v1090, 0.0
        %v1219 = vmax.f32 %v1091, 0.0
        %v1220 = vmax.f32 %v1092, 0.0
        %v1221 = vmax.f32 %v1093, 0.0
        %v1222 = vmax.f32 %v1094, 0.0
        %v1223 = vmax.f32 %v1095, 0.0
        %v1224 = vmax.f32 %v1096, 0.0
        %v1225 = vmax.f32 %v1097, 0.0
        %v1226 = vmax.f32 %v1098, 0.0
        %v1227 = vmax.f32 %v1099, 0.0
        %v1228 = vmax.f32 %v1100, 0.0
        %v1229 = vmax.f32 %v1101, 0.0
        %v1230 = vmax.f32 %v1102, 0.0
        %v1231 = vmax.f32 %v1103, 0.0
        %v1232 = vmax.f32 %v1104, 0.0
        %v1233 = vmax.f32 %v1105, 0.0
        %v1234 = vmax.f32 %v1106, 0.0
        %v1235 = vmax.f32 %v1107, 0.0
        %v1236 = vmax.f32 %v1108, 0.0
        %v1237 = vmax.f32 %v1109, 0.0
        %v1238 = vmax.f32 %v1110, 0.0
        %v1239 = vmax.f32 %v1111, 0.0
        %v1240 = vmax.f32 %v1112, 0.0
        %v1241 = vmax.f32 %v1113, 0.0
        %v1242 = vmax.f32 %v1114, 0.0
        %v1243 = vmax.f32 %v1115, 0.0
        %v1244 = vmax.f32 %v1116, 0.0
        %v1245 = vmax.f32 %v1117, 0.0
        %v1246 = vmax.f32 %v1118, 0.0
        %v1247 = vmax.f32 %v1119, 0.0
        %v1248 = vmax.f32 %v1120, 0.0
        %v1249 = vmax.f32 %v1121, 0.0
        %v1250 = vmax.f32 %v1122, 0.0
        %v1251 = vmax.f32 %v1123, 0.0
        %v1252 = vmax.f32 %v1124, 0.0
        %v1253 = vmax.f32 %v1125, 0.0
        %v1254 = vmax.f32 %v1126, 0.0
        %v1255 = vmax.f32 %v1127, 0.0
        %v1256 = vmax.f32 %v1128, 0.0
        %v1257 = vmax.f32 %v1129, 0.0
        %v1258 = vmax.f32 %v1130, 0.0
        %v1259 = vmax.f32 %v1131, 0.0
        %v1260 = vmax.f32 %v1132, 0.0
        %v1261 = vmax.f32 %v1133, 0.0
        %v1262 = vmax.f32 %v1134, 0.0
        %v1263 = vmax.f32 %v1135, 0.0
        %v1264 = vmax.f32 %v1136, 0.0
        %v1265 = vmax.f32 %v1137, 0.0
        %v1266 = vmax.f32 %v1138, 0.0
        %v1267 = vmax.f32 %v1139, 0.0
        %v1268 = vmax.f32 %v1140, 0.0
        %v1269 = vmax.f32 %v1141, 0.0
        %v1270 = vmax.f32 %v1142, 0.0
        %v1271 = vmax.f32 %v1143, 0.0
        %v1272 = vmax.f32 %v1144, 0.0
        %v1273 = vmax.f32 %v1145, 0.0
        %v1274 = vmax.f32 %v1146, 0.0
        %v1275 = vmax.f32 %v1147, 0.0
        %v1276 = vmax.f32 %v1148, 0.0
        %v1277 = vmax.f32 %v1149, 0.0
        %v1278 = vpack.c.bf16 %v1151, %v1150
        %v1279 = vpack.c.bf16 %v1153, %v1152
        %v1280 = vpack.c.bf16 %v1155, %v1154
        %v1281 = vpack.c.bf16 %v1157, %v1156
        %v1282 = vpack.c.bf16 %v1159, %v1158
        %v1283 = vpack.c.bf16 %v1161, %v1160
        %v1284 = vpack.c.bf16 %v1163, %v1162
        %v1285 = vpack.c.bf16 %v1165, %v1164
        %v1286 = vpack.c.bf16 %v1167, %v1166
        %v1287 = vpack.c.bf16 %v1169, %v1168
        %v1288 = vpack.c.bf16 %v1171, %v1170
        %v1289 = vpack.c.bf16 %v1173, %v1172
        %v1290 = vpack.c.bf16 %v1175, %v1174
        %v1291 = vpack.c.bf16 %v1177, %v1176
        %v1292 = vpack.c.bf16 %v1179, %v1178
        %v1293 = vpack.c.bf16 %v1181, %v1180
        %v1294 = vpack.c.bf16 %v1183, %v1182
        %v1295 = vpack.c.bf16 %v1185, %v1184
        %v1296 = vpack.c.bf16 %v1187, %v1186
        %v1297 = vpack.c.bf16 %v1189, %v1188
        %v1298 = vpack.c.bf16 %v1191, %v1190
        %v1299 = vpack.c.bf16 %v1193, %v1192
        %v1300 = vpack.c.bf16 %v1195, %v1194
        %v1301 = vpack.c.bf16 %v1197, %v1196
        %v1302 = vpack.c.bf16 %v1199, %v1198
        %v1303 = vpack.c.bf16 %v1201, %v1200
        %v1304 = vpack.c.bf16 %v1203, %v1202
        %v1305 = vpack.c.bf16 %v1205, %v1204
        %v1306 = vpack.c.bf16 %v1207, %v1206
        %v1307 = vpack.c.bf16 %v1209, %v1208
        %v1308 = vpack.c.bf16 %v1211, %v1210
        %v1309 = vpack.c.bf16 %v1213, %v1212
        %v1310 = vpack.c.bf16 %v1215, %v1214
        %v1311 = vpack.c.bf16 %v1217, %v1216
        %v1312 = vpack.c.bf16 %v1219, %v1218
        %v1313 = vpack.c.bf16 %v1221, %v1220
        %v1314 = vpack.c.bf16 %v1223, %v1222
        %v1315 = vpack.c.bf16 %v1225, %v1224
        %v1316 = vpack.c.bf16 %v1227, %v1226
        %v1317 = vpack.c.bf16 %v1229, %v1228
        %v1318 = vpack.c.bf16 %v1231, %v1230
        %v1319 = vpack.c.bf16 %v1233, %v1232
        %v1320 = vpack.c.bf16 %v1235, %v1234
        %v1321 = vpack.c.bf16 %v1237, %v1236
        %v1322 = vpack.c.bf16 %v1239, %v1238
        %v1323 = vpack.c.bf16 %v1241, %v1240
        %v1324 = vpack.c.bf16 %v1243, %v1242
        %v1325 = vpack.c.bf16 %v1245, %v1244
        %v1326 = vpack.c.bf16 %v1247, %v1246
        %v1327 = vpack.c.bf16 %v1249, %v1248
        %v1328 = vpack.c.bf16 %v1251, %v1250
        %v1329 = vpack.c.bf16 %v1253, %v1252
        %v1330 = vpack.c.bf16 %v1255, %v1254
        %v1331 = vpack.c.bf16 %v1257, %v1256
        %v1332 = vpack.c.bf16 %v1259, %v1258
        %v1333 = vpack.c.bf16 %v1261, %v1260
        %v1334 = vpack.c.bf16 %v1263, %v1262
        %v1335 = vpack.c.bf16 %v1265, %v1264
        %v1336 = vpack.c.bf16 %v1267, %v1266
        %v1337 = vpack.c.bf16 %v1269, %v1268
        %v1338 = vpack.c.bf16 %v1271, %v1270
        %v1339 = vpack.c.bf16 %v1273, %v1272
        %v1340 = vpack.c.bf16 %v1275, %v1274
        %v1341 = vpack.c.bf16 %v1277, %v1276
        %v1406 = vunpack.c.l.b16 %v1278
        %v1407 = vunpack.c.h.b16 %v1278
        %v1408 = vunpack.c.l.b16 %v1279
        %v1409 = vunpack.c.h.b16 %v1279
        %v1410 = vunpack.c.l.b16 %v1280
        %v1411 = vunpack.c.h.b16 %v1280
        %v1412 = vunpack.c.l.b16 %v1281
        %v1413 = vunpack.c.h.b16 %v1281
        %v1414 = vunpack.c.l.b16 %v1282
        %v1415 = vunpack.c.h.b16 %v1282
        %v1416 = vunpack.c.l.b16 %v1283
        %v1417 = vunpack.c.h.b16 %v1283
        %v1418 = vunpack.c.l.b16 %v1284
        %v1419 = vunpack.c.h.b16 %v1284
        %v1420 = vunpack.c.l.b16 %v1285
        %v1421 = vunpack.c.h.b16 %v1285
        %v1422 = vunpack.c.l.b16 %v1286
        %v1423 = vunpack.c.h.b16 %v1286
        %v1424 = vunpack.c.l.b16 %v1287
        %v1425 = vunpack.c.h.b16 %v1287
        %v1426 = vunpack.c.l.b16 %v1288
        %v1427 = vunpack.c.h.b16 %v1288
        %v1428 = vunpack.c.l.b16 %v1289
        %v1429 = vunpack.c.h.b16 %v1289
        %v1430 = vunpack.c.l.b16 %v1290
        %v1431 = vunpack.c.h.b16 %v1290
        %v1432 = vunpack.c.l.b16 %v1291
        %v1433 = vunpack.c.h.b16 %v1291
        %v1434 = vunpack.c.l.b16 %v1292
        %v1435 = vunpack.c.h.b16 %v1292
        %v1436 = vunpack.c.l.b16 %v1293
        %v1437 = vunpack.c.h.b16 %v1293
        %v1438 = vunpack.c.l.b16 %v1294
        %v1439 = vunpack.c.h.b16 %v1294
        %v1440 = vunpack.c.l.b16 %v1295
        %v1441 = vunpack.c.h.b16 %v1295
        %v1442 = vunpack.c.l.b16 %v1296
        %v1443 = vunpack.c.h.b16 %v1296
        %v1444 = vunpack.c.l.b16 %v1297
        %v1445 = vunpack.c.h.b16 %v1297
        %v1446 = vunpack.c.l.b16 %v1298
        %v1447 = vunpack.c.h.b16 %v1298
        %v1448 = vunpack.c.l.b16 %v1299
        %v1449 = vunpack.c.h.b16 %v1299
        %v1450 = vunpack.c.l.b16 %v1300
        %v1451 = vunpack.c.h.b16 %v1300
        %v1452 = vunpack.c.l.b16 %v1301
        %v1453 = vunpack.c.h.b16 %v1301
        %v1454 = vunpack.c.l.b16 %v1302
        %v1455 = vunpack.c.h.b16 %v1302
        %v1456 = vunpack.c.l.b16 %v1303
        %v1457 = vunpack.c.h.b16 %v1303
        %v1458 = vunpack.c.l.b16 %v1304
        %v1459 = vunpack.c.h.b16 %v1304
        %v1460 = vunpack.c.l.b16 %v1305
        %v1461 = vunpack.c.h.b16 %v1305
        %v1462 = vunpack.c.l.b16 %v1306
        %v1463 = vunpack.c.h.b16 %v1306
        %v1464 = vunpack.c.l.b16 %v1307
        %v1465 = vunpack.c.h.b16 %v1307
        %v1466 = vunpack.c.l.b16 %v1308
        %v1467 = vunpack.c.h.b16 %v1308
        %v1468 = vunpack.c.l.b16 %v1309
        %v1469 = vunpack.c.h.b16 %v1309
        %v1470 = vunpack.c.l.b16 %v1310
        %v1471 = vunpack.c.h.b16 %v1310
        %v1472 = vunpack.c.l.b16 %v1311
        %v1473 = vunpack.c.h.b16 %v1311
        %v1474 = vunpack.c.l.b16 %v1312
        %v1475 = vunpack.c.h.b16 %v1312
        %v1476 = vunpack.c.l.b16 %v1313
        %v1477 = vunpack.c.h.b16 %v1313
        %v1478 = vunpack.c.l.b16 %v1314
        %v1479 = vunpack.c.h.b16 %v1314
        %v1480 = vunpack.c.l.b16 %v1315
        %v1481 = vunpack.c.h.b16 %v1315
        %v1482 = vunpack.c.l.b16 %v1316
        %v1483 = vunpack.c.h.b16 %v1316
        %v1484 = vunpack.c.l.b16 %v1317
        %v1485 = vunpack.c.h.b16 %v1317
        %v1486 = vunpack.c.l.b16 %v1318
        %v1487 = vunpack.c.h.b16 %v1318
        %v1488 = vunpack.c.l.b16 %v1319
        %v1489 = vunpack.c.h.b16 %v1319
        %v1490 = vunpack.c.l.b16 %v1320
        %v1491 = vunpack.c.h.b16 %v1320
        %v1492 = vunpack.c.l.b16 %v1321
        %v1493 = vunpack.c.h.b16 %v1321
        %v1494 = vunpack.c.l.b16 %v1322
        %v1495 = vunpack.c.h.b16 %v1322
        %v1496 = vunpack.c.l.b16 %v1323
        %v1497 = vunpack.c.h.b16 %v1323
        %v1498 = vunpack.c.l.b16 %v1324
        %v1499 = vunpack.c.h.b16 %v1324
        %v1500 = vunpack.c.l.b16 %v1325
        %v1501 = vunpack.c.h.b16 %v1325
        %v1502 = vunpack.c.l.b16 %v1326
        %v1503 = vunpack.c.h.b16 %v1326
        %v1504 = vunpack.c.l.b16 %v1327
        %v1505 = vunpack.c.h.b16 %v1327
        %v1506 = vunpack.c.l.b16 %v1328
        %v1507 = vunpack.c.h.b16 %v1328
        %v1508 = vunpack.c.l.b16 %v1329
        %v1509 = vunpack.c.h.b16 %v1329
        %v1510 = vunpack.c.l.b16 %v1330
        %v1511 = vunpack.c.h.b16 %v1330
        %v1512 = vunpack.c.l.b16 %v1331
        %v1513 = vunpack.c.h.b16 %v1331
        %v1514 = vunpack.c.l.b16 %v1332
        %v1515 = vunpack.c.h.b16 %v1332
        %v1516 = vunpack.c.l.b16 %v1333
        %v1517 = vunpack.c.h.b16 %v1333
        %v1518 = vunpack.c.l.b16 %v1334
        %v1519 = vunpack.c.h.b16 %v1334
        %v1520 = vunpack.c.l.b16 %v1335
        %v1521 = vunpack.c.h.b16 %v1335
        %v1522 = vunpack.c.l.b16 %v1336
        %v1523 = vunpack.c.h.b16 %v1336
        %v1524 = vunpack.c.l.b16 %v1337
        %v1525 = vunpack.c.h.b16 %v1337
        %v1526 = vunpack.c.l.b16 %v1338
        %v1527 = vunpack.c.h.b16 %v1338
        %v1528 = vunpack.c.l.b16 %v1339
        %v1529 = vunpack.c.h.b16 %v1339
        %v1530 = vunpack.c.l.b16 %v1340
        %v1531 = vunpack.c.h.b16 %v1340
        %v1532 = vunpack.c.l.b16 %v1341
        %v1533 = vunpack.c.h.b16 %v1341
        %v1534 = vpack.c.b16 %v1406, %v1406
        %v1535 = vpack.c.b16 %v1407, %v1407
        %v1536 = vpack.c.b16 %v1408, %v1408
        %v1537 = vpack.c.b16 %v1409, %v1409
        %v1538 = vpack.c.b16 %v1410, %v1410
        %v1539 = vpack.c.b16 %v1411, %v1411
        %v1540 = vpack.c.b16 %v1412, %v1412
        %v1541 = vpack.c.b16 %v1413, %v1413
        %v1542 = vpack.c.b16 %v1414, %v1414
        %v1543 = vpack.c.b16 %v1415, %v1415
        %v1544 = vpack.c.b16 %v1416, %v1416
        %v1545 = vpack.c.b16 %v1417, %v1417
        %v1546 = vpack.c.b16 %v1418, %v1418
        %v1547 = vpack.c.b16 %v1419, %v1419
        %v1548 = vpack.c.b16 %v1420, %v1420
        %v1549 = vpack.c.b16 %v1421, %v1421
        %v1550 = vpack.c.b16 %v1422, %v1422
        %v1551 = vpack.c.b16 %v1423, %v1423
        %v1552 = vpack.c.b16 %v1424, %v1424
        %v1553 = vpack.c.b16 %v1425, %v1425
        %v1554 = vpack.c.b16 %v1426, %v1426
        %v1555 = vpack.c.b16 %v1427, %v1427
        %v1556 = vpack.c.b16 %v1428, %v1428
        %v1557 = vpack.c.b16 %v1429, %v1429
        %v1558 = vpack.c.b16 %v1430, %v1430
        %v1559 = vpack.c.b16 %v1431, %v1431
        %v1560 = vpack.c.b16 %v1432, %v1432
        %v1561 = vpack.c.b16 %v1433, %v1433
        %v1562 = vpack.c.b16 %v1434, %v1434
        %v1563 = vpack.c.b16 %v1435, %v1435
        %v1564 = vpack.c.b16 %v1436, %v1436
        %v1565 = vpack.c.b16 %v1437, %v1437
        %v1566 = vpack.c.b16 %v1438, %v1438
        %v1567 = vpack.c.b16 %v1439, %v1439
        %v1568 = vpack.c.b16 %v1440, %v1440
        %v1569 = vpack.c.b16 %v1441, %v1441
        %v1570 = vpack.c.b16 %v1442, %v1442
        %v1571 = vpack.c.b16 %v1443, %v1443
        %v1572 = vpack.c.b16 %v1444, %v1444
        %v1573 = vpack.c.b16 %v1445, %v1445
        %v1574 = vpack.c.b16 %v1446, %v1446
        %v1575 = vpack.c.b16 %v1447, %v1447
        %v1576 = vpack.c.b16 %v1448, %v1448
        %v1577 = vpack.c.b16 %v1449, %v1449
        %v1578 = vpack.c.b16 %v1450, %v1450
        %v1579 = vpack.c.b16 %v1451, %v1451
        %v1580 = vpack.c.b16 %v1452, %v1452
        %v1581 = vpack.c.b16 %v1453, %v1453
        %v1582 = vpack.c.b16 %v1454, %v1454
        %v1583 = vpack.c.b16 %v1455, %v1455
        %v1584 = vpack.c.b16 %v1456, %v1456
        %v1585 = vpack.c.b16 %v1457, %v1457
        %v1586 = vpack.c.b16 %v1458, %v1458
        %v1587 = vpack.c.b16 %v1459, %v1459
        %v1588 = vpack.c.b16 %v1460, %v1460
        %v1589 = vpack.c.b16 %v1461, %v1461
        %v1590 = vpack.c.b16 %v1462, %v1462
        %v1591 = vpack.c.b16 %v1463, %v1463
        %v1592 = vpack.c.b16 %v1464, %v1464
        %v1593 = vpack.c.b16 %v1465, %v1465
        %v1594 = vpack.c.b16 %v1466, %v1466
        %v1595 = vpack.c.b16 %v1467, %v1467
        %v1596 = vpack.c.b16 %v1468, %v1468
        %v1597 = vpack.c.b16 %v1469, %v1469
        %v1598 = vpack.c.b16 %v1470, %v1470
        %v1599 = vpack.c.b16 %v1471, %v1471
        %v1600 = vpack.c.b16 %v1472, %v1472
        %v1601 = vpack.c.b16 %v1473, %v1473
        %v1602 = vpack.c.b16 %v1474, %v1474
        %v1603 = vpack.c.b16 %v1475, %v1475
        %v1604 = vpack.c.b16 %v1476, %v1476
        %v1605 = vpack.c.b16 %v1477, %v1477
        %v1606 = vpack.c.b16 %v1478, %v1478
        %v1607 = vpack.c.b16 %v1479, %v1479
        %v1608 = vpack.c.b16 %v1480, %v1480
        %v1609 = vpack.c.b16 %v1481, %v1481
        %v1610 = vpack.c.b16 %v1482, %v1482
        %v1611 = vpack.c.b16 %v1483, %v1483
        %v1612 = vpack.c.b16 %v1484, %v1484
        %v1613 = vpack.c.b16 %v1485, %v1485
        %v1614 = vpack.c.b16 %v1486, %v1486
        %v1615 = vpack.c.b16 %v1487, %v1487
        %v1616 = vpack.c.b16 %v1488, %v1488
        %v1617 = vpack.c.b16 %v1489, %v1489
        %v1618 = vpack.c.b16 %v1490, %v1490
        %v1619 = vpack.c.b16 %v1491, %v1491
        %v1620 = vpack.c.b16 %v1492, %v1492
        %v1621 = vpack.c.b16 %v1493, %v1493
        %v1622 = vpack.c.b16 %v1494, %v1494
        %v1623 = vpack.c.b16 %v1495, %v1495
        %v1624 = vpack.c.b16 %v1496, %v1496
        %v1625 = vpack.c.b16 %v1497, %v1497
        %v1626 = vpack.c.b16 %v1498, %v1498
        %v1627 = vpack.c.b16 %v1499, %v1499
        %v1628 = vpack.c.b16 %v1500, %v1500
        %v1629 = vpack.c.b16 %v1501, %v1501
        %v1630 = vpack.c.b16 %v1502, %v1502
        %v1631 = vpack.c.b16 %v1503, %v1503
        %v1632 = vpack.c.b16 %v1504, %v1504
        %v1633 = vpack.c.b16 %v1505, %v1505
        %v1634 = vpack.c.b16 %v1506, %v1506
        %v1635 = vpack.c.b16 %v1507, %v1507
        %v1636 = vpack.c.b16 %v1508, %v1508
        %v1637 = vpack.c.b16 %v1509, %v1509
        %v1638 = vpack.c.b16 %v1510, %v1510
        %v1639 = vpack.c.b16 %v1511, %v1511
        %v1640 = vpack.c.b16 %v1512, %v1512
        %v1641 = vpack.c.b16 %v1513, %v1513
        %v1642 = vpack.c.b16 %v1514, %v1514
        %v1643 = vpack.c.b16 %v1515, %v1515
        %v1644 = vpack.c.b16 %v1516, %v1516
        %v1645 = vpack.c.b16 %v1517, %v1517
        %v1646 = vpack.c.b16 %v1518, %v1518
        %v1647 = vpack.c.b16 %v1519, %v1519
        %v1648 = vpack.c.b16 %v1520, %v1520
        %v1649 = vpack.c.b16 %v1521, %v1521
        %v1650 = vpack.c.b16 %v1522, %v1522
        %v1651 = vpack.c.b16 %v1523, %v1523
        %v1652 = vpack.c.b16 %v1524, %v1524
        %v1653 = vpack.c.b16 %v1525, %v1525
        %v1654 = vpack.c.b16 %v1526, %v1526
        %v1655 = vpack.c.b16 %v1527, %v1527
        %v1656 = vpack.c.b16 %v1528, %v1528
        %v1657 = vpack.c.b16 %v1529, %v1529
        %v1658 = vpack.c.b16 %v1530, %v1530
        %v1659 = vpack.c.b16 %v1531, %v1531
        %v1660 = vpack.c.b16 %v1532, %v1532
        %v1661 = vpack.c.b16 %v1533, %v1533
        %1790 = vst.msk [vmem:[%s3] sm:$0xf] %vm472, %v1534
        %1791 = vst.msk [vmem:[%s3 + $0x4] sm:$0xf] %vm472, %v1535
        %1792 = vst.msk [vmem:[%s3 + $0x8] sm:$0xf] %vm472, %v1536
        %1793 = vst.msk [vmem:[%s3 + $0xc] sm:$0xf] %vm472, %v1537
        %1794 = vst.msk [vmem:[%s3 + $0x10] sm:$0xf] %vm472, %v1538
        %1795 = vst.msk [vmem:[%s3 + $0x14] sm:$0xf] %vm472, %v1539
        %1796 = vst.msk [vmem:[%s3 + $0x18] sm:$0xf] %vm472, %v1540
        %1797 = vst.msk [vmem:[%s3 + $0x1c] sm:$0xf] %vm472, %v1541
        %1798 = vst.msk [vmem:[%s3 + $0x20] sm:$0xf] %vm472, %v1542
        %1799 = vst.msk [vmem:[%s3 + $0x24] sm:$0xf] %vm472, %v1543
        %1800 = vst.msk [vmem:[%s3 + $0x28] sm:$0xf] %vm472, %v1544
        %1801 = vst.msk [vmem:[%s3 + $0x2c] sm:$0xf] %vm472, %v1545
        %1802 = vst.msk [vmem:[%s3 + $0x30] sm:$0xf] %vm472, %v1546
        %1803 = vst.msk [vmem:[%s3 + $0x34] sm:$0xf] %vm472, %v1547
        %1804 = vst.msk [vmem:[%s3 + $0x38] sm:$0xf] %vm472, %v1548
        %1805 = vst.msk [vmem:[%s3 + $0x3c] sm:$0xf] %vm472, %v1549
        %1806 = vst.msk [vmem:[%s3 + $0x40] sm:$0xf] %vm472, %v1550
        %1807 = vst.msk [vmem:[%s3 + $0x44] sm:$0xf] %vm472, %v1551
        %1808 = vst.msk [vmem:[%s3 + $0x48] sm:$0xf] %vm472, %v1552
        %1809 = vst.msk [vmem:[%s3 + $0x4c] sm:$0xf] %vm472, %v1553
        %1810 = vst.msk [vmem:[%s3 + $0x50] sm:$0xf] %vm472, %v1554
        %1811 = vst.msk [vmem:[%s3 + $0x54] sm:$0xf] %vm472, %v1555
        %1812 = vst.msk [vmem:[%s3 + $0x58] sm:$0xf] %vm472, %v1556
        %1813 = vst.msk [vmem:[%s3 + $0x5c] sm:$0xf] %vm472, %v1557
        %1814 = vst.msk [vmem:[%s3 + $0x60] sm:$0xf] %vm472, %v1558
        %1815 = vst.msk [vmem:[%s3 + $0x64] sm:$0xf] %vm472, %v1559
        %1816 = vst.msk [vmem:[%s3 + $0x68] sm:$0xf] %vm472, %v1560
        %1817 = vst.msk [vmem:[%s3 + $0x6c] sm:$0xf] %vm472, %v1561
        %1818 = vst.msk [vmem:[%s3 + $0x70] sm:$0xf] %vm472, %v1562
        %1819 = vst.msk [vmem:[%s3 + $0x74] sm:$0xf] %vm472, %v1563
        %1820 = vst.msk [vmem:[%s3 + $0x78] sm:$0xf] %vm472, %v1564
        %1821 = vst.msk [vmem:[%s3 + $0x7c] sm:$0xf] %vm472, %v1565
        %1822 = vst.msk [vmem:[%s3 + $0x80] sm:$0xf] %vm472, %v1566
        %1823 = vst.msk [vmem:[%s3 + $0x84] sm:$0xf] %vm472, %v1567
        %1824 = vst.msk [vmem:[%s3 + $0x88] sm:$0xf] %vm472, %v1568
        %1825 = vst.msk [vmem:[%s3 + $0x8c] sm:$0xf] %vm472, %v1569
        %1826 = vst.msk [vmem:[%s3 + $0x90] sm:$0xf] %vm472, %v1570
        %1827 = vst.msk [vmem:[%s3 + $0x94] sm:$0xf] %vm472, %v1571
        %1828 = vst.msk [vmem:[%s3 + $0x98] sm:$0xf] %vm472, %v1572
        %1829 = vst.msk [vmem:[%s3 + $0x9c] sm:$0xf] %vm472, %v1573
        %1830 = vst.msk [vmem:[%s3 + $0xa0] sm:$0xf] %vm472, %v1574
        %1831 = vst.msk [vmem:[%s3 + $0xa4] sm:$0xf] %vm472, %v1575
        %1832 = vst.msk [vmem:[%s3 + $0xa8] sm:$0xf] %vm472, %v1576
        %1833 = vst.msk [vmem:[%s3 + $0xac] sm:$0xf] %vm472, %v1577
        %1834 = vst.msk [vmem:[%s3 + $0xb0] sm:$0xf] %vm472, %v1578
        %1835 = vst.msk [vmem:[%s3 + $0xb4] sm:$0xf] %vm472, %v1579
        %1836 = vst.msk [vmem:[%s3 + $0xb8] sm:$0xf] %vm472, %v1580
        %1837 = vst.msk [vmem:[%s3 + $0xbc] sm:$0xf] %vm472, %v1581
        %1838 = vst.msk [vmem:[%s3 + $0xc0] sm:$0xf] %vm472, %v1582
        %1839 = vst.msk [vmem:[%s3 + $0xc4] sm:$0xf] %vm472, %v1583
        %1840 = vst.msk [vmem:[%s3 + $0xc8] sm:$0xf] %vm472, %v1584
        %1841 = vst.msk [vmem:[%s3 + $0xcc] sm:$0xf] %vm472, %v1585
        %1842 = vst.msk [vmem:[%s3 + $0xd0] sm:$0xf] %vm472, %v1586
        %1843 = vst.msk [vmem:[%s3 + $0xd4] sm:$0xf] %vm472, %v1587
        %1844 = vst.msk [vmem:[%s3 + $0xd8] sm:$0xf] %vm472, %v1588
        %1845 = vst.msk [vmem:[%s3 + $0xdc] sm:$0xf] %vm472, %v1589
        %1846 = vst.msk [vmem:[%s3 + $0xe0] sm:$0xf] %vm472, %v1590
        %1847 = vst.msk [vmem:[%s3 + $0xe4] sm:$0xf] %vm472, %v1591
        %1848 = vst.msk [vmem:[%s3 + $0xe8] sm:$0xf] %vm472, %v1592
        %1849 = vst.msk [vmem:[%s3 + $0xec] sm:$0xf] %vm472, %v1593
        %1850 = vst.msk [vmem:[%s3 + $0xf0] sm:$0xf] %vm472, %v1594
        %1851 = vst.msk [vmem:[%s3 + $0xf4] sm:$0xf] %vm472, %v1595
        %1852 = vst.msk [vmem:[%s3 + $0xf8] sm:$0xf] %vm472, %v1596
        %1853 = vst.msk [vmem:[%s3 + $0xfc] sm:$0xf] %vm472, %v1597
        %1854 = vst.msk [vmem:[%s3 + $0x100] sm:$0xf] %vm472, %v1598
        %1855 = vst.msk [vmem:[%s3 + $0x104] sm:$0xf] %vm472, %v1599
        %1856 = vst.msk [vmem:[%s3 + $0x108] sm:$0xf] %vm472, %v1600
        %1857 = vst.msk [vmem:[%s3 + $0x10c] sm:$0xf] %vm472, %v1601
        %1858 = vst.msk [vmem:[%s3 + $0x110] sm:$0xf] %vm472, %v1602
        %1859 = vst.msk [vmem:[%s3 + $0x114] sm:$0xf] %vm472, %v1603
        %1860 = vst.msk [vmem:[%s3 + $0x118] sm:$0xf] %vm472, %v1604
        %1861 = vst.msk [vmem:[%s3 + $0x11c] sm:$0xf] %vm472, %v1605
        %1862 = vst.msk [vmem:[%s3 + $0x120] sm:$0xf] %vm472, %v1606
        %1863 = vst.msk [vmem:[%s3 + $0x124] sm:$0xf] %vm472, %v1607
        %1864 = vst.msk [vmem:[%s3 + $0x128] sm:$0xf] %vm472, %v1608
        %1865 = vst.msk [vmem:[%s3 + $0x12c] sm:$0xf] %vm472, %v1609
        %1866 = vst.msk [vmem:[%s3 + $0x130] sm:$0xf] %vm472, %v1610
        %1867 = vst.msk [vmem:[%s3 + $0x134] sm:$0xf] %vm472, %v1611
        %1868 = vst.msk [vmem:[%s3 + $0x138] sm:$0xf] %vm472, %v1612
        %1869 = vst.msk [vmem:[%s3 + $0x13c] sm:$0xf] %vm472, %v1613
        %1870 = vst.msk [vmem:[%s3 + $0x140] sm:$0xf] %vm472, %v1614
        %1871 = vst.msk [vmem:[%s3 + $0x144] sm:$0xf] %vm472, %v1615
        %1872 = vst.msk [vmem:[%s3 + $0x148] sm:$0xf] %vm472, %v1616
        %1873 = vst.msk [vmem:[%s3 + $0x14c] sm:$0xf] %vm472, %v1617
        %1874 = vst.msk [vmem:[%s3 + $0x150] sm:$0xf] %vm472, %v1618
        %1875 = vst.msk [vmem:[%s3 + $0x154] sm:$0xf] %vm472, %v1619
        %1876 = vst.msk [vmem:[%s3 + $0x158] sm:$0xf] %vm472, %v1620
        %1877 = vst.msk [vmem:[%s3 + $0x15c] sm:$0xf] %vm472, %v1621
        %1878 = vst.msk [vmem:[%s3 + $0x160] sm:$0xf] %vm472, %v1622
        %1879 = vst.msk [vmem:[%s3 + $0x164] sm:$0xf] %vm472, %v1623
        %1880 = vst.msk [vmem:[%s3 + $0x168] sm:$0xf] %vm472, %v1624
        %1881 = vst.msk [vmem:[%s3 + $0x16c] sm:$0xf] %vm472, %v1625
        %1882 = vst.msk [vmem:[%s3 + $0x170] sm:$0xf] %vm472, %v1626
        %1883 = vst.msk [vmem:[%s3 + $0x174] sm:$0xf] %vm472, %v1627
        %1884 = vst.msk [vmem:[%s3 + $0x178] sm:$0xf] %vm472, %v1628
        %1885 = vst.msk [vmem:[%s3 + $0x17c] sm:$0xf] %vm472, %v1629
        %1886 = vst.msk [vmem:[%s3 + $0x180] sm:$0xf] %vm472, %v1630
        %1887 = vst.msk [vmem:[%s3 + $0x184] sm:$0xf] %vm472, %v1631
        %1888 = vst.msk [vmem:[%s3 + $0x188] sm:$0xf] %vm472, %v1632
        %1889 = vst.msk [vmem:[%s3 + $0x18c] sm:$0xf] %vm472, %v1633
        %1890 = vst.msk [vmem:[%s3 + $0x190] sm:$0xf] %vm472, %v1634
        %1891 = vst.msk [vmem:[%s3 + $0x194] sm:$0xf] %vm472, %v1635
        %1892 = vst.msk [vmem:[%s3 + $0x198] sm:$0xf] %vm472, %v1636
        %1893 = vst.msk [vmem:[%s3 + $0x19c] sm:$0xf] %vm472, %v1637
        %1894 = vst.msk [vmem:[%s3 + $0x1a0] sm:$0xf] %vm472, %v1638
        %1895 = vst.msk [vmem:[%s3 + $0x1a4] sm:$0xf] %vm472, %v1639
        %1896 = vst.msk [vmem:[%s3 + $0x1a8] sm:$0xf] %vm472, %v1640
        %1897 = vst.msk [vmem:[%s3 + $0x1ac] sm:$0xf] %vm472, %v1641
        %1898 = vst.msk [vmem:[%s3 + $0x1b0] sm:$0xf] %vm472, %v1642
        %1899 = vst.msk [vmem:[%s3 + $0x1b4] sm:$0xf] %vm472, %v1643
        %1900 = vst.msk [vmem:[%s3 + $0x1b8] sm:$0xf] %vm472, %v1644
        %1901 = vst.msk [vmem:[%s3 + $0x1bc] sm:$0xf] %vm472, %v1645
        %1902 = vst.msk [vmem:[%s3 + $0x1c0] sm:$0xf] %vm472, %v1646
        %1903 = vst.msk [vmem:[%s3 + $0x1c4] sm:$0xf] %vm472, %v1647
        %1904 = vst.msk [vmem:[%s3 + $0x1c8] sm:$0xf] %vm472, %v1648
        %1905 = vst.msk [vmem:[%s3 + $0x1cc] sm:$0xf] %vm472, %v1649
        %1906 = vst.msk [vmem:[%s3 + $0x1d0] sm:$0xf] %vm472, %v1650
        %1907 = vst.msk [vmem:[%s3 + $0x1d4] sm:$0xf] %vm472, %v1651
        %1908 = vst.msk [vmem:[%s3 + $0x1d8] sm:$0xf] %vm472, %v1652
        %1909 = vst.msk [vmem:[%s3 + $0x1dc] sm:$0xf] %vm472, %v1653
        %1910 = vst.msk [vmem:[%s3 + $0x1e0] sm:$0xf] %vm472, %v1654
        %1911 = vst.msk [vmem:[%s3 + $0x1e4] sm:$0xf] %vm472, %v1655
        %1912 = vst.msk [vmem:[%s3 + $0x1e8] sm:$0xf] %vm472, %v1656
        %1913 = vst.msk [vmem:[%s3 + $0x1ec] sm:$0xf] %vm472, %v1657
        %1914 = vst.msk [vmem:[%s3 + $0x1f0] sm:$0xf] %vm472, %v1658
        %1915 = vst.msk [vmem:[%s3 + $0x1f4] sm:$0xf] %vm472, %v1659
        %1916 = vst.msk [vmem:[%s3 + $0x1f8] sm:$0xf] %vm472, %v1660
        %1917 = vst.msk [vmem:[%s3 + $0x1fc] sm:$0xf] %vm472, %v1661
      $region40: #{generator_forward.6} parent=31 // pred_fallthru
        _
      // Predicated region
      $region41: #{generator_forward.6} parent=31 // pred_check
        %p1918 = pneg %p114
      $region42: #{generator_forward.6} parent=31 // pred_check_branch
        %1920 = sbr.rel (%p1918) target = $region44
      $region43: #{generator_forward.6} parent=31 // pred_region
        _
      $region44: #{generator_forward.6} parent=31 // pred_fallthru
        _
      // Predicated region
      $region45: #{generator_forward.6} parent=31 // pred_check
        %p1921 = pneg %p114
      $region46: #{generator_forward.6} parent=31 // pred_check_branch
        %1923 = sbr.rel (%p1921) target = $region48
      $region47: #{generator_forward.6} parent=31 // pred_region
        _
      $region48: #{generator_forward.6} parent=31 // pred_fallthru
        _
    $region32: #{generator_forward.6} parent=5 // pred_fallthru
      _
    %p1924 = scmp.le.s32.totalorder 2, %s9
    // Predicated region
    $region49: #{generator_forward.6} parent=5 // pred_check
      %p1925 = pneg %p1924
    $region50: #{generator_forward.6} parent=5 // pred_check_branch
      %1927 = sbr.rel (%p1925) target = $region52
    $region51: #{generator_forward.6} parent=5 // pred_region
      %s1928 = ssub.s32 %s9, 2
    $region52: #{generator_forward.6} parent=5 // pred_fallthru
      _
  $region6: #{generator_forward.6} parent=0 // loop_footer
    %s13 = sadd.s32 1, %s9
  $region7: #{generator_forward.6} parent=0 // loop_footer_branch
    %8 = sbr.rel target = $region3
  $region8: #{generator_forward.6} parent=0 // loop_exit
    _

// kernel: generator_forward.7
$region0: #{generator_forward.7}
  #allocation0 [shape = 'u32[]', space=smem, size = 0x4, offset = 0x4, fixed_abs, tag = 'smem constant byte address 0x4 - core index']
  #allocation1 [shape = 'u32[144,128]{1,0:T(1,128)}', space=vmem, size = 0x12000, scoped, tag = 'internal scratch']
  #allocation2 [shape = 'f32[32,1]{1,0:T(8,128)}', space=vmem, size = 0x4000, scoped, tag = 'scratch operand']
  #allocation3 [shape = 'f32[32,1]{1,0:T(8,128)}', space=vmem, size = 0x4000, scoped, tag = 'scratch operand']
  %s0 = inlined_call_operand.vmem [shape: bf16[4,256,32], index: 0, kind: input, shape index: {}]
  %s1 = inlined_call_operand.vmem [shape: bf16[4,32,256], index: 1, kind: input, shape index: {}]
  %s2 = inlined_call_operand.vmem [shape: f32[32,1], index: 2, kind: input, shape index: {}]
  %s3 = inlined_call_operand.vmem [shape: bf16[4,32,32], index: 3, kind: output, shape index: {}]
  %s4 = sld [smem:[#allocation0]]
  $region53: #{generator_forward.7} parent=0
    _
  %s6 = ssub.s32 1, %s4
  %s7 = scalar_select 0, %s6, %s4
  loop: start=0, step=1, limit=6
  $region2: #{generator_forward.7} parent=0 // loop_pre_header
    _
  $region3: #{generator_forward.7} parent=0 // loop_header
    %s9 = sphi 0, %s13
    %p10 = scmp.ge.s32.totalorder %s9, 6
    %s16 = sphi 0, %s28
    %s17 = sphi 0, %s24
    %s18 = sphi 0, %s16
    %s19 = sphi 0, %s17
    %s20 = sphi 0, %s18
    %s21 = sphi 0, %s19
    %s33 = sphi 0, %s35
    %s36 = sphi 0, %s33
    %s37 = sphi 0, %s36
    %s53 = sphi 0, %s37
    %s59 = sphi 0, %s61
    %s62 = sphi 0, %s59
    %s63 = sphi 0, %s62
    %s79 = sphi 0, %s63
    %s83 = sphi 0, %s83
    %s85 = sphi 0, %s83
    %s86 = sphi 0, %s85
    %s100 = sphi 0, %s86
    %s104 = sphi 0, %s104
    %s106 = sphi 0, %s104
    %s107 = sphi 0, %s106
    %s121 = sphi 0, %s107
  $region4: #{generator_forward.7} parent=0 // loop_header_branch
    %12 = sbr.rel (%p10) target = $region8
  $region5: #{generator_forward.7} parent=0 // loop_body
    %s14 = ssub.s32 %s9, 1
    %s15 = ssub.s32 %s9, 2
    %s22 = sadd.s32 1, %s17
    %p23 = scmp.ge.s32.totalorder %s22, 1
    %s24 = scalar_select %p23, 0, %s22
    %s25 = sadd.s32 1, %s16
    %s26 = scalar_select %p23, %s25, %s16
    %p27 = scmp.ge.s32.totalorder %s26, 4
    %s28 = scalar_select %p27, 0, %s26
    %s29 = ssub.s32 %s16, %s28
    %s30 = ssub.s32 %s17, %s24
    %s31 = sor.u32 %s29, %s30
    %p32 = scmp.eq.s32.totalorder %s31, 0
    %s34 = sadd.s32 %s33, 1
    %s35 = scalar_select %p32, %s33, %s34
    %p38 = pneg %p32
    %p39 = scmp.eq.s32.totalorder %s9, 3
    %p40 = por %p38, %p39
    %p41 = scmp.ne.s32.totalorder %s33, %s36
    %p42 = scmp.eq.s32.totalorder %s9, 0
    %p43 = por %p41, %p42
    %p44 = scmp.ne.s32.totalorder %s33, %s36
    %p45 = scmp.eq.s32.totalorder %s14, 3
    %p46 = por %p44, %p45
    %p47 = scmp.ne.s32.totalorder %s36, %s37
    %p48 = scmp.eq.s32.totalorder %s14, 0
    %p49 = por %p47, %p48
    %p50 = scmp.ne.s32.totalorder %s36, %s37
    %p51 = scmp.eq.s32.totalorder %s15, 3
    %p52 = por %p50, %p51
    %p54 = scmp.ne.s32.totalorder %s37, %s53
    %p55 = scmp.eq.s32.totalorder %s15, 0
    %p56 = por %p54, %p55
    %s57 = ssub.s32 %s16, %s28
    %p58 = scmp.eq.s32.totalorder %s57, 0
    %s60 = sadd.s32 %s59, 1
    %s61 = scalar_select %p58, %s59, %s60
    %p64 = pneg %p58
    %p65 = scmp.eq.s32.totalorder %s9, 3
    %p66 = por %p64, %p65
    %p67 = scmp.ne.s32.totalorder %s59, %s62
    %p68 = scmp.eq.s32.totalorder %s9, 0
    %p69 = por %p67, %p68
    %p70 = scmp.ne.s32.totalorder %s59, %s62
    %p71 = scmp.eq.s32.totalorder %s14, 3
    %p72 = por %p70, %p71
    %p73 = scmp.ne.s32.totalorder %s62, %s63
    %p74 = scmp.eq.s32.totalorder %s14, 0
    %p75 = por %p73, %p74
    %p76 = scmp.ne.s32.totalorder %s62, %s63
    %p77 = scmp.eq.s32.totalorder %s15, 3
    %p78 = por %p76, %p77
    %p80 = scmp.ne.s32.totalorder %s63, %s79
    %p81 = scmp.eq.s32.totalorder %s15, 0
    %p82 = por %p80, %p81
    %s84 = sadd.s32 %s83, 1
    %p87 = scmp.eq.s32.totalorder %s9, 3
    %p88 = scmp.ne.s32.totalorder %s83, %s85
    %p89 = scmp.eq.s32.totalorder %s9, 0
    %p90 = por %p88, %p89
    %p91 = scmp.ne.s32.totalorder %s83, %s85
    %p92 = scmp.eq.s32.totalorder %s14, 3
    %p93 = por %p91, %p92
    %p94 = scmp.ne.s32.totalorder %s85, %s86
    %p95 = scmp.eq.s32.totalorder %s14, 0
    %p96 = por %p94, %p95
    %p97 = scmp.ne.s32.totalorder %s85, %s86
    %p98 = scmp.eq.s32.totalorder %s15, 3
    %p99 = por %p97, %p98
    %p101 = scmp.ne.s32.totalorder %s86, %s100
    %p102 = scmp.eq.s32.totalorder %s15, 0
    %p103 = por %p101, %p102
    %s105 = sadd.s32 %s104, 1
    %p108 = scmp.eq.s32.totalorder %s9, 3
    %p109 = scmp.ne.s32.totalorder %s104, %s106
    %p110 = scmp.eq.s32.totalorder %s9, 0
    %p111 = por %p109, %p110
    %p112 = scmp.ne.s32.totalorder %s104, %s106
    %p113 = scmp.eq.s32.totalorder %s14, 3
    %p114 = por %p112, %p113
    %p115 = scmp.ne.s32.totalorder %s106, %s107
    %p116 = scmp.eq.s32.totalorder %s14, 0
    %p117 = por %p115, %p116
    %p118 = scmp.ne.s32.totalorder %s106, %s107
    %p119 = scmp.eq.s32.totalorder %s15, 3
    %p120 = por %p118, %p119
    %p122 = scmp.ne.s32.totalorder %s107, %s121
    %p123 = scmp.eq.s32.totalorder %s15, 0
    %p124 = por %p122, %p123
    %p125 = scmp.le.s32.totalorder 1, %s9
    %p126 = scmp.lt.s32.totalorder %s9, 5
    %p127 = pnand %p125, %p126
    %p128 = pneg %p127
    // Predicated region
    $region9: #{generator_forward.7} parent=5 // pred_check
      _
    $region10: #{generator_forward.7} parent=5 // pred_check_branch
      %130 = sbr.rel (%p127) target = $region12
    $region11: #{generator_forward.7} parent=5 // pred_region
      %s131 = ssub.s32 %s9, 1
      // Predicated region
      $region13: #{generator_forward.7} parent=11 // pred_check
        %p132 = pneg %p96
      $region14: #{generator_forward.7} parent=11 // pred_check_branch
        %134 = sbr.rel (%p132) target = $region16
      $region15: #{generator_forward.7} parent=11 // pred_region
        _
      $region16: #{generator_forward.7} parent=11 // pred_fallthru
        _
    $region12: #{generator_forward.7} parent=5 // pred_fallthru
      _
    %p135 = scmp.lt.s32.totalorder %s9, 4
    // Predicated region
    $region17: #{generator_forward.7} parent=5 // pred_check
      %p136 = pneg %p135
    $region18: #{generator_forward.7} parent=5 // pred_check_branch
      %138 = sbr.rel (%p136) target = $region20
    $region19: #{generator_forward.7} parent=5 // pred_region
      // Predicated region
      $region21: #{generator_forward.7} parent=19 // pred_check
        %p139 = pneg %p43
      $region22: #{generator_forward.7} parent=19 // pred_check_branch
        %141 = sbr.rel (%p139) target = $region24
      $region23: #{generator_forward.7} parent=19 // pred_region
        %p142 = scmp.lt.s32.totalorder %s16, 3
        %s143 = scalar_select %p142, %s16, 3
        %p144 = scmp.lt.s32.totalorder %s17, 0
        %s145 = scalar_select %p144, %s17, 0
        %s146 = smul.addr %s143, 32
        %s147 = sadd.s32 %s145, %s146
        %s148 = smul.addr %s147, 4
        %s149 = scalar_lea.vmem %s0, %s148
      $region24: #{generator_forward.7} parent=19 // pred_fallthru
        _
      // Predicated region
      $region25: #{generator_forward.7} parent=19 // pred_check
        %p150 = pneg %p69
      $region26: #{generator_forward.7} parent=19 // pred_check_branch
        %152 = sbr.rel (%p150) target = $region28
      $region27: #{generator_forward.7} parent=19 // pred_region
        %p153 = scmp.lt.s32.totalorder %s16, 3
        %s154 = scalar_select %p153, %s16, 3
        %s155 = smul.addr %s154, 8
        %s156 = smul.addr %s155, 4
        %s157 = scalar_lea.vmem %s1, %s156
      $region28: #{generator_forward.7} parent=19 // pred_fallthru
        _
    $region20: #{generator_forward.7} parent=5 // pred_fallthru
      _
    %p158 = scmp.le.s32.totalorder 1, %s9
    %p159 = scmp.lt.s32.totalorder %s9, 5
    %p160 = pnand %p158, %p159
    %p161 = pneg %p160
    // Predicated region
    $region29: #{generator_forward.7} parent=5 // pred_check
      _
    $region30: #{generator_forward.7} parent=5 // pred_check_branch
      %163 = sbr.rel (%p160) target = $region32
    $region31: #{generator_forward.7} parent=5 // pred_region
      %s164 = ssub.s32 %s9, 1
      %p165 = scmp.lt.s32.totalorder %s18, 3
      %s166 = scalar_select %p165, %s18, 3
      %p167 = scmp.lt.s32.totalorder %s19, 0
      %s168 = scalar_select %p167, %s19, 0
      %s169 = smul.addr %s166, 32
      %s170 = sadd.s32 %s168, %s169
      %s171 = smul.addr %s170, 4
      %s172 = scalar_lea.vmem %s0, %s171
      %p173 = pneg %p49
      %p174 = pneg %p46
      %p175 = scmp.lt.s32.totalorder %s18, 3
      %s176 = scalar_select %p175, %s18, 3
      %s177 = smul.addr %s176, 8
      %s178 = smul.addr %s177, 4
      %s179 = scalar_lea.vmem %s1, %s178
      %p180 = pneg %p75
      %p181 = pneg %p72
      %p182 = pneg %p96
      %p183 = pneg %p93
      %p184 = pneg %p117
      %p185 = pneg %p114
      %p186 = scmp.lt.s32.totalorder %s18, 3
      %s187 = scalar_select %p186, %s18, 3
      %p188 = scmp.lt.s32.totalorder %s19, 0
      %s189 = scalar_select %p188, %s19, 0
      %s190 = smul.addr %s187, 32
      %s191 = sadd.s32 %s189, %s190
      %s192 = smul.addr %s191, 4
      %s193 = scalar_lea.vmem %s0, %s192
      %p194 = scmp.lt.s32.totalorder %s18, 3
      %s195 = scalar_select %p194, %s18, 3
      %s196 = smul.addr %s195, 8
      %s197 = smul.addr %s196, 4
      %s198 = scalar_lea.vmem %s1, %s197
      %v200 = vld [vmem:[%s198] sm:$0xff]
      %v201 = vld [vmem:[%s198 + $0x8] sm:$0xff]
      %v202 = vld [vmem:[%s198 + $0x10] sm:$0xff]
      %v203 = vld [vmem:[%s198 + $0x18] sm:$0xff]
      %v204 = vld [vmem:[%s193] sm:$0xf]
      %v205 = vld [vmem:[%s193 + $0x4] sm:$0xf]
      %v206 = vld [vmem:[%s193 + $0x8] sm:$0xf]
      %v207 = vld [vmem:[%s193 + $0xc] sm:$0xf]
      %v208 = vld [vmem:[%s193 + $0x10] sm:$0xf]
      %v209 = vld [vmem:[%s193 + $0x14] sm:$0xf]
      %v210 = vld [vmem:[%s193 + $0x18] sm:$0xf]
      %v211 = vld [vmem:[%s193 + $0x1c] sm:$0xf]
      %v212 = vld [vmem:[%s193 + $0x20] sm:$0xf]
      %v213 = vld [vmem:[%s193 + $0x24] sm:$0xf]
      %v214 = vld [vmem:[%s193 + $0x28] sm:$0xf]
      %v215 = vld [vmem:[%s193 + $0x2c] sm:$0xf]
      %v216 = vld [vmem:[%s193 + $0x30] sm:$0xf]
      %v217 = vld [vmem:[%s193 + $0x34] sm:$0xf]
      %v218 = vld [vmem:[%s193 + $0x38] sm:$0xf]
      %v219 = vld [vmem:[%s193 + $0x3c] sm:$0xf]
      %v220 = vld [vmem:[%s193 + $0x40] sm:$0xf]
      %v221 = vld [vmem:[%s193 + $0x44] sm:$0xf]
      %v222 = vld [vmem:[%s193 + $0x48] sm:$0xf]
      %v223 = vld [vmem:[%s193 + $0x4c] sm:$0xf]
      %v224 = vld [vmem:[%s193 + $0x50] sm:$0xf]
      %v225 = vld [vmem:[%s193 + $0x54] sm:$0xf]
      %v226 = vld [vmem:[%s193 + $0x58] sm:$0xf]
      %v227 = vld [vmem:[%s193 + $0x5c] sm:$0xf]
      %v228 = vld [vmem:[%s193 + $0x60] sm:$0xf]
      %v229 = vld [vmem:[%s193 + $0x64] sm:$0xf]
      %v230 = vld [vmem:[%s193 + $0x68] sm:$0xf]
      %v231 = vld [vmem:[%s193 + $0x6c] sm:$0xf]
      %v232 = vld [vmem:[%s193 + $0x70] sm:$0xf]
      %v233 = vld [vmem:[%s193 + $0x74] sm:$0xf]
      %v234 = vld [vmem:[%s193 + $0x78] sm:$0xf]
      %v235 = vld [vmem:[%s193 + $0x7c] sm:$0xf]
      %v240 = vunpack.c.l.b16 %v200
      %v241 = vunpack.c.h.b16 %v200
      %v242 = vunpack.c.l.b16 %v201
      %v243 = vunpack.c.h.b16 %v201
      %v244 = vunpack.c.l.b16 %v202
      %v245 = vunpack.c.h.b16 %v202
      %v246 = vunpack.c.l.b16 %v203
      %v247 = vunpack.c.h.b16 %v203
      %v248 = vpack.c.b16 %v242, %v240
      %v249 = vpack.c.b16 %v243, %v241
      %v250 = vpack.c.b16 %v246, %v244
      %v251 = vpack.c.b16 %v247, %v245
      %v288 = vunpack.c.l.b16 %v204
      %v289 = vunpack.c.l.b16 %v205
      %v290 = vunpack.c.l.b16 %v206
      %v291 = vunpack.c.l.b16 %v207
      %v292 = vunpack.c.l.b16 %v208
      %v293 = vunpack.c.l.b16 %v209
      %v294 = vunpack.c.l.b16 %v210
      %v295 = vunpack.c.l.b16 %v211
      %v296 = vunpack.c.l.b16 %v212
      %v297 = vunpack.c.l.b16 %v213
      %v298 = vunpack.c.l.b16 %v214
      %v299 = vunpack.c.l.b16 %v215
      %v300 = vunpack.c.l.b16 %v216
      %v301 = vunpack.c.l.b16 %v217
      %v302 = vunpack.c.l.b16 %v218
      %v303 = vunpack.c.l.b16 %v219
      %v304 = vunpack.c.l.b16 %v220
      %v305 = vunpack.c.l.b16 %v221
      %v306 = vunpack.c.l.b16 %v222
      %v307 = vunpack.c.l.b16 %v223
      %v308 = vunpack.c.l.b16 %v224
      %v309 = vunpack.c.l.b16 %v225
      %v310 = vunpack.c.l.b16 %v226
      %v311 = vunpack.c.l.b16 %v227
      %v312 = vunpack.c.l.b16 %v228
      %v313 = vunpack.c.l.b16 %v229
      %v314 = vunpack.c.l.b16 %v230
      %v315 = vunpack.c.l.b16 %v231
      %v316 = vunpack.c.l.b16 %v232
      %v317 = vunpack.c.l.b16 %v233
      %v318 = vunpack.c.l.b16 %v234
      %v319 = vunpack.c.l.b16 %v235
      %v320 = vpack.c.b16 %v289, %v288
      %v321 = vpack.c.b16 %v291, %v290
      %v322 = vpack.c.b16 %v293, %v292
      %v323 = vpack.c.b16 %v295, %v294
      %v324 = vpack.c.b16 %v297, %v296
      %v325 = vpack.c.b16 %v299, %v298
      %v326 = vpack.c.b16 %v301, %v300
      %v327 = vpack.c.b16 %v303, %v302
      %v328 = vpack.c.b16 %v305, %v304
      %v329 = vpack.c.b16 %v307, %v306
      %v330 = vpack.c.b16 %v309, %v308
      %v331 = vpack.c.b16 %v311, %v310
      %v332 = vpack.c.b16 %v313, %v312
      %v333 = vpack.c.b16 %v315, %v314
      %v334 = vpack.c.b16 %v317, %v316
      %v335 = vpack.c.b16 %v319, %v318
      %352 = vmatprep.subr.bf16.mxu0 0
      %353 = vmatpush1.bf16.msra.mxu0 %v327
      %354 = vmatprep.subr.bf16.mxu0 0
      %355 = vmatpush1.bf16.msra.mxu0 %v326
      %356 = vmatprep.subr.bf16.mxu0 0
      %357 = vmatpush1.bf16.msra.mxu0 %v325
      %358 = vmatprep.subr.bf16.mxu0 0
      %359 = vmatpush1.bf16.msra.mxu0 %v324
      %360 = vmatprep.subr.bf16.mxu0 0
      %361 = vmatpush1.bf16.msra.mxu0 %v323
      %362 = vmatprep.subr.bf16.mxu0 0
      %363 = vmatpush1.bf16.msra.mxu0 %v322
      %364 = vmatprep.subr.bf16.mxu0 0
      %365 = vmatpush1.bf16.msra.mxu0 %v321
      %366 = vmatprep.subr.bf16.mxu0 0
      %367 = vmatpush1.bf16.msra.mxu0 %v320
      %368 = vmatprep.subr.bf16.mxu0 0
      %369 = vmatpush2.bf16.msra.mxu0 %v335
      %370 = vmatprep.subr.bf16.mxu0 0
      %371 = vmatpush2.bf16.msra.mxu0 %v334
      %372 = vmatprep.subr.bf16.mxu0 0
      %373 = vmatpush2.bf16.msra.mxu0 %v333
      %374 = vmatprep.subr.bf16.mxu0 0
      %375 = vmatpush2.bf16.msra.mxu0 %v332
      %376 = vmatprep.subr.bf16.mxu0 0
      %377 = vmatpush2.bf16.msra.mxu0 %v331
      %378 = vmatprep.subr.bf16.mxu0 0
      %379 = vmatpush2.bf16.msra.mxu0 %v330
      %380 = vmatprep.subr.bf16.mxu0 0
      %381 = vmatpush2.bf16.msra.mxu0 %v329
      %382 = vmatprep.subr.bf16.mxu0 0
      %383 = vmatpush2.bf16.msra.mxu0 %v328
      %384 = vmatprep.mubr.bf16.mxu0 %v249
      %385 = vmatmul.mubr.bf16.gmra.mxu0 %v248
      %v386 = vpop.f32.mrf.mxu0
      %v387 = vadd.f32 0.0, %v386
      %v388 = vpop.f32.mrf.mxu0
      %v389 = vpop.f32.mrf.mxu0
      %v390 = vadd.f32 0.0, %v389
      %v391 = vpop.f32.mrf.mxu0
      %392 = vmatprep.mubr.bf16.mxu0 %v251
      %393 = vmatmul.mubr.bf16.gmra.mxu0 %v250
      %v394 = vpop.f32.mrf.mxu0
      %v395 = vadd.f32 0.0, %v394
      %v396 = vpop.f32.mrf.mxu0
      %v397 = vpop.f32.mrf.mxu0
      %v398 = vadd.f32 0.0, %v397
      %v399 = vpop.f32.mrf.mxu0
      %400 = vdwg.mxu0
      %p401 = scmp.eq.s32.totalorder %s18, 0
      %p402 = scmp.eq.s32.totalorder %s19, 0
      %p403 = pnand %p401, %p402
      %p404 = pneg %p403
      // Predicated region
      $region33: #{generator_forward.7} parent=31 // pred_check
        _
      $region34: #{generator_forward.7} parent=31 // pred_check_branch
        %406 = sbr.rel (%p403) target = $region36
      $region35: #{generator_forward.7} parent=31 // pred_region
        %vm407 = vcmask 7168
        %408 = vst.msk [vmem:[#allocation2] sm:$0xff] %vm407, 0.0
        %409 = vst.msk [vmem:[#allocation2 + $0x8] sm:$0xff] %vm407, 0.0
        %410 = vst.msk [vmem:[#allocation2 + $0x10] sm:$0xff] %vm407, 0.0
        %411 = vst.msk [vmem:[#allocation2 + $0x18] sm:$0xff] %vm407, 0.0
        %412 = vst.msk [vmem:[#allocation3] sm:$0xff] %vm407, 0.0
        %413 = vst.msk [vmem:[#allocation3 + $0x8] sm:$0xff] %vm407, 0.0
        %414 = vst.msk [vmem:[#allocation3 + $0x10] sm:$0xff] %vm407, 0.0
        %415 = vst.msk [vmem:[#allocation3 + $0x18] sm:$0xff] %vm407, 0.0
      $region36: #{generator_forward.7} parent=31 // pred_fallthru
        _
      %v416 = vld [vmem:[#allocation2] sm:$0xff]
      %v417 = vld [vmem:[#allocation2 + $0x8] sm:$0xff]
      %v418 = vld [vmem:[#allocation2 + $0x10] sm:$0xff]
      %v419 = vld [vmem:[#allocation2 + $0x18] sm:$0xff]
      %vm420 = vcmask 261120
      %v421 = vsel %vm420, %v387, 0.0
      %422 = vadd.xlane.f32.xlu0 %v421
      %v423 = vpop.xlane.xlu0 %422
      %v424 = vsel %vm420, %v390, 0.0
      %425 = vadd.xlane.f32.xlu0 %v424
      %v426 = vpop.xlane.xlu0 %425
      %v427 = vsel %vm420, %v395, 0.0
      %428 = vadd.xlane.f32.xlu0 %v427
      %v429 = vpop.xlane.xlu0 %428
      %v430 = vsel %vm420, %v398, 0.0
      %431 = vadd.xlane.f32.xlu0 %v430
      %v432 = vpop.xlane.xlu0 %431
      %v433 = vadd.f32 %v416, %v423
      %v434 = vadd.f32 %v417, %v426
      %v435 = vadd.f32 %v418, %v429
      %v436 = vadd.f32 %v419, %v432
      %vm437 = vcmask 7168
      %438 = vst.msk [vmem:[#allocation2] sm:$0xff] %vm437, %v433
      %439 = vst.msk [vmem:[#allocation2 + $0x8] sm:$0xff] %vm437, %v434
      %440 = vst.msk [vmem:[#allocation2 + $0x10] sm:$0xff] %vm437, %v435
      %441 = vst.msk [vmem:[#allocation2 + $0x18] sm:$0xff] %vm437, %v436
      %v442 = vld [vmem:[#allocation3] sm:$0xff]
      %v443 = vld [vmem:[#allocation3 + $0x8] sm:$0xff]
      %v444 = vld [vmem:[#allocation3 + $0x10] sm:$0xff]
      %v445 = vld [vmem:[#allocation3 + $0x18] sm:$0xff]
      %v446 = vmul.f32 %v387, %v387
      %v447 = vmul.f32 %v390, %v390
      %v448 = vmul.f32 %v395, %v395
      %v449 = vmul.f32 %v398, %v398
      %v450 = vsel %vm420, %v446, 0.0
      %451 = vadd.xlane.f32.xlu0 %v450
      %v452 = vpop.xlane.xlu0 %451
      %v453 = vsel %vm420, %v447, 0.0
      %454 = vadd.xlane.f32.xlu0 %v453
      %v455 = vpop.xlane.xlu0 %454
      %v456 = vsel %vm420, %v448, 0.0
      %457 = vadd.xlane.f32.xlu0 %v456
      %v458 = vpop.xlane.xlu0 %457
      %v459 = vsel %vm420, %v449, 0.0
      %460 = vadd.xlane.f32.xlu0 %v459
      %v461 = vpop.xlane.xlu0 %460
      %v462 = vadd.f32 %v442, %v452
      %v463 = vadd.f32 %v443, %v455
      %v464 = vadd.f32 %v444, %v458
      %v465 = vadd.f32 %v445, %v461
      %466 = vst.msk [vmem:[#allocation3] sm:$0xff] %vm437, %v462
      %467 = vst.msk [vmem:[#allocation3 + $0x8] sm:$0xff] %vm437, %v463
      %468 = vst.msk [vmem:[#allocation3 + $0x10] sm:$0xff] %vm437, %v464
      %469 = vst.msk [vmem:[#allocation3 + $0x18] sm:$0xff] %vm437, %v465
      %v470 = vpack.c.bf16 %v390, %v387
      %v471 = vpack.c.bf16 %v398, %v395
      %v474 = vunpack.c.l.b16 %v470
      %v475 = vunpack.c.h.b16 %v470
      %v476 = vunpack.c.l.b16 %v471
      %v477 = vunpack.c.h.b16 %v471
      %v478 = vpack.c.b16 %v474, %v474
      %v479 = vpack.c.b16 %v475, %v475
      %v480 = vpack.c.b16 %v476, %v476
      %v481 = vpack.c.b16 %v477, %v477
      %s486 = smul.u32 %s18, 4
      %s487 = smul.addr %s486, 4
      %s488 = scalar_lea.vmem %s3, %s487
      %vm489 = vcmask 257024
      %490 = vst.msk [vmem:[%s488] sm:$0xf] %vm489, %v478
      %491 = vst.msk [vmem:[%s488 + $0x4] sm:$0xf] %vm489, %v479
      %492 = vst.msk [vmem:[%s488 + $0x8] sm:$0xf] %vm489, %v480
      %493 = vst.msk [vmem:[%s488 + $0xc] sm:$0xf] %vm489, %v481
      %p494 = scmp.eq.s32.totalorder %s18, 3
      %p495 = pnand %p494, %p402
      %p496 = pneg %p495
      // Predicated region
      $region37: #{generator_forward.7} parent=31 // pred_check
        _
      $region38: #{generator_forward.7} parent=31 // pred_check_branch
        %498 = sbr.rel (%p495) target = $region40
      $region39: #{generator_forward.7} parent=31 // pred_region
        %v499 = vld [vmem:[%s3] sm:$0xf]
        %v500 = vld [vmem:[%s3 + $0x4] sm:$0xf]
        %v501 = vld [vmem:[%s3 + $0x8] sm:$0xf]
        %v502 = vld [vmem:[%s3 + $0xc] sm:$0xf]
        %v503 = vld [vmem:[%s3 + $0x10] sm:$0xf]
        %v504 = vld [vmem:[%s3 + $0x14] sm:$0xf]
        %v505 = vld [vmem:[%s3 + $0x18] sm:$0xf]
        %v506 = vld [vmem:[%s3 + $0x1c] sm:$0xf]
        %v507 = vld [vmem:[%s3 + $0x20] sm:$0xf]
        %v508 = vld [vmem:[%s3 + $0x24] sm:$0xf]
        %v509 = vld [vmem:[%s3 + $0x28] sm:$0xf]
        %v510 = vld [vmem:[%s3 + $0x2c] sm:$0xf]
        %v511 = vld [vmem:[%s3 + $0x30] sm:$0xf]
        %v512 = vld [vmem:[%s3 + $0x34] sm:$0xf]
        %v513 = vld [vmem:[%s3 + $0x38] sm:$0xf]
        %v514 = vld [vmem:[%s3 + $0x3c] sm:$0xf]
        %v515 = vunpack.c.l.bf16 %v499
        %v516 = vunpack.c.l.bf16 %v500
        %v517 = vunpack.c.l.bf16 %v501
        %v518 = vunpack.c.l.bf16 %v502
        %v519 = vunpack.c.l.bf16 %v503
        %v520 = vunpack.c.l.bf16 %v504
        %v521 = vunpack.c.l.bf16 %v505
        %v522 = vunpack.c.l.bf16 %v506
        %v523 = vunpack.c.l.bf16 %v507
        %v524 = vunpack.c.l.bf16 %v508
        %v525 = vunpack.c.l.bf16 %v509
        %v526 = vunpack.c.l.bf16 %v510
        %v527 = vunpack.c.l.bf16 %v511
        %v528 = vunpack.c.l.bf16 %v512
        %v529 = vunpack.c.l.bf16 %v513
        %v530 = vunpack.c.l.bf16 %v514
        %v531 = vld [vmem:[#allocation2] sm:$0xff]
        %v532 = vld [vmem:[#allocation2 + $0x8] sm:$0xff]
        %v533 = vld [vmem:[#allocation2 + $0x10] sm:$0xff]
        %v534 = vld [vmem:[#allocation2 + $0x18] sm:$0xff]
        %v535 = vmul.f32 %v531, 0.0078125
        %v536 = vmul.f32 %v532, 0.0078125
        %v537 = vmul.f32 %v533, 0.0078125
        %v538 = vmul.f32 %v534, 0.0078125
        %v539 = vld [vmem:[#allocation3] sm:$0xff]
        %v540 = vld [vmem:[#allocation3 + $0x8] sm:$0xff]
        %v541 = vld [vmem:[#allocation3 + $0x10] sm:$0xff]
        %v542 = vld [vmem:[#allocation3 + $0x18] sm:$0xff]
        %v543 = vmul.f32 %v539, 0.0078125
        %v544 = vmul.f32 %v540, 0.0078125
        %v545 = vmul.f32 %v541, 0.0078125
        %v546 = vmul.f32 %v542, 0.0078125
        %v547 = vmul.f32 %v535, %v535
        %v548 = vmul.f32 %v536, %v536
        %v549 = vmul.f32 %v537, %v537
        %v550 = vmul.f32 %v538, %v538
        %v551 = vsub.f32 %v543, %v547
        %v552 = vsub.f32 %v544, %v548
        %v553 = vsub.f32 %v545, %v549
        %v554 = vsub.f32 %v546, %v550
        %v555 = vmax.f32 %v551, 0.0
        %v556 = vmax.f32 %v552, 0.0
        %v557 = vmax.f32 %v553, 0.0
        %v558 = vmax.f32 %v554, 0.0
        %v559 = vadd.f32 %v555, 1e-05
        %v560 = vadd.f32 %v556, 1e-05
        %v561 = vadd.f32 %v557, 1e-05
        %v562 = vadd.f32 %v558, 1e-05
        %v563 = vrsqrt.pop %v559
        %v564 = vrsqrt.pop %v560
        %v565 = vrsqrt.pop %v561
        %v566 = vrsqrt.pop %v562
        %568 = vset.pattern.permute.xlu0 0
        %569 = vperm.xlu0 %568, %v535
        %v570 = vpop.permute.xlu0 %569
        %573 = vset.pattern.permute.xlu0 0
        %574 = vperm.xlu0 %573, %v536
        %v575 = vpop.permute.xlu0 %574
        %578 = vset.pattern.permute.xlu0 0
        %579 = vperm.xlu0 %578, %v537
        %v580 = vpop.permute.xlu0 %579
        %583 = vset.pattern.permute.xlu0 0
        %584 = vperm.xlu0 %583, %v538
        %v585 = vpop.permute.xlu0 %584
        %v587 = vsub.f32 %v515, %v570
        %v588 = vsub.f32 %v516, %v575
        %v589 = vsub.f32 %v517, %v580
        %v590 = vsub.f32 %v518, %v585
        %v591 = vsub.f32 %v519, %v570
        %v592 = vsub.f32 %v520, %v575
        %v593 = vsub.f32 %v521, %v580
        %v594 = vsub.f32 %v522, %v585
        %v595 = vsub.f32 %v523, %v570
        %v596 = vsub.f32 %v524, %v575
        %v597 = vsub.f32 %v525, %v580
        %v598 = vsub.f32 %v526, %v585
        %v599 = vsub.f32 %v527, %v570
        %v600 = vsub.f32 %v528, %v575
        %v601 = vsub.f32 %v529, %v580
        %v602 = vsub.f32 %v530, %v585
        %604 = vset.pattern.permute.xlu0 0
        %605 = vperm.xlu0 %604, %v563
        %v606 = vpop.permute.xlu0 %605
        %609 = vset.pattern.permute.xlu0 0
        %610 = vperm.xlu0 %609, %v564
        %v611 = vpop.permute.xlu0 %610
        %614 = vset.pattern.permute.xlu0 0
        %615 = vperm.xlu0 %614, %v565
        %v616 = vpop.permute.xlu0 %615
        %619 = vset.pattern.permute.xlu0 0
        %620 = vperm.xlu0 %619, %v566
        %v621 = vpop.permute.xlu0 %620
        %v623 = vmul.f32 %v587, %v606
        %v624 = vmul.f32 %v588, %v611
        %v625 = vmul.f32 %v589, %v616
        %v626 = vmul.f32 %v590, %v621
        %v627 = vmul.f32 %v591, %v606
        %v628 = vmul.f32 %v592, %v611
        %v629 = vmul.f32 %v593, %v616
        %v630 = vmul.f32 %v594, %v621
        %v631 = vmul.f32 %v595, %v606
        %v632 = vmul.f32 %v596, %v611
        %v633 = vmul.f32 %v597, %v616
        %v634 = vmul.f32 %v598, %v621
        %v635 = vmul.f32 %v599, %v606
        %v636 = vmul.f32 %v600, %v611
        %v637 = vmul.f32 %v601, %v616
        %v638 = vmul.f32 %v602, %v621
        %v639 = vmax.f32 %v623, 0.0
        %v640 = vmax.f32 %v624, 0.0
        %v641 = vmax.f32 %v625, 0.0
        %v642 = vmax.f32 %v626, 0.0
        %v643 = vmax.f32 %v627, 0.0
        %v644 = vmax.f32 %v628, 0.0
        %v645 = vmax.f32 %v629, 0.0
        %v646 = vmax.f32 %v630, 0.0
        %v647 = vmax.f32 %v631, 0.0
        %v648 = vmax.f32 %v632, 0.0
        %v649 = vmax.f32 %v633, 0.0
        %v650 = vmax.f32 %v634, 0.0
        %v651 = vmax.f32 %v635, 0.0
        %v652 = vmax.f32 %v636, 0.0
        %v653 = vmax.f32 %v637, 0.0
        %v654 = vmax.f32 %v638, 0.0
        %v655 = vpack.c.bf16 %v640, %v639
        %v656 = vpack.c.bf16 %v642, %v641
        %v657 = vpack.c.bf16 %v644, %v643
        %v658 = vpack.c.bf16 %v646, %v645
        %v659 = vpack.c.bf16 %v648, %v647
        %v660 = vpack.c.bf16 %v650, %v649
        %v661 = vpack.c.bf16 %v652, %v651
        %v662 = vpack.c.bf16 %v654, %v653
        %v671 = vunpack.c.l.b16 %v655
        %v672 = vunpack.c.h.b16 %v655
        %v673 = vunpack.c.l.b16 %v656
        %v674 = vunpack.c.h.b16 %v656
        %v675 = vunpack.c.l.b16 %v657
        %v676 = vunpack.c.h.b16 %v657
        %v677 = vunpack.c.l.b16 %v658
        %v678 = vunpack.c.h.b16 %v658
        %v679 = vunpack.c.l.b16 %v659
        %v680 = vunpack.c.h.b16 %v659
        %v681 = vunpack.c.l.b16 %v660
        %v682 = vunpack.c.h.b16 %v660
        %v683 = vunpack.c.l.b16 %v661
        %v684 = vunpack.c.h.b16 %v661
        %v685 = vunpack.c.l.b16 %v662
        %v686 = vunpack.c.h.b16 %v662
        %v687 = vpack.c.b16 %v671, %v671
        %v688 = vpack.c.b16 %v672, %v672
        %v689 = vpack.c.b16 %v673, %v673
        %v690 = vpack.c.b16 %v674, %v674
        %v691 = vpack.c.b16 %v675, %v675
        %v692 = vpack.c.b16 %v676, %v676
        %v693 = vpack.c.b16 %v677, %v677
        %v694 = vpack.c.b16 %v678, %v678
        %v695 = vpack.c.b16 %v679, %v679
        %v696 = vpack.c.b16 %v680, %v680
        %v697 = vpack.c.b16 %v681, %v681
        %v698 = vpack.c.b16 %v682, %v682
        %v699 = vpack.c.b16 %v683, %v683
        %v700 = vpack.c.b16 %v684, %v684
        %v701 = vpack.c.b16 %v685, %v685
        %v702 = vpack.c.b16 %v686, %v686
        %719 = vst.msk [vmem:[%s3] sm:$0xf] %vm489, %v687
        %720 = vst.msk [vmem:[%s3 + $0x4] sm:$0xf] %vm489, %v688
        %721 = vst.msk [vmem:[%s3 + $0x8] sm:$0xf] %vm489, %v689
        %722 = vst.msk [vmem:[%s3 + $0xc] sm:$0xf] %vm489, %v690
        %723 = vst.msk [vmem:[%s3 + $0x10] sm:$0xf] %vm489, %v691
        %724 = vst.msk [vmem:[%s3 + $0x14] sm:$0xf] %vm489, %v692
        %725 = vst.msk [vmem:[%s3 + $0x18] sm:$0xf] %vm489, %v693
        %726 = vst.msk [vmem:[%s3 + $0x1c] sm:$0xf] %vm489, %v694
        %727 = vst.msk [vmem:[%s3 + $0x20] sm:$0xf] %vm489, %v695
        %728 = vst.msk [vmem:[%s3 + $0x24] sm:$0xf] %vm489, %v696
        %729 = vst.msk [vmem:[%s3 + $0x28] sm:$0xf] %vm489, %v697
        %730 = vst.msk [vmem:[%s3 + $0x2c] sm:$0xf] %vm489, %v698
        %731 = vst.msk [vmem:[%s3 + $0x30] sm:$0xf] %vm489, %v699
        %732 = vst.msk [vmem:[%s3 + $0x34] sm:$0xf] %vm489, %v700
        %733 = vst.msk [vmem:[%s3 + $0x38] sm:$0xf] %vm489, %v701
        %734 = vst.msk [vmem:[%s3 + $0x3c] sm:$0xf] %vm489, %v702
      $region40: #{generator_forward.7} parent=31 // pred_fallthru
        _
      // Predicated region
      $region41: #{generator_forward.7} parent=31 // pred_check
        %p735 = pneg %p114
      $region42: #{generator_forward.7} parent=31 // pred_check_branch
        %737 = sbr.rel (%p735) target = $region44
      $region43: #{generator_forward.7} parent=31 // pred_region
        _
      $region44: #{generator_forward.7} parent=31 // pred_fallthru
        _
      // Predicated region
      $region45: #{generator_forward.7} parent=31 // pred_check
        %p738 = pneg %p114
      $region46: #{generator_forward.7} parent=31 // pred_check_branch
        %740 = sbr.rel (%p738) target = $region48
      $region47: #{generator_forward.7} parent=31 // pred_region
        _
      $region48: #{generator_forward.7} parent=31 // pred_fallthru
        _
    $region32: #{generator_forward.7} parent=5 // pred_fallthru
      _
    %p741 = scmp.le.s32.totalorder 2, %s9
    // Predicated region
    $region49: #{generator_forward.7} parent=5 // pred_check
      %p742 = pneg %p741
    $region50: #{generator_forward.7} parent=5 // pred_check_branch
      %744 = sbr.rel (%p742) target = $region52
    $region51: #{generator_forward.7} parent=5 // pred_region
      %s745 = ssub.s32 %s9, 2
    $region52: #{generator_forward.7} parent=5 // pred_fallthru
      _
  $region6: #{generator_forward.7} parent=0 // loop_footer
    %s13 = sadd.s32 1, %s9
  $region7: #{generator_forward.7} parent=0 // loop_footer_branch
    %8 = sbr.rel target = $region3
  $region8: #{generator_forward.7} parent=0 // loop_exit
    _

// kernel: generator_forward.8
$region0: #{generator_forward.8}
  #allocation0 [shape = 'u32[]', space=smem, size = 0x4, offset = 0x4, fixed_abs, tag = 'smem constant byte address 0x4 - core index']
  #allocation1 [shape = 'u32[144,128]{1,0:T(1,128)}', space=vmem, size = 0x12000, scoped, tag = 'internal scratch']
  #allocation2 [shape = 'f32[16,1]{1,0:T(8,128)}', space=vmem, size = 0x2000, scoped, tag = 'scratch operand']
  #allocation3 [shape = 'f32[16,1]{1,0:T(8,128)}', space=vmem, size = 0x2000, scoped, tag = 'scratch operand']
  %s0 = inlined_call_operand.vmem [shape: bf16[4,128,128], index: 0, kind: input, shape index: {}]
  %s1 = inlined_call_operand.vmem [shape: bf16[4,16,128], index: 1, kind: input, shape index: {}]
  %s2 = inlined_call_operand.vmem [shape: f32[16,1], index: 2, kind: input, shape index: {}]
  %s3 = inlined_call_operand.vmem [shape: bf16[4,16,128], index: 3, kind: output, shape index: {}]
  %s4 = sld [smem:[#allocation0]]
  $region53: #{generator_forward.8} parent=0
    _
  %s6 = ssub.s32 1, %s4
  %s7 = scalar_select 0, %s6, %s4
  loop: start=0, step=1, limit=6
  $region2: #{generator_forward.8} parent=0 // loop_pre_header
    _
  $region3: #{generator_forward.8} parent=0 // loop_header
    %s9 = sphi 0, %s13
    %p10 = scmp.ge.s32.totalorder %s9, 6
    %s16 = sphi 0, %s28
    %s17 = sphi 0, %s24
    %s18 = sphi 0, %s16
    %s19 = sphi 0, %s17
    %s20 = sphi 0, %s18
    %s21 = sphi 0, %s19
    %s33 = sphi 0, %s35
    %s36 = sphi 0, %s33
    %s37 = sphi 0, %s36
    %s53 = sphi 0, %s37
    %s59 = sphi 0, %s61
    %s62 = sphi 0, %s59
    %s63 = sphi 0, %s62
    %s79 = sphi 0, %s63
    %s83 = sphi 0, %s83
    %s85 = sphi 0, %s83
    %s86 = sphi 0, %s85
    %s100 = sphi 0, %s86
    %s104 = sphi 0, %s104
    %s106 = sphi 0, %s104
    %s107 = sphi 0, %s106
    %s121 = sphi 0, %s107
  $region4: #{generator_forward.8} parent=0 // loop_header_branch
    %12 = sbr.rel (%p10) target = $region8
  $region5: #{generator_forward.8} parent=0 // loop_body
    %s14 = ssub.s32 %s9, 1
    %s15 = ssub.s32 %s9, 2
    %s22 = sadd.s32 1, %s17
    %p23 = scmp.ge.s32.totalorder %s22, 1
    %s24 = scalar_select %p23, 0, %s22
    %s25 = sadd.s32 1, %s16
    %s26 = scalar_select %p23, %s25, %s16
    %p27 = scmp.ge.s32.totalorder %s26, 4
    %s28 = scalar_select %p27, 0, %s26
    %s29 = ssub.s32 %s16, %s28
    %s30 = ssub.s32 %s17, %s24
    %s31 = sor.u32 %s29, %s30
    %p32 = scmp.eq.s32.totalorder %s31, 0
    %s34 = sadd.s32 %s33, 1
    %s35 = scalar_select %p32, %s33, %s34
    %p38 = pneg %p32
    %p39 = scmp.eq.s32.totalorder %s9, 3
    %p40 = por %p38, %p39
    %p41 = scmp.ne.s32.totalorder %s33, %s36
    %p42 = scmp.eq.s32.totalorder %s9, 0
    %p43 = por %p41, %p42
    %p44 = scmp.ne.s32.totalorder %s33, %s36
    %p45 = scmp.eq.s32.totalorder %s14, 3
    %p46 = por %p44, %p45
    %p47 = scmp.ne.s32.totalorder %s36, %s37
    %p48 = scmp.eq.s32.totalorder %s14, 0
    %p49 = por %p47, %p48
    %p50 = scmp.ne.s32.totalorder %s36, %s37
    %p51 = scmp.eq.s32.totalorder %s15, 3
    %p52 = por %p50, %p51
    %p54 = scmp.ne.s32.totalorder %s37, %s53
    %p55 = scmp.eq.s32.totalorder %s15, 0
    %p56 = por %p54, %p55
    %s57 = ssub.s32 %s16, %s28
    %p58 = scmp.eq.s32.totalorder %s57, 0
    %s60 = sadd.s32 %s59, 1
    %s61 = scalar_select %p58, %s59, %s60
    %p64 = pneg %p58
    %p65 = scmp.eq.s32.totalorder %s9, 3
    %p66 = por %p64, %p65
    %p67 = scmp.ne.s32.totalorder %s59, %s62
    %p68 = scmp.eq.s32.totalorder %s9, 0
    %p69 = por %p67, %p68
    %p70 = scmp.ne.s32.totalorder %s59, %s62
    %p71 = scmp.eq.s32.totalorder %s14, 3
    %p72 = por %p70, %p71
    %p73 = scmp.ne.s32.totalorder %s62, %s63
    %p74 = scmp.eq.s32.totalorder %s14, 0
    %p75 = por %p73, %p74
    %p76 = scmp.ne.s32.totalorder %s62, %s63
    %p77 = scmp.eq.s32.totalorder %s15, 3
    %p78 = por %p76, %p77
    %p80 = scmp.ne.s32.totalorder %s63, %s79
    %p81 = scmp.eq.s32.totalorder %s15, 0
    %p82 = por %p80, %p81
    %s84 = sadd.s32 %s83, 1
    %p87 = scmp.eq.s32.totalorder %s9, 3
    %p88 = scmp.ne.s32.totalorder %s83, %s85
    %p89 = scmp.eq.s32.totalorder %s9, 0
    %p90 = por %p88, %p89
    %p91 = scmp.ne.s32.totalorder %s83, %s85
    %p92 = scmp.eq.s32.totalorder %s14, 3
    %p93 = por %p91, %p92
    %p94 = scmp.ne.s32.totalorder %s85, %s86
    %p95 = scmp.eq.s32.totalorder %s14, 0
    %p96 = por %p94, %p95
    %p97 = scmp.ne.s32.totalorder %s85, %s86
    %p98 = scmp.eq.s32.totalorder %s15, 3
    %p99 = por %p97, %p98
    %p101 = scmp.ne.s32.totalorder %s86, %s100
    %p102 = scmp.eq.s32.totalorder %s15, 0
    %p103 = por %p101, %p102
    %s105 = sadd.s32 %s104, 1
    %p108 = scmp.eq.s32.totalorder %s9, 3
    %p109 = scmp.ne.s32.totalorder %s104, %s106
    %p110 = scmp.eq.s32.totalorder %s9, 0
    %p111 = por %p109, %p110
    %p112 = scmp.ne.s32.totalorder %s104, %s106
    %p113 = scmp.eq.s32.totalorder %s14, 3
    %p114 = por %p112, %p113
    %p115 = scmp.ne.s32.totalorder %s106, %s107
    %p116 = scmp.eq.s32.totalorder %s14, 0
    %p117 = por %p115, %p116
    %p118 = scmp.ne.s32.totalorder %s106, %s107
    %p119 = scmp.eq.s32.totalorder %s15, 3
    %p120 = por %p118, %p119
    %p122 = scmp.ne.s32.totalorder %s107, %s121
    %p123 = scmp.eq.s32.totalorder %s15, 0
    %p124 = por %p122, %p123
    %p125 = scmp.le.s32.totalorder 1, %s9
    %p126 = scmp.lt.s32.totalorder %s9, 5
    %p127 = pnand %p125, %p126
    %p128 = pneg %p127
    // Predicated region
    $region9: #{generator_forward.8} parent=5 // pred_check
      _
    $region10: #{generator_forward.8} parent=5 // pred_check_branch
      %130 = sbr.rel (%p127) target = $region12
    $region11: #{generator_forward.8} parent=5 // pred_region
      %s131 = ssub.s32 %s9, 1
      // Predicated region
      $region13: #{generator_forward.8} parent=11 // pred_check
        %p132 = pneg %p96
      $region14: #{generator_forward.8} parent=11 // pred_check_branch
        %134 = sbr.rel (%p132) target = $region16
      $region15: #{generator_forward.8} parent=11 // pred_region
        _
      $region16: #{generator_forward.8} parent=11 // pred_fallthru
        _
    $region12: #{generator_forward.8} parent=5 // pred_fallthru
      _
    %p135 = scmp.lt.s32.totalorder %s9, 4
    // Predicated region
    $region17: #{generator_forward.8} parent=5 // pred_check
      %p136 = pneg %p135
    $region18: #{generator_forward.8} parent=5 // pred_check_branch
      %138 = sbr.rel (%p136) target = $region20
    $region19: #{generator_forward.8} parent=5 // pred_region
      // Predicated region
      $region21: #{generator_forward.8} parent=19 // pred_check
        %p139 = pneg %p43
      $region22: #{generator_forward.8} parent=19 // pred_check_branch
        %141 = sbr.rel (%p139) target = $region24
      $region23: #{generator_forward.8} parent=19 // pred_region
        %p142 = scmp.lt.s32.totalorder %s16, 3
        %s143 = scalar_select %p142, %s16, 3
        %p144 = scmp.lt.s32.totalorder %s17, 0
        %s145 = scalar_select %p144, %s17, 0
        %s146 = smul.addr %s143, 16
        %s147 = sadd.s32 %s145, %s146
        %s148 = smul.addr %s147, 4
        %s149 = scalar_lea.vmem %s0, %s148
      $region24: #{generator_forward.8} parent=19 // pred_fallthru
        _
      // Predicated region
      $region25: #{generator_forward.8} parent=19 // pred_check
        %p150 = pneg %p69
      $region26: #{generator_forward.8} parent=19 // pred_check_branch
        %152 = sbr.rel (%p150) target = $region28
      $region27: #{generator_forward.8} parent=19 // pred_region
        %p153 = scmp.lt.s32.totalorder %s16, 3
        %s154 = scalar_select %p153, %s16, 3
        %s155 = smul.addr %s154, 2
        %s156 = smul.addr %s155, 4
        %s157 = scalar_lea.vmem %s1, %s156
      $region28: #{generator_forward.8} parent=19 // pred_fallthru
        _
    $region20: #{generator_forward.8} parent=5 // pred_fallthru
      _
    %p158 = scmp.le.s32.totalorder 1, %s9
    %p159 = scmp.lt.s32.totalorder %s9, 5
    %p160 = pnand %p158, %p159
    %p161 = pneg %p160
    // Predicated region
    $region29: #{generator_forward.8} parent=5 // pred_check
      _
    $region30: #{generator_forward.8} parent=5 // pred_check_branch
      %163 = sbr.rel (%p160) target = $region32
    $region31: #{generator_forward.8} parent=5 // pred_region
      %s164 = ssub.s32 %s9, 1
      %p165 = scmp.lt.s32.totalorder %s18, 3
      %s166 = scalar_select %p165, %s18, 3
      %p167 = scmp.lt.s32.totalorder %s19, 0
      %s168 = scalar_select %p167, %s19, 0
      %s169 = smul.addr %s166, 16
      %s170 = sadd.s32 %s168, %s169
      %s171 = smul.addr %s170, 4
      %s172 = scalar_lea.vmem %s0, %s171
      %p173 = pneg %p49
      %p174 = pneg %p46
      %p175 = scmp.lt.s32.totalorder %s18, 3
      %s176 = scalar_select %p175, %s18, 3
      %s177 = smul.addr %s176, 2
      %s178 = smul.addr %s177, 4
      %s179 = scalar_lea.vmem %s1, %s178
      %p180 = pneg %p75
      %p181 = pneg %p72
      %p182 = pneg %p96
      %p183 = pneg %p93
      %p184 = pneg %p117
      %p185 = pneg %p114
      %p186 = scmp.lt.s32.totalorder %s18, 3
      %s187 = scalar_select %p186, %s18, 3
      %p188 = scmp.lt.s32.totalorder %s19, 0
      %s189 = scalar_select %p188, %s19, 0
      %s190 = smul.addr %s187, 16
      %s191 = sadd.s32 %s189, %s190
      %s192 = smul.addr %s191, 4
      %s193 = scalar_lea.vmem %s0, %s192
      %p194 = scmp.lt.s32.totalorder %s18, 3
      %s195 = scalar_select %p194, %s18, 3
      %s196 = smul.addr %s195, 2
      %s197 = smul.addr %s196, 4
      %s198 = scalar_lea.vmem %s1, %s197
      %v200 = vld [vmem:[%s198] sm:$0xf]
      %v201 = vld [vmem:[%s198 + $0x4] sm:$0xf]
      %v202 = vld [vmem:[%s193] sm:$0xf]
      %v203 = vld [vmem:[%s193 + $0x4] sm:$0xf]
      %v204 = vld [vmem:[%s193 + $0x8] sm:$0xf]
      %v205 = vld [vmem:[%s193 + $0xc] sm:$0xf]
      %v206 = vld [vmem:[%s193 + $0x10] sm:$0xf]
      %v207 = vld [vmem:[%s193 + $0x14] sm:$0xf]
      %v208 = vld [vmem:[%s193 + $0x18] sm:$0xf]
      %v209 = vld [vmem:[%s193 + $0x1c] sm:$0xf]
      %v210 = vld [vmem:[%s193 + $0x20] sm:$0xf]
      %v211 = vld [vmem:[%s193 + $0x24] sm:$0xf]
      %v212 = vld [vmem:[%s193 + $0x28] sm:$0xf]
      %v213 = vld [vmem:[%s193 + $0x2c] sm:$0xf]
      %v214 = vld [vmem:[%s193 + $0x30] sm:$0xf]
      %v215 = vld [vmem:[%s193 + $0x34] sm:$0xf]
      %v216 = vld [vmem:[%s193 + $0x38] sm:$0xf]
      %v217 = vld [vmem:[%s193 + $0x3c] sm:$0xf]
      %v220 = vunpack.c.l.b16 %v200
      %v221 = vunpack.c.l.b16 %v201
      %v222 = vpack.c.b16 %v221, %v220
      %v240 = vunpack.c.l.b16 %v202
      %v241 = vunpack.c.l.b16 %v203
      %v242 = vunpack.c.l.b16 %v204
      %v243 = vunpack.c.l.b16 %v205
      %v244 = vunpack.c.l.b16 %v206
      %v245 = vunpack.c.l.b16 %v207
      %v246 = vunpack.c.l.b16 %v208
      %v247 = vunpack.c.l.b16 %v209
      %v248 = vunpack.c.l.b16 %v210
      %v249 = vunpack.c.l.b16 %v211
      %v250 = vunpack.c.l.b16 %v212
      %v251 = vunpack.c.l.b16 %v213
      %v252 = vunpack.c.l.b16 %v214
      %v253 = vunpack.c.l.b16 %v215
      %v254 = vunpack.c.l.b16 %v216
      %v255 = vunpack.c.l.b16 %v217
      %v256 = vpack.c.b16 %v241, %v240
      %v257 = vpack.c.b16 %v243, %v242
      %v258 = vpack.c.b16 %v245, %v244
      %v259 = vpack.c.b16 %v247, %v246
      %v260 = vpack.c.b16 %v249, %v248
      %v261 = vpack.c.b16 %v251, %v250
      %v262 = vpack.c.b16 %v253, %v252
      %v263 = vpack.c.b16 %v255, %v254
      %272 = vmatprep.subr.bf16.mxu0 0
      %273 = vmatpush1.bf16.msra.mxu0 %v263
      %274 = vmatprep.subr.bf16.mxu0 0
      %275 = vmatpush1.bf16.msra.mxu0 %v262
      %276 = vmatprep.subr.bf16.mxu0 0
      %277 = vmatpush1.bf16.msra.mxu0 %v261
      %278 = vmatprep.subr.bf16.mxu0 0
      %279 = vmatpush1.bf16.msra.mxu0 %v260
      %280 = vmatprep.subr.bf16.mxu0 0
      %281 = vmatpush1.bf16.msra.mxu0 %v259
      %282 = vmatprep.subr.bf16.mxu0 0
      %283 = vmatpush1.bf16.msra.mxu0 %v258
      %284 = vmatprep.subr.bf16.mxu0 0
      %285 = vmatpush1.bf16.msra.mxu0 %v257
      %286 = vmatprep.subr.bf16.mxu0 0
      %287 = vmatpush1.bf16.msra.mxu0 %v256
      %288 = vmatprep.subr.bf16.mxu0 0
      %289 = vmatpush2.bf16.msra.mxu0 0
      %290 = vmatprep.subr.bf16.mxu0 0
      %291 = vmatpush2.bf16.msra.mxu0 0
      %292 = vmatprep.subr.bf16.mxu0 0
      %293 = vmatpush2.bf16.msra.mxu0 0
      %294 = vmatprep.subr.bf16.mxu0 0
      %295 = vmatpush2.bf16.msra.mxu0 0
      %296 = vmatprep.subr.bf16.mxu0 0
      %297 = vmatpush2.bf16.msra.mxu0 0
      %298 = vmatprep.subr.bf16.mxu0 0
      %299 = vmatpush2.bf16.msra.mxu0 0
      %300 = vmatprep.subr.bf16.mxu0 0
      %301 = vmatpush2.bf16.msra.mxu0 0
      %302 = vmatprep.subr.bf16.mxu0 0
      %303 = vmatpush2.bf16.msra.mxu0 0
      %304 = vmatprep.mubr.bf16.mxu0 0
      %305 = vmatmul.mubr.bf16.gmra.mxu0 %v222
      %v306 = vpop.f32.mrf.mxu0
      %v307 = vadd.f32 0.0, %v306
      %v308 = vpop.f32.mrf.mxu0
      %v309 = vpop.f32.mrf.mxu0
      %v310 = vadd.f32 0.0, %v309
      %v311 = vpop.f32.mrf.mxu0
      %312 = vdwg.mxu0
      %p313 = scmp.eq.s32.totalorder %s18, 0
      %p314 = scmp.eq.s32.totalorder %s19, 0
      %p315 = pnand %p313, %p314
      %p316 = pneg %p315
      // Predicated region
      $region33: #{generator_forward.8} parent=31 // pred_check
        _
      $region34: #{generator_forward.8} parent=31 // pred_check_branch
        %318 = sbr.rel (%p315) target = $region36
      $region35: #{generator_forward.8} parent=31 // pred_region
        %vm319 = vcmask 7168
        %320 = vst.msk [vmem:[#allocation2] sm:$0xff] %vm319, 0.0
        %321 = vst.msk [vmem:[#allocation2 + $0x8] sm:$0xff] %vm319, 0.0
        %322 = vst.msk [vmem:[#allocation3] sm:$0xff] %vm319, 0.0
        %323 = vst.msk [vmem:[#allocation3 + $0x8] sm:$0xff] %vm319, 0.0
      $region36: #{generator_forward.8} parent=31 // pred_fallthru
        _
      %v324 = vld [vmem:[#allocation2] sm:$0xff]
      %v325 = vld [vmem:[#allocation2 + $0x8] sm:$0xff]
      %326 = vadd.xlane.f32.xlu0 %v307
      %v327 = vpop.xlane.xlu0 %326
      %328 = vadd.xlane.f32.xlu0 %v310
      %v329 = vpop.xlane.xlu0 %328
      %v330 = vadd.f32 %v324, %v327
      %v331 = vadd.f32 %v325, %v329
      %vm332 = vcmask 7168
      %333 = vst.msk [vmem:[#allocation2] sm:$0xff] %vm332, %v330
      %334 = vst.msk [vmem:[#allocation2 + $0x8] sm:$0xff] %vm332, %v331
      %v335 = vld [vmem:[#allocation3] sm:$0xff]
      %v336 = vld [vmem:[#allocation3 + $0x8] sm:$0xff]
      %v337 = vmul.f32 %v307, %v307
      %v338 = vmul.f32 %v310, %v310
      %339 = vadd.xlane.f32.xlu0 %v337
      %v340 = vpop.xlane.xlu0 %339
      %341 = vadd.xlane.f32.xlu0 %v338
      %v342 = vpop.xlane.xlu0 %341
      %v343 = vadd.f32 %v335, %v340
      %v344 = vadd.f32 %v336, %v342
      %345 = vst.msk [vmem:[#allocation3] sm:$0xff] %vm332, %v343
      %346 = vst.msk [vmem:[#allocation3 + $0x8] sm:$0xff] %vm332, %v344
      %v347 = vpack.c.bf16 %v310, %v307
      %v349 = vunpack.c.l.b16 %v347
      %v350 = vunpack.c.h.b16 %v347
      %v351 = vpack.c.b16 %v349, %v349
      %v352 = vpack.c.b16 %v350, %v350
      %s355 = smul.u32 %s18, 2
      %s356 = smul.addr %s355, 4
      %s357 = scalar_lea.vmem %s3, %s356
      %358 = vst [vmem:[%s357] sm:$0xf] %v351
      %359 = vst [vmem:[%s357 + $0x4] sm:$0xf] %v352
      %p360 = scmp.eq.s32.totalorder %s18, 3
      %p361 = pnand %p360, %p314
      %p362 = pneg %p361
      // Predicated region
      $region37: #{generator_forward.8} parent=31 // pred_check
        _
      $region38: #{generator_forward.8} parent=31 // pred_check_branch
        %364 = sbr.rel (%p361) target = $region40
      $region39: #{generator_forward.8} parent=31 // pred_region
        %v365 = vld [vmem:[%s3] sm:$0xf]
        %v366 = vld [vmem:[%s3 + $0x4] sm:$0xf]
        %v367 = vld [vmem:[%s3 + $0x8] sm:$0xf]
        %v368 = vld [vmem:[%s3 + $0xc] sm:$0xf]
        %v369 = vld [vmem:[%s3 + $0x10] sm:$0xf]
        %v370 = vld [vmem:[%s3 + $0x14] sm:$0xf]
        %v371 = vld [vmem:[%s3 + $0x18] sm:$0xf]
        %v372 = vld [vmem:[%s3 + $0x1c] sm:$0xf]
        %v373 = vunpack.c.l.bf16 %v365
        %v374 = vunpack.c.l.bf16 %v366
        %v375 = vunpack.c.l.bf16 %v367
        %v376 = vunpack.c.l.bf16 %v368
        %v377 = vunpack.c.l.bf16 %v369
        %v378 = vunpack.c.l.bf16 %v370
        %v379 = vunpack.c.l.bf16 %v371
        %v380 = vunpack.c.l.bf16 %v372
        %v381 = vld [vmem:[#allocation2] sm:$0xff]
        %v382 = vld [vmem:[#allocation2 + $0x8] sm:$0xff]
        %v383 = vmul.f32 %v381, 0.001953125
        %v384 = vmul.f32 %v382, 0.001953125
        %v385 = vld [vmem:[#allocation3] sm:$0xff]
        %v386 = vld [vmem:[#allocation3 + $0x8] sm:$0xff]
        %v387 = vmul.f32 %v385, 0.001953125
        %v388 = vmul.f32 %v386, 0.001953125
        %v389 = vmul.f32 %v383, %v383
        %v390 = vmul.f32 %v384, %v384
        %v391 = vsub.f32 %v387, %v389
        %v392 = vsub.f32 %v388, %v390
        %v393 = vmax.f32 %v391, 0.0
        %v394 = vmax.f32 %v392, 0.0
        %v395 = vadd.f32 %v393, 1e-05
        %v396 = vadd.f32 %v394, 1e-05
        %v397 = vrsqrt.pop %v395
        %v398 = vrsqrt.pop %v396
        %400 = vset.pattern.permute.xlu0 0
        %401 = vperm.xlu0 %400, %v383
        %v402 = vpop.permute.xlu0 %401
        %405 = vset.pattern.permute.xlu0 0
        %406 = vperm.xlu0 %405, %v384
        %v407 = vpop.permute.xlu0 %406
        %v409 = vsub.f32 %v373, %v402
        %v410 = vsub.f32 %v374, %v407
        %v411 = vsub.f32 %v375, %v402
        %v412 = vsub.f32 %v376, %v407
        %v413 = vsub.f32 %v377, %v402
        %v414 = vsub.f32 %v378, %v407
        %v415 = vsub.f32 %v379, %v402
        %v416 = vsub.f32 %v380, %v407
        %418 = vset.pattern.permute.xlu0 0
        %419 = vperm.xlu0 %418, %v397
        %v420 = vpop.permute.xlu0 %419
        %423 = vset.pattern.permute.xlu0 0
        %424 = vperm.xlu0 %423, %v398
        %v425 = vpop.permute.xlu0 %424
        %v427 = vmul.f32 %v409, %v420
        %v428 = vmul.f32 %v410, %v425
        %v429 = vmul.f32 %v411, %v420
        %v430 = vmul.f32 %v412, %v425
        %v431 = vmul.f32 %v413, %v420
        %v432 = vmul.f32 %v414, %v425
        %v433 = vmul.f32 %v415, %v420
        %v434 = vmul.f32 %v416, %v425
        %v435 = vmax.f32 %v427, 0.0
        %v436 = vmax.f32 %v428, 0.0
        %v437 = vmax.f32 %v429, 0.0
        %v438 = vmax.f32 %v430, 0.0
        %v439 = vmax.f32 %v431, 0.0
        %v440 = vmax.f32 %v432, 0.0
        %v441 = vmax.f32 %v433, 0.0
        %v442 = vmax.f32 %v434, 0.0
        %v443 = vpack.c.bf16 %v436, %v435
        %v444 = vpack.c.bf16 %v438, %v437
        %v445 = vpack.c.bf16 %v440, %v439
        %v446 = vpack.c.bf16 %v442, %v441
        %v451 = vunpack.c.l.b16 %v443
        %v452 = vunpack.c.h.b16 %v443
        %v453 = vunpack.c.l.b16 %v444
        %v454 = vunpack.c.h.b16 %v444
        %v455 = vunpack.c.l.b16 %v445
        %v456 = vunpack.c.h.b16 %v445
        %v457 = vunpack.c.l.b16 %v446
        %v458 = vunpack.c.h.b16 %v446
        %v459 = vpack.c.b16 %v451, %v451
        %v460 = vpack.c.b16 %v452, %v452
        %v461 = vpack.c.b16 %v453, %v453
        %v462 = vpack.c.b16 %v454, %v454
        %v463 = vpack.c.b16 %v455, %v455
        %v464 = vpack.c.b16 %v456, %v456
        %v465 = vpack.c.b16 %v457, %v457
        %v466 = vpack.c.b16 %v458, %v458
        %475 = vst [vmem:[%s3] sm:$0xf] %v459
        %476 = vst [vmem:[%s3 + $0x4] sm:$0xf] %v460
        %477 = vst [vmem:[%s3 + $0x8] sm:$0xf] %v461
        %478 = vst [vmem:[%s3 + $0xc] sm:$0xf] %v462
        %479 = vst [vmem:[%s3 + $0x10] sm:$0xf] %v463
        %480 = vst [vmem:[%s3 + $0x14] sm:$0xf] %v464
        %481 = vst [vmem:[%s3 + $0x18] sm:$0xf] %v465
        %482 = vst [vmem:[%s3 + $0x1c] sm:$0xf] %v466
      $region40: #{generator_forward.8} parent=31 // pred_fallthru
        _
      // Predicated region
      $region41: #{generator_forward.8} parent=31 // pred_check
        %p483 = pneg %p114
      $region42: #{generator_forward.8} parent=31 // pred_check_branch
        %485 = sbr.rel (%p483) target = $region44
      $region43: #{generator_forward.8} parent=31 // pred_region
        _
      $region44: #{generator_forward.8} parent=31 // pred_fallthru
        _
      // Predicated region
      $region45: #{generator_forward.8} parent=31 // pred_check
        %p486 = pneg %p114
      $region46: #{generator_forward.8} parent=31 // pred_check_branch
        %488 = sbr.rel (%p486) target = $region48
      $region47: #{generator_forward.8} parent=31 // pred_region
        _
      $region48: #{generator_forward.8} parent=31 // pred_fallthru
        _
    $region32: #{generator_forward.8} parent=5 // pred_fallthru
      _
    %p489 = scmp.le.s32.totalorder 2, %s9
    // Predicated region
    $region49: #{generator_forward.8} parent=5 // pred_check
      %p490 = pneg %p489
    $region50: #{generator_forward.8} parent=5 // pred_check_branch
      %492 = sbr.rel (%p490) target = $region52
    $region51: #{generator_forward.8} parent=5 // pred_region
      %s493 = ssub.s32 %s9, 2
    $region52: #{generator_forward.8} parent=5 // pred_fallthru
      _
  $region6: #{generator_forward.8} parent=0 // loop_footer
    %s13 = sadd.s32 1, %s9
  $region7: #{generator_forward.8} parent=0 // loop_footer_branch
    %8 = sbr.rel target = $region3
  $region8: #{generator_forward.8} parent=0 // loop_exit
    _

// kernel: generator_forward.9
$region0: #{generator_forward.9}
  #allocation0 [shape = 'u32[]', space=smem, size = 0x4, offset = 0x4, fixed_abs, tag = 'smem constant byte address 0x4 - core index']
  #allocation1 [shape = 'u32[144,128]{1,0:T(1,128)}', space=vmem, size = 0x12000, scoped, tag = 'internal scratch']
  #allocation2 [shape = 'f32[8,1]{1,0:T(8,128)}', space=vmem, size = 0x1000, scoped, tag = 'scratch operand']
  #allocation3 [shape = 'f32[8,1]{1,0:T(8,128)}', space=vmem, size = 0x1000, scoped, tag = 'scratch operand']
  %s0 = inlined_call_operand.vmem [shape: bf16[4,64,512], index: 0, kind: input, shape index: {}]
  %s1 = inlined_call_operand.vmem [shape: bf16[4,8,64], index: 1, kind: input, shape index: {}]
  %s2 = inlined_call_operand.vmem [shape: f32[8,1], index: 2, kind: input, shape index: {}]
  %s3 = inlined_call_operand.vmem [shape: bf16[4,8,512], index: 3, kind: output, shape index: {}]
  %s4 = sld [smem:[#allocation0]]
  $region53: #{generator_forward.9} parent=0
    _
  %s6 = ssub.s32 1, %s4
  %s7 = scalar_select 0, %s6, %s4
  loop: start=0, step=1, limit=6
  $region2: #{generator_forward.9} parent=0 // loop_pre_header
    _
  $region3: #{generator_forward.9} parent=0 // loop_header
    %s9 = sphi 0, %s13
    %p10 = scmp.ge.s32.totalorder %s9, 6
    %s16 = sphi 0, %s28
    %s17 = sphi 0, %s24
    %s18 = sphi 0, %s16
    %s19 = sphi 0, %s17
    %s20 = sphi 0, %s18
    %s21 = sphi 0, %s19
    %s33 = sphi 0, %s35
    %s36 = sphi 0, %s33
    %s37 = sphi 0, %s36
    %s53 = sphi 0, %s37
    %s59 = sphi 0, %s61
    %s62 = sphi 0, %s59
    %s63 = sphi 0, %s62
    %s79 = sphi 0, %s63
    %s83 = sphi 0, %s83
    %s85 = sphi 0, %s83
    %s86 = sphi 0, %s85
    %s100 = sphi 0, %s86
    %s104 = sphi 0, %s104
    %s106 = sphi 0, %s104
    %s107 = sphi 0, %s106
    %s121 = sphi 0, %s107
  $region4: #{generator_forward.9} parent=0 // loop_header_branch
    %12 = sbr.rel (%p10) target = $region8
  $region5: #{generator_forward.9} parent=0 // loop_body
    %s14 = ssub.s32 %s9, 1
    %s15 = ssub.s32 %s9, 2
    %s22 = sadd.s32 1, %s17
    %p23 = scmp.ge.s32.totalorder %s22, 1
    %s24 = scalar_select %p23, 0, %s22
    %s25 = sadd.s32 1, %s16
    %s26 = scalar_select %p23, %s25, %s16
    %p27 = scmp.ge.s32.totalorder %s26, 4
    %s28 = scalar_select %p27, 0, %s26
    %s29 = ssub.s32 %s16, %s28
    %s30 = ssub.s32 %s17, %s24
    %s31 = sor.u32 %s29, %s30
    %p32 = scmp.eq.s32.totalorder %s31, 0
    %s34 = sadd.s32 %s33, 1
    %s35 = scalar_select %p32, %s33, %s34
    %p38 = pneg %p32
    %p39 = scmp.eq.s32.totalorder %s9, 3
    %p40 = por %p38, %p39
    %p41 = scmp.ne.s32.totalorder %s33, %s36
    %p42 = scmp.eq.s32.totalorder %s9, 0
    %p43 = por %p41, %p42
    %p44 = scmp.ne.s32.totalorder %s33, %s36
    %p45 = scmp.eq.s32.totalorder %s14, 3
    %p46 = por %p44, %p45
    %p47 = scmp.ne.s32.totalorder %s36, %s37
    %p48 = scmp.eq.s32.totalorder %s14, 0
    %p49 = por %p47, %p48
    %p50 = scmp.ne.s32.totalorder %s36, %s37
    %p51 = scmp.eq.s32.totalorder %s15, 3
    %p52 = por %p50, %p51
    %p54 = scmp.ne.s32.totalorder %s37, %s53
    %p55 = scmp.eq.s32.totalorder %s15, 0
    %p56 = por %p54, %p55
    %s57 = ssub.s32 %s16, %s28
    %p58 = scmp.eq.s32.totalorder %s57, 0
    %s60 = sadd.s32 %s59, 1
    %s61 = scalar_select %p58, %s59, %s60
    %p64 = pneg %p58
    %p65 = scmp.eq.s32.totalorder %s9, 3
    %p66 = por %p64, %p65
    %p67 = scmp.ne.s32.totalorder %s59, %s62
    %p68 = scmp.eq.s32.totalorder %s9, 0
    %p69 = por %p67, %p68
    %p70 = scmp.ne.s32.totalorder %s59, %s62
    %p71 = scmp.eq.s32.totalorder %s14, 3
    %p72 = por %p70, %p71
    %p73 = scmp.ne.s32.totalorder %s62, %s63
    %p74 = scmp.eq.s32.totalorder %s14, 0
    %p75 = por %p73, %p74
    %p76 = scmp.ne.s32.totalorder %s62, %s63
    %p77 = scmp.eq.s32.totalorder %s15, 3
    %p78 = por %p76, %p77
    %p80 = scmp.ne.s32.totalorder %s63, %s79
    %p81 = scmp.eq.s32.totalorder %s15, 0
    %p82 = por %p80, %p81
    %s84 = sadd.s32 %s83, 1
    %p87 = scmp.eq.s32.totalorder %s9, 3
    %p88 = scmp.ne.s32.totalorder %s83, %s85
    %p89 = scmp.eq.s32.totalorder %s9, 0
    %p90 = por %p88, %p89
    %p91 = scmp.ne.s32.totalorder %s83, %s85
    %p92 = scmp.eq.s32.totalorder %s14, 3
    %p93 = por %p91, %p92
    %p94 = scmp.ne.s32.totalorder %s85, %s86
    %p95 = scmp.eq.s32.totalorder %s14, 0
    %p96 = por %p94, %p95
    %p97 = scmp.ne.s32.totalorder %s85, %s86
    %p98 = scmp.eq.s32.totalorder %s15, 3
    %p99 = por %p97, %p98
    %p101 = scmp.ne.s32.totalorder %s86, %s100
    %p102 = scmp.eq.s32.totalorder %s15, 0
    %p103 = por %p101, %p102
    %s105 = sadd.s32 %s104, 1
    %p108 = scmp.eq.s32.totalorder %s9, 3
    %p109 = scmp.ne.s32.totalorder %s104, %s106
    %p110 = scmp.eq.s32.totalorder %s9, 0
    %p111 = por %p109, %p110
    %p112 = scmp.ne.s32.totalorder %s104, %s106
    %p113 = scmp.eq.s32.totalorder %s14, 3
    %p114 = por %p112, %p113
    %p115 = scmp.ne.s32.totalorder %s106, %s107
    %p116 = scmp.eq.s32.totalorder %s14, 0
    %p117 = por %p115, %p116
    %p118 = scmp.ne.s32.totalorder %s106, %s107
    %p119 = scmp.eq.s32.totalorder %s15, 3
    %p120 = por %p118, %p119
    %p122 = scmp.ne.s32.totalorder %s107, %s121
    %p123 = scmp.eq.s32.totalorder %s15, 0
    %p124 = por %p122, %p123
    %p125 = scmp.le.s32.totalorder 1, %s9
    %p126 = scmp.lt.s32.totalorder %s9, 5
    %p127 = pnand %p125, %p126
    %p128 = pneg %p127
    // Predicated region
    $region9: #{generator_forward.9} parent=5 // pred_check
      _
    $region10: #{generator_forward.9} parent=5 // pred_check_branch
      %130 = sbr.rel (%p127) target = $region12
    $region11: #{generator_forward.9} parent=5 // pred_region
      %s131 = ssub.s32 %s9, 1
      // Predicated region
      $region13: #{generator_forward.9} parent=11 // pred_check
        %p132 = pneg %p96
      $region14: #{generator_forward.9} parent=11 // pred_check_branch
        %134 = sbr.rel (%p132) target = $region16
      $region15: #{generator_forward.9} parent=11 // pred_region
        _
      $region16: #{generator_forward.9} parent=11 // pred_fallthru
        _
    $region12: #{generator_forward.9} parent=5 // pred_fallthru
      _
    %p135 = scmp.lt.s32.totalorder %s9, 4
    // Predicated region
    $region17: #{generator_forward.9} parent=5 // pred_check
      %p136 = pneg %p135
    $region18: #{generator_forward.9} parent=5 // pred_check_branch
      %138 = sbr.rel (%p136) target = $region20
    $region19: #{generator_forward.9} parent=5 // pred_region
      // Predicated region
      $region21: #{generator_forward.9} parent=19 // pred_check
        %p139 = pneg %p43
      $region22: #{generator_forward.9} parent=19 // pred_check_branch
        %141 = sbr.rel (%p139) target = $region24
      $region23: #{generator_forward.9} parent=19 // pred_region
        %s142 = smul.u32 4, %s17
        %p143 = scmp.lt.s32.totalorder %s16, 3
        %s144 = scalar_select %p143, %s16, 3
        %p145 = scmp.lt.s32.totalorder %s142, 3
        %s146 = scalar_select %p145, %s142, 3
        %s147 = smul.addr %s144, 32
        %s148 = sadd.s32 %s146, %s147
        %s149 = smul.addr %s148, 4
        %s150 = scalar_lea.vmem %s0, %s149
        %s151 = smul.u32 4, %s17
      $region24: #{generator_forward.9} parent=19 // pred_fallthru
        _
      // Predicated region
      $region25: #{generator_forward.9} parent=19 // pred_check
        %p152 = pneg %p69
      $region26: #{generator_forward.9} parent=19 // pred_check_branch
        %154 = sbr.rel (%p152) target = $region28
      $region27: #{generator_forward.9} parent=19 // pred_region
        %p155 = scmp.lt.s32.totalorder %s16, 3
        %s156 = scalar_select %p155, %s16, 3
        %s157 = smul.addr %s156, 4
        %s158 = scalar_lea.vmem %s1, %s157
      $region28: #{generator_forward.9} parent=19 // pred_fallthru
        _
    $region20: #{generator_forward.9} parent=5 // pred_fallthru
      _
    %p159 = scmp.le.s32.totalorder 1, %s9
    %p160 = scmp.lt.s32.totalorder %s9, 5
    %p161 = pnand %p159, %p160
    %p162 = pneg %p161
    // Predicated region
    $region29: #{generator_forward.9} parent=5 // pred_check
      _
    $region30: #{generator_forward.9} parent=5 // pred_check_branch
      %164 = sbr.rel (%p161) target = $region32
    $region31: #{generator_forward.9} parent=5 // pred_region
      %s165 = ssub.s32 %s9, 1
      %s166 = smul.u32 4, %s19
      %p167 = scmp.lt.s32.totalorder %s18, 3
      %s168 = scalar_select %p167, %s18, 3
      %p169 = scmp.lt.s32.totalorder %s166, 3
      %s170 = scalar_select %p169, %s166, 3
      %s171 = smul.addr %s168, 32
      %s172 = sadd.s32 %s170, %s171
      %s173 = smul.addr %s172, 4
      %s174 = scalar_lea.vmem %s0, %s173
      %p175 = pneg %p49
      %p176 = pneg %p46
      %p177 = scmp.lt.s32.totalorder %s18, 3
      %s178 = scalar_select %p177, %s18, 3
      %s179 = smul.addr %s178, 4
      %s180 = scalar_lea.vmem %s1, %s179
      %p181 = pneg %p75
      %p182 = pneg %p72
      %p183 = pneg %p96
      %p184 = pneg %p93
      %p185 = pneg %p117
      %p186 = pneg %p114
      %s187 = smul.u32 4, %s19
      %p188 = scmp.lt.s32.totalorder %s18, 3
      %s189 = scalar_select %p188, %s18, 3
      %p190 = scmp.lt.s32.totalorder %s187, 3
      %s191 = scalar_select %p190, %s187, 3
      %s192 = smul.addr %s189, 32
      %s193 = sadd.s32 %s191, %s192
      %s194 = smul.addr %s193, 4
      %s195 = scalar_lea.vmem %s0, %s194
      %s196 = smul.u32 4, %s19
      %p197 = scmp.lt.s32.totalorder %s18, 3
      %s198 = scalar_select %p197, %s18, 3
      %s199 = smul.addr %s198, 4
      %s200 = scalar_lea.vmem %s1, %s199
      %v202 = vld [vmem:[%s200] sm:$0xf]
      %v203 = vld [vmem:[%s195] sm:$0xff]
      %v204 = vld [vmem:[%s195 + $0x8] sm:$0xff]
      %v205 = vld [vmem:[%s195 + $0x10] sm:$0xff]
      %v206 = vld [vmem:[%s195 + $0x18] sm:$0xff]
      %v207 = vld [vmem:[%s195 + $0x20] sm:$0xff]
      %v208 = vld [vmem:[%s195 + $0x28] sm:$0xff]
      %v209 = vld [vmem:[%s195 + $0x30] sm:$0xff]
      %v210 = vld [vmem:[%s195 + $0x38] sm:$0xff]
      %v211 = vld [vmem:[%s195 + $0x40] sm:$0xff]
      %v212 = vld [vmem:[%s195 + $0x48] sm:$0xff]
      %v213 = vld [vmem:[%s195 + $0x50] sm:$0xff]
      %v214 = vld [vmem:[%s195 + $0x58] sm:$0xff]
      %v215 = vld [vmem:[%s195 + $0x60] sm:$0xff]
      %v216 = vld [vmem:[%s195 + $0x68] sm:$0xff]
      %v217 = vld [vmem:[%s195 + $0x70] sm:$0xff]
      %v218 = vld [vmem:[%s195 + $0x78] sm:$0xff]
      %v235 = vunpack.c.l.b16 %v203
      %v236 = vunpack.c.h.b16 %v203
      %v237 = vunpack.c.l.b16 %v204
      %v238 = vunpack.c.h.b16 %v204
      %v239 = vunpack.c.l.b16 %v205
      %v240 = vunpack.c.h.b16 %v205
      %v241 = vunpack.c.l.b16 %v206
      %v242 = vunpack.c.h.b16 %v206
      %v243 = vunpack.c.l.b16 %v207
      %v244 = vunpack.c.h.b16 %v207
      %v245 = vunpack.c.l.b16 %v208
      %v246 = vunpack.c.h.b16 %v208
      %v247 = vunpack.c.l.b16 %v209
      %v248 = vunpack.c.h.b16 %v209
      %v249 = vunpack.c.l.b16 %v210
      %v250 = vunpack.c.h.b16 %v210
      %v251 = vunpack.c.l.b16 %v211
      %v252 = vunpack.c.h.b16 %v211
      %v253 = vunpack.c.l.b16 %v212
      %v254 = vunpack.c.h.b16 %v212
      %v255 = vunpack.c.l.b16 %v213
      %v256 = vunpack.c.h.b16 %v213
      %v257 = vunpack.c.l.b16 %v214
      %v258 = vunpack.c.h.b16 %v214
      %v259 = vunpack.c.l.b16 %v215
      %v260 = vunpack.c.h.b16 %v215
      %v261 = vunpack.c.l.b16 %v216
      %v262 = vunpack.c.h.b16 %v216
      %v263 = vunpack.c.l.b16 %v217
      %v264 = vunpack.c.h.b16 %v217
      %v265 = vunpack.c.l.b16 %v218
      %v266 = vunpack.c.h.b16 %v218
      %v267 = vpack.c.b16 %v239, %v235
      %v268 = vpack.c.b16 %v240, %v236
      %v269 = vpack.c.b16 %v241, %v237
      %v270 = vpack.c.b16 %v242, %v238
      %v271 = vpack.c.b16 %v247, %v243
      %v272 = vpack.c.b16 %v248, %v244
      %v273 = vpack.c.b16 %v249, %v245
      %v274 = vpack.c.b16 %v250, %v246
      %v275 = vpack.c.b16 %v255, %v251
      %v276 = vpack.c.b16 %v256, %v252
      %v277 = vpack.c.b16 %v257, %v253
      %v278 = vpack.c.b16 %v258, %v254
      %v279 = vpack.c.b16 %v263, %v259
      %v280 = vpack.c.b16 %v264, %v260
      %v281 = vpack.c.b16 %v265, %v261
      %v282 = vpack.c.b16 %v266, %v262
      %vm299 = vcmask 523264
      %v301 = vsel %vm299, %v202, 0
      %303 = vmatprep.subr.bf16.mxu0 0
      %304 = vmatpush1.bf16.msra.mxu0 0
      %305 = vmatprep.subr.bf16.mxu0 0
      %306 = vmatpush1.bf16.msra.mxu0 0
      %307 = vmatprep.subr.bf16.mxu0 0
      %308 = vmatpush1.bf16.msra.mxu0 0
      %309 = vmatprep.subr.bf16.mxu0 0
      %310 = vmatpush1.bf16.msra.mxu0 0
      %311 = vmatprep.subr.bf16.mxu0 %v280
      %312 = vmatpush1.bf16.msra.mxu0 %v279
      %313 = vmatprep.subr.bf16.mxu0 %v276
      %314 = vmatpush1.bf16.msra.mxu0 %v275
      %315 = vmatprep.subr.bf16.mxu0 %v272
      %316 = vmatpush1.bf16.msra.mxu0 %v271
      %317 = vmatprep.subr.bf16.mxu0 %v268
      %318 = vmatpush1.bf16.msra.mxu0 %v267
      %319 = vmatprep.subr.bf16.mxu0 0
      %320 = vmatpush2.bf16.msra.mxu0 0
      %321 = vmatprep.subr.bf16.mxu0 0
      %322 = vmatpush2.bf16.msra.mxu0 0
      %323 = vmatprep.subr.bf16.mxu0 0
      %324 = vmatpush2.bf16.msra.mxu0 0
      %325 = vmatprep.subr.bf16.mxu0 0
      %326 = vmatpush2.bf16.msra.mxu0 0
      %327 = vmatprep.subr.bf16.mxu0 0
      %328 = vmatpush2.bf16.msra.mxu0 0
      %329 = vmatprep.subr.bf16.mxu0 0
      %330 = vmatpush2.bf16.msra.mxu0 0
      %331 = vmatprep.subr.bf16.mxu0 0
      %332 = vmatpush2.bf16.msra.mxu0 0
      %333 = vmatprep.subr.bf16.mxu0 0
      %334 = vmatpush2.bf16.msra.mxu0 0
      %335 = vmatprep.mubr.bf16.mxu0 0
      %336 = vmatmul.mubr.bf16.gmra.mxu0 %v301
      %v337 = vpop.f32.mrf.mxu0
      %v338 = vadd.f32 0.0, %v337
      %v339 = vpop.f32.mrf.mxu0
      %v340 = vadd.f32 0.0, %v339
      %v341 = vpop.f32.mrf.mxu0
      %v342 = vpop.f32.mrf.mxu0
      %343 = vdwg.mxu0
      %344 = vmatprep.subr.bf16.mxu0 0
      %345 = vmatpush1.bf16.msra.mxu0 0
      %346 = vmatprep.subr.bf16.mxu0 0
      %347 = vmatpush1.bf16.msra.mxu0 0
      %348 = vmatprep.subr.bf16.mxu0 0
      %349 = vmatpush1.bf16.msra.mxu0 0
      %350 = vmatprep.subr.bf16.mxu0 0
      %351 = vmatpush1.bf16.msra.mxu0 0
      %352 = vmatprep.subr.bf16.mxu0 %v282
      %353 = vmatpush1.bf16.msra.mxu0 %v281
      %354 = vmatprep.subr.bf16.mxu0 %v278
      %355 = vmatpush1.bf16.msra.mxu0 %v277
      %356 = vmatprep.subr.bf16.mxu0 %v274
      %357 = vmatpush1.bf16.msra.mxu0 %v273
      %358 = vmatprep.subr.bf16.mxu0 %v270
      %359 = vmatpush1.bf16.msra.mxu0 %v269
      %360 = vmatprep.subr.bf16.mxu0 0
      %361 = vmatpush2.bf16.msra.mxu0 0
      %362 = vmatprep.subr.bf16.mxu0 0
      %363 = vmatpush2.bf16.msra.mxu0 0
      %364 = vmatprep.subr.bf16.mxu0 0
      %365 = vmatpush2.bf16.msra.mxu0 0
      %366 = vmatprep.subr.bf16.mxu0 0
      %367 = vmatpush2.bf16.msra.mxu0 0
      %368 = vmatprep.subr.bf16.mxu0 0
      %369 = vmatpush2.bf16.msra.mxu0 0
      %370 = vmatprep.subr.bf16.mxu0 0
      %371 = vmatpush2.bf16.msra.mxu0 0
      %372 = vmatprep.subr.bf16.mxu0 0
      %373 = vmatpush2.bf16.msra.mxu0 0
      %374 = vmatprep.subr.bf16.mxu0 0
      %375 = vmatpush2.bf16.msra.mxu0 0
      %376 = vmatprep.mubr.bf16.mxu0 0
      %377 = vmatmul.mubr.bf16.gmra.mxu0 %v301
      %v378 = vpop.f32.mrf.mxu0
      %v379 = vadd.f32 0.0, %v378
      %v380 = vpop.f32.mrf.mxu0
      %v381 = vadd.f32 0.0, %v380
      %v382 = vpop.f32.mrf.mxu0
      %v383 = vpop.f32.mrf.mxu0
      %384 = vdwg.mxu0
      %p385 = scmp.eq.s32.totalorder %s18, 0
      %p386 = scmp.eq.s32.totalorder %s19, 0
      %p387 = pnand %p385, %p386
      %p388 = pneg %p387
      // Predicated region
      $region33: #{generator_forward.9} parent=31 // pred_check
        _
      $region34: #{generator_forward.9} parent=31 // pred_check_branch
        %390 = sbr.rel (%p387) target = $region36
      $region35: #{generator_forward.9} parent=31 // pred_region
        %vm391 = vcmask 7168
        %392 = vst.msk [vmem:[#allocation2] sm:$0xff] %vm391, 0.0
        %393 = vst.msk [vmem:[#allocation3] sm:$0xff] %vm391, 0.0
      $region36: #{generator_forward.9} parent=31 // pred_fallthru
        _
      %v394 = vld [vmem:[#allocation2] sm:$0xff]
      %v395 = vadd.f32 %v338, %v340
      %v396 = vadd.f32 %v395, %v379
      %v397 = vadd.f32 %v396, %v381
      %398 = vadd.xlane.f32.xlu0 %v397
      %v399 = vpop.xlane.xlu0 %398
      %v400 = vadd.f32 %v394, %v399
      %vm401 = vcmask 7168
      %402 = vst.msk [vmem:[#allocation2] sm:$0xff] %vm401, %v400
      %v403 = vld [vmem:[#allocation3] sm:$0xff]
      %v404 = vmul.f32 %v338, %v338
      %v405 = vmul.f32 %v340, %v340
      %v406 = vmul.f32 %v379, %v379
      %v407 = vmul.f32 %v381, %v381
      %v408 = vadd.f32 %v404, %v405
      %v409 = vadd.f32 %v408, %v406
      %v410 = vadd.f32 %v409, %v407
      %411 = vadd.xlane.f32.xlu0 %v410
      %v412 = vpop.xlane.xlu0 %411
      %v413 = vadd.f32 %v403, %v412
      %414 = vst.msk [vmem:[#allocation3] sm:$0xff] %vm401, %v413
      %v415 = vpack.c.bf16 %v338, %v338
      %v416 = vpack.c.bf16 %v340, %v340
      %v417 = vpack.c.bf16 %v379, %v379
      %v418 = vpack.c.bf16 %v381, %v381
      %v423 = vunpack.c.l.b16 %v415
      %v424 = vunpack.c.l.b16 %v416
      %v425 = vunpack.c.l.b16 %v417
      %v426 = vunpack.c.l.b16 %v418
      %v427 = vpack.c.b16 %v424, %v423
      %v428 = vpack.c.b16 %v426, %v425
      %s431 = smul.u32 %s18, 4
      %s432 = smul.addr %s431, 4
      %s433 = scalar_lea.vmem %s3, %s432
      %434 = vst [vmem:[%s433] sm:$0xff] %v427
      %435 = vst [vmem:[%s433 + $0x8] sm:$0xff] %v428
      %p436 = scmp.eq.s32.totalorder %s18, 3
      %p437 = pnand %p436, %p386
      %p438 = pneg %p437
      // Predicated region
      $region37: #{generator_forward.9} parent=31 // pred_check
        _
      $region38: #{generator_forward.9} parent=31 // pred_check_branch
        %440 = sbr.rel (%p437) target = $region40
      $region39: #{generator_forward.9} parent=31 // pred_region
        %v441 = vld [vmem:[%s3] sm:$0xff]
        %v442 = vld [vmem:[%s3 + $0x8] sm:$0xff]
        %v443 = vld [vmem:[%s3 + $0x10] sm:$0xff]
        %v444 = vld [vmem:[%s3 + $0x18] sm:$0xff]
        %v445 = vld [vmem:[%s3 + $0x20] sm:$0xff]
        %v446 = vld [vmem:[%s3 + $0x28] sm:$0xff]
        %v447 = vld [vmem:[%s3 + $0x30] sm:$0xff]
        %v448 = vld [vmem:[%s3 + $0x38] sm:$0xff]
        %v449 = vunpack.c.l.bf16 %v441
        %v450 = vunpack.c.h.bf16 %v441
        %v451 = vunpack.c.l.bf16 %v442
        %v452 = vunpack.c.h.bf16 %v442
        %v453 = vunpack.c.l.bf16 %v443
        %v454 = vunpack.c.h.bf16 %v443
        %v455 = vunpack.c.l.bf16 %v444
        %v456 = vunpack.c.h.bf16 %v444
        %v457 = vunpack.c.l.bf16 %v445
        %v458 = vunpack.c.h.bf16 %v445
        %v459 = vunpack.c.l.bf16 %v446
        %v460 = vunpack.c.h.bf16 %v446
        %v461 = vunpack.c.l.bf16 %v447
        %v462 = vunpack.c.h.bf16 %v447
        %v463 = vunpack.c.l.bf16 %v448
        %v464 = vunpack.c.h.bf16 %v448
        %v465 = vld [vmem:[#allocation2] sm:$0xff]
        %v466 = vmul.f32 %v465, 0.00048828125
        %v467 = vld [vmem:[#allocation3] sm:$0xff]
        %v468 = vmul.f32 %v467, 0.00048828125
        %v469 = vmul.f32 %v466, %v466
        %v470 = vsub.f32 %v468, %v469
        %v471 = vmax.f32 %v470, 0.0
        %v472 = vadd.f32 %v471, 1e-05
        %v473 = vrsqrt.pop %v472
        %475 = vset.pattern.permute.xlu0 0
        %476 = vperm.xlu0 %475, %v466
        %v477 = vpop.permute.xlu0 %476
        %v479 = vsub.f32 %v449, %v477
        %v480 = vsub.f32 %v450, %v477
        %v481 = vsub.f32 %v451, %v477
        %v482 = vsub.f32 %v452, %v477
        %v483 = vsub.f32 %v453, %v477
        %v484 = vsub.f32 %v454, %v477
        %v485 = vsub.f32 %v455, %v477
        %v486 = vsub.f32 %v456, %v477
        %v487 = vsub.f32 %v457, %v477
        %v488 = vsub.f32 %v458, %v477
        %v489 = vsub.f32 %v459, %v477
        %v490 = vsub.f32 %v460, %v477
        %v491 = vsub.f32 %v461, %v477
        %v492 = vsub.f32 %v462, %v477
        %v493 = vsub.f32 %v463, %v477
        %v494 = vsub.f32 %v464, %v477
        %496 = vset.pattern.permute.xlu0 0
        %497 = vperm.xlu0 %496, %v473
        %v498 = vpop.permute.xlu0 %497
        %v500 = vmul.f32 %v479, %v498
        %v501 = vmul.f32 %v480, %v498
        %v502 = vmul.f32 %v481, %v498
        %v503 = vmul.f32 %v482, %v498
        %v504 = vmul.f32 %v483, %v498
        %v505 = vmul.f32 %v484, %v498
        %v506 = vmul.f32 %v485, %v498
        %v507 = vmul.f32 %v486, %v498
        %v508 = vmul.f32 %v487, %v498
        %v509 = vmul.f32 %v488, %v498
        %v510 = vmul.f32 %v489, %v498
        %v511 = vmul.f32 %v490, %v498
        %v512 = vmul.f32 %v491, %v498
        %v513 = vmul.f32 %v492, %v498
        %v514 = vmul.f32 %v493, %v498
        %v515 = vmul.f32 %v494, %v498
        %v516 = vmax.f32 %v500, 0.0
        %v517 = vmax.f32 %v501, 0.0
        %v518 = vmax.f32 %v502, 0.0
        %v519 = vmax.f32 %v503, 0.0
        %v520 = vmax.f32 %v504, 0.0
        %v521 = vmax.f32 %v505, 0.0
        %v522 = vmax.f32 %v506, 0.0
        %v523 = vmax.f32 %v507, 0.0
        %v524 = vmax.f32 %v508, 0.0
        %v525 = vmax.f32 %v509, 0.0
        %v526 = vmax.f32 %v510, 0.0
        %v527 = vmax.f32 %v511, 0.0
        %v528 = vmax.f32 %v512, 0.0
        %v529 = vmax.f32 %v513, 0.0
        %v530 = vmax.f32 %v514, 0.0
        %v531 = vmax.f32 %v515, 0.0
        %v532 = vpack.c.bf16 %v516, %v516
        %v533 = vpack.c.bf16 %v517, %v517
        %v534 = vpack.c.bf16 %v518, %v518
        %v535 = vpack.c.bf16 %v519, %v519
        %v536 = vpack.c.bf16 %v520, %v520
        %v537 = vpack.c.bf16 %v521, %v521
        %v538 = vpack.c.bf16 %v522, %v522
        %v539 = vpack.c.bf16 %v523, %v523
        %v540 = vpack.c.bf16 %v524, %v524
        %v541 = vpack.c.bf16 %v525, %v525
        %v542 = vpack.c.bf16 %v526, %v526
        %v543 = vpack.c.bf16 %v527, %v527
        %v544 = vpack.c.bf16 %v528, %v528
        %v545 = vpack.c.bf16 %v529, %v529
        %v546 = vpack.c.bf16 %v530, %v530
        %v547 = vpack.c.bf16 %v531, %v531
        %v564 = vunpack.c.l.b16 %v532
        %v565 = vunpack.c.l.b16 %v533
        %v566 = vunpack.c.l.b16 %v534
        %v567 = vunpack.c.l.b16 %v535
        %v568 = vunpack.c.l.b16 %v536
        %v569 = vunpack.c.l.b16 %v537
        %v570 = vunpack.c.l.b16 %v538
        %v571 = vunpack.c.l.b16 %v539
        %v572 = vunpack.c.l.b16 %v540
        %v573 = vunpack.c.l.b16 %v541
        %v574 = vunpack.c.l.b16 %v542
        %v575 = vunpack.c.l.b16 %v543
        %v576 = vunpack.c.l.b16 %v544
        %v577 = vunpack.c.l.b16 %v545
        %v578 = vunpack.c.l.b16 %v546
        %v579 = vunpack.c.l.b16 %v547
        %v580 = vpack.c.b16 %v565, %v564
        %v581 = vpack.c.b16 %v567, %v566
        %v582 = vpack.c.b16 %v569, %v568
        %v583 = vpack.c.b16 %v571, %v570
        %v584 = vpack.c.b16 %v573, %v572
        %v585 = vpack.c.b16 %v575, %v574
        %v586 = vpack.c.b16 %v577, %v576
        %v587 = vpack.c.b16 %v579, %v578
        %596 = vst [vmem:[%s3] sm:$0xff] %v580
        %597 = vst [vmem:[%s3 + $0x8] sm:$0xff] %v581
        %598 = vst [vmem:[%s3 + $0x10] sm:$0xff] %v582
        %599 = vst [vmem:[%s3 + $0x18] sm:$0xff] %v583
        %600 = vst [vmem:[%s3 + $0x20] sm:$0xff] %v584
        %601 = vst [vmem:[%s3 + $0x28] sm:$0xff] %v585
        %602 = vst [vmem:[%s3 + $0x30] sm:$0xff] %v586
        %603 = vst [vmem:[%s3 + $0x38] sm:$0xff] %v587
      $region40: #{generator_forward.9} parent=31 // pred_fallthru
        _
      // Predicated region
      $region41: #{generator_forward.9} parent=31 // pred_check
        %p604 = pneg %p114
      $region42: #{generator_forward.9} parent=31 // pred_check_branch
        %606 = sbr.rel (%p604) target = $region44
      $region43: #{generator_forward.9} parent=31 // pred_region
        _
      $region44: #{generator_forward.9} parent=31 // pred_fallthru
        _
      // Predicated region
      $region45: #{generator_forward.9} parent=31 // pred_check
        %p607 = pneg %p114
      $region46: #{generator_forward.9} parent=31 // pred_check_branch
        %609 = sbr.rel (%p607) target = $region48
      $region47: #{generator_forward.9} parent=31 // pred_region
        _
      $region48: #{generator_forward.9} parent=31 // pred_fallthru
        _
    $region32: #{generator_forward.9} parent=5 // pred_fallthru
      _
    %p610 = scmp.le.s32.totalorder 2, %s9
    // Predicated region
    $region49: #{generator_forward.9} parent=5 // pred_check
      %p611 = pneg %p610
    $region50: #{generator_forward.9} parent=5 // pred_check_branch
      %613 = sbr.rel (%p611) target = $region52
    $region51: #{generator_forward.9} parent=5 // pred_region
      %s614 = ssub.s32 %s9, 2
    $region52: #{generator_forward.9} parent=5 // pred_fallthru
      _
  $region6: #{generator_forward.9} parent=0 // loop_footer
    %s13 = sadd.s32 1, %s9
  $region7: #{generator_forward.9} parent=0 // loop_footer_branch
    %8 = sbr.rel target = $region3
  $region8: #{generator_forward.9} parent=0 // loop_exit
    _

// kernel: generator_forward.10
$region0: #{generator_forward.10}
  #allocation0 [shape = 'u32[]', space=smem, size = 0x4, offset = 0x4, fixed_abs, tag = 'smem constant byte address 0x4 - core index']
  #allocation1 [shape = 'u32[144,128]{1,0:T(1,128)}', space=vmem, size = 0x12000, scoped, tag = 'internal scratch']
  #allocation2 [shape = 'f32[4,1]{1,0:T(4,128)}', space=vmem, size = 0x800, scoped, tag = 'scratch operand']
  #allocation3 [shape = 'f32[4,1]{1,0:T(4,128)}', space=vmem, size = 0x800, scoped, tag = 'scratch operand']
  %s0 = inlined_call_operand.vmem [shape: bf16[4,32,2048], index: 0, kind: input, shape index: {}]
  %s1 = inlined_call_operand.vmem [shape: bf16[4,4,32], index: 1, kind: input, shape index: {}]
  %s2 = inlined_call_operand.vmem [shape: f32[4,1], index: 2, kind: input, shape index: {}]
  %s3 = inlined_call_operand.vmem [shape: bf16[4,4,2048], index: 3, kind: output, shape index: {}]
  %s4 = sld [smem:[#allocation0]]
  $region53: #{generator_forward.10} parent=0
    _
  %s6 = ssub.s32 1, %s4
  %s7 = scalar_select 0, %s6, %s4
  loop: start=0, step=1, limit=6
  $region2: #{generator_forward.10} parent=0 // loop_pre_header
    _
  $region3: #{generator_forward.10} parent=0 // loop_header
    %s9 = sphi 0, %s13
    %p10 = scmp.ge.s32.totalorder %s9, 6
    %s16 = sphi 0, %s28
    %s17 = sphi 0, %s24
    %s18 = sphi 0, %s16
    %s19 = sphi 0, %s17
    %s20 = sphi 0, %s18
    %s21 = sphi 0, %s19
    %s33 = sphi 0, %s35
    %s36 = sphi 0, %s33
    %s37 = sphi 0, %s36
    %s53 = sphi 0, %s37
    %s59 = sphi 0, %s61
    %s62 = sphi 0, %s59
    %s63 = sphi 0, %s62
    %s79 = sphi 0, %s63
    %s83 = sphi 0, %s83
    %s85 = sphi 0, %s83
    %s86 = sphi 0, %s85
    %s100 = sphi 0, %s86
    %s104 = sphi 0, %s104
    %s106 = sphi 0, %s104
    %s107 = sphi 0, %s106
    %s121 = sphi 0, %s107
  $region4: #{generator_forward.10} parent=0 // loop_header_branch
    %12 = sbr.rel (%p10) target = $region8
  $region5: #{generator_forward.10} parent=0 // loop_body
    %s14 = ssub.s32 %s9, 1
    %s15 = ssub.s32 %s9, 2
    %s22 = sadd.s32 1, %s17
    %p23 = scmp.ge.s32.totalorder %s22, 1
    %s24 = scalar_select %p23, 0, %s22
    %s25 = sadd.s32 1, %s16
    %s26 = scalar_select %p23, %s25, %s16
    %p27 = scmp.ge.s32.totalorder %s26, 4
    %s28 = scalar_select %p27, 0, %s26
    %s29 = ssub.s32 %s16, %s28
    %s30 = ssub.s32 %s17, %s24
    %s31 = sor.u32 %s29, %s30
    %p32 = scmp.eq.s32.totalorder %s31, 0
    %s34 = sadd.s32 %s33, 1
    %s35 = scalar_select %p32, %s33, %s34
    %p38 = pneg %p32
    %p39 = scmp.eq.s32.totalorder %s9, 3
    %p40 = por %p38, %p39
    %p41 = scmp.ne.s32.totalorder %s33, %s36
    %p42 = scmp.eq.s32.totalorder %s9, 0
    %p43 = por %p41, %p42
    %p44 = scmp.ne.s32.totalorder %s33, %s36
    %p45 = scmp.eq.s32.totalorder %s14, 3
    %p46 = por %p44, %p45
    %p47 = scmp.ne.s32.totalorder %s36, %s37
    %p48 = scmp.eq.s32.totalorder %s14, 0
    %p49 = por %p47, %p48
    %p50 = scmp.ne.s32.totalorder %s36, %s37
    %p51 = scmp.eq.s32.totalorder %s15, 3
    %p52 = por %p50, %p51
    %p54 = scmp.ne.s32.totalorder %s37, %s53
    %p55 = scmp.eq.s32.totalorder %s15, 0
    %p56 = por %p54, %p55
    %s57 = ssub.s32 %s16, %s28
    %p58 = scmp.eq.s32.totalorder %s57, 0
    %s60 = sadd.s32 %s59, 1
    %s61 = scalar_select %p58, %s59, %s60
    %p64 = pneg %p58
    %p65 = scmp.eq.s32.totalorder %s9, 3
    %p66 = por %p64, %p65
    %p67 = scmp.ne.s32.totalorder %s59, %s62
    %p68 = scmp.eq.s32.totalorder %s9, 0
    %p69 = por %p67, %p68
    %p70 = scmp.ne.s32.totalorder %s59, %s62
    %p71 = scmp.eq.s32.totalorder %s14, 3
    %p72 = por %p70, %p71
    %p73 = scmp.ne.s32.totalorder %s62, %s63
    %p74 = scmp.eq.s32.totalorder %s14, 0
    %p75 = por %p73, %p74
    %p76 = scmp.ne.s32.totalorder %s62, %s63
    %p77 = scmp.eq.s32.totalorder %s15, 3
    %p78 = por %p76, %p77
    %p80 = scmp.ne.s32.totalorder %s63, %s79
    %p81 = scmp.eq.s32.totalorder %s15, 0
    %p82 = por %p80, %p81
    %s84 = sadd.s32 %s83, 1
    %p87 = scmp.eq.s32.totalorder %s9, 3
    %p88 = scmp.ne.s32.totalorder %s83, %s85
    %p89 = scmp.eq.s32.totalorder %s9, 0
    %p90 = por %p88, %p89
    %p91 = scmp.ne.s32.totalorder %s83, %s85
    %p92 = scmp.eq.s32.totalorder %s14, 3
    %p93 = por %p91, %p92
    %p94 = scmp.ne.s32.totalorder %s85, %s86
    %p95 = scmp.eq.s32.totalorder %s14, 0
    %p96 = por %p94, %p95
    %p97 = scmp.ne.s32.totalorder %s85, %s86
    %p98 = scmp.eq.s32.totalorder %s15, 3
    %p99 = por %p97, %p98
    %p101 = scmp.ne.s32.totalorder %s86, %s100
    %p102 = scmp.eq.s32.totalorder %s15, 0
    %p103 = por %p101, %p102
    %s105 = sadd.s32 %s104, 1
    %p108 = scmp.eq.s32.totalorder %s9, 3
    %p109 = scmp.ne.s32.totalorder %s104, %s106
    %p110 = scmp.eq.s32.totalorder %s9, 0
    %p111 = por %p109, %p110
    %p112 = scmp.ne.s32.totalorder %s104, %s106
    %p113 = scmp.eq.s32.totalorder %s14, 3
    %p114 = por %p112, %p113
    %p115 = scmp.ne.s32.totalorder %s106, %s107
    %p116 = scmp.eq.s32.totalorder %s14, 0
    %p117 = por %p115, %p116
    %p118 = scmp.ne.s32.totalorder %s106, %s107
    %p119 = scmp.eq.s32.totalorder %s15, 3
    %p120 = por %p118, %p119
    %p122 = scmp.ne.s32.totalorder %s107, %s121
    %p123 = scmp.eq.s32.totalorder %s15, 0
    %p124 = por %p122, %p123
    %p125 = scmp.le.s32.totalorder 1, %s9
    %p126 = scmp.lt.s32.totalorder %s9, 5
    %p127 = pnand %p125, %p126
    %p128 = pneg %p127
    // Predicated region
    $region9: #{generator_forward.10} parent=5 // pred_check
      _
    $region10: #{generator_forward.10} parent=5 // pred_check_branch
      %130 = sbr.rel (%p127) target = $region12
    $region11: #{generator_forward.10} parent=5 // pred_region
      %s131 = ssub.s32 %s9, 1
      // Predicated region
      $region13: #{generator_forward.10} parent=11 // pred_check
        %p132 = pneg %p96
      $region14: #{generator_forward.10} parent=11 // pred_check_branch
        %134 = sbr.rel (%p132) target = $region16
      $region15: #{generator_forward.10} parent=11 // pred_region
        _
      $region16: #{generator_forward.10} parent=11 // pred_fallthru
        _
    $region12: #{generator_forward.10} parent=5 // pred_fallthru
      _
    %p135 = scmp.lt.s32.totalorder %s9, 4
    // Predicated region
    $region17: #{generator_forward.10} parent=5 // pred_check
      %p136 = pneg %p135
    $region18: #{generator_forward.10} parent=5 // pred_check_branch
      %138 = sbr.rel (%p136) target = $region20
    $region19: #{generator_forward.10} parent=5 // pred_region
      // Predicated region
      $region21: #{generator_forward.10} parent=19 // pred_check
        %p139 = pneg %p43
      $region22: #{generator_forward.10} parent=19 // pred_check_branch
        %141 = sbr.rel (%p139) target = $region24
      $region23: #{generator_forward.10} parent=19 // pred_region
        %s142 = smul.u32 16, %s17
        %p143 = scmp.lt.s32.totalorder %s16, 3
        %s144 = scalar_select %p143, %s16, 3
        %p145 = scmp.lt.s32.totalorder %s142, 15
        %s146 = scalar_select %p145, %s142, 15
        %s147 = smul.addr %s144, 64
        %s148 = sadd.s32 %s146, %s147
        %s149 = smul.addr %s148, 4
        %s150 = scalar_lea.vmem %s0, %s149
        %s151 = smul.u32 16, %s17
      $region24: #{generator_forward.10} parent=19 // pred_fallthru
        _
      // Predicated region
      $region25: #{generator_forward.10} parent=19 // pred_check
        %p152 = pneg %p69
      $region26: #{generator_forward.10} parent=19 // pred_check_branch
        %154 = sbr.rel (%p152) target = $region28
      $region27: #{generator_forward.10} parent=19 // pred_region
        %p155 = scmp.lt.s32.totalorder %s16, 3
        %s156 = scalar_select %p155, %s16, 3
        %s157 = smul.addr %s156, 2
        %s158 = scalar_lea.vmem %s1, %s157
      $region28: #{generator_forward.10} parent=19 // pred_fallthru
        _
    $region20: #{generator_forward.10} parent=5 // pred_fallthru
      _
    %p159 = scmp.le.s32.totalorder 1, %s9
    %p160 = scmp.lt.s32.totalorder %s9, 5
    %p161 = pnand %p159, %p160
    %p162 = pneg %p161
    // Predicated region
    $region29: #{generator_forward.10} parent=5 // pred_check
      _
    $region30: #{generator_forward.10} parent=5 // pred_check_branch
      %164 = sbr.rel (%p161) target = $region32
    $region31: #{generator_forward.10} parent=5 // pred_region
      %s165 = ssub.s32 %s9, 1
      %s166 = smul.u32 16, %s19
      %p167 = scmp.lt.s32.totalorder %s18, 3
      %s168 = scalar_select %p167, %s18, 3
      %p169 = scmp.lt.s32.totalorder %s166, 15
      %s170 = scalar_select %p169, %s166, 15
      %s171 = smul.addr %s168, 64
      %s172 = sadd.s32 %s170, %s171
      %s173 = smul.addr %s172, 4
      %s174 = scalar_lea.vmem %s0, %s173
      %p175 = pneg %p49
      %p176 = pneg %p46
      %p177 = scmp.lt.s32.totalorder %s18, 3
      %s178 = scalar_select %p177, %s18, 3
      %s179 = smul.addr %s178, 2
      %s180 = scalar_lea.vmem %s1, %s179
      %p181 = pneg %p75
      %p182 = pneg %p72
      %p183 = pneg %p96
      %p184 = pneg %p93
      %p185 = pneg %p117
      %p186 = pneg %p114
      %s187 = smul.u32 16, %s19
      %p188 = scmp.lt.s32.totalorder %s18, 3
      %s189 = scalar_select %p188, %s18, 3
      %p190 = scmp.lt.s32.totalorder %s187, 15
      %s191 = scalar_select %p190, %s187, 15
      %s192 = smul.addr %s189, 64
      %s193 = sadd.s32 %s191, %s192
      %s194 = smul.addr %s193, 4
      %s195 = scalar_lea.vmem %s0, %s194
      %s196 = smul.u32 16, %s19
      %p197 = scmp.lt.s32.totalorder %s18, 3
      %s198 = scalar_select %p197, %s18, 3
      %s199 = smul.addr %s198, 2
      %s200 = scalar_lea.vmem %s1, %s199
      %v202 = vld [vmem:[%s200] sm:$0x3]
      %v203 = vld [vmem:[%s195] sm:$0xff]
      %v204 = vld [vmem:[%s195 + $0x8] sm:$0xff]
      %v205 = vld [vmem:[%s195 + $0x10] sm:$0xff]
      %v206 = vld [vmem:[%s195 + $0x18] sm:$0xff]
      %v207 = vld [vmem:[%s195 + $0x20] sm:$0xff]
      %v208 = vld [vmem:[%s195 + $0x28] sm:$0xff]
      %v209 = vld [vmem:[%s195 + $0x30] sm:$0xff]
      %v210 = vld [vmem:[%s195 + $0x38] sm:$0xff]
      %v211 = vld [vmem:[%s195 + $0x40] sm:$0xff]
      %v212 = vld [vmem:[%s195 + $0x48] sm:$0xff]
      %v213 = vld [vmem:[%s195 + $0x50] sm:$0xff]
      %v214 = vld [vmem:[%s195 + $0x58] sm:$0xff]
      %v215 = vld [vmem:[%s195 + $0x60] sm:$0xff]
      %v216 = vld [vmem:[%s195 + $0x68] sm:$0xff]
      %v217 = vld [vmem:[%s195 + $0x70] sm:$0xff]
      %v218 = vld [vmem:[%s195 + $0x78] sm:$0xff]
      %v219 = vld [vmem:[%s195 + $0x80] sm:$0xff]
      %v220 = vld [vmem:[%s195 + $0x88] sm:$0xff]
      %v221 = vld [vmem:[%s195 + $0x90] sm:$0xff]
      %v222 = vld [vmem:[%s195 + $0x98] sm:$0xff]
      %v223 = vld [vmem:[%s195 + $0xa0] sm:$0xff]
      %v224 = vld [vmem:[%s195 + $0xa8] sm:$0xff]
      %v225 = vld [vmem:[%s195 + $0xb0] sm:$0xff]
      %v226 = vld [vmem:[%s195 + $0xb8] sm:$0xff]
      %v227 = vld [vmem:[%s195 + $0xc0] sm:$0xff]
      %v228 = vld [vmem:[%s195 + $0xc8] sm:$0xff]
      %v229 = vld [vmem:[%s195 + $0xd0] sm:$0xff]
      %v230 = vld [vmem:[%s195 + $0xd8] sm:$0xff]
      %v231 = vld [vmem:[%s195 + $0xe0] sm:$0xff]
      %v232 = vld [vmem:[%s195 + $0xe8] sm:$0xff]
      %v233 = vld [vmem:[%s195 + $0xf0] sm:$0xff]
      %v234 = vld [vmem:[%s195 + $0xf8] sm:$0xff]
      %v267 = vunpack.c.l.b16 %v203
      %v268 = vunpack.c.h.b16 %v203
      %v269 = vunpack.c.l.b16 %v204
      %v270 = vunpack.c.h.b16 %v204
      %v271 = vunpack.c.l.b16 %v205
      %v272 = vunpack.c.h.b16 %v205
      %v273 = vunpack.c.l.b16 %v206
      %v274 = vunpack.c.h.b16 %v206
      %v275 = vunpack.c.l.b16 %v207
      %v276 = vunpack.c.h.b16 %v207
      %v277 = vunpack.c.l.b16 %v208
      %v278 = vunpack.c.h.b16 %v208
      %v279 = vunpack.c.l.b16 %v209
      %v280 = vunpack.c.h.b16 %v209
      %v281 = vunpack.c.l.b16 %v210
      %v282 = vunpack.c.h.b16 %v210
      %v283 = vunpack.c.l.b16 %v211
      %v284 = vunpack.c.h.b16 %v211
      %v285 = vunpack.c.l.b16 %v212
      %v286 = vunpack.c.h.b16 %v212
      %v287 = vunpack.c.l.b16 %v213
      %v288 = vunpack.c.h.b16 %v213
      %v289 = vunpack.c.l.b16 %v214
      %v290 = vunpack.c.h.b16 %v214
      %v291 = vunpack.c.l.b16 %v215
      %v292 = vunpack.c.h.b16 %v215
      %v293 = vunpack.c.l.b16 %v216
      %v294 = vunpack.c.h.b16 %v216
      %v295 = vunpack.c.l.b16 %v217
      %v296 = vunpack.c.h.b16 %v217
      %v297 = vunpack.c.l.b16 %v218
      %v298 = vunpack.c.h.b16 %v218
      %v299 = vunpack.c.l.b16 %v219
      %v300 = vunpack.c.h.b16 %v219
      %v301 = vunpack.c.l.b16 %v220
      %v302 = vunpack.c.h.b16 %v220
      %v303 = vunpack.c.l.b16 %v221
      %v304 = vunpack.c.h.b16 %v221
      %v305 = vunpack.c.l.b16 %v222
      %v306 = vunpack.c.h.b16 %v222
      %v307 = vunpack.c.l.b16 %v223
      %v308 = vunpack.c.h.b16 %v223
      %v309 = vunpack.c.l.b16 %v224
      %v310 = vunpack.c.h.b16 %v224
      %v311 = vunpack.c.l.b16 %v225
      %v312 = vunpack.c.h.b16 %v225
      %v313 = vunpack.c.l.b16 %v226
      %v314 = vunpack.c.h.b16 %v226
      %v315 = vunpack.c.l.b16 %v227
      %v316 = vunpack.c.h.b16 %v227
      %v317 = vunpack.c.l.b16 %v228
      %v318 = vunpack.c.h.b16 %v228
      %v319 = vunpack.c.l.b16 %v229
      %v320 = vunpack.c.h.b16 %v229
      %v321 = vunpack.c.l.b16 %v230
      %v322 = vunpack.c.h.b16 %v230
      %v323 = vunpack.c.l.b16 %v231
      %v324 = vunpack.c.h.b16 %v231
      %v325 = vunpack.c.l.b16 %v232
      %v326 = vunpack.c.h.b16 %v232
      %v327 = vunpack.c.l.b16 %v233
      %v328 = vunpack.c.h.b16 %v233
      %v329 = vunpack.c.l.b16 %v234
      %v330 = vunpack.c.h.b16 %v234
      %v331 = vpack.c.b16 %v283, %v267
      %v332 = vpack.c.b16 %v284, %v268
      %v333 = vpack.c.b16 %v285, %v269
      %v334 = vpack.c.b16 %v286, %v270
      %v335 = vpack.c.b16 %v287, %v271
      %v336 = vpack.c.b16 %v288, %v272
      %v337 = vpack.c.b16 %v289, %v273
      %v338 = vpack.c.b16 %v290, %v274
      %v339 = vpack.c.b16 %v291, %v275
      %v340 = vpack.c.b16 %v292, %v276
      %v341 = vpack.c.b16 %v293, %v277
      %v342 = vpack.c.b16 %v294, %v278
      %v343 = vpack.c.b16 %v295, %v279
      %v344 = vpack.c.b16 %v296, %v280
      %v345 = vpack.c.b16 %v297, %v281
      %v346 = vpack.c.b16 %v298, %v282
      %v347 = vpack.c.b16 %v315, %v299
      %v348 = vpack.c.b16 %v316, %v300
      %v349 = vpack.c.b16 %v317, %v301
      %v350 = vpack.c.b16 %v318, %v302
      %v351 = vpack.c.b16 %v319, %v303
      %v352 = vpack.c.b16 %v320, %v304
      %v353 = vpack.c.b16 %v321, %v305
      %v354 = vpack.c.b16 %v322, %v306
      %v355 = vpack.c.b16 %v323, %v307
      %v356 = vpack.c.b16 %v324, %v308
      %v357 = vpack.c.b16 %v325, %v309
      %v358 = vpack.c.b16 %v326, %v310
      %v359 = vpack.c.b16 %v327, %v311
      %v360 = vpack.c.b16 %v328, %v312
      %v361 = vpack.c.b16 %v329, %v313
      %v362 = vpack.c.b16 %v330, %v314
      %vm395 = vcmask 261120
      %v397 = vsel %vm395, %v202, 0
      %399 = vmatprep.subr.bf16.mxu0 0
      %400 = vmatpush1.bf16.msra.mxu0 0
      %401 = vmatprep.subr.bf16.mxu0 0
      %402 = vmatpush1.bf16.msra.mxu0 0
      %403 = vmatprep.subr.bf16.mxu0 0
      %404 = vmatpush1.bf16.msra.mxu0 0
      %405 = vmatprep.subr.bf16.mxu0 0
      %406 = vmatpush1.bf16.msra.mxu0 0
      %407 = vmatprep.subr.bf16.mxu0 0
      %408 = vmatpush1.bf16.msra.mxu0 0
      %409 = vmatprep.subr.bf16.mxu0 0
      %410 = vmatpush1.bf16.msra.mxu0 0
      %411 = vmatprep.subr.bf16.mxu0 %v348
      %412 = vmatpush1.bf16.msra.mxu0 %v347
      %413 = vmatprep.subr.bf16.mxu0 %v332
      %414 = vmatpush1.bf16.msra.mxu0 %v331
      %415 = vmatprep.subr.bf16.mxu0 0
      %416 = vmatpush2.bf16.msra.mxu0 0
      %417 = vmatprep.subr.bf16.mxu0 0
      %418 = vmatpush2.bf16.msra.mxu0 0
      %419 = vmatprep.subr.bf16.mxu0 0
      %420 = vmatpush2.bf16.msra.mxu0 0
      %421 = vmatprep.subr.bf16.mxu0 0
      %422 = vmatpush2.bf16.msra.mxu0 0
      %423 = vmatprep.subr.bf16.mxu0 0
      %424 = vmatpush2.bf16.msra.mxu0 0
      %425 = vmatprep.subr.bf16.mxu0 0
      %426 = vmatpush2.bf16.msra.mxu0 0
      %427 = vmatprep.subr.bf16.mxu0 0
      %428 = vmatpush2.bf16.msra.mxu0 0
      %429 = vmatprep.subr.bf16.mxu0 0
      %430 = vmatpush2.bf16.msra.mxu0 0
      %431 = vmatprep.mubr.bf16.mxu0 0
      %432 = vmatmul.mubr.bf16.gmra.mxu0 %v397
      %v433 = vpop.f32.mrf.mxu0
      %v434 = vadd.f32 0.0, %v433
      %v435 = vpop.f32.mrf.mxu0
      %v436 = vadd.f32 0.0, %v435
      %v437 = vpop.f32.mrf.mxu0
      %v438 = vpop.f32.mrf.mxu0
      %439 = vdwg.mxu0
      %440 = vmatprep.subr.bf16.mxu0 0
      %441 = vmatpush1.bf16.msra.mxu0 0
      %442 = vmatprep.subr.bf16.mxu0 0
      %443 = vmatpush1.bf16.msra.mxu0 0
      %444 = vmatprep.subr.bf16.mxu0 0
      %445 = vmatpush1.bf16.msra.mxu0 0
      %446 = vmatprep.subr.bf16.mxu0 0
      %447 = vmatpush1.bf16.msra.mxu0 0
      %448 = vmatprep.subr.bf16.mxu0 0
      %449 = vmatpush1.bf16.msra.mxu0 0
      %450 = vmatprep.subr.bf16.mxu0 0
      %451 = vmatpush1.bf16.msra.mxu0 0
      %452 = vmatprep.subr.bf16.mxu0 %v350
      %453 = vmatpush1.bf16.msra.mxu0 %v349
      %454 = vmatprep.subr.bf16.mxu0 %v334
      %455 = vmatpush1.bf16.msra.mxu0 %v333
      %456 = vmatprep.subr.bf16.mxu0 0
      %457 = vmatpush2.bf16.msra.mxu0 0
      %458 = vmatprep.subr.bf16.mxu0 0
      %459 = vmatpush2.bf16.msra.mxu0 0
      %460 = vmatprep.subr.bf16.mxu0 0
      %461 = vmatpush2.bf16.msra.mxu0 0
      %462 = vmatprep.subr.bf16.mxu0 0
      %463 = vmatpush2.bf16.msra.mxu0 0
      %464 = vmatprep.subr.bf16.mxu0 0
      %465 = vmatpush2.bf16.msra.mxu0 0
      %466 = vmatprep.subr.bf16.mxu0 0
      %467 = vmatpush2.bf16.msra.mxu0 0
      %468 = vmatprep.subr.bf16.mxu0 0
      %469 = vmatpush2.bf16.msra.mxu0 0
      %470 = vmatprep.subr.bf16.mxu0 0
      %471 = vmatpush2.bf16.msra.mxu0 0
      %472 = vmatprep.mubr.bf16.mxu0 0
      %473 = vmatmul.mubr.bf16.gmra.mxu0 %v397
      %v474 = vpop.f32.mrf.mxu0
      %v475 = vadd.f32 0.0, %v474
      %v476 = vpop.f32.mrf.mxu0
      %v477 = vadd.f32 0.0, %v476
      %v478 = vpop.f32.mrf.mxu0
      %v479 = vpop.f32.mrf.mxu0
      %480 = vdwg.mxu0
      %481 = vmatprep.subr.bf16.mxu0 0
      %482 = vmatpush1.bf16.msra.mxu0 0
      %483 = vmatprep.subr.bf16.mxu0 0
      %484 = vmatpush1.bf16.msra.mxu0 0
      %485 = vmatprep.subr.bf16.mxu0 0
      %486 = vmatpush1.bf16.msra.mxu0 0
      %487 = vmatprep.subr.bf16.mxu0 0
      %488 = vmatpush1.bf16.msra.mxu0 0
      %489 = vmatprep.subr.bf16.mxu0 0
      %490 = vmatpush1.bf16.msra.mxu0 0
      %491 = vmatprep.subr.bf16.mxu0 0
      %492 = vmatpush1.bf16.msra.mxu0 0
      %493 = vmatprep.subr.bf16.mxu0 %v352
      %494 = vmatpush1.bf16.msra.mxu0 %v351
      %495 = vmatprep.subr.bf16.mxu0 %v336
      %496 = vmatpush1.bf16.msra.mxu0 %v335
      %497 = vmatprep.subr.bf16.mxu0 0
      %498 = vmatpush2.bf16.msra.mxu0 0
      %499 = vmatprep.subr.bf16.mxu0 0
      %500 = vmatpush2.bf16.msra.mxu0 0
      %501 = vmatprep.subr.bf16.mxu0 0
      %502 = vmatpush2.bf16.msra.mxu0 0
      %503 = vmatprep.subr.bf16.mxu0 0
      %504 = vmatpush2.bf16.msra.mxu0 0
      %505 = vmatprep.subr.bf16.mxu0 0
      %506 = vmatpush2.bf16.msra.mxu0 0
      %507 = vmatprep.subr.bf16.mxu0 0
      %508 = vmatpush2.bf16.msra.mxu0 0
      %509 = vmatprep.subr.bf16.mxu0 0
      %510 = vmatpush2.bf16.msra.mxu0 0
      %511 = vmatprep.subr.bf16.mxu0 0
      %512 = vmatpush2.bf16.msra.mxu0 0
      %513 = vmatprep.mubr.bf16.mxu0 0
      %514 = vmatmul.mubr.bf16.gmra.mxu0 %v397
      %v515 = vpop.f32.mrf.mxu0
      %v516 = vadd.f32 0.0, %v515
      %v517 = vpop.f32.mrf.mxu0
      %v518 = vadd.f32 0.0, %v517
      %v519 = vpop.f32.mrf.mxu0
      %v520 = vpop.f32.mrf.mxu0
      %521 = vdwg.mxu0
      %522 = vmatprep.subr.bf16.mxu0 0
      %523 = vmatpush1.bf16.msra.mxu0 0
      %524 = vmatprep.subr.bf16.mxu0 0
      %525 = vmatpush1.bf16.msra.mxu0 0
      %526 = vmatprep.subr.bf16.mxu0 0
      %527 = vmatpush1.bf16.msra.mxu0 0
      %528 = vmatprep.subr.bf16.mxu0 0
      %529 = vmatpush1.bf16.msra.mxu0 0
      %530 = vmatprep.subr.bf16.mxu0 0
      %531 = vmatpush1.bf16.msra.mxu0 0
      %532 = vmatprep.subr.bf16.mxu0 0
      %533 = vmatpush1.bf16.msra.mxu0 0
      %534 = vmatprep.subr.bf16.mxu0 %v354
      %535 = vmatpush1.bf16.msra.mxu0 %v353
      %536 = vmatprep.subr.bf16.mxu0 %v338
      %537 = vmatpush1.bf16.msra.mxu0 %v337
      %538 = vmatprep.subr.bf16.mxu0 0
      %539 = vmatpush2.bf16.msra.mxu0 0
      %540 = vmatprep.subr.bf16.mxu0 0
      %541 = vmatpush2.bf16.msra.mxu0 0
      %542 = vmatprep.subr.bf16.mxu0 0
      %543 = vmatpush2.bf16.msra.mxu0 0
      %544 = vmatprep.subr.bf16.mxu0 0
      %545 = vmatpush2.bf16.msra.mxu0 0
      %546 = vmatprep.subr.bf16.mxu0 0
      %547 = vmatpush2.bf16.msra.mxu0 0
      %548 = vmatprep.subr.bf16.mxu0 0
      %549 = vmatpush2.bf16.msra.mxu0 0
      %550 = vmatprep.subr.bf16.mxu0 0
      %551 = vmatpush2.bf16.msra.mxu0 0
      %552 = vmatprep.subr.bf16.mxu0 0
      %553 = vmatpush2.bf16.msra.mxu0 0
      %554 = vmatprep.mubr.bf16.mxu0 0
      %555 = vmatmul.mubr.bf16.gmra.mxu0 %v397
      %v556 = vpop.f32.mrf.mxu0
      %v557 = vadd.f32 0.0, %v556
      %v558 = vpop.f32.mrf.mxu0
      %v559 = vadd.f32 0.0, %v558
      %v560 = vpop.f32.mrf.mxu0
      %v561 = vpop.f32.mrf.mxu0
      %562 = vdwg.mxu0
      %563 = vmatprep.subr.bf16.mxu0 0
      %564 = vmatpush1.bf16.msra.mxu0 0
      %565 = vmatprep.subr.bf16.mxu0 0
      %566 = vmatpush1.bf16.msra.mxu0 0
      %567 = vmatprep.subr.bf16.mxu0 0
      %568 = vmatpush1.bf16.msra.mxu0 0
      %569 = vmatprep.subr.bf16.mxu0 0
      %570 = vmatpush1.bf16.msra.mxu0 0
      %571 = vmatprep.subr.bf16.mxu0 0
      %572 = vmatpush1.bf16.msra.mxu0 0
      %573 = vmatprep.subr.bf16.mxu0 0
      %574 = vmatpush1.bf16.msra.mxu0 0
      %575 = vmatprep.subr.bf16.mxu0 %v356
      %576 = vmatpush1.bf16.msra.mxu0 %v355
      %577 = vmatprep.subr.bf16.mxu0 %v340
      %578 = vmatpush1.bf16.msra.mxu0 %v339
      %579 = vmatprep.subr.bf16.mxu0 0
      %580 = vmatpush2.bf16.msra.mxu0 0
      %581 = vmatprep.subr.bf16.mxu0 0
      %582 = vmatpush2.bf16.msra.mxu0 0
      %583 = vmatprep.subr.bf16.mxu0 0
      %584 = vmatpush2.bf16.msra.mxu0 0
      %585 = vmatprep.subr.bf16.mxu0 0
      %586 = vmatpush2.bf16.msra.mxu0 0
      %587 = vmatprep.subr.bf16.mxu0 0
      %588 = vmatpush2.bf16.msra.mxu0 0
      %589 = vmatprep.subr.bf16.mxu0 0
      %590 = vmatpush2.bf16.msra.mxu0 0
      %591 = vmatprep.subr.bf16.mxu0 0
      %592 = vmatpush2.bf16.msra.mxu0 0
      %593 = vmatprep.subr.bf16.mxu0 0
      %594 = vmatpush2.bf16.msra.mxu0 0
      %595 = vmatprep.mubr.bf16.mxu0 0
      %596 = vmatmul.mubr.bf16.gmra.mxu0 %v397
      %v597 = vpop.f32.mrf.mxu0
      %v598 = vadd.f32 0.0, %v597
      %v599 = vpop.f32.mrf.mxu0
      %v600 = vadd.f32 0.0, %v599
      %v601 = vpop.f32.mrf.mxu0
      %v602 = vpop.f32.mrf.mxu0
      %603 = vdwg.mxu0
      %604 = vmatprep.subr.bf16.mxu0 0
      %605 = vmatpush1.bf16.msra.mxu0 0
      %606 = vmatprep.subr.bf16.mxu0 0
      %607 = vmatpush1.bf16.msra.mxu0 0
      %608 = vmatprep.subr.bf16.mxu0 0
      %609 = vmatpush1.bf16.msra.mxu0 0
      %610 = vmatprep.subr.bf16.mxu0 0
      %611 = vmatpush1.bf16.msra.mxu0 0
      %612 = vmatprep.subr.bf16.mxu0 0
      %613 = vmatpush1.bf16.msra.mxu0 0
      %614 = vmatprep.subr.bf16.mxu0 0
      %615 = vmatpush1.bf16.msra.mxu0 0
      %616 = vmatprep.subr.bf16.mxu0 %v358
      %617 = vmatpush1.bf16.msra.mxu0 %v357
      %618 = vmatprep.subr.bf16.mxu0 %v342
      %619 = vmatpush1.bf16.msra.mxu0 %v341
      %620 = vmatprep.subr.bf16.mxu0 0
      %621 = vmatpush2.bf16.msra.mxu0 0
      %622 = vmatprep.subr.bf16.mxu0 0
      %623 = vmatpush2.bf16.msra.mxu0 0
      %624 = vmatprep.subr.bf16.mxu0 0
      %625 = vmatpush2.bf16.msra.mxu0 0
      %626 = vmatprep.subr.bf16.mxu0 0
      %627 = vmatpush2.bf16.msra.mxu0 0
      %628 = vmatprep.subr.bf16.mxu0 0
      %629 = vmatpush2.bf16.msra.mxu0 0
      %630 = vmatprep.subr.bf16.mxu0 0
      %631 = vmatpush2.bf16.msra.mxu0 0
      %632 = vmatprep.subr.bf16.mxu0 0
      %633 = vmatpush2.bf16.msra.mxu0 0
      %634 = vmatprep.subr.bf16.mxu0 0
      %635 = vmatpush2.bf16.msra.mxu0 0
      %636 = vmatprep.mubr.bf16.mxu0 0
      %637 = vmatmul.mubr.bf16.gmra.mxu0 %v397
      %v638 = vpop.f32.mrf.mxu0
      %v639 = vadd.f32 0.0, %v638
      %v640 = vpop.f32.mrf.mxu0
      %v641 = vadd.f32 0.0, %v640
      %v642 = vpop.f32.mrf.mxu0
      %v643 = vpop.f32.mrf.mxu0
      %644 = vdwg.mxu0
      %645 = vmatprep.subr.bf16.mxu0 0
      %646 = vmatpush1.bf16.msra.mxu0 0
      %647 = vmatprep.subr.bf16.mxu0 0
      %648 = vmatpush1.bf16.msra.mxu0 0
      %649 = vmatprep.subr.bf16.mxu0 0
      %650 = vmatpush1.bf16.msra.mxu0 0
      %651 = vmatprep.subr.bf16.mxu0 0
      %652 = vmatpush1.bf16.msra.mxu0 0
      %653 = vmatprep.subr.bf16.mxu0 0
      %654 = vmatpush1.bf16.msra.mxu0 0
      %655 = vmatprep.subr.bf16.mxu0 0
      %656 = vmatpush1.bf16.msra.mxu0 0
      %657 = vmatprep.subr.bf16.mxu0 %v360
      %658 = vmatpush1.bf16.msra.mxu0 %v359
      %659 = vmatprep.subr.bf16.mxu0 %v344
      %660 = vmatpush1.bf16.msra.mxu0 %v343
      %661 = vmatprep.subr.bf16.mxu0 0
      %662 = vmatpush2.bf16.msra.mxu0 0
      %663 = vmatprep.subr.bf16.mxu0 0
      %664 = vmatpush2.bf16.msra.mxu0 0
      %665 = vmatprep.subr.bf16.mxu0 0
      %666 = vmatpush2.bf16.msra.mxu0 0
      %667 = vmatprep.subr.bf16.mxu0 0
      %668 = vmatpush2.bf16.msra.mxu0 0
      %669 = vmatprep.subr.bf16.mxu0 0
      %670 = vmatpush2.bf16.msra.mxu0 0
      %671 = vmatprep.subr.bf16.mxu0 0
      %672 = vmatpush2.bf16.msra.mxu0 0
      %673 = vmatprep.subr.bf16.mxu0 0
      %674 = vmatpush2.bf16.msra.mxu0 0
      %675 = vmatprep.subr.bf16.mxu0 0
      %676 = vmatpush2.bf16.msra.mxu0 0
      %677 = vmatprep.mubr.bf16.mxu0 0
      %678 = vmatmul.mubr.bf16.gmra.mxu0 %v397
      %v679 = vpop.f32.mrf.mxu0
      %v680 = vadd.f32 0.0, %v679
      %v681 = vpop.f32.mrf.mxu0
      %v682 = vadd.f32 0.0, %v681
      %v683 = vpop.f32.mrf.mxu0
      %v684 = vpop.f32.mrf.mxu0
      %685 = vdwg.mxu0
      %686 = vmatprep.subr.bf16.mxu0 0
      %687 = vmatpush1.bf16.msra.mxu0 0
      %688 = vmatprep.subr.bf16.mxu0 0
      %689 = vmatpush1.bf16.msra.mxu0 0
      %690 = vmatprep.subr.bf16.mxu0 0
      %691 = vmatpush1.bf16.msra.mxu0 0
      %692 = vmatprep.subr.bf16.mxu0 0
      %693 = vmatpush1.bf16.msra.mxu0 0
      %694 = vmatprep.subr.bf16.mxu0 0
      %695 = vmatpush1.bf16.msra.mxu0 0
      %696 = vmatprep.subr.bf16.mxu0 0
      %697 = vmatpush1.bf16.msra.mxu0 0
      %698 = vmatprep.subr.bf16.mxu0 %v362
      %699 = vmatpush1.bf16.msra.mxu0 %v361
      %700 = vmatprep.subr.bf16.mxu0 %v346
      %701 = vmatpush1.bf16.msra.mxu0 %v345
      %702 = vmatprep.subr.bf16.mxu0 0
      %703 = vmatpush2.bf16.msra.mxu0 0
      %704 = vmatprep.subr.bf16.mxu0 0
      %705 = vmatpush2.bf16.msra.mxu0 0
      %706 = vmatprep.subr.bf16.mxu0 0
      %707 = vmatpush2.bf16.msra.mxu0 0
      %708 = vmatprep.subr.bf16.mxu0 0
      %709 = vmatpush2.bf16.msra.mxu0 0
      %710 = vmatprep.subr.bf16.mxu0 0
      %711 = vmatpush2.bf16.msra.mxu0 0
      %712 = vmatprep.subr.bf16.mxu0 0
      %713 = vmatpush2.bf16.msra.mxu0 0
      %714 = vmatprep.subr.bf16.mxu0 0
      %715 = vmatpush2.bf16.msra.mxu0 0
      %716 = vmatprep.subr.bf16.mxu0 0
      %717 = vmatpush2.bf16.msra.mxu0 0
      %718 = vmatprep.mubr.bf16.mxu0 0
      %719 = vmatmul.mubr.bf16.gmra.mxu0 %v397
      %v720 = vpop.f32.mrf.mxu0
      %v721 = vadd.f32 0.0, %v720
      %v722 = vpop.f32.mrf.mxu0
      %v723 = vadd.f32 0.0, %v722
      %v724 = vpop.f32.mrf.mxu0
      %v725 = vpop.f32.mrf.mxu0
      %726 = vdwg.mxu0
      %p727 = scmp.eq.s32.totalorder %s18, 0
      %p728 = scmp.eq.s32.totalorder %s19, 0
      %p729 = pnand %p727, %p728
      %p730 = pneg %p729
      // Predicated region
      $region33: #{generator_forward.10} parent=31 // pred_check
        _
      $region34: #{generator_forward.10} parent=31 // pred_check_branch
        %732 = sbr.rel (%p729) target = $region36
      $region35: #{generator_forward.10} parent=31 // pred_region
        %vm733 = vcmask 3072
        %734 = vst.msk [vmem:[#allocation2] sm:$0xf] %vm733, 0.0
        %735 = vst.msk [vmem:[#allocation3] sm:$0xf] %vm733, 0.0
      $region36: #{generator_forward.10} parent=31 // pred_fallthru
        _
      %v736 = vld [vmem:[#allocation2] sm:$0xf]
      %vm737 = vcmask 1043456
      %v738 = vsel %vm737, %v434, 0.0
      %v739 = vsel %vm737, %v436, 0.0
      %v740 = vadd.f32 %v738, %v739
      %v741 = vsel %vm737, %v475, 0.0
      %v742 = vadd.f32 %v740, %v741
      %v743 = vsel %vm737, %v477, 0.0
      %v744 = vadd.f32 %v742, %v743
      %v745 = vsel %vm737, %v516, 0.0
      %v746 = vadd.f32 %v744, %v745
      %v747 = vsel %vm737, %v518, 0.0
      %v748 = vadd.f32 %v746, %v747
      %v749 = vsel %vm737, %v557, 0.0
      %v750 = vadd.f32 %v748, %v749
      %v751 = vsel %vm737, %v559, 0.0
      %v752 = vadd.f32 %v750, %v751
      %v753 = vsel %vm737, %v598, 0.0
      %v754 = vadd.f32 %v752, %v753
      %v755 = vsel %vm737, %v600, 0.0
      %v756 = vadd.f32 %v754, %v755
      %v757 = vsel %vm737, %v639, 0.0
      %v758 = vadd.f32 %v756, %v757
      %v759 = vsel %vm737, %v641, 0.0
      %v760 = vadd.f32 %v758, %v759
      %v761 = vsel %vm737, %v680, 0.0
      %v762 = vadd.f32 %v760, %v761
      %v763 = vsel %vm737, %v682, 0.0
      %v764 = vadd.f32 %v762, %v763
      %v765 = vsel %vm737, %v721, 0.0
      %v766 = vadd.f32 %v764, %v765
      %v767 = vsel %vm737, %v723, 0.0
      %v768 = vadd.f32 %v766, %v767
      %769 = vadd.xlane.f32.xlu0 %v768
      %v770 = vpop.xlane.xlu0 %769
      %v771 = vadd.f32 %v736, %v770
      %vm772 = vcmask 3072
      %773 = vst.msk [vmem:[#allocation2] sm:$0xf] %vm772, %v771
      %v774 = vld [vmem:[#allocation3] sm:$0xf]
      %v775 = vmul.f32 %v434, %v434
      %v776 = vmul.f32 %v436, %v436
      %v777 = vmul.f32 %v475, %v475
      %v778 = vmul.f32 %v477, %v477
      %v779 = vmul.f32 %v516, %v516
      %v780 = vmul.f32 %v518, %v518
      %v781 = vmul.f32 %v557, %v557
      %v782 = vmul.f32 %v559, %v559
      %v783 = vmul.f32 %v598, %v598
      %v784 = vmul.f32 %v600, %v600
      %v785 = vmul.f32 %v639, %v639
      %v786 = vmul.f32 %v641, %v641
      %v787 = vmul.f32 %v680, %v680
      %v788 = vmul.f32 %v682, %v682
      %v789 = vmul.f32 %v721, %v721
      %v790 = vmul.f32 %v723, %v723
      %v791 = vsel %vm737, %v775, 0.0
      %v792 = vsel %vm737, %v776, 0.0
      %v793 = vadd.f32 %v791, %v792
      %v794 = vsel %vm737, %v777, 0.0
      %v795 = vadd.f32 %v793, %v794
      %v796 = vsel %vm737, %v778, 0.0
      %v797 = vadd.f32 %v795, %v796
      %v798 = vsel %vm737, %v779, 0.0
      %v799 = vadd.f32 %v797, %v798
      %v800 = vsel %vm737, %v780, 0.0
      %v801 = vadd.f32 %v799, %v800
      %v802 = vsel %vm737, %v781, 0.0
      %v803 = vadd.f32 %v801, %v802
      %v804 = vsel %vm737, %v782, 0.0
      %v805 = vadd.f32 %v803, %v804
      %v806 = vsel %vm737, %v783, 0.0
      %v807 = vadd.f32 %v805, %v806
      %v808 = vsel %vm737, %v784, 0.0
      %v809 = vadd.f32 %v807, %v808
      %v810 = vsel %vm737, %v785, 0.0
      %v811 = vadd.f32 %v809, %v810
      %v812 = vsel %vm737, %v786, 0.0
      %v813 = vadd.f32 %v811, %v812
      %v814 = vsel %vm737, %v787, 0.0
      %v815 = vadd.f32 %v813, %v814
      %v816 = vsel %vm737, %v788, 0.0
      %v817 = vadd.f32 %v815, %v816
      %v818 = vsel %vm737, %v789, 0.0
      %v819 = vadd.f32 %v817, %v818
      %v820 = vsel %vm737, %v790, 0.0
      %v821 = vadd.f32 %v819, %v820
      %822 = vadd.xlane.f32.xlu0 %v821
      %v823 = vpop.xlane.xlu0 %822
      %v824 = vadd.f32 %v774, %v823
      %825 = vst.msk [vmem:[#allocation3] sm:$0xf] %vm772, %v824
      %v826 = vpack.c.bf16 %v434, %v434
      %v827 = vpack.c.bf16 %v436, %v436
      %v828 = vpack.c.bf16 %v475, %v475
      %v829 = vpack.c.bf16 %v477, %v477
      %v830 = vpack.c.bf16 %v516, %v516
      %v831 = vpack.c.bf16 %v518, %v518
      %v832 = vpack.c.bf16 %v557, %v557
      %v833 = vpack.c.bf16 %v559, %v559
      %v834 = vpack.c.bf16 %v598, %v598
      %v835 = vpack.c.bf16 %v600, %v600
      %v836 = vpack.c.bf16 %v639, %v639
      %v837 = vpack.c.bf16 %v641, %v641
      %v838 = vpack.c.bf16 %v680, %v680
      %v839 = vpack.c.bf16 %v682, %v682
      %v840 = vpack.c.bf16 %v721, %v721
      %v841 = vpack.c.bf16 %v723, %v723
      %v858 = vcombine.low %v826, %v827
      %v859 = vcombine.low %v828, %v829
      %v861 = vunpack.c.l.s4 1983009808
      %v862 = vunpack.c.0.s8 %v861
      %v863 = vlaneseq
      %v864 = vshrl.u32 %v863, 7
      %v865 = vsub.s32 %v862, %v864
      %v866 = vrot.slane %v858, %v865
      %v868 = vunpack.c.l.s4 1983009808
      %v869 = vunpack.c.0.s8 %v868
      %v870 = vlaneseq
      %v871 = vshrl.u32 %v870, 7
      %v872 = vsub.s32 %v869, %v871
      %v873 = vrot.slane %v859, %v872
      %v874 = vcombine.low %v866, %v873
      %v875 = vcombine.low %v830, %v831
      %v876 = vcombine.low %v832, %v833
      %v878 = vunpack.c.l.s4 1983009808
      %v879 = vunpack.c.0.s8 %v878
      %v880 = vlaneseq
      %v881 = vshrl.u32 %v880, 7
      %v882 = vsub.s32 %v879, %v881
      %v883 = vrot.slane %v875, %v882
      %v885 = vunpack.c.l.s4 1983009808
      %v886 = vunpack.c.0.s8 %v885
      %v887 = vlaneseq
      %v888 = vshrl.u32 %v887, 7
      %v889 = vsub.s32 %v886, %v888
      %v890 = vrot.slane %v876, %v889
      %v891 = vcombine.low %v883, %v890
      %v892 = vcombine.low %v834, %v835
      %v893 = vcombine.low %v836, %v837
      %v895 = vunpack.c.l.s4 1983009808
      %v896 = vunpack.c.0.s8 %v895
      %v897 = vlaneseq
      %v898 = vshrl.u32 %v897, 7
      %v899 = vsub.s32 %v896, %v898
      %v900 = vrot.slane %v892, %v899
      %v902 = vunpack.c.l.s4 1983009808
      %v903 = vunpack.c.0.s8 %v902
      %v904 = vlaneseq
      %v905 = vshrl.u32 %v904, 7
      %v906 = vsub.s32 %v903, %v905
      %v907 = vrot.slane %v893, %v906
      %v908 = vcombine.low %v900, %v907
      %v909 = vcombine.low %v838, %v839
      %v910 = vcombine.low %v840, %v841
      %v912 = vunpack.c.l.s4 1983009808
      %v913 = vunpack.c.0.s8 %v912
      %v914 = vlaneseq
      %v915 = vshrl.u32 %v914, 7
      %v916 = vsub.s32 %v913, %v915
      %v917 = vrot.slane %v909, %v916
      %v919 = vunpack.c.l.s4 1983009808
      %v920 = vunpack.c.0.s8 %v919
      %v921 = vlaneseq
      %v922 = vshrl.u32 %v921, 7
      %v923 = vsub.s32 %v920, %v922
      %v924 = vrot.slane %v910, %v923
      %v925 = vcombine.low %v917, %v924
      %s930 = smul.u32 %s18, 16
      %s931 = smul.addr %s930, 2
      %s932 = scalar_lea.vmem %s3, %s931
      %933 = vst [vmem:[%s932] sm:$0xff] %v874
      %934 = vst [vmem:[%s932 + $0x8] sm:$0xff] %v891
      %935 = vst [vmem:[%s932 + $0x10] sm:$0xff] %v908
      %936 = vst [vmem:[%s932 + $0x18] sm:$0xff] %v925
      %p937 = scmp.eq.s32.totalorder %s18, 3
      %p938 = pnand %p937, %p728
      %p939 = pneg %p938
      // Predicated region
      $region37: #{generator_forward.10} parent=31 // pred_check
        _
      $region38: #{generator_forward.10} parent=31 // pred_check_branch
        %941 = sbr.rel (%p938) target = $region40
      $region39: #{generator_forward.10} parent=31 // pred_region
        %v942 = vld [vmem:[%s3] sm:$0xff]
        %v943 = vld [vmem:[%s3 + $0x8] sm:$0xff]
        %v944 = vld [vmem:[%s3 + $0x10] sm:$0xff]
        %v945 = vld [vmem:[%s3 + $0x18] sm:$0xff]
        %v946 = vld [vmem:[%s3 + $0x20] sm:$0xff]
        %v947 = vld [vmem:[%s3 + $0x28] sm:$0xff]
        %v948 = vld [vmem:[%s3 + $0x30] sm:$0xff]
        %v949 = vld [vmem:[%s3 + $0x38] sm:$0xff]
        %v950 = vld [vmem:[%s3 + $0x40] sm:$0xff]
        %v951 = vld [vmem:[%s3 + $0x48] sm:$0xff]
        %v952 = vld [vmem:[%s3 + $0x50] sm:$0xff]
        %v953 = vld [vmem:[%s3 + $0x58] sm:$0xff]
        %v954 = vld [vmem:[%s3 + $0x60] sm:$0xff]
        %v955 = vld [vmem:[%s3 + $0x68] sm:$0xff]
        %v956 = vld [vmem:[%s3 + $0x70] sm:$0xff]
        %v957 = vld [vmem:[%s3 + $0x78] sm:$0xff]
        %v958 = vunpack.c.l.bf16 %v942
        %v959 = vunpack.c.h.bf16 %v942
        %v960 = vunpack.c.l.bf16 %v943
        %v961 = vunpack.c.h.bf16 %v943
        %v962 = vunpack.c.l.bf16 %v944
        %v963 = vunpack.c.h.bf16 %v944
        %v964 = vunpack.c.l.bf16 %v945
        %v965 = vunpack.c.h.bf16 %v945
        %v966 = vunpack.c.l.bf16 %v946
        %v967 = vunpack.c.h.bf16 %v946
        %v968 = vunpack.c.l.bf16 %v947
        %v969 = vunpack.c.h.bf16 %v947
        %v970 = vunpack.c.l.bf16 %v948
        %v971 = vunpack.c.h.bf16 %v948
        %v972 = vunpack.c.l.bf16 %v949
        %v973 = vunpack.c.h.bf16 %v949
        %v974 = vunpack.c.l.bf16 %v950
        %v975 = vunpack.c.h.bf16 %v950
        %v976 = vunpack.c.l.bf16 %v951
        %v977 = vunpack.c.h.bf16 %v951
        %v978 = vunpack.c.l.bf16 %v952
        %v979 = vunpack.c.h.bf16 %v952
        %v980 = vunpack.c.l.bf16 %v953
        %v981 = vunpack.c.h.bf16 %v953
        %v982 = vunpack.c.l.bf16 %v954
        %v983 = vunpack.c.h.bf16 %v954
        %v984 = vunpack.c.l.bf16 %v955
        %v985 = vunpack.c.h.bf16 %v955
        %v986 = vunpack.c.l.bf16 %v956
        %v987 = vunpack.c.h.bf16 %v956
        %v988 = vunpack.c.l.bf16 %v957
        %v989 = vunpack.c.h.bf16 %v957
        %v990 = vld [vmem:[#allocation2] sm:$0xf]
        %v991 = vmul.f32 %v990, 0.00012207031
        %v992 = vld [vmem:[#allocation3] sm:$0xf]
        %v993 = vmul.f32 %v992, 0.00012207031
        %v994 = vmul.f32 %v991, %v991
        %v995 = vsub.f32 %v993, %v994
        %v996 = vmax.f32 %v995, 0.0
        %v997 = vadd.f32 %v996, 1e-05
        %v998 = vrsqrt.pop %v997
        %1000 = vset.pattern.permute.xlu0 0
        %1001 = vperm.xlu0 %1000, %v991
        %v1002 = vpop.permute.xlu0 %1001
        %v1004 = vunpack.c.l.s4 839922192
        %v1005 = vunpack.c.0.s8 %v1004
        %v1006 = vlaneseq
        %v1007 = vshrl.u32 %v1006, 7
        %v1008 = vsub.s32 %v1005, %v1007
        %v1009 = vrot.slane %v1002, %v1008
        %v1011 = vsub.f32 %v958, %v1009
        %v1012 = vsub.f32 %v959, %v1009
        %v1013 = vsub.f32 %v960, %v1009
        %v1014 = vsub.f32 %v961, %v1009
        %v1015 = vsub.f32 %v962, %v1009
        %v1016 = vsub.f32 %v963, %v1009
        %v1017 = vsub.f32 %v964, %v1009
        %v1018 = vsub.f32 %v965, %v1009
        %v1019 = vsub.f32 %v966, %v1009
        %v1020 = vsub.f32 %v967, %v1009
        %v1021 = vsub.f32 %v968, %v1009
        %v1022 = vsub.f32 %v969, %v1009
        %v1023 = vsub.f32 %v970, %v1009
        %v1024 = vsub.f32 %v971, %v1009
        %v1025 = vsub.f32 %v972, %v1009
        %v1026 = vsub.f32 %v973, %v1009
        %v1027 = vsub.f32 %v974, %v1009
        %v1028 = vsub.f32 %v975, %v1009
        %v1029 = vsub.f32 %v976, %v1009
        %v1030 = vsub.f32 %v977, %v1009
        %v1031 = vsub.f32 %v978, %v1009
        %v1032 = vsub.f32 %v979, %v1009
        %v1033 = vsub.f32 %v980, %v1009
        %v1034 = vsub.f32 %v981, %v1009
        %v1035 = vsub.f32 %v982, %v1009
        %v1036 = vsub.f32 %v983, %v1009
        %v1037 = vsub.f32 %v984, %v1009
        %v1038 = vsub.f32 %v985, %v1009
        %v1039 = vsub.f32 %v986, %v1009
        %v1040 = vsub.f32 %v987, %v1009
        %v1041 = vsub.f32 %v988, %v1009
        %v1042 = vsub.f32 %v989, %v1009
        %1044 = vset.pattern.permute.xlu0 0
        %1045 = vperm.xlu0 %1044, %v998
        %v1046 = vpop.permute.xlu0 %1045
        %v1048 = vunpack.c.l.s4 839922192
        %v1049 = vunpack.c.0.s8 %v1048
        %v1050 = vlaneseq
        %v1051 = vshrl.u32 %v1050, 7
        %v1052 = vsub.s32 %v1049, %v1051
        %v1053 = vrot.slane %v1046, %v1052
        %v1055 = vmul.f32 %v1011, %v1053
        %v1056 = vmul.f32 %v1012, %v1053
        %v1057 = vmul.f32 %v1013, %v1053
        %v1058 = vmul.f32 %v1014, %v1053
        %v1059 = vmul.f32 %v1015, %v1053
        %v1060 = vmul.f32 %v1016, %v1053
        %v1061 = vmul.f32 %v1017, %v1053
        %v1062 = vmul.f32 %v1018, %v1053
        %v1063 = vmul.f32 %v1019, %v1053
        %v1064 = vmul.f32 %v1020, %v1053
        %v1065 = vmul.f32 %v1021, %v1053
        %v1066 = vmul.f32 %v1022, %v1053
        %v1067 = vmul.f32 %v1023, %v1053
        %v1068 = vmul.f32 %v1024, %v1053
        %v1069 = vmul.f32 %v1025, %v1053
        %v1070 = vmul.f32 %v1026, %v1053
        %v1071 = vmul.f32 %v1027, %v1053
        %v1072 = vmul.f32 %v1028, %v1053
        %v1073 = vmul.f32 %v1029, %v1053
        %v1074 = vmul.f32 %v1030, %v1053
        %v1075 = vmul.f32 %v1031, %v1053
        %v1076 = vmul.f32 %v1032, %v1053
        %v1077 = vmul.f32 %v1033, %v1053
        %v1078 = vmul.f32 %v1034, %v1053
        %v1079 = vmul.f32 %v1035, %v1053
        %v1080 = vmul.f32 %v1036, %v1053
        %v1081 = vmul.f32 %v1037, %v1053
        %v1082 = vmul.f32 %v1038, %v1053
        %v1083 = vmul.f32 %v1039, %v1053
        %v1084 = vmul.f32 %v1040, %v1053
        %v1085 = vmul.f32 %v1041, %v1053
        %v1086 = vmul.f32 %v1042, %v1053
        %v1087 = vmax.f32 %v1055, 0.0
        %v1088 = vmax.f32 %v1056, 0.0
        %v1089 = vmax.f32 %v1057, 0.0
        %v1090 = vmax.f32 %v1058, 0.0
        %v1091 = vmax.f32 %v1059, 0.0
        %v1092 = vmax.f32 %v1060, 0.0
        %v1093 = vmax.f32 %v1061, 0.0
        %v1094 = vmax.f32 %v1062, 0.0
        %v1095 = vmax.f32 %v1063, 0.0
        %v1096 = vmax.f32 %v1064, 0.0
        %v1097 = vmax.f32 %v1065, 0.0
        %v1098 = vmax.f32 %v1066, 0.0
        %v1099 = vmax.f32 %v1067, 0.0
        %v1100 = vmax.f32 %v1068, 0.0
        %v1101 = vmax.f32 %v1069, 0.0
        %v1102 = vmax.f32 %v1070, 0.0
        %v1103 = vmax.f32 %v1071, 0.0
        %v1104 = vmax.f32 %v1072, 0.0
        %v1105 = vmax.f32 %v1073, 0.0
        %v1106 = vmax.f32 %v1074, 0.0
        %v1107 = vmax.f32 %v1075, 0.0
        %v1108 = vmax.f32 %v1076, 0.0
        %v1109 = vmax.f32 %v1077, 0.0
        %v1110 = vmax.f32 %v1078, 0.0
        %v1111 = vmax.f32 %v1079, 0.0
        %v1112 = vmax.f32 %v1080, 0.0
        %v1113 = vmax.f32 %v1081, 0.0
        %v1114 = vmax.f32 %v1082, 0.0
        %v1115 = vmax.f32 %v1083, 0.0
        %v1116 = vmax.f32 %v1084, 0.0
        %v1117 = vmax.f32 %v1085, 0.0
        %v1118 = vmax.f32 %v1086, 0.0
        %v1151 = vcombine.high %v1087, %v1087
        %v1152 = vcombine.high %v1088, %v1088
        %v1153 = vcombine.high %v1089, %v1089
        %v1154 = vcombine.high %v1090, %v1090
        %v1155 = vcombine.high %v1091, %v1091
        %v1156 = vcombine.high %v1092, %v1092
        %v1157 = vcombine.high %v1093, %v1093
        %v1158 = vcombine.high %v1094, %v1094
        %v1159 = vcombine.high %v1095, %v1095
        %v1160 = vcombine.high %v1096, %v1096
        %v1161 = vcombine.high %v1097, %v1097
        %v1162 = vcombine.high %v1098, %v1098
        %v1163 = vcombine.high %v1099, %v1099
        %v1164 = vcombine.high %v1100, %v1100
        %v1165 = vcombine.high %v1101, %v1101
        %v1166 = vcombine.high %v1102, %v1102
        %v1167 = vcombine.high %v1103, %v1103
        %v1168 = vcombine.high %v1104, %v1104
        %v1169 = vcombine.high %v1105, %v1105
        %v1170 = vcombine.high %v1106, %v1106
        %v1171 = vcombine.high %v1107, %v1107
        %v1172 = vcombine.high %v1108, %v1108
        %v1173 = vcombine.high %v1109, %v1109
        %v1174 = vcombine.high %v1110, %v1110
        %v1175 = vcombine.high %v1111, %v1111
        %v1176 = vcombine.high %v1112, %v1112
        %v1177 = vcombine.high %v1113, %v1113
        %v1178 = vcombine.high %v1114, %v1114
        %v1179 = vcombine.high %v1115, %v1115
        %v1180 = vcombine.high %v1116, %v1116
        %v1181 = vcombine.high %v1117, %v1117
        %v1182 = vcombine.high %v1118, %v1118
        %v1215 = vpack.c.bf16 %v1087, %v1087
        %v1216 = vpack.c.bf16 %v1151, %v1151
        %v1217 = vpack.c.bf16 %v1088, %v1088
        %v1218 = vpack.c.bf16 %v1152, %v1152
        %v1219 = vpack.c.bf16 %v1089, %v1089
        %v1220 = vpack.c.bf16 %v1153, %v1153
        %v1221 = vpack.c.bf16 %v1090, %v1090
        %v1222 = vpack.c.bf16 %v1154, %v1154
        %v1223 = vpack.c.bf16 %v1091, %v1091
        %v1224 = vpack.c.bf16 %v1155, %v1155
        %v1225 = vpack.c.bf16 %v1092, %v1092
        %v1226 = vpack.c.bf16 %v1156, %v1156
        %v1227 = vpack.c.bf16 %v1093, %v1093
        %v1228 = vpack.c.bf16 %v1157, %v1157
        %v1229 = vpack.c.bf16 %v1094, %v1094
        %v1230 = vpack.c.bf16 %v1158, %v1158
        %v1231 = vpack.c.bf16 %v1095, %v1095
        %v1232 = vpack.c.bf16 %v1159, %v1159
        %v1233 = vpack.c.bf16 %v1096, %v1096
        %v1234 = vpack.c.bf16 %v1160, %v1160
        %v1235 = vpack.c.bf16 %v1097, %v1097
        %v1236 = vpack.c.bf16 %v1161, %v1161
        %v1237 = vpack.c.bf16 %v1098, %v1098
        %v1238 = vpack.c.bf16 %v1162, %v1162
        %v1239 = vpack.c.bf16 %v1099, %v1099
        %v1240 = vpack.c.bf16 %v1163, %v1163
        %v1241 = vpack.c.bf16 %v1100, %v1100
        %v1242 = vpack.c.bf16 %v1164, %v1164
        %v1243 = vpack.c.bf16 %v1101, %v1101
        %v1244 = vpack.c.bf16 %v1165, %v1165
        %v1245 = vpack.c.bf16 %v1102, %v1102
        %v1246 = vpack.c.bf16 %v1166, %v1166
        %v1247 = vpack.c.bf16 %v1103, %v1103
        %v1248 = vpack.c.bf16 %v1167, %v1167
        %v1249 = vpack.c.bf16 %v1104, %v1104
        %v1250 = vpack.c.bf16 %v1168, %v1168
        %v1251 = vpack.c.bf16 %v1105, %v1105
        %v1252 = vpack.c.bf16 %v1169, %v1169
        %v1253 = vpack.c.bf16 %v1106, %v1106
        %v1254 = vpack.c.bf16 %v1170, %v1170
        %v1255 = vpack.c.bf16 %v1107, %v1107
        %v1256 = vpack.c.bf16 %v1171, %v1171
        %v1257 = vpack.c.bf16 %v1108, %v1108
        %v1258 = vpack.c.bf16 %v1172, %v1172
        %v1259 = vpack.c.bf16 %v1109, %v1109
        %v1260 = vpack.c.bf16 %v1173, %v1173
        %v1261 = vpack.c.bf16 %v1110, %v1110
        %v1262 = vpack.c.bf16 %v1174, %v1174
        %v1263 = vpack.c.bf16 %v1111, %v1111
        %v1264 = vpack.c.bf16 %v1175, %v1175
        %v1265 = vpack.c.bf16 %v1112, %v1112
        %v1266 = vpack.c.bf16 %v1176, %v1176
        %v1267 = vpack.c.bf16 %v1113, %v1113
        %v1268 = vpack.c.bf16 %v1177, %v1177
        %v1269 = vpack.c.bf16 %v1114, %v1114
        %v1270 = vpack.c.bf16 %v1178, %v1178
        %v1271 = vpack.c.bf16 %v1115, %v1115
        %v1272 = vpack.c.bf16 %v1179, %v1179
        %v1273 = vpack.c.bf16 %v1116, %v1116
        %v1274 = vpack.c.bf16 %v1180, %v1180
        %v1275 = vpack.c.bf16 %v1117, %v1117
        %v1276 = vpack.c.bf16 %v1181, %v1181
        %v1277 = vpack.c.bf16 %v1118, %v1118
        %v1278 = vpack.c.bf16 %v1182, %v1182
        %v1343 = vcombine.low %v1215, %v1216
        %v1344 = vcombine.low %v1217, %v1218
        %v1346 = vunpack.c.l.s4 1983009808
        %v1347 = vunpack.c.0.s8 %v1346
        %v1348 = vlaneseq
        %v1349 = vshrl.u32 %v1348, 7
        %v1350 = vsub.s32 %v1347, %v1349
        %v1351 = vrot.slane %v1343, %v1350
        %v1353 = vunpack.c.l.s4 1983009808
        %v1354 = vunpack.c.0.s8 %v1353
        %v1355 = vlaneseq
        %v1356 = vshrl.u32 %v1355, 7
        %v1357 = vsub.s32 %v1354, %v1356
        %v1358 = vrot.slane %v1344, %v1357
        %v1359 = vcombine.low %v1351, %v1358
        %v1360 = vcombine.low %v1219, %v1220
        %v1361 = vcombine.low %v1221, %v1222
        %v1363 = vunpack.c.l.s4 1983009808
        %v1364 = vunpack.c.0.s8 %v1363
        %v1365 = vlaneseq
        %v1366 = vshrl.u32 %v1365, 7
        %v1367 = vsub.s32 %v1364, %v1366
        %v1368 = vrot.slane %v1360, %v1367
        %v1370 = vunpack.c.l.s4 1983009808
        %v1371 = vunpack.c.0.s8 %v1370
        %v1372 = vlaneseq
        %v1373 = vshrl.u32 %v1372, 7
        %v1374 = vsub.s32 %v1371, %v1373
        %v1375 = vrot.slane %v1361, %v1374
        %v1376 = vcombine.low %v1368, %v1375
        %v1377 = vcombine.low %v1223, %v1224
        %v1378 = vcombine.low %v1225, %v1226
        %v1380 = vunpack.c.l.s4 1983009808
        %v1381 = vunpack.c.0.s8 %v1380
        %v1382 = vlaneseq
        %v1383 = vshrl.u32 %v1382, 7
        %v1384 = vsub.s32 %v1381, %v1383
        %v1385 = vrot.slane %v1377, %v1384
        %v1387 = vunpack.c.l.s4 1983009808
        %v1388 = vunpack.c.0.s8 %v1387
        %v1389 = vlaneseq
        %v1390 = vshrl.u32 %v1389, 7
        %v1391 = vsub.s32 %v1388, %v1390
        %v1392 = vrot.slane %v1378, %v1391
        %v1393 = vcombine.low %v1385, %v1392
        %v1394 = vcombine.low %v1227, %v1228
        %v1395 = vcombine.low %v1229, %v1230
        %v1397 = vunpack.c.l.s4 1983009808
        %v1398 = vunpack.c.0.s8 %v1397
        %v1399 = vlaneseq
        %v1400 = vshrl.u32 %v1399, 7
        %v1401 = vsub.s32 %v1398, %v1400
        %v1402 = vrot.slane %v1394, %v1401
        %v1404 = vunpack.c.l.s4 1983009808
        %v1405 = vunpack.c.0.s8 %v1404
        %v1406 = vlaneseq
        %v1407 = vshrl.u32 %v1406, 7
        %v1408 = vsub.s32 %v1405, %v1407
        %v1409 = vrot.slane %v1395, %v1408
        %v1410 = vcombine.low %v1402, %v1409
        %v1411 = vcombine.low %v1231, %v1232
        %v1412 = vcombine.low %v1233, %v1234
        %v1414 = vunpack.c.l.s4 1983009808
        %v1415 = vunpack.c.0.s8 %v1414
        %v1416 = vlaneseq
        %v1417 = vshrl.u32 %v1416, 7
        %v1418 = vsub.s32 %v1415, %v1417
        %v1419 = vrot.slane %v1411, %v1418
        %v1421 = vunpack.c.l.s4 1983009808
        %v1422 = vunpack.c.0.s8 %v1421
        %v1423 = vlaneseq
        %v1424 = vshrl.u32 %v1423, 7
        %v1425 = vsub.s32 %v1422, %v1424
        %v1426 = vrot.slane %v1412, %v1425
        %v1427 = vcombine.low %v1419, %v1426
        %v1428 = vcombine.low %v1235, %v1236
        %v1429 = vcombine.low %v1237, %v1238
        %v1431 = vunpack.c.l.s4 1983009808
        %v1432 = vunpack.c.0.s8 %v1431
        %v1433 = vlaneseq
        %v1434 = vshrl.u32 %v1433, 7
        %v1435 = vsub.s32 %v1432, %v1434
        %v1436 = vrot.slane %v1428, %v1435
        %v1438 = vunpack.c.l.s4 1983009808
        %v1439 = vunpack.c.0.s8 %v1438
        %v1440 = vlaneseq
        %v1441 = vshrl.u32 %v1440, 7
        %v1442 = vsub.s32 %v1439, %v1441
        %v1443 = vrot.slane %v1429, %v1442
        %v1444 = vcombine.low %v1436, %v1443
        %v1445 = vcombine.low %v1239, %v1240
        %v1446 = vcombine.low %v1241, %v1242
        %v1448 = vunpack.c.l.s4 1983009808
        %v1449 = vunpack.c.0.s8 %v1448
        %v1450 = vlaneseq
        %v1451 = vshrl.u32 %v1450, 7
        %v1452 = vsub.s32 %v1449, %v1451
        %v1453 = vrot.slane %v1445, %v1452
        %v1455 = vunpack.c.l.s4 1983009808
        %v1456 = vunpack.c.0.s8 %v1455
        %v1457 = vlaneseq
        %v1458 = vshrl.u32 %v1457, 7
        %v1459 = vsub.s32 %v1456, %v1458
        %v1460 = vrot.slane %v1446, %v1459
        %v1461 = vcombine.low %v1453, %v1460
        %v1462 = vcombine.low %v1243, %v1244
        %v1463 = vcombine.low %v1245, %v1246
        %v1465 = vunpack.c.l.s4 1983009808
        %v1466 = vunpack.c.0.s8 %v1465
        %v1467 = vlaneseq
        %v1468 = vshrl.u32 %v1467, 7
        %v1469 = vsub.s32 %v1466, %v1468
        %v1470 = vrot.slane %v1462, %v1469
        %v1472 = vunpack.c.l.s4 1983009808
        %v1473 = vunpack.c.0.s8 %v1472
        %v1474 = vlaneseq
        %v1475 = vshrl.u32 %v1474, 7
        %v1476 = vsub.s32 %v1473, %v1475
        %v1477 = vrot.slane %v1463, %v1476
        %v1478 = vcombine.low %v1470, %v1477
        %v1479 = vcombine.low %v1247, %v1248
        %v1480 = vcombine.low %v1249, %v1250
        %v1482 = vunpack.c.l.s4 1983009808
        %v1483 = vunpack.c.0.s8 %v1482
        %v1484 = vlaneseq
        %v1485 = vshrl.u32 %v1484, 7
        %v1486 = vsub.s32 %v1483, %v1485
        %v1487 = vrot.slane %v1479, %v1486
        %v1489 = vunpack.c.l.s4 1983009808
        %v1490 = vunpack.c.0.s8 %v1489
        %v1491 = vlaneseq
        %v1492 = vshrl.u32 %v1491, 7
        %v1493 = vsub.s32 %v1490, %v1492
        %v1494 = vrot.slane %v1480, %v1493
        %v1495 = vcombine.low %v1487, %v1494
        %v1496 = vcombine.low %v1251, %v1252
        %v1497 = vcombine.low %v1253, %v1254
        %v1499 = vunpack.c.l.s4 1983009808
        %v1500 = vunpack.c.0.s8 %v1499
        %v1501 = vlaneseq
        %v1502 = vshrl.u32 %v1501, 7
        %v1503 = vsub.s32 %v1500, %v1502
        %v1504 = vrot.slane %v1496, %v1503
        %v1506 = vunpack.c.l.s4 1983009808
        %v1507 = vunpack.c.0.s8 %v1506
        %v1508 = vlaneseq
        %v1509 = vshrl.u32 %v1508, 7
        %v1510 = vsub.s32 %v1507, %v1509
        %v1511 = vrot.slane %v1497, %v1510
        %v1512 = vcombine.low %v1504, %v1511
        %v1513 = vcombine.low %v1255, %v1256
        %v1514 = vcombine.low %v1257, %v1258
        %v1516 = vunpack.c.l.s4 1983009808
        %v1517 = vunpack.c.0.s8 %v1516
        %v1518 = vlaneseq
        %v1519 = vshrl.u32 %v1518, 7
        %v1520 = vsub.s32 %v1517, %v1519
        %v1521 = vrot.slane %v1513, %v1520
        %v1523 = vunpack.c.l.s4 1983009808
        %v1524 = vunpack.c.0.s8 %v1523
        %v1525 = vlaneseq
        %v1526 = vshrl.u32 %v1525, 7
        %v1527 = vsub.s32 %v1524, %v1526
        %v1528 = vrot.slane %v1514, %v1527
        %v1529 = vcombine.low %v1521, %v1528
        %v1530 = vcombine.low %v1259, %v1260
        %v1531 = vcombine.low %v1261, %v1262
        %v1533 = vunpack.c.l.s4 1983009808
        %v1534 = vunpack.c.0.s8 %v1533
        %v1535 = vlaneseq
        %v1536 = vshrl.u32 %v1535, 7
        %v1537 = vsub.s32 %v1534, %v1536
        %v1538 = vrot.slane %v1530, %v1537
        %v1540 = vunpack.c.l.s4 1983009808
        %v1541 = vunpack.c.0.s8 %v1540
        %v1542 = vlaneseq
        %v1543 = vshrl.u32 %v1542, 7
        %v1544 = vsub.s32 %v1541, %v1543
        %v1545 = vrot.slane %v1531, %v1544
        %v1546 = vcombine.low %v1538, %v1545
        %v1547 = vcombine.low %v1263, %v1264
        %v1548 = vcombine.low %v1265, %v1266
        %v1550 = vunpack.c.l.s4 1983009808
        %v1551 = vunpack.c.0.s8 %v1550
        %v1552 = vlaneseq
        %v1553 = vshrl.u32 %v1552, 7
        %v1554 = vsub.s32 %v1551, %v1553
        %v1555 = vrot.slane %v1547, %v1554
        %v1557 = vunpack.c.l.s4 1983009808
        %v1558 = vunpack.c.0.s8 %v1557
        %v1559 = vlaneseq
        %v1560 = vshrl.u32 %v1559, 7
        %v1561 = vsub.s32 %v1558, %v1560
        %v1562 = vrot.slane %v1548, %v1561
        %v1563 = vcombine.low %v1555, %v1562
        %v1564 = vcombine.low %v1267, %v1268
        %v1565 = vcombine.low %v1269, %v1270
        %v1567 = vunpack.c.l.s4 1983009808
        %v1568 = vunpack.c.0.s8 %v1567
        %v1569 = vlaneseq
        %v1570 = vshrl.u32 %v1569, 7
        %v1571 = vsub.s32 %v1568, %v1570
        %v1572 = vrot.slane %v1564, %v1571
        %v1574 = vunpack.c.l.s4 1983009808
        %v1575 = vunpack.c.0.s8 %v1574
        %v1576 = vlaneseq
        %v1577 = vshrl.u32 %v1576, 7
        %v1578 = vsub.s32 %v1575, %v1577
        %v1579 = vrot.slane %v1565, %v1578
        %v1580 = vcombine.low %v1572, %v1579
        %v1581 = vcombine.low %v1271, %v1272
        %v1582 = vcombine.low %v1273, %v1274
        %v1584 = vunpack.c.l.s4 1983009808
        %v1585 = vunpack.c.0.s8 %v1584
        %v1586 = vlaneseq
        %v1587 = vshrl.u32 %v1586, 7
        %v1588 = vsub.s32 %v1585, %v1587
        %v1589 = vrot.slane %v1581, %v1588
        %v1591 = vunpack.c.l.s4 1983009808
        %v1592 = vunpack.c.0.s8 %v1591
        %v1593 = vlaneseq
        %v1594 = vshrl.u32 %v1593, 7
        %v1595 = vsub.s32 %v1592, %v1594
        %v1596 = vrot.slane %v1582, %v1595
        %v1597 = vcombine.low %v1589, %v1596
        %v1598 = vcombine.low %v1275, %v1276
        %v1599 = vcombine.low %v1277, %v1278
        %v1601 = vunpack.c.l.s4 1983009808
        %v1602 = vunpack.c.0.s8 %v1601
        %v1603 = vlaneseq
        %v1604 = vshrl.u32 %v1603, 7
        %v1605 = vsub.s32 %v1602, %v1604
        %v1606 = vrot.slane %v1598, %v1605
        %v1608 = vunpack.c.l.s4 1983009808
        %v1609 = vunpack.c.0.s8 %v1608
        %v1610 = vlaneseq
        %v1611 = vshrl.u32 %v1610, 7
        %v1612 = vsub.s32 %v1609, %v1611
        %v1613 = vrot.slane %v1599, %v1612
        %v1614 = vcombine.low %v1606, %v1613
        %1631 = vst [vmem:[%s3] sm:$0xff] %v1359
        %1632 = vst [vmem:[%s3 + $0x8] sm:$0xff] %v1376
        %1633 = vst [vmem:[%s3 + $0x10] sm:$0xff] %v1393
        %1634 = vst [vmem:[%s3 + $0x18] sm:$0xff] %v1410
        %1635 = vst [vmem:[%s3 + $0x20] sm:$0xff] %v1427
        %1636 = vst [vmem:[%s3 + $0x28] sm:$0xff] %v1444
        %1637 = vst [vmem:[%s3 + $0x30] sm:$0xff] %v1461
        %1638 = vst [vmem:[%s3 + $0x38] sm:$0xff] %v1478
        %1639 = vst [vmem:[%s3 + $0x40] sm:$0xff] %v1495
        %1640 = vst [vmem:[%s3 + $0x48] sm:$0xff] %v1512
        %1641 = vst [vmem:[%s3 + $0x50] sm:$0xff] %v1529
        %1642 = vst [vmem:[%s3 + $0x58] sm:$0xff] %v1546
        %1643 = vst [vmem:[%s3 + $0x60] sm:$0xff] %v1563
        %1644 = vst [vmem:[%s3 + $0x68] sm:$0xff] %v1580
        %1645 = vst [vmem:[%s3 + $0x70] sm:$0xff] %v1597
        %1646 = vst [vmem:[%s3 + $0x78] sm:$0xff] %v1614
      $region40: #{generator_forward.10} parent=31 // pred_fallthru
        _
      // Predicated region
      $region41: #{generator_forward.10} parent=31 // pred_check
        %p1647 = pneg %p114
      $region42: #{generator_forward.10} parent=31 // pred_check_branch
        %1649 = sbr.rel (%p1647) target = $region44
      $region43: #{generator_forward.10} parent=31 // pred_region
        _
      $region44: #{generator_forward.10} parent=31 // pred_fallthru
        _
      // Predicated region
      $region45: #{generator_forward.10} parent=31 // pred_check
        %p1650 = pneg %p114
      $region46: #{generator_forward.10} parent=31 // pred_check_branch
        %1652 = sbr.rel (%p1650) target = $region48
      $region47: #{generator_forward.10} parent=31 // pred_region
        _
      $region48: #{generator_forward.10} parent=31 // pred_fallthru
        _
    $region32: #{generator_forward.10} parent=5 // pred_fallthru
      _
    %p1653 = scmp.le.s32.totalorder 2, %s9
    // Predicated region
    $region49: #{generator_forward.10} parent=5 // pred_check
      %p1654 = pneg %p1653
    $region50: #{generator_forward.10} parent=5 // pred_check_branch
      %1656 = sbr.rel (%p1654) target = $region52
    $region51: #{generator_forward.10} parent=5 // pred_region
      %s1657 = ssub.s32 %s9, 2
    $region52: #{generator_forward.10} parent=5 // pred_fallthru
      _
  $region6: #{generator_forward.10} parent=0 // loop_footer
    %s13 = sadd.s32 1, %s9
  $region7: #{generator_forward.10} parent=0 // loop_footer_branch
    %8 = sbr.rel target = $region3
  $region8: #{generator_forward.10} parent=0 // loop_exit
    _

// kernel: generator_forward.11
$region0: #{generator_forward.11}
  #allocation0 [shape = 'u32[]', space=smem, size = 0x4, offset = 0x4, fixed_abs, tag = 'smem constant byte address 0x4 - core index']
  #allocation1 [shape = 'u32[144,128]{1,0:T(1,128)}', space=vmem, size = 0x12000, scoped, tag = 'internal scratch']
  #allocation2 [shape = 'f32[3,1]{1,0:T(4,128)}', space=vmem, size = 0x800, scoped, tag = 'scratch operand']
  #allocation3 [shape = 'f32[3,1]{1,0:T(4,128)}', space=vmem, size = 0x800, scoped, tag = 'scratch operand']
  %s0 = inlined_call_operand.vmem [shape: bf16[4,16,8192], index: 0, kind: input, shape index: {}]
  %s1 = inlined_call_operand.vmem [shape: bf16[4,3,16], index: 1, kind: input, shape index: {}]
  %s2 = inlined_call_operand.vmem [shape: f32[3,1], index: 2, kind: input, shape index: {}]
  %s3 = inlined_call_operand.vmem [shape: f32[4,3,8192], index: 3, kind: output, shape index: {}]
  %s4 = sld [smem:[#allocation0]]
  $region72: #{generator_forward.11} parent=0
    _
  %s6 = ssub.s32 1, %s4
  %s7 = scalar_select 0, %s6, %s4
  $region1: #{generator_forward.11} parent=0
    #allocation4 [shape = 'u8[262144]{0}', space=vmem, size = 0x40000, scoped, tag = 'input window, operand 0']
    loop: start=0, step=1, limit=10
    $region2: #{generator_forward.11} parent=1 // loop_pre_header
      _
    $region3: #{generator_forward.11} parent=1 // loop_header
      %s9 = sphi 0, %s13
      %p10 = scmp.ge.s32.totalorder %s9, 10
      %s16 = sphi 0, %s28
      %s17 = sphi 0, %s24
      %s18 = sphi 0, %s16
      %s19 = sphi 0, %s17
      %s20 = sphi 0, %s18
      %s21 = sphi 0, %s19
      %s33 = sphi 0, %s35
      %s36 = sphi 0, %s33
      %s37 = sphi 0, %s36
      %s53 = sphi 0, %s37
      %s59 = sphi 0, %s61
      %s62 = sphi 0, %s59
      %s63 = sphi 0, %s62
      %s79 = sphi 0, %s63
      %s83 = sphi 0, %s83
      %s85 = sphi 0, %s83
      %s86 = sphi 0, %s85
      %s100 = sphi 0, %s86
      %s104 = sphi 0, %s104
      %s106 = sphi 0, %s104
      %s107 = sphi 0, %s106
      %s121 = sphi 0, %s107
    $region4: #{generator_forward.11} parent=1 // loop_header_branch
      %12 = sbr.rel (%p10) target = $region8
    $region5: #{generator_forward.11} parent=1 // loop_body
      %s14 = ssub.s32 %s9, 1
      %s15 = ssub.s32 %s9, 2
      %s22 = sadd.s32 1, %s17
      %p23 = scmp.ge.s32.totalorder %s22, 2
      %s24 = scalar_select %p23, 0, %s22
      %s25 = sadd.s32 1, %s16
      %s26 = scalar_select %p23, %s25, %s16
      %p27 = scmp.ge.s32.totalorder %s26, 4
      %s28 = scalar_select %p27, 0, %s26
      %s29 = ssub.s32 %s16, %s28
      %s30 = ssub.s32 %s17, %s24
      %s31 = sor.u32 %s29, %s30
      %p32 = scmp.eq.s32.totalorder %s31, 0
      %s34 = sadd.s32 %s33, 1
      %s35 = scalar_select %p32, %s33, %s34
      %p38 = pneg %p32
      %p39 = scmp.eq.s32.totalorder %s9, 7
      %p40 = por %p38, %p39
      %p41 = scmp.ne.s32.totalorder %s33, %s36
      %p42 = scmp.eq.s32.totalorder %s9, 0
      %p43 = por %p41, %p42
      %p44 = scmp.ne.s32.totalorder %s33, %s36
      %p45 = scmp.eq.s32.totalorder %s14, 7
      %p46 = por %p44, %p45
      %p47 = scmp.ne.s32.totalorder %s36, %s37
      %p48 = scmp.eq.s32.totalorder %s14, 0
      %p49 = por %p47, %p48
      %p50 = scmp.ne.s32.totalorder %s36, %s37
      %p51 = scmp.eq.s32.totalorder %s15, 7
      %p52 = por %p50, %p51
      %p54 = scmp.ne.s32.totalorder %s37, %s53
      %p55 = scmp.eq.s32.totalorder %s15, 0
      %p56 = por %p54, %p55
      %s57 = ssub.s32 %s16, %s28
      %p58 = scmp.eq.s32.totalorder %s57, 0
      %s60 = sadd.s32 %s59, 1
      %s61 = scalar_select %p58, %s59, %s60
      %p64 = pneg %p58
      %p65 = scmp.eq.s32.totalorder %s9, 7
      %p66 = por %p64, %p65
      %p67 = scmp.ne.s32.totalorder %s59, %s62
      %p68 = scmp.eq.s32.totalorder %s9, 0
      %p69 = por %p67, %p68
      %p70 = scmp.ne.s32.totalorder %s59, %s62
      %p71 = scmp.eq.s32.totalorder %s14, 7
      %p72 = por %p70, %p71
      %p73 = scmp.ne.s32.totalorder %s62, %s63
      %p74 = scmp.eq.s32.totalorder %s14, 0
      %p75 = por %p73, %p74
      %p76 = scmp.ne.s32.totalorder %s62, %s63
      %p77 = scmp.eq.s32.totalorder %s15, 7
      %p78 = por %p76, %p77
      %p80 = scmp.ne.s32.totalorder %s63, %s79
      %p81 = scmp.eq.s32.totalorder %s15, 0
      %p82 = por %p80, %p81
      %s84 = sadd.s32 %s83, 1
      %p87 = scmp.eq.s32.totalorder %s9, 7
      %p88 = scmp.ne.s32.totalorder %s83, %s85
      %p89 = scmp.eq.s32.totalorder %s9, 0
      %p90 = por %p88, %p89
      %p91 = scmp.ne.s32.totalorder %s83, %s85
      %p92 = scmp.eq.s32.totalorder %s14, 7
      %p93 = por %p91, %p92
      %p94 = scmp.ne.s32.totalorder %s85, %s86
      %p95 = scmp.eq.s32.totalorder %s14, 0
      %p96 = por %p94, %p95
      %p97 = scmp.ne.s32.totalorder %s85, %s86
      %p98 = scmp.eq.s32.totalorder %s15, 7
      %p99 = por %p97, %p98
      %p101 = scmp.ne.s32.totalorder %s86, %s100
      %p102 = scmp.eq.s32.totalorder %s15, 0
      %p103 = por %p101, %p102
      %s105 = sadd.s32 %s104, 1
      %p108 = scmp.eq.s32.totalorder %s9, 7
      %p109 = scmp.ne.s32.totalorder %s104, %s106
      %p110 = scmp.eq.s32.totalorder %s9, 0
      %p111 = por %p109, %p110
      %p112 = scmp.ne.s32.totalorder %s104, %s106
      %p113 = scmp.eq.s32.totalorder %s14, 7
      %p114 = por %p112, %p113
      %p115 = scmp.ne.s32.totalorder %s106, %s107
      %p116 = scmp.eq.s32.totalorder %s14, 0
      %p117 = por %p115, %p116
      %p118 = scmp.ne.s32.totalorder %s106, %s107
      %p119 = scmp.eq.s32.totalorder %s15, 7
      %p120 = por %p118, %p119
      %p122 = scmp.ne.s32.totalorder %s107, %s121
      %p123 = scmp.eq.s32.totalorder %s15, 0
      %p124 = por %p122, %p123
      %p125 = scmp.le.s32.totalorder 1, %s9
      %p126 = scmp.lt.s32.totalorder %s9, 9
      %p127 = pnand %p125, %p126
      %p128 = pneg %p127
      // Predicated region
      $region9: #{generator_forward.11} parent=5 // pred_check
        _
      $region10: #{generator_forward.11} parent=5 // pred_check_branch
        %130 = sbr.rel (%p127) target = $region12
      $region11: #{generator_forward.11} parent=5 // pred_region
        %s131 = ssub.s32 %s9, 1
        // Predicated region
        $region13: #{generator_forward.11} parent=11 // pred_check
          %p132 = pneg %p96
        $region14: #{generator_forward.11} parent=11 // pred_check_branch
          %134 = sbr.rel (%p132) target = $region16
        $region15: #{generator_forward.11} parent=11 // pred_region
          _
        $region16: #{generator_forward.11} parent=11 // pred_fallthru
          _
      $region12: #{generator_forward.11} parent=5 // pred_fallthru
        _
      %p135 = scmp.lt.s32.totalorder %s9, 8
      // Predicated region
      $region17: #{generator_forward.11} parent=5 // pred_check
        %p136 = pneg %p135
      $region18: #{generator_forward.11} parent=5 // pred_check_branch
        %138 = sbr.rel (%p136) target = $region20
      $region19: #{generator_forward.11} parent=5 // pred_region
        // Predicated region
        $region21: #{generator_forward.11} parent=19 // pred_check
          %p139 = pneg %p43
        $region22: #{generator_forward.11} parent=19 // pred_check_branch
          %141 = sbr.rel (%p139) target = $region24
        $region23: #{generator_forward.11} parent=19 // pred_region
          %s142 = sand.u32 %s33, 1
          %s143 = sand.u32 %s33, 1
          %s144 = smul.addr %s143, 256
          %s145 = scalar_lea.vmem [#allocation4], %s144
          %s146 = smul.u32 32, %s17
          %s147 = smul.addr %s16, 128
          %s148 = sadd.s32 %s146, %s147
          %s149 = smul.addr %s148, 4
          %s150 = scalar_lea.vmem %s0, %s149
          // Predicated region
          $region25: #{generator_forward.11} parent=23 // pred_check
            _
          $region26: #{generator_forward.11} parent=23 // pred_check_branch
            %152 = sbr.rel (0) target = $region28
          $region27: #{generator_forward.11} parent=23 // pred_region
            // Predicated region
            $region29: #{generator_forward.11} parent=27 // pred_check
              _
            $region30: #{generator_forward.11} parent=27 // pred_check_branch
              %154 = sbr.rel (0) target = $region32
            $region31: #{generator_forward.11} parent=27 // pred_region
              loop: start=0, step=1, limit=1
              $region33: #{generator_forward.11} parent=31 // loop_pre_header
                _
              $region34: #{generator_forward.11} parent=31 // loop_header
                %s156 = sphi 0, %s160
                %p157 = scmp.ge.s32.totalorder %s156, 1
                %s161 = sphi %s150, %s150
                %s162 = sphi %s145, %s145
              $region35: #{generator_forward.11} parent=31 // loop_header_branch
                %159 = sbr.rel (%p157) target = $region39
              $region36: #{generator_forward.11} parent=31 // loop_body
                %v163 = vld [vmem:[%s161] sm:$0xff]
                %164 = vst [vmem:[%s162] sm:$0xff] %v163
                %v165 = vld [vmem:[%s161 + $0x8] sm:$0xff]
                %166 = vst [vmem:[%s162 + $0x8] sm:$0xff] %v165
                %v167 = vld [vmem:[%s161 + $0x10] sm:$0xff]
                %168 = vst [vmem:[%s162 + $0x10] sm:$0xff] %v167
                %v169 = vld [vmem:[%s161 + $0x18] sm:$0xff]
                %170 = vst [vmem:[%s162 + $0x18] sm:$0xff] %v169
                %v171 = vld [vmem:[%s161 + $0x20] sm:$0xff]
                %172 = vst [vmem:[%s162 + $0x20] sm:$0xff] %v171
                %v173 = vld [vmem:[%s161 + $0x28] sm:$0xff]
                %174 = vst [vmem:[%s162 + $0x28] sm:$0xff] %v173
                %v175 = vld [vmem:[%s161 + $0x30] sm:$0xff]
                %176 = vst [vmem:[%s162 + $0x30] sm:$0xff] %v175
                %v177 = vld [vmem:[%s161 + $0x38] sm:$0xff]
                %178 = vst [vmem:[%s162 + $0x38] sm:$0xff] %v177
                %v179 = vld [vmem:[%s161 + $0x40] sm:$0xff]
                %180 = vst [vmem:[%s162 + $0x40] sm:$0xff] %v179
                %v181 = vld [vmem:[%s161 + $0x48] sm:$0xff]
                %182 = vst [vmem:[%s162 + $0x48] sm:$0xff] %v181
                %v183 = vld [vmem:[%s161 + $0x50] sm:$0xff]
                %184 = vst [vmem:[%s162 + $0x50] sm:$0xff] %v183
                %v185 = vld [vmem:[%s161 + $0x58] sm:$0xff]
                %186 = vst [vmem:[%s162 + $0x58] sm:$0xff] %v185
                %v187 = vld [vmem:[%s161 + $0x60] sm:$0xff]
                %188 = vst [vmem:[%s162 + $0x60] sm:$0xff] %v187
                %v189 = vld [vmem:[%s161 + $0x68] sm:$0xff]
                %190 = vst [vmem:[%s162 + $0x68] sm:$0xff] %v189
                %v191 = vld [vmem:[%s161 + $0x70] sm:$0xff]
                %192 = vst [vmem:[%s162 + $0x70] sm:$0xff] %v191
                %v193 = vld [vmem:[%s161 + $0x78] sm:$0xff]
                %194 = vst [vmem:[%s162 + $0x78] sm:$0xff] %v193
                %v195 = vld [vmem:[%s161 + $0x100] sm:$0xff]
                %196 = vst [vmem:[%s162 + $0x80] sm:$0xff] %v195
                %v197 = vld [vmem:[%s161 + $0x108] sm:$0xff]
                %198 = vst [vmem:[%s162 + $0x88] sm:$0xff] %v197
                %v199 = vld [vmem:[%s161 + $0x110] sm:$0xff]
                %200 = vst [vmem:[%s162 + $0x90] sm:$0xff] %v199
                %v201 = vld [vmem:[%s161 + $0x118] sm:$0xff]
                %202 = vst [vmem:[%s162 + $0x98] sm:$0xff] %v201
                %v203 = vld [vmem:[%s161 + $0x120] sm:$0xff]
                %204 = vst [vmem:[%s162 + $0xa0] sm:$0xff] %v203
                %v205 = vld [vmem:[%s161 + $0x128] sm:$0xff]
                %206 = vst [vmem:[%s162 + $0xa8] sm:$0xff] %v205
                %v207 = vld [vmem:[%s161 + $0x130] sm:$0xff]
                %208 = vst [vmem:[%s162 + $0xb0] sm:$0xff] %v207
                %v209 = vld [vmem:[%s161 + $0x138] sm:$0xff]
                %210 = vst [vmem:[%s162 + $0xb8] sm:$0xff] %v209
                %v211 = vld [vmem:[%s161 + $0x140] sm:$0xff]
                %212 = vst [vmem:[%s162 + $0xc0] sm:$0xff] %v211
                %v213 = vld [vmem:[%s161 + $0x148] sm:$0xff]
                %214 = vst [vmem:[%s162 + $0xc8] sm:$0xff] %v213
                %v215 = vld [vmem:[%s161 + $0x150] sm:$0xff]
                %216 = vst [vmem:[%s162 + $0xd0] sm:$0xff] %v215
                %v217 = vld [vmem:[%s161 + $0x158] sm:$0xff]
                %218 = vst [vmem:[%s162 + $0xd8] sm:$0xff] %v217
                %v219 = vld [vmem:[%s161 + $0x160] sm:$0xff]
                %220 = vst [vmem:[%s162 + $0xe0] sm:$0xff] %v219
                %v221 = vld [vmem:[%s161 + $0x168] sm:$0xff]
                %222 = vst [vmem:[%s162 + $0xe8] sm:$0xff] %v221
                %v223 = vld [vmem:[%s161 + $0x170] sm:$0xff]
                %224 = vst [vmem:[%s162 + $0xf0] sm:$0xff] %v223
                %v225 = vld [vmem:[%s161 + $0x178] sm:$0xff]
                %226 = vst [vmem:[%s162 + $0xf8] sm:$0xff] %v225
              $region37: #{generator_forward.11} parent=31 // loop_footer
                %s160 = sadd.s32 1, %s156
              $region38: #{generator_forward.11} parent=31 // loop_footer_branch
                %155 = sbr.rel target = $region34
              $region39: #{generator_forward.11} parent=31 // loop_exit
                _
            $region32: #{generator_forward.11} parent=27 // pred_fallthru
              _
            // Predicated region
            $region40: #{generator_forward.11} parent=27 // pred_check
              _
            $region41: #{generator_forward.11} parent=27 // pred_check_branch
              %228 = sbr.rel target = $region43
            $region42: #{generator_forward.11} parent=27 // pred_region
              _
            $region43: #{generator_forward.11} parent=27 // pred_fallthru
              _
          $region28: #{generator_forward.11} parent=23 // pred_fallthru
            _
          %229 = vnop
        $region24: #{generator_forward.11} parent=19 // pred_fallthru
          _
        // Predicated region
        $region44: #{generator_forward.11} parent=19 // pred_check
          %p230 = pneg %p69
        $region45: #{generator_forward.11} parent=19 // pred_check_branch
          %232 = sbr.rel (%p230) target = $region47
        $region46: #{generator_forward.11} parent=19 // pred_region
          %p233 = scmp.lt.s32.totalorder %s16, 3
          %s234 = scalar_select %p233, %s16, 3
          %s235 = smul.addr %s234, 2
          %s236 = scalar_lea.vmem %s1, %s235
        $region47: #{generator_forward.11} parent=19 // pred_fallthru
          _
      $region20: #{generator_forward.11} parent=5 // pred_fallthru
        _
      %p237 = scmp.le.s32.totalorder 1, %s9
      %p238 = scmp.lt.s32.totalorder %s9, 9
      %p239 = pnand %p237, %p238
      %p240 = pneg %p239
      // Predicated region
      $region48: #{generator_forward.11} parent=5 // pred_check
        _
      $region49: #{generator_forward.11} parent=5 // pred_check_branch
        %242 = sbr.rel (%p239) target = $region51
      $region50: #{generator_forward.11} parent=5 // pred_region
        %s243 = ssub.s32 %s9, 1
        %s244 = sand.u32 %s36, 1
        %s245 = sand.u32 %s36, 1
        %s246 = smul.addr %s245, 256
        %s247 = scalar_lea.vmem [#allocation4], %s246
        // Predicated region
        $region52: #{generator_forward.11} parent=50 // pred_check
          %p248 = pneg %p49
        $region53: #{generator_forward.11} parent=50 // pred_check_branch
          %250 = sbr.rel (%p248) target = $region55
        $region54: #{generator_forward.11} parent=50 // pred_region
          _
        $region55: #{generator_forward.11} parent=50 // pred_fallthru
          _
        %s251 = sand.u32 %s36, 1
        %s252 = sand.u32 %s36, 1
        %s253 = smul.addr %s252, 256
        %s254 = scalar_lea.vmem [#allocation4], %s253
        %p255 = pneg %p49
        %p256 = pneg %p46
        %p257 = scmp.lt.s32.totalorder %s18, 3
        %s258 = scalar_select %p257, %s18, 3
        %s259 = smul.addr %s258, 2
        %s260 = scalar_lea.vmem %s1, %s259
        %p261 = pneg %p75
        %p262 = pneg %p72
        %p263 = pneg %p96
        %p264 = pneg %p93
        %p265 = pneg %p117
        %p266 = pneg %p114
        %s267 = smul.u32 32, %s19
        %p268 = scmp.lt.s32.totalorder %s18, 3
        %s269 = scalar_select %p268, %s18, 3
        %s270 = smul.addr %s269, 2
        %s271 = scalar_lea.vmem %s1, %s270
        %v273 = vld [vmem:[%s271] sm:$0x3]
        %v274 = vld [vmem:[%s247] sm:$0xff]
        %v275 = vld [vmem:[%s247 + $0x8] sm:$0xff]
        %v276 = vld [vmem:[%s247 + $0x10] sm:$0xff]
        %v277 = vld [vmem:[%s247 + $0x18] sm:$0xff]
        %v278 = vld [vmem:[%s247 + $0x20] sm:$0xff]
        %v279 = vld [vmem:[%s247 + $0x28] sm:$0xff]
        %v280 = vld [vmem:[%s247 + $0x30] sm:$0xff]
        %v281 = vld [vmem:[%s247 + $0x38] sm:$0xff]
        %v282 = vld [vmem:[%s247 + $0x40] sm:$0xff]
        %v283 = vld [vmem:[%s247 + $0x48] sm:$0xff]
        %v284 = vld [vmem:[%s247 + $0x50] sm:$0xff]
        %v285 = vld [vmem:[%s247 + $0x58] sm:$0xff]
        %v286 = vld [vmem:[%s247 + $0x60] sm:$0xff]
        %v287 = vld [vmem:[%s247 + $0x68] sm:$0xff]
        %v288 = vld [vmem:[%s247 + $0x70] sm:$0xff]
        %v289 = vld [vmem:[%s247 + $0x78] sm:$0xff]
        %v290 = vld [vmem:[%s247 + $0x80] sm:$0xff]
        %v291 = vld [vmem:[%s247 + $0x88] sm:$0xff]
        %v292 = vld [vmem:[%s247 + $0x90] sm:$0xff]
        %v293 = vld [vmem:[%s247 + $0x98] sm:$0xff]
        %v294 = vld [vmem:[%s247 + $0xa0] sm:$0xff]
        %v295 = vld [vmem:[%s247 + $0xa8] sm:$0xff]
        %v296 = vld [vmem:[%s247 + $0xb0] sm:$0xff]
        %v297 = vld [vmem:[%s247 + $0xb8] sm:$0xff]
        %v298 = vld [vmem:[%s247 + $0xc0] sm:$0xff]
        %v299 = vld [vmem:[%s247 + $0xc8] sm:$0xff]
        %v300 = vld [vmem:[%s247 + $0xd0] sm:$0xff]
        %v301 = vld [vmem:[%s247 + $0xd8] sm:$0xff]
        %v302 = vld [vmem:[%s247 + $0xe0] sm:$0xff]
        %v303 = vld [vmem:[%s247 + $0xe8] sm:$0xff]
        %v304 = vld [vmem:[%s247 + $0xf0] sm:$0xff]
        %v305 = vld [vmem:[%s247 + $0xf8] sm:$0xff]
        %v338 = vunpack.c.l.b16 %v274
        %v339 = vunpack.c.h.b16 %v274
        %v340 = vunpack.c.l.b16 %v275
        %v341 = vunpack.c.h.b16 %v275
        %v342 = vunpack.c.l.b16 %v276
        %v343 = vunpack.c.h.b16 %v276
        %v344 = vunpack.c.l.b16 %v277
        %v345 = vunpack.c.h.b16 %v277
        %v346 = vunpack.c.l.b16 %v278
        %v347 = vunpack.c.h.b16 %v278
        %v348 = vunpack.c.l.b16 %v279
        %v349 = vunpack.c.h.b16 %v279
        %v350 = vunpack.c.l.b16 %v280
        %v351 = vunpack.c.h.b16 %v280
        %v352 = vunpack.c.l.b16 %v281
        %v353 = vunpack.c.h.b16 %v281
        %v354 = vunpack.c.l.b16 %v282
        %v355 = vunpack.c.h.b16 %v282
        %v356 = vunpack.c.l.b16 %v283
        %v357 = vunpack.c.h.b16 %v283
        %v358 = vunpack.c.l.b16 %v284
        %v359 = vunpack.c.h.b16 %v284
        %v360 = vunpack.c.l.b16 %v285
        %v361 = vunpack.c.h.b16 %v285
        %v362 = vunpack.c.l.b16 %v286
        %v363 = vunpack.c.h.b16 %v286
        %v364 = vunpack.c.l.b16 %v287
        %v365 = vunpack.c.h.b16 %v287
        %v366 = vunpack.c.l.b16 %v288
        %v367 = vunpack.c.h.b16 %v288
        %v368 = vunpack.c.l.b16 %v289
        %v369 = vunpack.c.h.b16 %v289
        %v370 = vunpack.c.l.b16 %v290
        %v371 = vunpack.c.h.b16 %v290
        %v372 = vunpack.c.l.b16 %v291
        %v373 = vunpack.c.h.b16 %v291
        %v374 = vunpack.c.l.b16 %v292
        %v375 = vunpack.c.h.b16 %v292
        %v376 = vunpack.c.l.b16 %v293
        %v377 = vunpack.c.h.b16 %v293
        %v378 = vunpack.c.l.b16 %v294
        %v379 = vunpack.c.h.b16 %v294
        %v380 = vunpack.c.l.b16 %v295
        %v381 = vunpack.c.h.b16 %v295
        %v382 = vunpack.c.l.b16 %v296
        %v383 = vunpack.c.h.b16 %v296
        %v384 = vunpack.c.l.b16 %v297
        %v385 = vunpack.c.h.b16 %v297
        %v386 = vunpack.c.l.b16 %v298
        %v387 = vunpack.c.h.b16 %v298
        %v388 = vunpack.c.l.b16 %v299
        %v389 = vunpack.c.h.b16 %v299
        %v390 = vunpack.c.l.b16 %v300
        %v391 = vunpack.c.h.b16 %v300
        %v392 = vunpack.c.l.b16 %v301
        %v393 = vunpack.c.h.b16 %v301
        %v394 = vunpack.c.l.b16 %v302
        %v395 = vunpack.c.h.b16 %v302
        %v396 = vunpack.c.l.b16 %v303
        %v397 = vunpack.c.h.b16 %v303
        %v398 = vunpack.c.l.b16 %v304
        %v399 = vunpack.c.h.b16 %v304
        %v400 = vunpack.c.l.b16 %v305
        %v401 = vunpack.c.h.b16 %v305
        %v402 = vpack.c.b16 %v370, %v338
        %v403 = vpack.c.b16 %v371, %v339
        %v404 = vpack.c.b16 %v372, %v340
        %v405 = vpack.c.b16 %v373, %v341
        %v406 = vpack.c.b16 %v374, %v342
        %v407 = vpack.c.b16 %v375, %v343
        %v408 = vpack.c.b16 %v376, %v344
        %v409 = vpack.c.b16 %v377, %v345
        %v410 = vpack.c.b16 %v378, %v346
        %v411 = vpack.c.b16 %v379, %v347
        %v412 = vpack.c.b16 %v380, %v348
        %v413 = vpack.c.b16 %v381, %v349
        %v414 = vpack.c.b16 %v382, %v350
        %v415 = vpack.c.b16 %v383, %v351
        %v416 = vpack.c.b16 %v384, %v352
        %v417 = vpack.c.b16 %v385, %v353
        %v418 = vpack.c.b16 %v386, %v354
        %v419 = vpack.c.b16 %v387, %v355
        %v420 = vpack.c.b16 %v388, %v356
        %v421 = vpack.c.b16 %v389, %v357
        %v422 = vpack.c.b16 %v390, %v358
        %v423 = vpack.c.b16 %v391, %v359
        %v424 = vpack.c.b16 %v392, %v360
        %v425 = vpack.c.b16 %v393, %v361
        %v426 = vpack.c.b16 %v394, %v362
        %v427 = vpack.c.b16 %v395, %v363
        %v428 = vpack.c.b16 %v396, %v364
        %v429 = vpack.c.b16 %v397, %v365
        %v430 = vpack.c.b16 %v398, %v366
        %v431 = vpack.c.b16 %v399, %v367
        %v432 = vpack.c.b16 %v400, %v368
        %v433 = vpack.c.b16 %v401, %v369
        %vm466 = vcmask 130048
        %v468 = vsel %vm466, %v273, 0
        %470 = vmatprep.subr.bf16.mxu0 0
        %471 = vmatpush1.bf16.msra.mxu0 0
        %472 = vmatprep.subr.bf16.mxu0 0
        %473 = vmatpush1.bf16.msra.mxu0 0
        %474 = vmatprep.subr.bf16.mxu0 0
        %475 = vmatpush1.bf16.msra.mxu0 0
        %476 = vmatprep.subr.bf16.mxu0 0
        %477 = vmatpush1.bf16.msra.mxu0 0
        %478 = vmatprep.subr.bf16.mxu0 0
        %479 = vmatpush1.bf16.msra.mxu0 0
        %480 = vmatprep.subr.bf16.mxu0 0
        %481 = vmatpush1.bf16.msra.mxu0 0
        %482 = vmatprep.subr.bf16.mxu0 0
        %483 = vmatpush1.bf16.msra.mxu0 0
        %484 = vmatprep.subr.bf16.mxu0 %v403
        %485 = vmatpush1.bf16.msra.mxu0 %v402
        %486 = vmatprep.subr.bf16.mxu0 0
        %487 = vmatpush2.bf16.msra.mxu0 0
        %488 = vmatprep.subr.bf16.mxu0 0
        %489 = vmatpush2.bf16.msra.mxu0 0
        %490 = vmatprep.subr.bf16.mxu0 0
        %491 = vmatpush2.bf16.msra.mxu0 0
        %492 = vmatprep.subr.bf16.mxu0 0
        %493 = vmatpush2.bf16.msra.mxu0 0
        %494 = vmatprep.subr.bf16.mxu0 0
        %495 = vmatpush2.bf16.msra.mxu0 0
        %496 = vmatprep.subr.bf16.mxu0 0
        %497 = vmatpush2.bf16.msra.mxu0 0
        %498 = vmatprep.subr.bf16.mxu0 0
        %499 = vmatpush2.bf16.msra.mxu0 0
        %500 = vmatprep.subr.bf16.mxu0 0
        %501 = vmatpush2.bf16.msra.mxu0 0
        %502 = vmatprep.mubr.bf16.mxu0 0
        %503 = vmatmul.mubr.bf16.gmra.mxu0 %v468
        %v504 = vpop.f32.mrf.mxu0
        %v505 = vadd.f32 0.0, %v504
        %v506 = vpop.f32.mrf.mxu0
        %v507 = vadd.f32 0.0, %v506
        %v508 = vpop.f32.mrf.mxu0
        %v509 = vpop.f32.mrf.mxu0
        %510 = vdwg.mxu0
        %511 = vmatprep.subr.bf16.mxu0 0
        %512 = vmatpush1.bf16.msra.mxu0 0
        %513 = vmatprep.subr.bf16.mxu0 0
        %514 = vmatpush1.bf16.msra.mxu0 0
        %515 = vmatprep.subr.bf16.mxu0 0
        %516 = vmatpush1.bf16.msra.mxu0 0
        %517 = vmatprep.subr.bf16.mxu0 0
        %518 = vmatpush1.bf16.msra.mxu0 0
        %519 = vmatprep.subr.bf16.mxu0 0
        %520 = vmatpush1.bf16.msra.mxu0 0
        %521 = vmatprep.subr.bf16.mxu0 0
        %522 = vmatpush1.bf16.msra.mxu0 0
        %523 = vmatprep.subr.bf16.mxu0 0
        %524 = vmatpush1.bf16.msra.mxu0 0
        %525 = vmatprep.subr.bf16.mxu0 %v405
        %526 = vmatpush1.bf16.msra.mxu0 %v404
        %527 = vmatprep.subr.bf16.mxu0 0
        %528 = vmatpush2.bf16.msra.mxu0 0
        %529 = vmatprep.subr.bf16.mxu0 0
        %530 = vmatpush2.bf16.msra.mxu0 0
        %531 = vmatprep.subr.bf16.mxu0 0
        %532 = vmatpush2.bf16.msra.mxu0 0
        %533 = vmatprep.subr.bf16.mxu0 0
        %534 = vmatpush2.bf16.msra.mxu0 0
        %535 = vmatprep.subr.bf16.mxu0 0
        %536 = vmatpush2.bf16.msra.mxu0 0
        %537 = vmatprep.subr.bf16.mxu0 0
        %538 = vmatpush2.bf16.msra.mxu0 0
        %539 = vmatprep.subr.bf16.mxu0 0
        %540 = vmatpush2.bf16.msra.mxu0 0
        %541 = vmatprep.subr.bf16.mxu0 0
        %542 = vmatpush2.bf16.msra.mxu0 0
        %543 = vmatprep.mubr.bf16.mxu0 0
        %544 = vmatmul.mubr.bf16.gmra.mxu0 %v468
        %v545 = vpop.f32.mrf.mxu0
        %v546 = vadd.f32 0.0, %v545
        %v547 = vpop.f32.mrf.mxu0
        %v548 = vadd.f32 0.0, %v547
        %v549 = vpop.f32.mrf.mxu0
        %v550 = vpop.f32.mrf.mxu0
        %551 = vdwg.mxu0
        %552 = vmatprep.subr.bf16.mxu0 0
        %553 = vmatpush1.bf16.msra.mxu0 0
        %554 = vmatprep.subr.bf16.mxu0 0
        %555 = vmatpush1.bf16.msra.mxu0 0
        %556 = vmatprep.subr.bf16.mxu0 0
        %557 = vmatpush1.bf16.msra.mxu0 0
        %558 = vmatprep.subr.bf16.mxu0 0
        %559 = vmatpush1.bf16.msra.mxu0 0
        %560 = vmatprep.subr.bf16.mxu0 0
        %561 = vmatpush1.bf16.msra.mxu0 0
        %562 = vmatprep.subr.bf16.mxu0 0
        %563 = vmatpush1.bf16.msra.mxu0 0
        %564 = vmatprep.subr.bf16.mxu0 0
        %565 = vmatpush1.bf16.msra.mxu0 0
        %566 = vmatprep.subr.bf16.mxu0 %v407
        %567 = vmatpush1.bf16.msra.mxu0 %v406
        %568 = vmatprep.subr.bf16.mxu0 0
        %569 = vmatpush2.bf16.msra.mxu0 0
        %570 = vmatprep.subr.bf16.mxu0 0
        %571 = vmatpush2.bf16.msra.mxu0 0
        %572 = vmatprep.subr.bf16.mxu0 0
        %573 = vmatpush2.bf16.msra.mxu0 0
        %574 = vmatprep.subr.bf16.mxu0 0
        %575 = vmatpush2.bf16.msra.mxu0 0
        %576 = vmatprep.subr.bf16.mxu0 0
        %577 = vmatpush2.bf16.msra.mxu0 0
        %578 = vmatprep.subr.bf16.mxu0 0
        %579 = vmatpush2.bf16.msra.mxu0 0
        %580 = vmatprep.subr.bf16.mxu0 0
        %581 = vmatpush2.bf16.msra.mxu0 0
        %582 = vmatprep.subr.bf16.mxu0 0
        %583 = vmatpush2.bf16.msra.mxu0 0
        %584 = vmatprep.mubr.bf16.mxu0 0
        %585 = vmatmul.mubr.bf16.gmra.mxu0 %v468
        %v586 = vpop.f32.mrf.mxu0
        %v587 = vadd.f32 0.0, %v586
        %v588 = vpop.f32.mrf.mxu0
        %v589 = vadd.f32 0.0, %v588
        %v590 = vpop.f32.mrf.mxu0
        %v591 = vpop.f32.mrf.mxu0
        %592 = vdwg.mxu0
        %593 = vmatprep.subr.bf16.mxu0 0
        %594 = vmatpush1.bf16.msra.mxu0 0
        %595 = vmatprep.subr.bf16.mxu0 0
        %596 = vmatpush1.bf16.msra.mxu0 0
        %597 = vmatprep.subr.bf16.mxu0 0
        %598 = vmatpush1.bf16.msra.mxu0 0
        %599 = vmatprep.subr.bf16.mxu0 0
        %600 = vmatpush1.bf16.msra.mxu0 0
        %601 = vmatprep.subr.bf16.mxu0 0
        %602 = vmatpush1.bf16.msra.mxu0 0
        %603 = vmatprep.subr.bf16.mxu0 0
        %604 = vmatpush1.bf16.msra.mxu0 0
        %605 = vmatprep.subr.bf16.mxu0 0
        %606 = vmatpush1.bf16.msra.mxu0 0
        %607 = vmatprep.subr.bf16.mxu0 %v409
        %608 = vmatpush1.bf16.msra.mxu0 %v408
        %609 = vmatprep.subr.bf16.mxu0 0
        %610 = vmatpush2.bf16.msra.mxu0 0
        %611 = vmatprep.subr.bf16.mxu0 0
        %612 = vmatpush2.bf16.msra.mxu0 0
        %613 = vmatprep.subr.bf16.mxu0 0
        %614 = vmatpush2.bf16.msra.mxu0 0
        %615 = vmatprep.subr.bf16.mxu0 0
        %616 = vmatpush2.bf16.msra.mxu0 0
        %617 = vmatprep.subr.bf16.mxu0 0
        %618 = vmatpush2.bf16.msra.mxu0 0
        %619 = vmatprep.subr.bf16.mxu0 0
        %620 = vmatpush2.bf16.msra.mxu0 0
        %621 = vmatprep.subr.bf16.mxu0 0
        %622 = vmatpush2.bf16.msra.mxu0 0
        %623 = vmatprep.subr.bf16.mxu0 0
        %624 = vmatpush2.bf16.msra.mxu0 0
        %625 = vmatprep.mubr.bf16.mxu0 0
        %626 = vmatmul.mubr.bf16.gmra.mxu0 %v468
        %v627 = vpop.f32.mrf.mxu0
        %v628 = vadd.f32 0.0, %v627
        %v629 = vpop.f32.mrf.mxu0
        %v630 = vadd.f32 0.0, %v629
        %v631 = vpop.f32.mrf.mxu0
        %v632 = vpop.f32.mrf.mxu0
        %633 = vdwg.mxu0
        %634 = vmatprep.subr.bf16.mxu0 0
        %635 = vmatpush1.bf16.msra.mxu0 0
        %636 = vmatprep.subr.bf16.mxu0 0
        %637 = vmatpush1.bf16.msra.mxu0 0
        %638 = vmatprep.subr.bf16.mxu0 0
        %639 = vmatpush1.bf16.msra.mxu0 0
        %640 = vmatprep.subr.bf16.mxu0 0
        %641 = vmatpush1.bf16.msra.mxu0 0
        %642 = vmatprep.subr.bf16.mxu0 0
        %643 = vmatpush1.bf16.msra.mxu0 0
        %644 = vmatprep.subr.bf16.mxu0 0
        %645 = vmatpush1.bf16.msra.mxu0 0
        %646 = vmatprep.subr.bf16.mxu0 0
        %647 = vmatpush1.bf16.msra.mxu0 0
        %648 = vmatprep.subr.bf16.mxu0 %v411
        %649 = vmatpush1.bf16.msra.mxu0 %v410
        %650 = vmatprep.subr.bf16.mxu0 0
        %651 = vmatpush2.bf16.msra.mxu0 0
        %652 = vmatprep.subr.bf16.mxu0 0
        %653 = vmatpush2.bf16.msra.mxu0 0
        %654 = vmatprep.subr.bf16.mxu0 0
        %655 = vmatpush2.bf16.msra.mxu0 0
        %656 = vmatprep.subr.bf16.mxu0 0
        %657 = vmatpush2.bf16.msra.mxu0 0
        %658 = vmatprep.subr.bf16.mxu0 0
        %659 = vmatpush2.bf16.msra.mxu0 0
        %660 = vmatprep.subr.bf16.mxu0 0
        %661 = vmatpush2.bf16.msra.mxu0 0
        %662 = vmatprep.subr.bf16.mxu0 0
        %663 = vmatpush2.bf16.msra.mxu0 0
        %664 = vmatprep.subr.bf16.mxu0 0
        %665 = vmatpush2.bf16.msra.mxu0 0
        %666 = vmatprep.mubr.bf16.mxu0 0
        %667 = vmatmul.mubr.bf16.gmra.mxu0 %v468
        %v668 = vpop.f32.mrf.mxu0
        %v669 = vadd.f32 0.0, %v668
        %v670 = vpop.f32.mrf.mxu0
        %v671 = vadd.f32 0.0, %v670
        %v672 = vpop.f32.mrf.mxu0
        %v673 = vpop.f32.mrf.mxu0
        %674 = vdwg.mxu0
        %675 = vmatprep.subr.bf16.mxu0 0
        %676 = vmatpush1.bf16.msra.mxu0 0
        %677 = vmatprep.subr.bf16.mxu0 0
        %678 = vmatpush1.bf16.msra.mxu0 0
        %679 = vmatprep.subr.bf16.mxu0 0
        %680 = vmatpush1.bf16.msra.mxu0 0
        %681 = vmatprep.subr.bf16.mxu0 0
        %682 = vmatpush1.bf16.msra.mxu0 0
        %683 = vmatprep.subr.bf16.mxu0 0
        %684 = vmatpush1.bf16.msra.mxu0 0
        %685 = vmatprep.subr.bf16.mxu0 0
        %686 = vmatpush1.bf16.msra.mxu0 0
        %687 = vmatprep.subr.bf16.mxu0 0
        %688 = vmatpush1.bf16.msra.mxu0 0
        %689 = vmatprep.subr.bf16.mxu0 %v413
        %690 = vmatpush1.bf16.msra.mxu0 %v412
        %691 = vmatprep.subr.bf16.mxu0 0
        %692 = vmatpush2.bf16.msra.mxu0 0
        %693 = vmatprep.subr.bf16.mxu0 0
        %694 = vmatpush2.bf16.msra.mxu0 0
        %695 = vmatprep.subr.bf16.mxu0 0
        %696 = vmatpush2.bf16.msra.mxu0 0
        %697 = vmatprep.subr.bf16.mxu0 0
        %698 = vmatpush2.bf16.msra.mxu0 0
        %699 = vmatprep.subr.bf16.mxu0 0
        %700 = vmatpush2.bf16.msra.mxu0 0
        %701 = vmatprep.subr.bf16.mxu0 0
        %702 = vmatpush2.bf16.msra.mxu0 0
        %703 = vmatprep.subr.bf16.mxu0 0
        %704 = vmatpush2.bf16.msra.mxu0 0
        %705 = vmatprep.subr.bf16.mxu0 0
        %706 = vmatpush2.bf16.msra.mxu0 0
        %707 = vmatprep.mubr.bf16.mxu0 0
        %708 = vmatmul.mubr.bf16.gmra.mxu0 %v468
        %v709 = vpop.f32.mrf.mxu0
        %v710 = vadd.f32 0.0, %v709
        %v711 = vpop.f32.mrf.mxu0
        %v712 = vadd.f32 0.0, %v711
        %v713 = vpop.f32.mrf.mxu0
        %v714 = vpop.f32.mrf.mxu0
        %715 = vdwg.mxu0
        %716 = vmatprep.subr.bf16.mxu0 0
        %717 = vmatpush1.bf16.msra.mxu0 0
        %718 = vmatprep.subr.bf16.mxu0 0
        %719 = vmatpush1.bf16.msra.mxu0 0
        %720 = vmatprep.subr.bf16.mxu0 0
        %721 = vmatpush1.bf16.msra.mxu0 0
        %722 = vmatprep.subr.bf16.mxu0 0
        %723 = vmatpush1.bf16.msra.mxu0 0
        %724 = vmatprep.subr.bf16.mxu0 0
        %725 = vmatpush1.bf16.msra.mxu0 0
        %726 = vmatprep.subr.bf16.mxu0 0
        %727 = vmatpush1.bf16.msra.mxu0 0
        %728 = vmatprep.subr.bf16.mxu0 0
        %729 = vmatpush1.bf16.msra.mxu0 0
        %730 = vmatprep.subr.bf16.mxu0 %v415
        %731 = vmatpush1.bf16.msra.mxu0 %v414
        %732 = vmatprep.subr.bf16.mxu0 0
        %733 = vmatpush2.bf16.msra.mxu0 0
        %734 = vmatprep.subr.bf16.mxu0 0
        %735 = vmatpush2.bf16.msra.mxu0 0
        %736 = vmatprep.subr.bf16.mxu0 0
        %737 = vmatpush2.bf16.msra.mxu0 0
        %738 = vmatprep.subr.bf16.mxu0 0
        %739 = vmatpush2.bf16.msra.mxu0 0
        %740 = vmatprep.subr.bf16.mxu0 0
        %741 = vmatpush2.bf16.msra.mxu0 0
        %742 = vmatprep.subr.bf16.mxu0 0
        %743 = vmatpush2.bf16.msra.mxu0 0
        %744 = vmatprep.subr.bf16.mxu0 0
        %745 = vmatpush2.bf16.msra.mxu0 0
        %746 = vmatprep.subr.bf16.mxu0 0
        %747 = vmatpush2.bf16.msra.mxu0 0
        %748 = vmatprep.mubr.bf16.mxu0 0
        %749 = vmatmul.mubr.bf16.gmra.mxu0 %v468
        %v750 = vpop.f32.mrf.mxu0
        %v751 = vadd.f32 0.0, %v750
        %v752 = vpop.f32.mrf.mxu0
        %v753 = vadd.f32 0.0, %v752
        %v754 = vpop.f32.mrf.mxu0
        %v755 = vpop.f32.mrf.mxu0
        %756 = vdwg.mxu0
        %757 = vmatprep.subr.bf16.mxu0 0
        %758 = vmatpush1.bf16.msra.mxu0 0
        %759 = vmatprep.subr.bf16.mxu0 0
        %760 = vmatpush1.bf16.msra.mxu0 0
        %761 = vmatprep.subr.bf16.mxu0 0
        %762 = vmatpush1.bf16.msra.mxu0 0
        %763 = vmatprep.subr.bf16.mxu0 0
        %764 = vmatpush1.bf16.msra.mxu0 0
        %765 = vmatprep.subr.bf16.mxu0 0
        %766 = vmatpush1.bf16.msra.mxu0 0
        %767 = vmatprep.subr.bf16.mxu0 0
        %768 = vmatpush1.bf16.msra.mxu0 0
        %769 = vmatprep.subr.bf16.mxu0 0
        %770 = vmatpush1.bf16.msra.mxu0 0
        %771 = vmatprep.subr.bf16.mxu0 %v417
        %772 = vmatpush1.bf16.msra.mxu0 %v416
        %773 = vmatprep.subr.bf16.mxu0 0
        %774 = vmatpush2.bf16.msra.mxu0 0
        %775 = vmatprep.subr.bf16.mxu0 0
        %776 = vmatpush2.bf16.msra.mxu0 0
        %777 = vmatprep.subr.bf16.mxu0 0
        %778 = vmatpush2.bf16.msra.mxu0 0
        %779 = vmatprep.subr.bf16.mxu0 0
        %780 = vmatpush2.bf16.msra.mxu0 0
        %781 = vmatprep.subr.bf16.mxu0 0
        %782 = vmatpush2.bf16.msra.mxu0 0
        %783 = vmatprep.subr.bf16.mxu0 0
        %784 = vmatpush2.bf16.msra.mxu0 0
        %785 = vmatprep.subr.bf16.mxu0 0
        %786 = vmatpush2.bf16.msra.mxu0 0
        %787 = vmatprep.subr.bf16.mxu0 0
        %788 = vmatpush2.bf16.msra.mxu0 0
        %789 = vmatprep.mubr.bf16.mxu0 0
        %790 = vmatmul.mubr.bf16.gmra.mxu0 %v468
        %v791 = vpop.f32.mrf.mxu0
        %v792 = vadd.f32 0.0, %v791
        %v793 = vpop.f32.mrf.mxu0
        %v794 = vadd.f32 0.0, %v793
        %v795 = vpop.f32.mrf.mxu0
        %v796 = vpop.f32.mrf.mxu0
        %797 = vdwg.mxu0
        %798 = vmatprep.subr.bf16.mxu0 0
        %799 = vmatpush1.bf16.msra.mxu0 0
        %800 = vmatprep.subr.bf16.mxu0 0
        %801 = vmatpush1.bf16.msra.mxu0 0
        %802 = vmatprep.subr.bf16.mxu0 0
        %803 = vmatpush1.bf16.msra.mxu0 0
        %804 = vmatprep.subr.bf16.mxu0 0
        %805 = vmatpush1.bf16.msra.mxu0 0
        %806 = vmatprep.subr.bf16.mxu0 0
        %807 = vmatpush1.bf16.msra.mxu0 0
        %808 = vmatprep.subr.bf16.mxu0 0
        %809 = vmatpush1.bf16.msra.mxu0 0
        %810 = vmatprep.subr.bf16.mxu0 0
        %811 = vmatpush1.bf16.msra.mxu0 0
        %812 = vmatprep.subr.bf16.mxu0 %v419
        %813 = vmatpush1.bf16.msra.mxu0 %v418
        %814 = vmatprep.subr.bf16.mxu0 0
        %815 = vmatpush2.bf16.msra.mxu0 0
        %816 = vmatprep.subr.bf16.mxu0 0
        %817 = vmatpush2.bf16.msra.mxu0 0
        %818 = vmatprep.subr.bf16.mxu0 0
        %819 = vmatpush2.bf16.msra.mxu0 0
        %820 = vmatprep.subr.bf16.mxu0 0
        %821 = vmatpush2.bf16.msra.mxu0 0
        %822 = vmatprep.subr.bf16.mxu0 0
        %823 = vmatpush2.bf16.msra.mxu0 0
        %824 = vmatprep.subr.bf16.mxu0 0
        %825 = vmatpush2.bf16.msra.mxu0 0
        %826 = vmatprep.subr.bf16.mxu0 0
        %827 = vmatpush2.bf16.msra.mxu0 0
        %828 = vmatprep.subr.bf16.mxu0 0
        %829 = vmatpush2.bf16.msra.mxu0 0
        %830 = vmatprep.mubr.bf16.mxu0 0
        %831 = vmatmul.mubr.bf16.gmra.mxu0 %v468
        %v832 = vpop.f32.mrf.mxu0
        %v833 = vadd.f32 0.0, %v832
        %v834 = vpop.f32.mrf.mxu0
        %v835 = vadd.f32 0.0, %v834
        %v836 = vpop.f32.mrf.mxu0
        %v837 = vpop.f32.mrf.mxu0
        %838 = vdwg.mxu0
        %839 = vmatprep.subr.bf16.mxu0 0
        %840 = vmatpush1.bf16.msra.mxu0 0
        %841 = vmatprep.subr.bf16.mxu0 0
        %842 = vmatpush1.bf16.msra.mxu0 0
        %843 = vmatprep.subr.bf16.mxu0 0
        %844 = vmatpush1.bf16.msra.mxu0 0
        %845 = vmatprep.subr.bf16.mxu0 0
        %846 = vmatpush1.bf16.msra.mxu0 0
        %847 = vmatprep.subr.bf16.mxu0 0
        %848 = vmatpush1.bf16.msra.mxu0 0
        %849 = vmatprep.subr.bf16.mxu0 0
        %850 = vmatpush1.bf16.msra.mxu0 0
        %851 = vmatprep.subr.bf16.mxu0 0
        %852 = vmatpush1.bf16.msra.mxu0 0
        %853 = vmatprep.subr.bf16.mxu0 %v421
        %854 = vmatpush1.bf16.msra.mxu0 %v420
        %855 = vmatprep.subr.bf16.mxu0 0
        %856 = vmatpush2.bf16.msra.mxu0 0
        %857 = vmatprep.subr.bf16.mxu0 0
        %858 = vmatpush2.bf16.msra.mxu0 0
        %859 = vmatprep.subr.bf16.mxu0 0
        %860 = vmatpush2.bf16.msra.mxu0 0
        %861 = vmatprep.subr.bf16.mxu0 0
        %862 = vmatpush2.bf16.msra.mxu0 0
        %863 = vmatprep.subr.bf16.mxu0 0
        %864 = vmatpush2.bf16.msra.mxu0 0
        %865 = vmatprep.subr.bf16.mxu0 0
        %866 = vmatpush2.bf16.msra.mxu0 0
        %867 = vmatprep.subr.bf16.mxu0 0
        %868 = vmatpush2.bf16.msra.mxu0 0
        %869 = vmatprep.subr.bf16.mxu0 0
        %870 = vmatpush2.bf16.msra.mxu0 0
        %871 = vmatprep.mubr.bf16.mxu0 0
        %872 = vmatmul.mubr.bf16.gmra.mxu0 %v468
        %v873 = vpop.f32.mrf.mxu0
        %v874 = vadd.f32 0.0, %v873
        %v875 = vpop.f32.mrf.mxu0
        %v876 = vadd.f32 0.0, %v875
        %v877 = vpop.f32.mrf.mxu0
        %v878 = vpop.f32.mrf.mxu0
        %879 = vdwg.mxu0
        %880 = vmatprep.subr.bf16.mxu0 0
        %881 = vmatpush1.bf16.msra.mxu0 0
        %882 = vmatprep.subr.bf16.mxu0 0
        %883 = vmatpush1.bf16.msra.mxu0 0
        %884 = vmatprep.subr.bf16.mxu0 0
        %885 = vmatpush1.bf16.msra.mxu0 0
        %886 = vmatprep.subr.bf16.mxu0 0
        %887 = vmatpush1.bf16.msra.mxu0 0
        %888 = vmatprep.subr.bf16.mxu0 0
        %889 = vmatpush1.bf16.msra.mxu0 0
        %890 = vmatprep.subr.bf16.mxu0 0
        %891 = vmatpush1.bf16.msra.mxu0 0
        %892 = vmatprep.subr.bf16.mxu0 0
        %893 = vmatpush1.bf16.msra.mxu0 0
        %894 = vmatprep.subr.bf16.mxu0 %v423
        %895 = vmatpush1.bf16.msra.mxu0 %v422
        %896 = vmatprep.subr.bf16.mxu0 0
        %897 = vmatpush2.bf16.msra.mxu0 0
        %898 = vmatprep.subr.bf16.mxu0 0
        %899 = vmatpush2.bf16.msra.mxu0 0
        %900 = vmatprep.subr.bf16.mxu0 0
        %901 = vmatpush2.bf16.msra.mxu0 0
        %902 = vmatprep.subr.bf16.mxu0 0
        %903 = vmatpush2.bf16.msra.mxu0 0
        %904 = vmatprep.subr.bf16.mxu0 0
        %905 = vmatpush2.bf16.msra.mxu0 0
        %906 = vmatprep.subr.bf16.mxu0 0
        %907 = vmatpush2.bf16.msra.mxu0 0
        %908 = vmatprep.subr.bf16.mxu0 0
        %909 = vmatpush2.bf16.msra.mxu0 0
        %910 = vmatprep.subr.bf16.mxu0 0
        %911 = vmatpush2.bf16.msra.mxu0 0
        %912 = vmatprep.mubr.bf16.mxu0 0
        %913 = vmatmul.mubr.bf16.gmra.mxu0 %v468
        %v914 = vpop.f32.mrf.mxu0
        %v915 = vadd.f32 0.0, %v914
        %v916 = vpop.f32.mrf.mxu0
        %v917 = vadd.f32 0.0, %v916
        %v918 = vpop.f32.mrf.mxu0
        %v919 = vpop.f32.mrf.mxu0
        %920 = vdwg.mxu0
        %921 = vmatprep.subr.bf16.mxu0 0
        %922 = vmatpush1.bf16.msra.mxu0 0
        %923 = vmatprep.subr.bf16.mxu0 0
        %924 = vmatpush1.bf16.msra.mxu0 0
        %925 = vmatprep.subr.bf16.mxu0 0
        %926 = vmatpush1.bf16.msra.mxu0 0
        %927 = vmatprep.subr.bf16.mxu0 0
        %928 = vmatpush1.bf16.msra.mxu0 0
        %929 = vmatprep.subr.bf16.mxu0 0
        %930 = vmatpush1.bf16.msra.mxu0 0
        %931 = vmatprep.subr.bf16.mxu0 0
        %932 = vmatpush1.bf16.msra.mxu0 0
        %933 = vmatprep.subr.bf16.mxu0 0
        %934 = vmatpush1.bf16.msra.mxu0 0
        %935 = vmatprep.subr.bf16.mxu0 %v425
        %936 = vmatpush1.bf16.msra.mxu0 %v424
        %937 = vmatprep.subr.bf16.mxu0 0
        %938 = vmatpush2.bf16.msra.mxu0 0
        %939 = vmatprep.subr.bf16.mxu0 0
        %940 = vmatpush2.bf16.msra.mxu0 0
        %941 = vmatprep.subr.bf16.mxu0 0
        %942 = vmatpush2.bf16.msra.mxu0 0
        %943 = vmatprep.subr.bf16.mxu0 0
        %944 = vmatpush2.bf16.msra.mxu0 0
        %945 = vmatprep.subr.bf16.mxu0 0
        %946 = vmatpush2.bf16.msra.mxu0 0
        %947 = vmatprep.subr.bf16.mxu0 0
        %948 = vmatpush2.bf16.msra.mxu0 0
        %949 = vmatprep.subr.bf16.mxu0 0
        %950 = vmatpush2.bf16.msra.mxu0 0
        %951 = vmatprep.subr.bf16.mxu0 0
        %952 = vmatpush2.bf16.msra.mxu0 0
        %953 = vmatprep.mubr.bf16.mxu0 0
        %954 = vmatmul.mubr.bf16.gmra.mxu0 %v468
        %v955 = vpop.f32.mrf.mxu0
        %v956 = vadd.f32 0.0, %v955
        %v957 = vpop.f32.mrf.mxu0
        %v958 = vadd.f32 0.0, %v957
        %v959 = vpop.f32.mrf.mxu0
        %v960 = vpop.f32.mrf.mxu0
        %961 = vdwg.mxu0
        %962 = vmatprep.subr.bf16.mxu0 0
        %963 = vmatpush1.bf16.msra.mxu0 0
        %964 = vmatprep.subr.bf16.mxu0 0
        %965 = vmatpush1.bf16.msra.mxu0 0
        %966 = vmatprep.subr.bf16.mxu0 0
        %967 = vmatpush1.bf16.msra.mxu0 0
        %968 = vmatprep.subr.bf16.mxu0 0
        %969 = vmatpush1.bf16.msra.mxu0 0
        %970 = vmatprep.subr.bf16.mxu0 0
        %971 = vmatpush1.bf16.msra.mxu0 0
        %972 = vmatprep.subr.bf16.mxu0 0
        %973 = vmatpush1.bf16.msra.mxu0 0
        %974 = vmatprep.subr.bf16.mxu0 0
        %975 = vmatpush1.bf16.msra.mxu0 0
        %976 = vmatprep.subr.bf16.mxu0 %v427
        %977 = vmatpush1.bf16.msra.mxu0 %v426
        %978 = vmatprep.subr.bf16.mxu0 0
        %979 = vmatpush2.bf16.msra.mxu0 0
        %980 = vmatprep.subr.bf16.mxu0 0
        %981 = vmatpush2.bf16.msra.mxu0 0
        %982 = vmatprep.subr.bf16.mxu0 0
        %983 = vmatpush2.bf16.msra.mxu0 0
        %984 = vmatprep.subr.bf16.mxu0 0
        %985 = vmatpush2.bf16.msra.mxu0 0
        %986 = vmatprep.subr.bf16.mxu0 0
        %987 = vmatpush2.bf16.msra.mxu0 0
        %988 = vmatprep.subr.bf16.mxu0 0
        %989 = vmatpush2.bf16.msra.mxu0 0
        %990 = vmatprep.subr.bf16.mxu0 0
        %991 = vmatpush2.bf16.msra.mxu0 0
        %992 = vmatprep.subr.bf16.mxu0 0
        %993 = vmatpush2.bf16.msra.mxu0 0
        %994 = vmatprep.mubr.bf16.mxu0 0
        %995 = vmatmul.mubr.bf16.gmra.mxu0 %v468
        %v996 = vpop.f32.mrf.mxu0
        %v997 = vadd.f32 0.0, %v996
        %v998 = vpop.f32.mrf.mxu0
        %v999 = vadd.f32 0.0, %v998
        %v1000 = vpop.f32.mrf.mxu0
        %v1001 = vpop.f32.mrf.mxu0
        %1002 = vdwg.mxu0
        %1003 = vmatprep.subr.bf16.mxu0 0
        %1004 = vmatpush1.bf16.msra.mxu0 0
        %1005 = vmatprep.subr.bf16.mxu0 0
        %1006 = vmatpush1.bf16.msra.mxu0 0
        %1007 = vmatprep.subr.bf16.mxu0 0
        %1008 = vmatpush1.bf16.msra.mxu0 0
        %1009 = vmatprep.subr.bf16.mxu0 0
        %1010 = vmatpush1.bf16.msra.mxu0 0
        %1011 = vmatprep.subr.bf16.mxu0 0
        %1012 = vmatpush1.bf16.msra.mxu0 0
        %1013 = vmatprep.subr.bf16.mxu0 0
        %1014 = vmatpush1.bf16.msra.mxu0 0
        %1015 = vmatprep.subr.bf16.mxu0 0
        %1016 = vmatpush1.bf16.msra.mxu0 0
        %1017 = vmatprep.subr.bf16.mxu0 %v429
        %1018 = vmatpush1.bf16.msra.mxu0 %v428
        %1019 = vmatprep.subr.bf16.mxu0 0
        %1020 = vmatpush2.bf16.msra.mxu0 0
        %1021 = vmatprep.subr.bf16.mxu0 0
        %1022 = vmatpush2.bf16.msra.mxu0 0
        %1023 = vmatprep.subr.bf16.mxu0 0
        %1024 = vmatpush2.bf16.msra.mxu0 0
        %1025 = vmatprep.subr.bf16.mxu0 0
        %1026 = vmatpush2.bf16.msra.mxu0 0
        %1027 = vmatprep.subr.bf16.mxu0 0
        %1028 = vmatpush2.bf16.msra.mxu0 0
        %1029 = vmatprep.subr.bf16.mxu0 0
        %1030 = vmatpush2.bf16.msra.mxu0 0
        %1031 = vmatprep.subr.bf16.mxu0 0
        %1032 = vmatpush2.bf16.msra.mxu0 0
        %1033 = vmatprep.subr.bf16.mxu0 0
        %1034 = vmatpush2.bf16.msra.mxu0 0
        %1035 = vmatprep.mubr.bf16.mxu0 0
        %1036 = vmatmul.mubr.bf16.gmra.mxu0 %v468
        %v1037 = vpop.f32.mrf.mxu0
        %v1038 = vadd.f32 0.0, %v1037
        %v1039 = vpop.f32.mrf.mxu0
        %v1040 = vadd.f32 0.0, %v1039
        %v1041 = vpop.f32.mrf.mxu0
        %v1042 = vpop.f32.mrf.mxu0
        %1043 = vdwg.mxu0
        %1044 = vmatprep.subr.bf16.mxu0 0
        %1045 = vmatpush1.bf16.msra.mxu0 0
        %1046 = vmatprep.subr.bf16.mxu0 0
        %1047 = vmatpush1.bf16.msra.mxu0 0
        %1048 = vmatprep.subr.bf16.mxu0 0
        %1049 = vmatpush1.bf16.msra.mxu0 0
        %1050 = vmatprep.subr.bf16.mxu0 0
        %1051 = vmatpush1.bf16.msra.mxu0 0
        %1052 = vmatprep.subr.bf16.mxu0 0
        %1053 = vmatpush1.bf16.msra.mxu0 0
        %1054 = vmatprep.subr.bf16.mxu0 0
        %1055 = vmatpush1.bf16.msra.mxu0 0
        %1056 = vmatprep.subr.bf16.mxu0 0
        %1057 = vmatpush1.bf16.msra.mxu0 0
        %1058 = vmatprep.subr.bf16.mxu0 %v431
        %1059 = vmatpush1.bf16.msra.mxu0 %v430
        %1060 = vmatprep.subr.bf16.mxu0 0
        %1061 = vmatpush2.bf16.msra.mxu0 0
        %1062 = vmatprep.subr.bf16.mxu0 0
        %1063 = vmatpush2.bf16.msra.mxu0 0
        %1064 = vmatprep.subr.bf16.mxu0 0
        %1065 = vmatpush2.bf16.msra.mxu0 0
        %1066 = vmatprep.subr.bf16.mxu0 0
        %1067 = vmatpush2.bf16.msra.mxu0 0
        %1068 = vmatprep.subr.bf16.mxu0 0
        %1069 = vmatpush2.bf16.msra.mxu0 0
        %1070 = vmatprep.subr.bf16.mxu0 0
        %1071 = vmatpush2.bf16.msra.mxu0 0
        %1072 = vmatprep.subr.bf16.mxu0 0
        %1073 = vmatpush2.bf16.msra.mxu0 0
        %1074 = vmatprep.subr.bf16.mxu0 0
        %1075 = vmatpush2.bf16.msra.mxu0 0
        %1076 = vmatprep.mubr.bf16.mxu0 0
        %1077 = vmatmul.mubr.bf16.gmra.mxu0 %v468
        %v1078 = vpop.f32.mrf.mxu0
        %v1079 = vadd.f32 0.0, %v1078
        %v1080 = vpop.f32.mrf.mxu0
        %v1081 = vadd.f32 0.0, %v1080
        %v1082 = vpop.f32.mrf.mxu0
        %v1083 = vpop.f32.mrf.mxu0
        %1084 = vdwg.mxu0
        %1085 = vmatprep.subr.bf16.mxu0 0
        %1086 = vmatpush1.bf16.msra.mxu0 0
        %1087 = vmatprep.subr.bf16.mxu0 0
        %1088 = vmatpush1.bf16.msra.mxu0 0
        %1089 = vmatprep.subr.bf16.mxu0 0
        %1090 = vmatpush1.bf16.msra.mxu0 0
        %1091 = vmatprep.subr.bf16.mxu0 0
        %1092 = vmatpush1.bf16.msra.mxu0 0
        %1093 = vmatprep.subr.bf16.mxu0 0
        %1094 = vmatpush1.bf16.msra.mxu0 0
        %1095 = vmatprep.subr.bf16.mxu0 0
        %1096 = vmatpush1.bf16.msra.mxu0 0
        %1097 = vmatprep.subr.bf16.mxu0 0
        %1098 = vmatpush1.bf16.msra.mxu0 0
        %1099 = vmatprep.subr.bf16.mxu0 %v433
        %1100 = vmatpush1.bf16.msra.mxu0 %v432
        %1101 = vmatprep.subr.bf16.mxu0 0
        %1102 = vmatpush2.bf16.msra.mxu0 0
        %1103 = vmatprep.subr.bf16.mxu0 0
        %1104 = vmatpush2.bf16.msra.mxu0 0
        %1105 = vmatprep.subr.bf16.mxu0 0
        %1106 = vmatpush2.bf16.msra.mxu0 0
        %1107 = vmatprep.subr.bf16.mxu0 0
        %1108 = vmatpush2.bf16.msra.mxu0 0
        %1109 = vmatprep.subr.bf16.mxu0 0
        %1110 = vmatpush2.bf16.msra.mxu0 0
        %1111 = vmatprep.subr.bf16.mxu0 0
        %1112 = vmatpush2.bf16.msra.mxu0 0
        %1113 = vmatprep.subr.bf16.mxu0 0
        %1114 = vmatpush2.bf16.msra.mxu0 0
        %1115 = vmatprep.subr.bf16.mxu0 0
        %1116 = vmatpush2.bf16.msra.mxu0 0
        %1117 = vmatprep.mubr.bf16.mxu0 0
        %1118 = vmatmul.mubr.bf16.gmra.mxu0 %v468
        %v1119 = vpop.f32.mrf.mxu0
        %v1120 = vadd.f32 0.0, %v1119
        %v1121 = vpop.f32.mrf.mxu0
        %v1122 = vadd.f32 0.0, %v1121
        %v1123 = vpop.f32.mrf.mxu0
        %v1124 = vpop.f32.mrf.mxu0
        %1125 = vdwg.mxu0
        %s1126 = smul.u32 %s19, 4096
        %v1159 = vcombine.low %v505, %v507
        %v1160 = vcombine.low %v546, %v548
        %v1161 = vcombine.low %v587, %v589
        %v1162 = vcombine.low %v628, %v630
        %v1163 = vcombine.low %v669, %v671
        %v1164 = vcombine.low %v710, %v712
        %v1165 = vcombine.low %v751, %v753
        %v1166 = vcombine.low %v792, %v794
        %v1167 = vcombine.low %v833, %v835
        %v1168 = vcombine.low %v874, %v876
        %v1169 = vcombine.low %v915, %v917
        %v1170 = vcombine.low %v956, %v958
        %v1171 = vcombine.low %v997, %v999
        %v1172 = vcombine.low %v1038, %v1040
        %v1173 = vcombine.low %v1079, %v1081
        %v1174 = vcombine.low %v1120, %v1122
        %s1191 = sshra.s32 %s1126, 7
        %s1192 = sand.u32 %s1126, 127
        %s1193 = smul.u32 %s18, 64
        %s1194 = sadd.s32 %s1191, %s1193
        %s1195 = smul.addr %s1194, 4
        %s1196 = scalar_lea.vmem %s3, %s1195
        %1197 = vst [vmem:[%s1196] sm:$0x77] %v1159
        %1198 = vst [vmem:[%s1196 + $0x8] sm:$0x77] %v1160
        %1199 = vst [vmem:[%s1196 + $0x10] sm:$0x77] %v1161
        %1200 = vst [vmem:[%s1196 + $0x18] sm:$0x77] %v1162
        %1201 = vst [vmem:[%s1196 + $0x20] sm:$0x77] %v1163
        %1202 = vst [vmem:[%s1196 + $0x28] sm:$0x77] %v1164
        %1203 = vst [vmem:[%s1196 + $0x30] sm:$0x77] %v1165
        %1204 = vst [vmem:[%s1196 + $0x38] sm:$0x77] %v1166
        %1205 = vst [vmem:[%s1196 + $0x40] sm:$0x77] %v1167
        %1206 = vst [vmem:[%s1196 + $0x48] sm:$0x77] %v1168
        %1207 = vst [vmem:[%s1196 + $0x50] sm:$0x77] %v1169
        %1208 = vst [vmem:[%s1196 + $0x58] sm:$0x77] %v1170
        %1209 = vst [vmem:[%s1196 + $0x60] sm:$0x77] %v1171
        %1210 = vst [vmem:[%s1196 + $0x68] sm:$0x77] %v1172
        %1211 = vst [vmem:[%s1196 + $0x70] sm:$0x77] %v1173
        %1212 = vst [vmem:[%s1196 + $0x78] sm:$0x77] %v1174
        %p1213 = scmp.eq.s32.totalorder %s18, 3
        %p1214 = scmp.eq.s32.totalorder %s19, 1
        %p1215 = pnand %p1213, %p1214
        %p1216 = pneg %p1215
        // Predicated region
        $region56: #{generator_forward.11} parent=50 // pred_check
          _
        $region57: #{generator_forward.11} parent=50 // pred_check_branch
          %1218 = sbr.rel (%p1215) target = $region59
        $region58: #{generator_forward.11} parent=50 // pred_region
          %v1219 = vld [vmem:[%s3] sm:$0x77]
          %v1220 = vld [vmem:[%s3 + $0x8] sm:$0x77]
          %v1221 = vld [vmem:[%s3 + $0x10] sm:$0x77]
          %v1222 = vld [vmem:[%s3 + $0x18] sm:$0x77]
          %v1223 = vld [vmem:[%s3 + $0x20] sm:$0x77]
          %v1224 = vld [vmem:[%s3 + $0x28] sm:$0x77]
          %v1225 = vld [vmem:[%s3 + $0x30] sm:$0x77]
          %v1226 = vld [vmem:[%s3 + $0x38] sm:$0x77]
          %v1227 = vld [vmem:[%s3 + $0x40] sm:$0x77]
          %v1228 = vld [vmem:[%s3 + $0x48] sm:$0x77]
          %v1229 = vld [vmem:[%s3 + $0x50] sm:$0x77]
          %v1230 = vld [vmem:[%s3 + $0x58] sm:$0x77]
          %v1231 = vld [vmem:[%s3 + $0x60] sm:$0x77]
          %v1232 = vld [vmem:[%s3 + $0x68] sm:$0x77]
          %v1233 = vld [vmem:[%s3 + $0x70] sm:$0x77]
          %v1234 = vld [vmem:[%s3 + $0x78] sm:$0x77]
          %v1235 = vld [vmem:[%s3 + $0x80] sm:$0x77]
          %v1236 = vld [vmem:[%s3 + $0x88] sm:$0x77]
          %v1237 = vld [vmem:[%s3 + $0x90] sm:$0x77]
          %v1238 = vld [vmem:[%s3 + $0x98] sm:$0x77]
          %v1239 = vld [vmem:[%s3 + $0xa0] sm:$0x77]
          %v1240 = vld [vmem:[%s3 + $0xa8] sm:$0x77]
          %v1241 = vld [vmem:[%s3 + $0xb0] sm:$0x77]
          %v1242 = vld [vmem:[%s3 + $0xb8] sm:$0x77]
          %v1243 = vld [vmem:[%s3 + $0xc0] sm:$0x77]
          %v1244 = vld [vmem:[%s3 + $0xc8] sm:$0x77]
          %v1245 = vld [vmem:[%s3 + $0xd0] sm:$0x77]
          %v1246 = vld [vmem:[%s3 + $0xd8] sm:$0x77]
          %v1247 = vld [vmem:[%s3 + $0xe0] sm:$0x77]
          %v1248 = vld [vmem:[%s3 + $0xe8] sm:$0x77]
          %v1249 = vld [vmem:[%s3 + $0xf0] sm:$0x77]
          %v1250 = vld [vmem:[%s3 + $0xf8] sm:$0x77]
          %v1251 = vld [vmem:[%s3 + $0x100] sm:$0x77]
          %v1252 = vld [vmem:[%s3 + $0x108] sm:$0x77]
          %v1253 = vld [vmem:[%s3 + $0x110] sm:$0x77]
          %v1254 = vld [vmem:[%s3 + $0x118] sm:$0x77]
          %v1255 = vld [vmem:[%s3 + $0x120] sm:$0x77]
          %v1256 = vld [vmem:[%s3 + $0x128] sm:$0x77]
          %v1257 = vld [vmem:[%s3 + $0x130] sm:$0x77]
          %v1258 = vld [vmem:[%s3 + $0x138] sm:$0x77]
          %v1259 = vld [vmem:[%s3 + $0x140] sm:$0x77]
          %v1260 = vld [vmem:[%s3 + $0x148] sm:$0x77]
          %v1261 = vld [vmem:[%s3 + $0x150] sm:$0x77]
          %v1262 = vld [vmem:[%s3 + $0x158] sm:$0x77]
          %v1263 = vld [vmem:[%s3 + $0x160] sm:$0x77]
          %v1264 = vld [vmem:[%s3 + $0x168] sm:$0x77]
          %v1265 = vld [vmem:[%s3 + $0x170] sm:$0x77]
          %v1266 = vld [vmem:[%s3 + $0x178] sm:$0x77]
          %v1267 = vld [vmem:[%s3 + $0x180] sm:$0x77]
          %v1268 = vld [vmem:[%s3 + $0x188] sm:$0x77]
          %v1269 = vld [vmem:[%s3 + $0x190] sm:$0x77]
          %v1270 = vld [vmem:[%s3 + $0x198] sm:$0x77]
          %v1271 = vld [vmem:[%s3 + $0x1a0] sm:$0x77]
          %v1272 = vld [vmem:[%s3 + $0x1a8] sm:$0x77]
          %v1273 = vld [vmem:[%s3 + $0x1b0] sm:$0x77]
          %v1274 = vld [vmem:[%s3 + $0x1b8] sm:$0x77]
          %v1275 = vld [vmem:[%s3 + $0x1c0] sm:$0x77]
          %v1276 = vld [vmem:[%s3 + $0x1c8] sm:$0x77]
          %v1277 = vld [vmem:[%s3 + $0x1d0] sm:$0x77]
          %v1278 = vld [vmem:[%s3 + $0x1d8] sm:$0x77]
          %v1279 = vld [vmem:[%s3 + $0x1e0] sm:$0x77]
          %v1280 = vld [vmem:[%s3 + $0x1e8] sm:$0x77]
          %v1281 = vld [vmem:[%s3 + $0x1f0] sm:$0x77]
          %v1282 = vld [vmem:[%s3 + $0x1f8] sm:$0x77]
          %v1283 = vld [vmem:[%s3 + $0x200] sm:$0x77]
          %v1284 = vld [vmem:[%s3 + $0x208] sm:$0x77]
          %v1285 = vld [vmem:[%s3 + $0x210] sm:$0x77]
          %v1286 = vld [vmem:[%s3 + $0x218] sm:$0x77]
          %v1287 = vld [vmem:[%s3 + $0x220] sm:$0x77]
          %v1288 = vld [vmem:[%s3 + $0x228] sm:$0x77]
          %v1289 = vld [vmem:[%s3 + $0x230] sm:$0x77]
          %v1290 = vld [vmem:[%s3 + $0x238] sm:$0x77]
          %v1291 = vld [vmem:[%s3 + $0x240] sm:$0x77]
          %v1292 = vld [vmem:[%s3 + $0x248] sm:$0x77]
          %v1293 = vld [vmem:[%s3 + $0x250] sm:$0x77]
          %v1294 = vld [vmem:[%s3 + $0x258] sm:$0x77]
          %v1295 = vld [vmem:[%s3 + $0x260] sm:$0x77]
          %v1296 = vld [vmem:[%s3 + $0x268] sm:$0x77]
          %v1297 = vld [vmem:[%s3 + $0x270] sm:$0x77]
          %v1298 = vld [vmem:[%s3 + $0x278] sm:$0x77]
          %v1299 = vld [vmem:[%s3 + $0x280] sm:$0x77]
          %v1300 = vld [vmem:[%s3 + $0x288] sm:$0x77]
          %v1301 = vld [vmem:[%s3 + $0x290] sm:$0x77]
          %v1302 = vld [vmem:[%s3 + $0x298] sm:$0x77]
          %v1303 = vld [vmem:[%s3 + $0x2a0] sm:$0x77]
          %v1304 = vld [vmem:[%s3 + $0x2a8] sm:$0x77]
          %v1305 = vld [vmem:[%s3 + $0x2b0] sm:$0x77]
          %v1306 = vld [vmem:[%s3 + $0x2b8] sm:$0x77]
          %v1307 = vld [vmem:[%s3 + $0x2c0] sm:$0x77]
          %v1308 = vld [vmem:[%s3 + $0x2c8] sm:$0x77]
          %v1309 = vld [vmem:[%s3 + $0x2d0] sm:$0x77]
          %v1310 = vld [vmem:[%s3 + $0x2d8] sm:$0x77]
          %v1311 = vld [vmem:[%s3 + $0x2e0] sm:$0x77]
          %v1312 = vld [vmem:[%s3 + $0x2e8] sm:$0x77]
          %v1313 = vld [vmem:[%s3 + $0x2f0] sm:$0x77]
          %v1314 = vld [vmem:[%s3 + $0x2f8] sm:$0x77]
          %v1315 = vld [vmem:[%s3 + $0x300] sm:$0x77]
          %v1316 = vld [vmem:[%s3 + $0x308] sm:$0x77]
          %v1317 = vld [vmem:[%s3 + $0x310] sm:$0x77]
          %v1318 = vld [vmem:[%s3 + $0x318] sm:$0x77]
          %v1319 = vld [vmem:[%s3 + $0x320] sm:$0x77]
          %v1320 = vld [vmem:[%s3 + $0x328] sm:$0x77]
          %v1321 = vld [vmem:[%s3 + $0x330] sm:$0x77]
          %v1322 = vld [vmem:[%s3 + $0x338] sm:$0x77]
          %v1323 = vld [vmem:[%s3 + $0x340] sm:$0x77]
          %v1324 = vld [vmem:[%s3 + $0x348] sm:$0x77]
          %v1325 = vld [vmem:[%s3 + $0x350] sm:$0x77]
          %v1326 = vld [vmem:[%s3 + $0x358] sm:$0x77]
          %v1327 = vld [vmem:[%s3 + $0x360] sm:$0x77]
          %v1328 = vld [vmem:[%s3 + $0x368] sm:$0x77]
          %v1329 = vld [vmem:[%s3 + $0x370] sm:$0x77]
          %v1330 = vld [vmem:[%s3 + $0x378] sm:$0x77]
          %v1331 = vld [vmem:[%s3 + $0x380] sm:$0x77]
          %v1332 = vld [vmem:[%s3 + $0x388] sm:$0x77]
          %v1333 = vld [vmem:[%s3 + $0x390] sm:$0x77]
          %v1334 = vld [vmem:[%s3 + $0x398] sm:$0x77]
          %v1335 = vld [vmem:[%s3 + $0x3a0] sm:$0x77]
          %v1336 = vld [vmem:[%s3 + $0x3a8] sm:$0x77]
          %v1337 = vld [vmem:[%s3 + $0x3b0] sm:$0x77]
          %v1338 = vld [vmem:[%s3 + $0x3b8] sm:$0x77]
          %v1339 = vld [vmem:[%s3 + $0x3c0] sm:$0x77]
          %v1340 = vld [vmem:[%s3 + $0x3c8] sm:$0x77]
          %v1341 = vld [vmem:[%s3 + $0x3d0] sm:$0x77]
          %v1342 = vld [vmem:[%s3 + $0x3d8] sm:$0x77]
          %v1343 = vld [vmem:[%s3 + $0x3e0] sm:$0x77]
          %v1344 = vld [vmem:[%s3 + $0x3e8] sm:$0x77]
          %v1345 = vld [vmem:[%s3 + $0x3f0] sm:$0x77]
          %v1346 = vld [vmem:[%s3 + $0x3f8] sm:$0x77]
          %v1347 = vld [vmem:[%s2] sm:$0x7]
          %1349 = vset.pattern.permute.xlu0 0
          %1350 = vperm.xlu0 %1349, %v1347
          %v1351 = vpop.permute.xlu0 %1350
          %v1353 = vunpack.c.l.s4 839922192
          %v1354 = vunpack.c.0.s8 %v1353
          %v1355 = vlaneseq
          %v1356 = vshrl.u32 %v1355, 7
          %v1357 = vsub.s32 %v1354, %v1356
          %v1358 = vrot.slane %v1351, %v1357
          %v1360 = vadd.f32 %v1219, %v1358
          %v1361 = vadd.f32 %v1220, %v1358
          %v1362 = vadd.f32 %v1221, %v1358
          %v1363 = vadd.f32 %v1222, %v1358
          %v1364 = vadd.f32 %v1223, %v1358
          %v1365 = vadd.f32 %v1224, %v1358
          %v1366 = vadd.f32 %v1225, %v1358
          %v1367 = vadd.f32 %v1226, %v1358
          %v1368 = vadd.f32 %v1227, %v1358
          %v1369 = vadd.f32 %v1228, %v1358
          %v1370 = vadd.f32 %v1229, %v1358
          %v1371 = vadd.f32 %v1230, %v1358
          %v1372 = vadd.f32 %v1231, %v1358
          %v1373 = vadd.f32 %v1232, %v1358
          %v1374 = vadd.f32 %v1233, %v1358
          %v1375 = vadd.f32 %v1234, %v1358
          %v1376 = vadd.f32 %v1235, %v1358
          %v1377 = vadd.f32 %v1236, %v1358
          %v1378 = vadd.f32 %v1237, %v1358
          %v1379 = vadd.f32 %v1238, %v1358
          %v1380 = vadd.f32 %v1239, %v1358
          %v1381 = vadd.f32 %v1240, %v1358
          %v1382 = vadd.f32 %v1241, %v1358
          %v1383 = vadd.f32 %v1242, %v1358
          %v1384 = vadd.f32 %v1243, %v1358
          %v1385 = vadd.f32 %v1244, %v1358
          %v1386 = vadd.f32 %v1245, %v1358
          %v1387 = vadd.f32 %v1246, %v1358
          %v1388 = vadd.f32 %v1247, %v1358
          %v1389 = vadd.f32 %v1248, %v1358
          %v1390 = vadd.f32 %v1249, %v1358
          %v1391 = vadd.f32 %v1250, %v1358
          %v1392 = vadd.f32 %v1251, %v1358
          %v1393 = vadd.f32 %v1252, %v1358
          %v1394 = vadd.f32 %v1253, %v1358
          %v1395 = vadd.f32 %v1254, %v1358
          %v1396 = vadd.f32 %v1255, %v1358
          %v1397 = vadd.f32 %v1256, %v1358
          %v1398 = vadd.f32 %v1257, %v1358
          %v1399 = vadd.f32 %v1258, %v1358
          %v1400 = vadd.f32 %v1259, %v1358
          %v1401 = vadd.f32 %v1260, %v1358
          %v1402 = vadd.f32 %v1261, %v1358
          %v1403 = vadd.f32 %v1262, %v1358
          %v1404 = vadd.f32 %v1263, %v1358
          %v1405 = vadd.f32 %v1264, %v1358
          %v1406 = vadd.f32 %v1265, %v1358
          %v1407 = vadd.f32 %v1266, %v1358
          %v1408 = vadd.f32 %v1267, %v1358
          %v1409 = vadd.f32 %v1268, %v1358
          %v1410 = vadd.f32 %v1269, %v1358
          %v1411 = vadd.f32 %v1270, %v1358
          %v1412 = vadd.f32 %v1271, %v1358
          %v1413 = vadd.f32 %v1272, %v1358
          %v1414 = vadd.f32 %v1273, %v1358
          %v1415 = vadd.f32 %v1274, %v1358
          %v1416 = vadd.f32 %v1275, %v1358
          %v1417 = vadd.f32 %v1276, %v1358
          %v1418 = vadd.f32 %v1277, %v1358
          %v1419 = vadd.f32 %v1278, %v1358
          %v1420 = vadd.f32 %v1279, %v1358
          %v1421 = vadd.f32 %v1280, %v1358
          %v1422 = vadd.f32 %v1281, %v1358
          %v1423 = vadd.f32 %v1282, %v1358
          %v1424 = vadd.f32 %v1283, %v1358
          %v1425 = vadd.f32 %v1284, %v1358
          %v1426 = vadd.f32 %v1285, %v1358
          %v1427 = vadd.f32 %v1286, %v1358
          %v1428 = vadd.f32 %v1287, %v1358
          %v1429 = vadd.f32 %v1288, %v1358
          %v1430 = vadd.f32 %v1289, %v1358
          %v1431 = vadd.f32 %v1290, %v1358
          %v1432 = vadd.f32 %v1291, %v1358
          %v1433 = vadd.f32 %v1292, %v1358
          %v1434 = vadd.f32 %v1293, %v1358
          %v1435 = vadd.f32 %v1294, %v1358
          %v1436 = vadd.f32 %v1295, %v1358
          %v1437 = vadd.f32 %v1296, %v1358
          %v1438 = vadd.f32 %v1297, %v1358
          %v1439 = vadd.f32 %v1298, %v1358
          %v1440 = vadd.f32 %v1299, %v1358
          %v1441 = vadd.f32 %v1300, %v1358
          %v1442 = vadd.f32 %v1301, %v1358
          %v1443 = vadd.f32 %v1302, %v1358
          %v1444 = vadd.f32 %v1303, %v1358
          %v1445 = vadd.f32 %v1304, %v1358
          %v1446 = vadd.f32 %v1305, %v1358
          %v1447 = vadd.f32 %v1306, %v1358
          %v1448 = vadd.f32 %v1307, %v1358
          %v1449 = vadd.f32 %v1308, %v1358
          %v1450 = vadd.f32 %v1309, %v1358
          %v1451 = vadd.f32 %v1310, %v1358
          %v1452 = vadd.f32 %v1311, %v1358
          %v1453 = vadd.f32 %v1312, %v1358
          %v1454 = vadd.f32 %v1313, %v1358
          %v1455 = vadd.f32 %v1314, %v1358
          %v1456 = vadd.f32 %v1315, %v1358
          %v1457 = vadd.f32 %v1316, %v1358
          %v1458 = vadd.f32 %v1317, %v1358
          %v1459 = vadd.f32 %v1318, %v1358
          %v1460 = vadd.f32 %v1319, %v1358
          %v1461 = vadd.f32 %v1320, %v1358
          %v1462 = vadd.f32 %v1321, %v1358
          %v1463 = vadd.f32 %v1322, %v1358
          %v1464 = vadd.f32 %v1323, %v1358
          %v1465 = vadd.f32 %v1324, %v1358
          %v1466 = vadd.f32 %v1325, %v1358
          %v1467 = vadd.f32 %v1326, %v1358
          %v1468 = vadd.f32 %v1327, %v1358
          %v1469 = vadd.f32 %v1328, %v1358
          %v1470 = vadd.f32 %v1329, %v1358
          %v1471 = vadd.f32 %v1330, %v1358
          %v1472 = vadd.f32 %v1331, %v1358
          %v1473 = vadd.f32 %v1332, %v1358
          %v1474 = vadd.f32 %v1333, %v1358
          %v1475 = vadd.f32 %v1334, %v1358
          %v1476 = vadd.f32 %v1335, %v1358
          %v1477 = vadd.f32 %v1336, %v1358
          %v1478 = vadd.f32 %v1337, %v1358
          %v1479 = vadd.f32 %v1338, %v1358
          %v1480 = vadd.f32 %v1339, %v1358
          %v1481 = vadd.f32 %v1340, %v1358
          %v1482 = vadd.f32 %v1341, %v1358
          %v1483 = vadd.f32 %v1342, %v1358
          %v1484 = vadd.f32 %v1343, %v1358
          %v1485 = vadd.f32 %v1344, %v1358
          %v1486 = vadd.f32 %v1345, %v1358
          %v1487 = vadd.f32 %v1346, %v1358
          %v1488 = vtanh.pop %v1360
          %v1489 = vtanh.pop %v1361
          %v1490 = vtanh.pop %v1362
          %v1491 = vtanh.pop %v1363
          %v1492 = vtanh.pop %v1364
          %v1493 = vtanh.pop %v1365
          %v1494 = vtanh.pop %v1366
          %v1495 = vtanh.pop %v1367
          %v1496 = vtanh.pop %v1368
          %v1497 = vtanh.pop %v1369
          %v1498 = vtanh.pop %v1370
          %v1499 = vtanh.pop %v1371
          %v1500 = vtanh.pop %v1372
          %v1501 = vtanh.pop %v1373
          %v1502 = vtanh.pop %v1374
          %v1503 = vtanh.pop %v1375
          %v1504 = vtanh.pop %v1376
          %v1505 = vtanh.pop %v1377
          %v1506 = vtanh.pop %v1378
          %v1507 = vtanh.pop %v1379
          %v1508 = vtanh.pop %v1380
          %v1509 = vtanh.pop %v1381
          %v1510 = vtanh.pop %v1382
          %v1511 = vtanh.pop %v1383
          %v1512 = vtanh.pop %v1384
          %v1513 = vtanh.pop %v1385
          %v1514 = vtanh.pop %v1386
          %v1515 = vtanh.pop %v1387
          %v1516 = vtanh.pop %v1388
          %v1517 = vtanh.pop %v1389
          %v1518 = vtanh.pop %v1390
          %v1519 = vtanh.pop %v1391
          %v1520 = vtanh.pop %v1392
          %v1521 = vtanh.pop %v1393
          %v1522 = vtanh.pop %v1394
          %v1523 = vtanh.pop %v1395
          %v1524 = vtanh.pop %v1396
          %v1525 = vtanh.pop %v1397
          %v1526 = vtanh.pop %v1398
          %v1527 = vtanh.pop %v1399
          %v1528 = vtanh.pop %v1400
          %v1529 = vtanh.pop %v1401
          %v1530 = vtanh.pop %v1402
          %v1531 = vtanh.pop %v1403
          %v1532 = vtanh.pop %v1404
          %v1533 = vtanh.pop %v1405
          %v1534 = vtanh.pop %v1406
          %v1535 = vtanh.pop %v1407
          %v1536 = vtanh.pop %v1408
          %v1537 = vtanh.pop %v1409
          %v1538 = vtanh.pop %v1410
          %v1539 = vtanh.pop %v1411
          %v1540 = vtanh.pop %v1412
          %v1541 = vtanh.pop %v1413
          %v1542 = vtanh.pop %v1414
          %v1543 = vtanh.pop %v1415
          %v1544 = vtanh.pop %v1416
          %v1545 = vtanh.pop %v1417
          %v1546 = vtanh.pop %v1418
          %v1547 = vtanh.pop %v1419
          %v1548 = vtanh.pop %v1420
          %v1549 = vtanh.pop %v1421
          %v1550 = vtanh.pop %v1422
          %v1551 = vtanh.pop %v1423
          %v1552 = vtanh.pop %v1424
          %v1553 = vtanh.pop %v1425
          %v1554 = vtanh.pop %v1426
          %v1555 = vtanh.pop %v1427
          %v1556 = vtanh.pop %v1428
          %v1557 = vtanh.pop %v1429
          %v1558 = vtanh.pop %v1430
          %v1559 = vtanh.pop %v1431
          %v1560 = vtanh.pop %v1432
          %v1561 = vtanh.pop %v1433
          %v1562 = vtanh.pop %v1434
          %v1563 = vtanh.pop %v1435
          %v1564 = vtanh.pop %v1436
          %v1565 = vtanh.pop %v1437
          %v1566 = vtanh.pop %v1438
          %v1567 = vtanh.pop %v1439
          %v1568 = vtanh.pop %v1440
          %v1569 = vtanh.pop %v1441
          %v1570 = vtanh.pop %v1442
          %v1571 = vtanh.pop %v1443
          %v1572 = vtanh.pop %v1444
          %v1573 = vtanh.pop %v1445
          %v1574 = vtanh.pop %v1446
          %v1575 = vtanh.pop %v1447
          %v1576 = vtanh.pop %v1448
          %v1577 = vtanh.pop %v1449
          %v1578 = vtanh.pop %v1450
          %v1579 = vtanh.pop %v1451
          %v1580 = vtanh.pop %v1452
          %v1581 = vtanh.pop %v1453
          %v1582 = vtanh.pop %v1454
          %v1583 = vtanh.pop %v1455
          %v1584 = vtanh.pop %v1456
          %v1585 = vtanh.pop %v1457
          %v1586 = vtanh.pop %v1458
          %v1587 = vtanh.pop %v1459
          %v1588 = vtanh.pop %v1460
          %v1589 = vtanh.pop %v1461
          %v1590 = vtanh.pop %v1462
          %v1591 = vtanh.pop %v1463
          %v1592 = vtanh.pop %v1464
          %v1593 = vtanh.pop %v1465
          %v1594 = vtanh.pop %v1466
          %v1595 = vtanh.pop %v1467
          %v1596 = vtanh.pop %v1468
          %v1597 = vtanh.pop %v1469
          %v1598 = vtanh.pop %v1470
          %v1599 = vtanh.pop %v1471
          %v1600 = vtanh.pop %v1472
          %v1601 = vtanh.pop %v1473
          %v1602 = vtanh.pop %v1474
          %v1603 = vtanh.pop %v1475
          %v1604 = vtanh.pop %v1476
          %v1605 = vtanh.pop %v1477
          %v1606 = vtanh.pop %v1478
          %v1607 = vtanh.pop %v1479
          %v1608 = vtanh.pop %v1480
          %v1609 = vtanh.pop %v1481
          %v1610 = vtanh.pop %v1482
          %v1611 = vtanh.pop %v1483
          %v1612 = vtanh.pop %v1484
          %v1613 = vtanh.pop %v1485
          %v1614 = vtanh.pop %v1486
          %v1615 = vtanh.pop %v1487
          %1616 = vst [vmem:[%s3] sm:$0x77] %v1488
          %1617 = vst [vmem:[%s3 + $0x8] sm:$0x77] %v1489
          %1618 = vst [vmem:[%s3 + $0x10] sm:$0x77] %v1490
          %1619 = vst [vmem:[%s3 + $0x18] sm:$0x77] %v1491
          %1620 = vst [vmem:[%s3 + $0x20] sm:$0x77] %v1492
          %1621 = vst [vmem:[%s3 + $0x28] sm:$0x77] %v1493
          %1622 = vst [vmem:[%s3 + $0x30] sm:$0x77] %v1494
          %1623 = vst [vmem:[%s3 + $0x38] sm:$0x77] %v1495
          %1624 = vst [vmem:[%s3 + $0x40] sm:$0x77] %v1496
          %1625 = vst [vmem:[%s3 + $0x48] sm:$0x77] %v1497
          %1626 = vst [vmem:[%s3 + $0x50] sm:$0x77] %v1498
          %1627 = vst [vmem:[%s3 + $0x58] sm:$0x77] %v1499
          %1628 = vst [vmem:[%s3 + $0x60] sm:$0x77] %v1500
          %1629 = vst [vmem:[%s3 + $0x68] sm:$0x77] %v1501
          %1630 = vst [vmem:[%s3 + $0x70] sm:$0x77] %v1502
          %1631 = vst [vmem:[%s3 + $0x78] sm:$0x77] %v1503
          %1632 = vst [vmem:[%s3 + $0x80] sm:$0x77] %v1504
          %1633 = vst [vmem:[%s3 + $0x88] sm:$0x77] %v1505
          %1634 = vst [vmem:[%s3 + $0x90] sm:$0x77] %v1506
          %1635 = vst [vmem:[%s3 + $0x98] sm:$0x77] %v1507
          %1636 = vst [vmem:[%s3 + $0xa0] sm:$0x77] %v1508
          %1637 = vst [vmem:[%s3 + $0xa8] sm:$0x77] %v1509
          %1638 = vst [vmem:[%s3 + $0xb0] sm:$0x77] %v1510
          %1639 = vst [vmem:[%s3 + $0xb8] sm:$0x77] %v1511
          %1640 = vst [vmem:[%s3 + $0xc0] sm:$0x77] %v1512
          %1641 = vst [vmem:[%s3 + $0xc8] sm:$0x77] %v1513
          %1642 = vst [vmem:[%s3 + $0xd0] sm:$0x77] %v1514
          %1643 = vst [vmem:[%s3 + $0xd8] sm:$0x77] %v1515
          %1644 = vst [vmem:[%s3 + $0xe0] sm:$0x77] %v1516
          %1645 = vst [vmem:[%s3 + $0xe8] sm:$0x77] %v1517
          %1646 = vst [vmem:[%s3 + $0xf0] sm:$0x77] %v1518
          %1647 = vst [vmem:[%s3 + $0xf8] sm:$0x77] %v1519
          %1648 = vst [vmem:[%s3 + $0x100] sm:$0x77] %v1520
          %1649 = vst [vmem:[%s3 + $0x108] sm:$0x77] %v1521
          %1650 = vst [vmem:[%s3 + $0x110] sm:$0x77] %v1522
          %1651 = vst [vmem:[%s3 + $0x118] sm:$0x77] %v1523
          %1652 = vst [vmem:[%s3 + $0x120] sm:$0x77] %v1524
          %1653 = vst [vmem:[%s3 + $0x128] sm:$0x77] %v1525
          %1654 = vst [vmem:[%s3 + $0x130] sm:$0x77] %v1526
          %1655 = vst [vmem:[%s3 + $0x138] sm:$0x77] %v1527
          %1656 = vst [vmem:[%s3 + $0x140] sm:$0x77] %v1528
          %1657 = vst [vmem:[%s3 + $0x148] sm:$0x77] %v1529
          %1658 = vst [vmem:[%s3 + $0x150] sm:$0x77] %v1530
          %1659 = vst [vmem:[%s3 + $0x158] sm:$0x77] %v1531
          %1660 = vst [vmem:[%s3 + $0x160] sm:$0x77] %v1532
          %1661 = vst [vmem:[%s3 + $0x168] sm:$0x77] %v1533
          %1662 = vst [vmem:[%s3 + $0x170] sm:$0x77] %v1534
          %1663 = vst [vmem:[%s3 + $0x178] sm:$0x77] %v1535
          %1664 = vst [vmem:[%s3 + $0x180] sm:$0x77] %v1536
          %1665 = vst [vmem:[%s3 + $0x188] sm:$0x77] %v1537
          %1666 = vst [vmem:[%s3 + $0x190] sm:$0x77] %v1538
          %1667 = vst [vmem:[%s3 + $0x198] sm:$0x77] %v1539
          %1668 = vst [vmem:[%s3 + $0x1a0] sm:$0x77] %v1540
          %1669 = vst [vmem:[%s3 + $0x1a8] sm:$0x77] %v1541
          %1670 = vst [vmem:[%s3 + $0x1b0] sm:$0x77] %v1542
          %1671 = vst [vmem:[%s3 + $0x1b8] sm:$0x77] %v1543
          %1672 = vst [vmem:[%s3 + $0x1c0] sm:$0x77] %v1544
          %1673 = vst [vmem:[%s3 + $0x1c8] sm:$0x77] %v1545
          %1674 = vst [vmem:[%s3 + $0x1d0] sm:$0x77] %v1546
          %1675 = vst [vmem:[%s3 + $0x1d8] sm:$0x77] %v1547
          %1676 = vst [vmem:[%s3 + $0x1e0] sm:$0x77] %v1548
          %1677 = vst [vmem:[%s3 + $0x1e8] sm:$0x77] %v1549
          %1678 = vst [vmem:[%s3 + $0x1f0] sm:$0x77] %v1550
          %1679 = vst [vmem:[%s3 + $0x1f8] sm:$0x77] %v1551
          %1680 = vst [vmem:[%s3 + $0x200] sm:$0x77] %v1552
          %1681 = vst [vmem:[%s3 + $0x208] sm:$0x77] %v1553
          %1682 = vst [vmem:[%s3 + $0x210] sm:$0x77] %v1554
          %1683 = vst [vmem:[%s3 + $0x218] sm:$0x77] %v1555
          %1684 = vst [vmem:[%s3 + $0x220] sm:$0x77] %v1556
          %1685 = vst [vmem:[%s3 + $0x228] sm:$0x77] %v1557
          %1686 = vst [vmem:[%s3 + $0x230] sm:$0x77] %v1558
          %1687 = vst [vmem:[%s3 + $0x238] sm:$0x77] %v1559
          %1688 = vst [vmem:[%s3 + $0x240] sm:$0x77] %v1560
          %1689 = vst [vmem:[%s3 + $0x248] sm:$0x77] %v1561
          %1690 = vst [vmem:[%s3 + $0x250] sm:$0x77] %v1562
          %1691 = vst [vmem:[%s3 + $0x258] sm:$0x77] %v1563
          %1692 = vst [vmem:[%s3 + $0x260] sm:$0x77] %v1564
          %1693 = vst [vmem:[%s3 + $0x268] sm:$0x77] %v1565
          %1694 = vst [vmem:[%s3 + $0x270] sm:$0x77] %v1566
          %1695 = vst [vmem:[%s3 + $0x278] sm:$0x77] %v1567
          %1696 = vst [vmem:[%s3 + $0x280] sm:$0x77] %v1568
          %1697 = vst [vmem:[%s3 + $0x288] sm:$0x77] %v1569
          %1698 = vst [vmem:[%s3 + $0x290] sm:$0x77] %v1570
          %1699 = vst [vmem:[%s3 + $0x298] sm:$0x77] %v1571
          %1700 = vst [vmem:[%s3 + $0x2a0] sm:$0x77] %v1572
          %1701 = vst [vmem:[%s3 + $0x2a8] sm:$0x77] %v1573
          %1702 = vst [vmem:[%s3 + $0x2b0] sm:$0x77] %v1574
          %1703 = vst [vmem:[%s3 + $0x2b8] sm:$0x77] %v1575
          %1704 = vst [vmem:[%s3 + $0x2c0] sm:$0x77] %v1576
          %1705 = vst [vmem:[%s3 + $0x2c8] sm:$0x77] %v1577
          %1706 = vst [vmem:[%s3 + $0x2d0] sm:$0x77] %v1578
          %1707 = vst [vmem:[%s3 + $0x2d8] sm:$0x77] %v1579
          %1708 = vst [vmem:[%s3 + $0x2e0] sm:$0x77] %v1580
          %1709 = vst [vmem:[%s3 + $0x2e8] sm:$0x77] %v1581
          %1710 = vst [vmem:[%s3 + $0x2f0] sm:$0x77] %v1582
          %1711 = vst [vmem:[%s3 + $0x2f8] sm:$0x77] %v1583
          %1712 = vst [vmem:[%s3 + $0x300] sm:$0x77] %v1584
          %1713 = vst [vmem:[%s3 + $0x308] sm:$0x77] %v1585
          %1714 = vst [vmem:[%s3 + $0x310] sm:$0x77] %v1586
          %1715 = vst [vmem:[%s3 + $0x318] sm:$0x77] %v1587
          %1716 = vst [vmem:[%s3 + $0x320] sm:$0x77] %v1588
          %1717 = vst [vmem:[%s3 + $0x328] sm:$0x77] %v1589
          %1718 = vst [vmem:[%s3 + $0x330] sm:$0x77] %v1590
          %1719 = vst [vmem:[%s3 + $0x338] sm:$0x77] %v1591
          %1720 = vst [vmem:[%s3 + $0x340] sm:$0x77] %v1592
          %1721 = vst [vmem:[%s3 + $0x348] sm:$0x77] %v1593
          %1722 = vst [vmem:[%s3 + $0x350] sm:$0x77] %v1594
          %1723 = vst [vmem:[%s3 + $0x358] sm:$0x77] %v1595
          %1724 = vst [vmem:[%s3 + $0x360] sm:$0x77] %v1596
          %1725 = vst [vmem:[%s3 + $0x368] sm:$0x77] %v1597
          %1726 = vst [vmem:[%s3 + $0x370] sm:$0x77] %v1598
          %1727 = vst [vmem:[%s3 + $0x378] sm:$0x77] %v1599
          %1728 = vst [vmem:[%s3 + $0x380] sm:$0x77] %v1600
          %1729 = vst [vmem:[%s3 + $0x388] sm:$0x77] %v1601
          %1730 = vst [vmem:[%s3 + $0x390] sm:$0x77] %v1602
          %1731 = vst [vmem:[%s3 + $0x398] sm:$0x77] %v1603
          %1732 = vst [vmem:[%s3 + $0x3a0] sm:$0x77] %v1604
          %1733 = vst [vmem:[%s3 + $0x3a8] sm:$0x77] %v1605
          %1734 = vst [vmem:[%s3 + $0x3b0] sm:$0x77] %v1606
          %1735 = vst [vmem:[%s3 + $0x3b8] sm:$0x77] %v1607
          %1736 = vst [vmem:[%s3 + $0x3c0] sm:$0x77] %v1608
          %1737 = vst [vmem:[%s3 + $0x3c8] sm:$0x77] %v1609
          %1738 = vst [vmem:[%s3 + $0x3d0] sm:$0x77] %v1610
          %1739 = vst [vmem:[%s3 + $0x3d8] sm:$0x77] %v1611
          %1740 = vst [vmem:[%s3 + $0x3e0] sm:$0x77] %v1612
          %1741 = vst [vmem:[%s3 + $0x3e8] sm:$0x77] %v1613
          %1742 = vst [vmem:[%s3 + $0x3f0] sm:$0x77] %v1614
          %1743 = vst [vmem:[%s3 + $0x3f8] sm:$0x77] %v1615
        $region59: #{generator_forward.11} parent=50 // pred_fallthru
          _
        // Predicated region
        $region60: #{generator_forward.11} parent=50 // pred_check
          %p1744 = pneg %p114
        $region61: #{generator_forward.11} parent=50 // pred_check_branch
          %1746 = sbr.rel (%p1744) target = $region63
        $region62: #{generator_forward.11} parent=50 // pred_region
          _
        $region63: #{generator_forward.11} parent=50 // pred_fallthru
          _
        // Predicated region
        $region64: #{generator_forward.11} parent=50 // pred_check
          %p1747 = pneg %p114
        $region65: #{generator_forward.11} parent=50 // pred_check_branch
          %1749 = sbr.rel (%p1747) target = $region67
        $region66: #{generator_forward.11} parent=50 // pred_region
          _
        $region67: #{generator_forward.11} parent=50 // pred_fallthru
          _
      $region51: #{generator_forward.11} parent=5 // pred_fallthru
        _
      %p1750 = scmp.le.s32.totalorder 2, %s9
      // Predicated region
      $region68: #{generator_forward.11} parent=5 // pred_check
        %p1751 = pneg %p1750
      $region69: #{generator_forward.11} parent=5 // pred_check_branch
        %1753 = sbr.rel (%p1751) target = $region71
      $region70: #{generator_forward.11} parent=5 // pred_region
        %s1754 = ssub.s32 %s9, 2
      $region71: #{generator_forward.11} parent=5 // pred_fallthru
        _
    $region6: #{generator_forward.11} parent=1 // loop_footer
      %s13 = sadd.s32 1, %s9
    $region7: #{generator_forward.11} parent=1 // loop_footer_branch
      %8 = sbr.rel target = $region3
    $region8: #{generator_forward.11} parent=1 // loop_exit
      _

</llo_original>
